<compile_context>
chip_gen: v7x
topology: tpu7x:2x2x1
jax: 0.10.0
libtpu: 0.0.40
codegen_flags: <defaults>
</compile_context>

<pallas_src>
import math
from functools import partial

import numpy as np
import jax
import jax.numpy as jnp
from jax.experimental import pallas as pl
from jax.experimental.pallas import tpu as pltpu

# ----------------------------- model config ---------------------------------
PAD = 0
N_HEAD = 4
D_MODEL = 32
D_K = 8
D_V = 8
D_INNER = 64
N_LAYERS = 2
N_SRC_VOCAB = 50
N_TGT_VOCAB = 50
N_POSITION = 64
SHARE_DECPRO_EMB = False
X_LOGIT_SCALE = 1.0 if not SHARE_DECPRO_EMB else D_MODEL ** (-0.5)

V_PAD = ((N_TGT_VOCAB + 127) // 128) * 128   # lane-dense vocab projection width
NEG_INF = -1e9
LN_EPS = 1e-5                                # PyTorch nn.LayerNorm default


def _round_up(x, m):
    return ((x + m - 1) // m) * m


EMB_SRC_ROWS = _round_up(N_SRC_VOCAB, 8)     # sublane-aligned embedding tables
EMB_TGT_ROWS = _round_up(N_TGT_VOCAB, 8)


# ----------------------------- fused Pallas kernel ---------------------------
def _fused_transformer_call(src_ids, src_pos_c, tgt_ids, tgt_pos_c,
                            src_kadd, tgt_kadd, src_emb, tgt_emb,
                            pk, proj_w, proj_b, B, Sp, Tp):
    """One pallas_call running the whole encoder+decoder+projection in VMEM.

    Per-batch inputs (grid axis b picks the batch element):
      src_ids/src_pos_c: (B, Sp, 1) int32     tgt_ids/tgt_pos_c: (B, Tp, 1) int32
      src_kadd: (B, 1, Sp) f32 additive       tgt_kadd: (B, 1, Tp) f32 additive
    Grid-constant inputs: embedding tables, positional table, layer-stacked
    weights (leading axis = layer), vocab projection.
    """
    HK = N_HEAD * D_K
    HV = N_HEAD * D_V
    scale = 1.0 / math.sqrt(D_K)
    emb_src_rows = src_emb.shape[0]
    emb_tgt_rows = tgt_emb.shape[0]

    # --------------------------- in-kernel helpers ---------------------------
    def _ln(x, g, b):
        # single-pass variance: E[x^2] - mu^2 (independent reductions)
        mu = jnp.mean(x, axis=-1, keepdims=True)
        var = jnp.mean(x * x, axis=-1, keepdims=True) - mu * mu
        return (x - mu) * jax.lax.rsqrt(var + LN_EPS) * g + b

    def _softmax(s):
        s = s - jnp.max(s, axis=-1, keepdims=True)
        p = jnp.exp(s)
        return p * pl.reciprocal(jnp.sum(p, axis=-1, keepdims=True), approx=True)

    def _embed(ids, pos, emb_tab, pos_tab, rows, emb_rows):
        # one-hot gather on the (otherwise idle) MXU; PAD token / position 0
        # rows of the tables are zero, matching nn.Embedding(padding_idx=0).
        tok_oh = (jax.lax.broadcasted_iota(jnp.int32, (rows, emb_rows), 1)
                  == ids).astype(jnp.float32)
        pos_oh = (jax.lax.broadcasted_iota(jnp.int32, (rows, N_POSITION), 1)
                  == pos).astype(jnp.float32)
        return (jnp.dot(tok_oh, emb_tab, preferred_element_type=jnp.float32)
                + jnp.dot(pos_oh, pos_tab, preferred_element_type=jnp.float32))

    def _attn(q2d, k2d, v2d, add_mask, wo, Tq, Tk):
        # q2d: (Tq, H*Dk)  k2d: (Tk, H*Dk)  v2d: (Tk, H*Dv)
        # add_mask: broadcastable to (H*Tq, Tk) additive mask.
        # All head score tiles are stacked along sublanes so the mask add,
        # softmax (max/exp/sum/reciprocal) run ONCE per sublayer.
        s_heads = [jax.lax.dot_general(
                       q2d[:, h * D_K:(h + 1) * D_K],
                       k2d[:, h * D_K:(h + 1) * D_K],
                       (((1,), (1,)), ((), ())),
                       preferred_element_type=jnp.float32)
                   for h in range(N_HEAD)]
        s = jnp.concatenate(s_heads, axis=0) * scale + add_mask   # (H*Tq, Tk)
        p = _softmax(s)
        o_heads = [jnp.dot(p[h * Tq:(h + 1) * Tq, :],
                           v2d[:, h * D_V:(h + 1) * D_V],
                           preferred_element_type=jnp.float32)
                   for h in range(N_HEAD)]
        o_cat = jnp.concatenate(o_heads, axis=-1)                 # (Tq, H*Dv)
        # single W_o matmul with contraction H*Dv (no per-head accumulate adds)
        return jnp.dot(o_cat, wo, preferred_element_type=jnp.float32)

    def _self_mha(x, qkv_w, qkv_b, wo, bo, g, bln, add_mask, nonpad, T):
        qkv = jnp.dot(x, qkv_w, preferred_element_type=jnp.float32) + qkv_b
        a = _attn(qkv[:, 0:HK], qkv[:, HK:2 * HK], qkv[:, 2 * HK:2 * HK + HV],
                  add_mask, wo, T, T)
        return _ln(a + bo + x, g, bln) * nonpad

    def _cross_mha(x, mem, q_w, q_b, kv_w, kv_b, wo, bo, g, bln,
                   add_mask, nonpad, Tq, Tk):
        q = jnp.dot(x, q_w, preferred_element_type=jnp.float32) + q_b
        kv = jnp.dot(mem, kv_w, preferred_element_type=jnp.float32) + kv_b
        a = _attn(q, kv[:, 0:HK], kv[:, HK:HK + HV], add_mask, wo, Tq, Tk)
        return _ln(a + bo + x, g, bln) * nonpad

    def _ffn(x, w1, b1, w2, b2, g, bln, nonpad):
        h = jnp.maximum(jnp.dot(x, w1, preferred_element_type=jnp.float32) + b1, 0.0)
        out = jnp.dot(h, w2, preferred_element_type=jnp.float32) + b2
        return _ln(out + x, g, bln) * nonpad

    # ------------------------------ kernel body ------------------------------
    def kernel(src_ids_ref, src_pos_ref, tgt_ids_ref, tgt_pos_ref,
               src_kadd_ref, tgt_kadd_ref,
               src_emb_ref, tgt_emb_ref, pos_tab_ref,
               e_qkv_w, e_qkv_b, e_wo, e_bo, e_ln1_g, e_ln1_b,
               e_w1, e_b1, e_w2, e_b2, e_ln2_g, e_ln2_b,
               s_qkv_w, s_qkv_b, s_wo, s_bo, s_ln_g, s_ln_b,
               c_q_w, c_q_b, c_kv_w, c_kv_b, c_wo, c_bo, c_ln_g, c_ln_b,
               f_w1, f_b1, f_w2, f_b2, f_ln_g, f_ln_b,
               p_w, p_b, out_ref):
        pos_tab = pos_tab_ref[...]
        sids = src_ids_ref[...]                       # (Sp, 1) int32
        tids = tgt_ids_ref[...]                       # (Tp, 1) int32

        # ---- embeddings + non-pad vectors + additive masks (in-kernel) ----
        x = _embed(sids, src_pos_ref[...], src_emb_ref[...], pos_tab, Sp, emb_src_rows)
        y = _embed(tids, tgt_pos_ref[...], tgt_emb_ref[...], pos_tab, Tp, emb_tgt_rows)
        src_np = (sids != PAD).astype(jnp.float32)    # (Sp, 1)
        tgt_np = (tids != PAD).astype(jnp.float32)    # (Tp, 1)

        enc_add = src_kadd_ref[...]                   # (1, Sp) additive key mask
        tgt_key_add = tgt_kadd_ref[...]               # (1, Tp)
        causal = (jax.lax.broadcasted_iota(jnp.int32, (Tp, Tp), 1)
                  <= jax.lax.broadcasted_iota(jnp.int32, (Tp, Tp), 0))
        causal_add = jnp.where(causal, 0.0, NEG_INF)
        dec_add = jnp.concatenate([causal_add] * N_HEAD, axis=0) + tgt_key_add

        # ---------------- encoder ----------------
        for l in range(N_LAYERS):
            x = _self_mha(x, e_qkv_w[l], e_qkv_b[l], e_wo[l], e_bo[l],
                          e_ln1_g[l], e_ln1_b[l], enc_add, src_np, Sp)
            x = _ffn(x, e_w1[l], e_b1[l], e_w2[l], e_b2[l],
                     e_ln2_g[l], e_ln2_b[l], src_np)
        enc_out = x

        # ---------------- decoder ----------------
        for l in range(N_LAYERS):
            y = _self_mha(y, s_qkv_w[l], s_qkv_b[l], s_wo[l], s_bo[l],
                          s_ln_g[l], s_ln_b[l], dec_add, tgt_np, Tp)
            y = _cross_mha(y, enc_out, c_q_w[l], c_q_b[l], c_kv_w[l], c_kv_b[l],
                           c_wo[l], c_bo[l], c_ln_g[l], c_ln_b[l],
                           enc_add, tgt_np, Tp, Sp)
            y = _ffn(y, f_w1[l], f_b1[l], f_w2[l], f_b2[l],
                     f_ln_g[l], f_ln_b[l], tgt_np)

        # -------- vocab projection (lane-dense, padded to 128 lanes) --------
        logits = jnp.dot(y, p_w[...], preferred_element_type=jnp.float32) + p_b[...]
        if X_LOGIT_SCALE != 1.0:                      # Python-level: skipped when 1.0
            logits = logits * X_LOGIT_SCALE
        out_ref[...] = logits

    per_batch = [src_ids, src_pos_c, tgt_ids, tgt_pos_c, src_kadd, tgt_kadd]
    weights = [src_emb, tgt_emb, pk["pos_table"],
               pk["e_qkv_w"], pk["e_qkv_b"], pk["e_wo"], pk["e_bo"],
               pk["e_ln1_g"], pk["e_ln1_b"],
               pk["e_w1"], pk["e_b1"], pk["e_w2"], pk["e_b2"],
               pk["e_ln2_g"], pk["e_ln2_b"],
               pk["s_qkv_w"], pk["s_qkv_b"], pk["s_wo"], pk["s_bo"],
               pk["s_ln_g"], pk["s_ln_b"],
               pk["c_q_w"], pk["c_q_b"], pk["c_kv_w"], pk["c_kv_b"],
               pk["c_wo"], pk["c_bo"], pk["c_ln_g"], pk["c_ln_b"],
               pk["f_w1"], pk["f_b1"], pk["f_w2"], pk["f_b2"],
               pk["f_ln_g"], pk["f_ln_b"],
               proj_w, proj_b]

    def _b_spec(a):
        # per-batch block: squeeze the leading batch axis inside the kernel
        return pl.BlockSpec((None,) + tuple(a.shape[1:]), lambda b: (b, 0, 0))

    def _c_spec(a):
        nd = a.ndim
        return pl.BlockSpec(tuple(a.shape), lambda b, nd=nd: (0,) * nd)

    return pl.pallas_call(
        kernel,
        grid=(B,),
        in_specs=[_b_spec(a) for a in per_batch] + [_c_spec(a) for a in weights],
        out_specs=pl.BlockSpec((None, Tp, V_PAD), lambda b: (b, 0, 0)),
        out_shape=jax.ShapeDtypeStruct((B, Tp, V_PAD), jnp.float32),
        compiler_params=pltpu.CompilerParams(dimension_semantics=("parallel",)),
    )(*per_batch, *weights)


# ----------------------------- model wrapper ---------------------------------
@partial(jax.jit, static_argnames=("src_id", "tgt_id"))
def transformer_forward(packed, src_seq, src_pos, tgt_seq, tgt_pos, *, src_id, tgt_id):
    # matches: tgt_seq, tgt_pos = tgt_seq[:, :-1], tgt_pos[:, :-1]
    tgt_seq = tgt_seq[:, :-1]
    tgt_pos = tgt_pos[:, :-1]

    B, S = src_seq.shape
    T = tgt_seq.shape[1]
    Sp = _round_up(S, 8)
    Tp = _round_up(T, 8)

    # pad sequences to sublane-aligned lengths with PAD tokens (position 0)
    src_seq_p = jnp.pad(src_seq, ((0, 0), (0, Sp - S)), constant_values=PAD)
    src_pos_p = jnp.pad(src_pos, ((0, 0), (0, Sp - S)), constant_values=0)
    tgt_seq_p = jnp.pad(tgt_seq, ((0, 0), (0, Tp - T)), constant_values=PAD)
    tgt_pos_p = jnp.pad(tgt_pos, ((0, 0), (0, Tp - T)), constant_values=0)

    # tiny kernel inputs: token/position ids as (B, len, 1) columns and
    # additive key-pad masks as (B, 1, len) rows; everything else (embedding
    # gathers, causal mask, non-pad vectors) is built inside the kernel.
    src_ids = src_seq_p[:, :, None].astype(jnp.int32)
    src_pos_c = src_pos_p[:, :, None].astype(jnp.int32)
    tgt_ids = tgt_seq_p[:, :, None].astype(jnp.int32)
    tgt_pos_c = tgt_pos_p[:, :, None].astype(jnp.int32)
    src_kadd = jnp.where(src_seq_p != PAD, 0.0, NEG_INF).astype(jnp.float32)[:, None, :]
    tgt_kadd = jnp.where(tgt_seq_p != PAD, 0.0, NEG_INF).astype(jnp.float32)[:, None, :]

    out = _fused_transformer_call(
        src_ids, src_pos_c, tgt_ids, tgt_pos_c, src_kadd, tgt_kadd,
        packed["src_emb"][src_id], packed["tgt_emb"][tgt_id],
        packed, packed["proj_w"][tgt_id], packed["proj_b"][tgt_id],
        B, Sp, Tp)

    # drop padded rows / padded vocab lanes  ->  (B*T, n_tgt_vocab)
    logits = out[:, :T, :N_TGT_VOCAB]
    return logits.reshape(B * T, N_TGT_VOCAB)


# ----------------------------- parameter init / packing ----------------------
def _xavier_normal(key, shape):
    fan_in, fan_out = shape[0], shape[1]
    std = math.sqrt(2.0 / (fan_in + fan_out))
    return std * jax.random.normal(key, shape, jnp.float32)


def _sinusoid_table(n_pos, d):
    pos = np.arange(n_pos)[:, None].astype(np.float64)
    i = np.arange(d)[None, :]
    angle = pos / np.power(10000.0, 2 * (i // 2) / d)
    table = np.zeros((n_pos, d), np.float64)
    table[:, 0::2] = np.sin(angle[:, 0::2])
    table[:, 1::2] = np.cos(angle[:, 1::2])
    table[0] = 0.0  # PAD position
    return jnp.asarray(table, jnp.float32)


def _init_mha(key):
    ks = jax.random.split(key, 4)
    return {
        "wq": _xavier_normal(ks[0], (D_MODEL, N_HEAD * D_K)),
        "bq": jnp.zeros((N_HEAD * D_K,), jnp.float32),
        "wk": _xavier_normal(ks[1], (D_MODEL, N_HEAD * D_K)),
        "bk": jnp.zeros((N_HEAD * D_K,), jnp.float32),
        "wv": _xavier_normal(ks[2], (D_MODEL, N_HEAD * D_V)),
        "bv": jnp.zeros((N_HEAD * D_V,), jnp.float32),
        "wo": _xavier_normal(ks[3], (N_HEAD * D_V, D_MODEL)),
        "bo": jnp.zeros((D_MODEL,), jnp.float32),
        "ln_g": jnp.ones((D_MODEL,), jnp.float32),
        "ln_b": jnp.zeros((D_MODEL,), jnp.float32),
    }


def _init_ffn(key):
    k1, k2 = jax.random.split(key)
    return {
        "w1": _xavier_normal(k1, (D_MODEL, D_INNER)),
        "b1": jnp.zeros((D_INNER,), jnp.float32),
        "w2": _xavier_normal(k2, (D_INNER, D_MODEL)),
        "b2": jnp.zeros((D_MODEL,), jnp.float32),
        "ln_g": jnp.ones((D_MODEL,), jnp.float32),
        "ln_b": jnp.zeros((D_MODEL,), jnp.float32),
    }


def init_params(seed=0):
    key = jax.random.PRNGKey(seed)
    keys = jax.random.split(key, 16)

    def emb(k, vocab):
        e = jax.random.normal(k, (vocab, D_MODEL), jnp.float32) * (D_MODEL ** -0.5)
        return e.at[PAD].set(0.0)

    params = {
        "src_emb": [emb(keys[0], N_SRC_VOCAB), emb(keys[1], N_SRC_VOCAB)],
        "tgt_emb": [emb(keys[2], N_TGT_VOCAB), emb(keys[3], N_TGT_VOCAB)],
        "pos_table": _sinusoid_table(N_POSITION, D_MODEL),
        "proj_w": [_xavier_normal(keys[4], (D_MODEL, N_TGT_VOCAB)),
                   _xavier_normal(keys[5], (D_MODEL, N_TGT_VOCAB))],
        "proj_b": [jnp.zeros((N_TGT_VOCAB,), jnp.float32),
                   jnp.zeros((N_TGT_VOCAB,), jnp.float32)],
        "enc_layers": [],
        "dec_layers": [],
    }
    lk = jax.random.split(keys[6], N_LAYERS * 2)
    for l in range(N_LAYERS):
        params["enc_layers"].append(
            {"attn": _init_mha(lk[2 * l]), "ffn": _init_ffn(lk[2 * l + 1])}
        )
    dk = jax.random.split(keys[7], N_LAYERS * 3)
    for l in range(N_LAYERS):
        params["dec_layers"].append(
            {
                "self_attn": _init_mha(dk[3 * l]),
                "cross_attn": _init_mha(dk[3 * l + 1]),
                "ffn": _init_ffn(dk[3 * l + 2]),
            }
        )
    return params


def pack_params(params):
    """Pack per-layer weights into layer-stacked, kernel-friendly arrays."""
    def qkv_w(a):
        return jnp.concatenate([a["wq"], a["wk"], a["wv"]], axis=1)

    def qkv_b(a):
        return jnp.concatenate([a["bq"], a["bk"], a["bv"]])[None, :]

    def row(v):
        return v[None, :]

    def pad_rows(a, rows):
        return jnp.zeros((rows, a.shape[1]), jnp.float32).at[:a.shape[0], :].set(a)

    enc_a = [lp["attn"] for lp in params["enc_layers"]]
    enc_f = [lp["ffn"] for lp in params["enc_layers"]]
    dec_s = [lp["self_attn"] for lp in params["dec_layers"]]
    dec_c = [lp["cross_attn"] for lp in params["dec_layers"]]
    dec_f = [lp["ffn"] for lp in params["dec_layers"]]
    st = lambda xs: jnp.stack(xs, axis=0)

    def pad_proj(w, b):
        wp = jnp.zeros((w.shape[0], V_PAD), jnp.float32).at[:, :w.shape[1]].set(w)
        bp = jnp.zeros((1, V_PAD), jnp.float32).at[0, :b.shape[0]].set(b)
        return wp, bp

    proj = [pad_proj(params["proj_w"][i], params["proj_b"][i]) for i in range(2)]

    return {
        # embedding tables, padded to sublane-aligned row counts (zero rows)
        "src_emb": [pad_rows(e, EMB_SRC_ROWS) for e in params["src_emb"]],
        "tgt_emb": [pad_rows(e, EMB_TGT_ROWS) for e in params["tgt_emb"]],
        "pos_table": params["pos_table"],
        "proj_w": [p[0] for p in proj],
        "proj_b": [p[1] for p in proj],
        # encoder layers
        "e_qkv_w": st([qkv_w(a) for a in enc_a]),
        "e_qkv_b": st([qkv_b(a) for a in enc_a]),
        "e_wo": st([a["wo"] for a in enc_a]),
        "e_bo": st([row(a["bo"]) for a in enc_a]),
        "e_ln1_g": st([row(a["ln_g"]) for a in enc_a]),
        "e_ln1_b": st([row(a["ln_b"]) for a in enc_a]),
        "e_w1": st([f["w1"] for f in enc_f]),
        "e_b1": st([row(f["b1"]) for f in enc_f]),
        "e_w2": st([f["w2"] for f in enc_f]),
        "e_b2": st([row(f["b2"]) for f in enc_f]),
        "e_ln2_g": st([row(f["ln_g"]) for f in enc_f]),
        "e_ln2_b": st([row(f["ln_b"]) for f in enc_f]),
        # decoder self-attention
        "s_qkv_w": st([qkv_w(a) for a in dec_s]),
        "s_qkv_b": st([qkv_b(a) for a in dec_s]),
        "s_wo": st([a["wo"] for a in dec_s]),
        "s_bo": st([row(a["bo"]) for a in dec_s]),
        "s_ln_g": st([row(a["ln_g"]) for a in dec_s]),
        "s_ln_b": st([row(a["ln_b"]) for a in dec_s]),
        # decoder cross-attention (q from dec, fused kv from enc)
        "c_q_w": st([a["wq"] for a in dec_c]),
        "c_q_b": st([row(a["bq"]) for a in dec_c]),
        "c_kv_w": st([jnp.concatenate([a["wk"], a["wv"]], axis=1) for a in dec_c]),
        "c_kv_b": st([jnp.concatenate([a["bk"], a["bv"]])[None, :] for a in dec_c]),
        "c_wo": st([a["wo"] for a in dec_c]),
        "c_bo": st([row(a["bo"]) for a in dec_c]),
        "c_ln_g": st([row(a["ln_g"]) for a in dec_c]),
        "c_ln_b": st([row(a["ln_b"]) for a in dec_c]),
        # decoder FFN
        "f_w1": st([f["w1"] for f in dec_f]),
        "f_b1": st([row(f["b1"]) for f in dec_f]),
        "f_w2": st([f["w2"] for f in dec_f]),
        "f_b2": st([row(f["b2"]) for f in dec_f]),
        "f_ln_g": st([row(f["ln_g"]) for f in dec_f]),
        "f_ln_b": st([row(f["ln_b"]) for f in dec_f]),
    }


# ----------------------------- main ------------------------------------------
if __name__ == "__main__":
    B, S_SRC, S_TGT = 2, 8, 8
    key = jax.random.PRNGKey(0)
    k1, k2 = jax.random.split(key)

    # token ids in [1, vocab); trailing PADs to exercise the masks
    src_seq = jax.random.randint(k1, (B, S_SRC), 1, N_SRC_VOCAB, dtype=jnp.int32)
    src_seq = src_seq.at[1, -2:].set(PAD)
    tgt_seq = jax.random.randint(k2, (B, S_TGT), 1, N_TGT_VOCAB, dtype=jnp.int32)
    tgt_seq = tgt_seq.at[0, -1:].set(PAD)

    def make_pos(seq):
        T = seq.shape[1]
        pos = jnp.arange(1, T + 1, dtype=jnp.int32)[None, :]
        return jnp.where(seq != PAD, pos, 0).astype(jnp.int32)

    src_pos = make_pos(src_seq)
    tgt_pos = make_pos(tgt_seq)

    params = init_params(seed=0)
    packed = pack_params(params)

    logits = transformer_forward(
        packed, src_seq, src_pos, tgt_seq, tgt_pos, src_id=0, tgt_id=1
    )
    logits = jax.block_until_ready(logits)

    assert logits.shape == (B * (S_TGT - 1), N_TGT_VOCAB), logits.shape
    assert bool(jnp.all(jnp.isfinite(logits)))
    print("KERNEL_OK")
</pallas_src>

<mosaic_0001>
module attributes {stable_mosaic.version = 11 : i64} {
  func.func @kernel(%arg0: i32, %arg1: memref<1x8x1xi32, #tpu.memory_space<vmem>>, %arg2: memref<1x8x1xi32, #tpu.memory_space<vmem>>, %arg3: memref<1x8x1xi32, #tpu.memory_space<vmem>>, %arg4: memref<1x8x1xi32, #tpu.memory_space<vmem>>, %arg5: memref<1x1x8xf32, #tpu.memory_space<vmem>>, %arg6: memref<1x1x8xf32, #tpu.memory_space<vmem>>, %arg7: memref<56x32xf32, #tpu.memory_space<vmem>>, %arg8: memref<56x32xf32, #tpu.memory_space<vmem>>, %arg9: memref<64x32xf32, #tpu.memory_space<vmem>>, %arg10: memref<2x32x96xf32, #tpu.memory_space<vmem>>, %arg11: memref<2x1x96xf32, #tpu.memory_space<vmem>>, %arg12: memref<2x32x32xf32, #tpu.memory_space<vmem>>, %arg13: memref<2x1x32xf32, #tpu.memory_space<vmem>>, %arg14: memref<2x1x32xf32, #tpu.memory_space<vmem>>, %arg15: memref<2x1x32xf32, #tpu.memory_space<vmem>>, %arg16: memref<2x32x64xf32, #tpu.memory_space<vmem>>, %arg17: memref<2x1x64xf32, #tpu.memory_space<vmem>>, %arg18: memref<2x64x32xf32, #tpu.memory_space<vmem>>, %arg19: memref<2x1x32xf32, #tpu.memory_space<vmem>>, %arg20: memref<2x1x32xf32, #tpu.memory_space<vmem>>, %arg21: memref<2x1x32xf32, #tpu.memory_space<vmem>>, %arg22: memref<2x32x96xf32, #tpu.memory_space<vmem>>, %arg23: memref<2x1x96xf32, #tpu.memory_space<vmem>>, %arg24: memref<2x32x32xf32, #tpu.memory_space<vmem>>, %arg25: memref<2x1x32xf32, #tpu.memory_space<vmem>>, %arg26: memref<2x1x32xf32, #tpu.memory_space<vmem>>, %arg27: memref<2x1x32xf32, #tpu.memory_space<vmem>>, %arg28: memref<2x32x32xf32, #tpu.memory_space<vmem>>, %arg29: memref<2x1x32xf32, #tpu.memory_space<vmem>>, %arg30: memref<2x32x64xf32, #tpu.memory_space<vmem>>, %arg31: memref<2x1x64xf32, #tpu.memory_space<vmem>>, %arg32: memref<2x32x32xf32, #tpu.memory_space<vmem>>, %arg33: memref<2x1x32xf32, #tpu.memory_space<vmem>>, %arg34: memref<2x1x32xf32, #tpu.memory_space<vmem>>, %arg35: memref<2x1x32xf32, #tpu.memory_space<vmem>>, %arg36: memref<2x32x64xf32, #tpu.memory_space<vmem>>, %arg37: memref<2x1x64xf32, #tpu.memory_space<vmem>>, %arg38: memref<2x64x32xf32, #tpu.memory_space<vmem>>, %arg39: memref<2x1x32xf32, #tpu.memory_space<vmem>>, %arg40: memref<2x1x32xf32, #tpu.memory_space<vmem>>, %arg41: memref<2x1x32xf32, #tpu.memory_space<vmem>>, %arg42: memref<32x128xf32, #tpu.memory_space<vmem>>, %arg43: memref<1x128xf32, #tpu.memory_space<vmem>>, %arg44: memref<1x8x128xf32, #tpu.memory_space<vmem>>) attributes {dimension_semantics = [#tpu.dimension_semantics<parallel>], iteration_bounds = array<i64: 2>, scalar_prefetch = 0 : i64, scratch_operands = 0 : i64, tpu.core_type = #tpu.core_type<tc>, window_params = [{transform_indices = @transform_0, window_bounds = array<i64: 1, 8, 1>}, {transform_indices = @transform_1, window_bounds = array<i64: 1, 8, 1>}, {transform_indices = @transform_2, window_bounds = array<i64: 1, 8, 1>}, {transform_indices = @transform_3, window_bounds = array<i64: 1, 8, 1>}, {transform_indices = @transform_4, window_bounds = array<i64: 1, 1, 8>}, {transform_indices = @transform_5, window_bounds = array<i64: 1, 1, 8>}, {pipeline_mode = #tpu.pipeline_mode<synchronous>, transform_indices = @transform_6, window_bounds = array<i64: 56, 32>}, {pipeline_mode = #tpu.pipeline_mode<synchronous>, transform_indices = @transform_7, window_bounds = array<i64: 56, 32>}, {pipeline_mode = #tpu.pipeline_mode<synchronous>, transform_indices = @transform_8, window_bounds = array<i64: 64, 32>}, {pipeline_mode = #tpu.pipeline_mode<synchronous>, transform_indices = @transform_9, window_bounds = array<i64: 2, 32, 96>}, {pipeline_mode = #tpu.pipeline_mode<synchronous>, transform_indices = @transform_10, window_bounds = array<i64: 2, 1, 96>}, {pipeline_mode = #tpu.pipeline_mode<synchronous>, transform_indices = @transform_11, window_bounds = array<i64: 2, 32, 32>}, {pipeline_mode = #tpu.pipeline_mode<synchronous>, transform_indices = @transform_12, window_bounds = array<i64: 2, 1, 32>}, {pipeline_mode = #tpu.pipeline_mode<synchronous>, transform_indices = @transform_13, window_bounds = array<i64: 2, 1, 32>}, {pipeline_mode = #tpu.pipeline_mode<synchronous>, transform_indices = @transform_14, window_bounds = array<i64: 2, 1, 32>}, {pipeline_mode = #tpu.pipeline_mode<synchronous>, transform_indices = @transform_15, window_bounds = array<i64: 2, 32, 64>}, {pipeline_mode = #tpu.pipeline_mode<synchronous>, transform_indices = @transform_16, window_bounds = array<i64: 2, 1, 64>}, {pipeline_mode = #tpu.pipeline_mode<synchronous>, transform_indices = @transform_17, window_bounds = array<i64: 2, 64, 32>}, {pipeline_mode = #tpu.pipeline_mode<synchronous>, transform_indices = @transform_18, window_bounds = array<i64: 2, 1, 32>}, {pipeline_mode = #tpu.pipeline_mode<synchronous>, transform_indices = @transform_19, window_bounds = array<i64: 2, 1, 32>}, {pipeline_mode = #tpu.pipeline_mode<synchronous>, transform_indices = @transform_20, window_bounds = array<i64: 2, 1, 32>}, {pipeline_mode = #tpu.pipeline_mode<synchronous>, transform_indices = @transform_21, window_bounds = array<i64: 2, 32, 96>}, {pipeline_mode = #tpu.pipeline_mode<synchronous>, transform_indices = @transform_22, window_bounds = array<i64: 2, 1, 96>}, {pipeline_mode = #tpu.pipeline_mode<synchronous>, transform_indices = @transform_23, window_bounds = array<i64: 2, 32, 32>}, {pipeline_mode = #tpu.pipeline_mode<synchronous>, transform_indices = @transform_24, window_bounds = array<i64: 2, 1, 32>}, {pipeline_mode = #tpu.pipeline_mode<synchronous>, transform_indices = @transform_25, window_bounds = array<i64: 2, 1, 32>}, {pipeline_mode = #tpu.pipeline_mode<synchronous>, transform_indices = @transform_26, window_bounds = array<i64: 2, 1, 32>}, {pipeline_mode = #tpu.pipeline_mode<synchronous>, transform_indices = @transform_27, window_bounds = array<i64: 2, 32, 32>}, {pipeline_mode = #tpu.pipeline_mode<synchronous>, transform_indices = @transform_28, window_bounds = array<i64: 2, 1, 32>}, {pipeline_mode = #tpu.pipeline_mode<synchronous>, transform_indices = @transform_29, window_bounds = array<i64: 2, 32, 64>}, {pipeline_mode = #tpu.pipeline_mode<synchronous>, transform_indices = @transform_30, window_bounds = array<i64: 2, 1, 64>}, {pipeline_mode = #tpu.pipeline_mode<synchronous>, transform_indices = @transform_31, window_bounds = array<i64: 2, 32, 32>}, {pipeline_mode = #tpu.pipeline_mode<synchronous>, transform_indices = @transform_32, window_bounds = array<i64: 2, 1, 32>}, {pipeline_mode = #tpu.pipeline_mode<synchronous>, transform_indices = @transform_33, window_bounds = array<i64: 2, 1, 32>}, {pipeline_mode = #tpu.pipeline_mode<synchronous>, transform_indices = @transform_34, window_bounds = array<i64: 2, 1, 32>}, {pipeline_mode = #tpu.pipeline_mode<synchronous>, transform_indices = @transform_35, window_bounds = array<i64: 2, 32, 64>}, {pipeline_mode = #tpu.pipeline_mode<synchronous>, transform_indices = @transform_36, window_bounds = array<i64: 2, 1, 64>}, {pipeline_mode = #tpu.pipeline_mode<synchronous>, transform_indices = @transform_37, window_bounds = array<i64: 2, 64, 32>}, {pipeline_mode = #tpu.pipeline_mode<synchronous>, transform_indices = @transform_38, window_bounds = array<i64: 2, 1, 32>}, {pipeline_mode = #tpu.pipeline_mode<synchronous>, transform_indices = @transform_39, window_bounds = array<i64: 2, 1, 32>}, {pipeline_mode = #tpu.pipeline_mode<synchronous>, transform_indices = @transform_40, window_bounds = array<i64: 2, 1, 32>}, {pipeline_mode = #tpu.pipeline_mode<synchronous>, transform_indices = @transform_41, window_bounds = array<i64: 32, 128>}, {pipeline_mode = #tpu.pipeline_mode<synchronous>, transform_indices = @transform_42, window_bounds = array<i64: 1, 128>}, {transform_indices = @transform_43, window_bounds = array<i64: 1, 8, 128>}]} {
    %c0 = arith.constant 0 : index
    %c0_0 = arith.constant 0 : index
    %0 = vector.load %arg9[%c0, %c0_0] : memref<64x32xf32, #tpu.memory_space<vmem>>, vector<64x32xf32>
    %c0_1 = arith.constant 0 : index
    %c0_2 = arith.constant 0 : index
    %c0_3 = arith.constant 0 : index
    %1 = vector.load %arg1[%c0_1, %c0_2, %c0_3] : memref<1x8x1xi32, #tpu.memory_space<vmem>>, vector<1x8x1xi32>
    %2 = vector.shape_cast %1 : vector<1x8x1xi32> to vector<8x1xi32>
    %c0_4 = arith.constant 0 : index
    %c0_5 = arith.constant 0 : index
    %c0_6 = arith.constant 0 : index
    %3 = vector.load %arg3[%c0_4, %c0_5, %c0_6] : memref<1x8x1xi32, #tpu.memory_space<vmem>>, vector<1x8x1xi32>
    %4 = vector.shape_cast %3 : vector<1x8x1xi32> to vector<8x1xi32>
    %c0_7 = arith.constant 0 : index
    %c0_8 = arith.constant 0 : index
    %c0_9 = arith.constant 0 : index
    %5 = vector.load %arg2[%c0_7, %c0_8, %c0_9] : memref<1x8x1xi32, #tpu.memory_space<vmem>>, vector<1x8x1xi32>
    %6 = vector.shape_cast %5 : vector<1x8x1xi32> to vector<8x1xi32>
    %c0_10 = arith.constant 0 : index
    %c0_11 = arith.constant 0 : index
    %7 = vector.load %arg7[%c0_10, %c0_11] : memref<56x32xf32, #tpu.memory_space<vmem>>, vector<56x32xf32>
    %8 = tpu.iota {dimensions = array<i32: 1>} : vector<8x56xi32>
    %9 = vector.broadcast %2 : vector<8x1xi32> to vector<8x56xi32>
    %10 = arith.cmpi eq, %8, %9 : vector<8x56xi32>
    %11 = arith.extui %10 : vector<8x56xi1> to vector<8x56xi32>
    %12 = arith.sitofp %11 : vector<8x56xi32> to vector<8x56xf32>
    %13 = tpu.iota {dimensions = array<i32: 1>} : vector<8x64xi32>
    %14 = vector.broadcast %6 : vector<8x1xi32> to vector<8x64xi32>
    %15 = arith.cmpi eq, %13, %14 : vector<8x64xi32>
    %16 = arith.extui %15 : vector<8x64xi1> to vector<8x64xi32>
    %17 = arith.sitofp %16 : vector<8x64xi32> to vector<8x64xf32>
    %cst = arith.constant dense<0.000000e+00> : vector<8x32xf32>
    %18 = tpu.matmul %12, %7, %cst {dimension_numbers = #tpu.dot_dimension_numbers<[1], [0], [0], [1], [0, 0, 1, 1], [], []>} : vector<8x56xf32>, vector<56x32xf32>, vector<8x32xf32> -> vector<8x32xf32>
    %cst_12 = arith.constant dense<0.000000e+00> : vector<8x32xf32>
    %19 = tpu.matmul %17, %0, %cst_12 {dimension_numbers = #tpu.dot_dimension_numbers<[1], [0], [0], [1], [0, 0, 1, 1], [], []>} : vector<8x64xf32>, vector<64x32xf32>, vector<8x32xf32> -> vector<8x32xf32>
    %20 = arith.addf %18, %19 : vector<8x32xf32>
    %c0_13 = arith.constant 0 : index
    %c0_14 = arith.constant 0 : index
    %c0_15 = arith.constant 0 : index
    %21 = vector.load %arg4[%c0_13, %c0_14, %c0_15] : memref<1x8x1xi32, #tpu.memory_space<vmem>>, vector<1x8x1xi32>
    %22 = vector.shape_cast %21 : vector<1x8x1xi32> to vector<8x1xi32>
    %c0_16 = arith.constant 0 : index
    %c0_17 = arith.constant 0 : index
    %23 = vector.load %arg8[%c0_16, %c0_17] : memref<56x32xf32, #tpu.memory_space<vmem>>, vector<56x32xf32>
    %24 = tpu.iota {dimensions = array<i32: 1>} : vector<8x56xi32>
    %25 = vector.broadcast %4 : vector<8x1xi32> to vector<8x56xi32>
    %26 = arith.cmpi eq, %24, %25 : vector<8x56xi32>
    %27 = arith.extui %26 : vector<8x56xi1> to vector<8x56xi32>
    %28 = arith.sitofp %27 : vector<8x56xi32> to vector<8x56xf32>
    %29 = tpu.iota {dimensions = array<i32: 1>} : vector<8x64xi32>
    %30 = vector.broadcast %22 : vector<8x1xi32> to vector<8x64xi32>
    %31 = arith.cmpi eq, %29, %30 : vector<8x64xi32>
    %32 = arith.extui %31 : vector<8x64xi1> to vector<8x64xi32>
    %33 = arith.sitofp %32 : vector<8x64xi32> to vector<8x64xf32>
    %cst_18 = arith.constant dense<0.000000e+00> : vector<8x32xf32>
    %34 = tpu.matmul %28, %23, %cst_18 {dimension_numbers = #tpu.dot_dimension_numbers<[1], [0], [0], [1], [0, 0, 1, 1], [], []>} : vector<8x56xf32>, vector<56x32xf32>, vector<8x32xf32> -> vector<8x32xf32>
    %cst_19 = arith.constant dense<0.000000e+00> : vector<8x32xf32>
    %35 = tpu.matmul %33, %0, %cst_19 {dimension_numbers = #tpu.dot_dimension_numbers<[1], [0], [0], [1], [0, 0, 1, 1], [], []>} : vector<8x64xf32>, vector<64x32xf32>, vector<8x32xf32> -> vector<8x32xf32>
    %36 = arith.addf %34, %35 : vector<8x32xf32>
    %c0_i32 = arith.constant 0 : i32
    %37 = vector.broadcast %c0_i32 : i32 to vector<8x1xi32>
    %38 = arith.cmpi ne, %2, %37 : vector<8x1xi32>
    %39 = arith.extui %38 : vector<8x1xi1> to vector<8x1xi32>
    %40 = arith.sitofp %39 : vector<8x1xi32> to vector<8x1xf32>
    %c0_i32_20 = arith.constant 0 : i32
    %41 = vector.broadcast %c0_i32_20 : i32 to vector<8x1xi32>
    %42 = arith.cmpi ne, %4, %41 : vector<8x1xi32>
    %43 = arith.extui %42 : vector<8x1xi1> to vector<8x1xi32>
    %44 = arith.sitofp %43 : vector<8x1xi32> to vector<8x1xf32>
    %c0_21 = arith.constant 0 : index
    %c0_22 = arith.constant 0 : index
    %c0_23 = arith.constant 0 : index
    %45 = vector.load %arg5[%c0_21, %c0_22, %c0_23] : memref<1x1x8xf32, #tpu.memory_space<vmem>>, vector<1x1x8xf32>
    %46 = vector.shape_cast %45 : vector<1x1x8xf32> to vector<1x8xf32>
    %c0_24 = arith.constant 0 : index
    %c0_25 = arith.constant 0 : index
    %c0_26 = arith.constant 0 : index
    %47 = vector.load %arg6[%c0_24, %c0_25, %c0_26] : memref<1x1x8xf32, #tpu.memory_space<vmem>>, vector<1x1x8xf32>
    %48 = vector.shape_cast %47 : vector<1x1x8xf32> to vector<1x8xf32>
    %49 = tpu.iota {dimensions = array<i32: 1>} : vector<8x8xi32>
    %50 = tpu.iota {dimensions = array<i32: 0>} : vector<8x8xi32>
    %51 = arith.cmpi sle, %49, %50 : vector<8x8xi32>
    %cst_27 = arith.constant 0.000000e+00 : f32
    %cst_28 = arith.constant -1.000000e+09 : f32
    %52 = vector.broadcast %cst_27 : f32 to vector<8x8xf32>
    %53 = vector.broadcast %cst_28 : f32 to vector<8x8xf32>
    %54 = arith.select %51, %52, %53 : vector<8x8xi1>, vector<8x8xf32>
    %55 = tpu.concatenate %54, %54, %54, %54 in 0 : vector<8x8xf32>, vector<8x8xf32>, vector<8x8xf32>, vector<8x8xf32> -> vector<32x8xf32>
    %56 = vector.broadcast %48 : vector<1x8xf32> to vector<32x8xf32>
    %57 = arith.addf %55, %56 : vector<32x8xf32>
    %c0_29 = arith.constant 0 : index
    %c0_30 = arith.constant 0 : index
    %c0_31 = arith.constant 0 : index
    %58 = vector.load %arg10[%c0_29, %c0_30, %c0_31] : memref<2x32x96xf32, #tpu.memory_space<vmem>>, vector<1x32x96xf32>
    %59 = vector.shape_cast %58 : vector<1x32x96xf32> to vector<32x96xf32>
    %c0_32 = arith.constant 0 : index
    %c0_33 = arith.constant 0 : index
    %c0_34 = arith.constant 0 : index
    %60 = vector.load %arg11[%c0_32, %c0_33, %c0_34] : memref<2x1x96xf32, #tpu.memory_space<vmem>>, vector<1x1x96xf32>
    %61 = vector.shape_cast %60 : vector<1x1x96xf32> to vector<1x96xf32>
    %c0_35 = arith.constant 0 : index
    %c0_36 = arith.constant 0 : index
    %c0_37 = arith.constant 0 : index
    %62 = vector.load %arg12[%c0_35, %c0_36, %c0_37] : memref<2x32x32xf32, #tpu.memory_space<vmem>>, vector<1x32x32xf32>
    %63 = vector.shape_cast %62 : vector<1x32x32xf32> to vector<32x32xf32>
    %c0_38 = arith.constant 0 : index
    %c0_39 = arith.constant 0 : index
    %c0_40 = arith.constant 0 : index
    %64 = vector.load %arg13[%c0_38, %c0_39, %c0_40] : memref<2x1x32xf32, #tpu.memory_space<vmem>>, vector<1x1x32xf32>
    %65 = vector.shape_cast %64 : vector<1x1x32xf32> to vector<1x32xf32>
    %c0_41 = arith.constant 0 : index
    %c0_42 = arith.constant 0 : index
    %c0_43 = arith.constant 0 : index
    %66 = vector.load %arg14[%c0_41, %c0_42, %c0_43] : memref<2x1x32xf32, #tpu.memory_space<vmem>>, vector<1x1x32xf32>
    %67 = vector.shape_cast %66 : vector<1x1x32xf32> to vector<1x32xf32>
    %c0_44 = arith.constant 0 : index
    %c0_45 = arith.constant 0 : index
    %c0_46 = arith.constant 0 : index
    %68 = vector.load %arg15[%c0_44, %c0_45, %c0_46] : memref<2x1x32xf32, #tpu.memory_space<vmem>>, vector<1x1x32xf32>
    %69 = vector.shape_cast %68 : vector<1x1x32xf32> to vector<1x32xf32>
    %cst_47 = arith.constant dense<0.000000e+00> : vector<8x96xf32>
    %70 = tpu.matmul %20, %59, %cst_47 {dimension_numbers = #tpu.dot_dimension_numbers<[1], [0], [0], [1], [0, 0, 1, 1], [], []>} : vector<8x32xf32>, vector<32x96xf32>, vector<8x96xf32> -> vector<8x96xf32>
    %71 = vector.broadcast %61 : vector<1x96xf32> to vector<8x96xf32>
    %72 = arith.addf %70, %71 : vector<8x96xf32>
    %73 = vector.extract_strided_slice %72 {offsets = [0, 0], sizes = [8, 32], strides = [1, 1]} : vector<8x96xf32> to vector<8x32xf32>
    %74 = vector.extract_strided_slice %72 {offsets = [0, 32], sizes = [8, 32], strides = [1, 1]} : vector<8x96xf32> to vector<8x32xf32>
    %75 = vector.extract_strided_slice %72 {offsets = [0, 64], sizes = [8, 32], strides = [1, 1]} : vector<8x96xf32> to vector<8x32xf32>
    %76 = vector.extract_strided_slice %73 {offsets = [0, 0], sizes = [8, 8], strides = [1, 1]} : vector<8x32xf32> to vector<8x8xf32>
    %77 = vector.extract_strided_slice %74 {offsets = [0, 0], sizes = [8, 8], strides = [1, 1]} : vector<8x32xf32> to vector<8x8xf32>
    %cst_48 = arith.constant dense<0.000000e+00> : vector<8x8xf32>
    %78 = tpu.matmul %76, %77, %cst_48 {dimension_numbers = #tpu.dot_dimension_numbers<[1], [1], [0], [0], [0, 0, 1, 0], [], []>} : vector<8x8xf32>, vector<8x8xf32>, vector<8x8xf32> -> vector<8x8xf32>
    %79 = vector.extract_strided_slice %73 {offsets = [0, 8], sizes = [8, 8], strides = [1, 1]} : vector<8x32xf32> to vector<8x8xf32>
    %80 = vector.extract_strided_slice %74 {offsets = [0, 8], sizes = [8, 8], strides = [1, 1]} : vector<8x32xf32> to vector<8x8xf32>
    %cst_49 = arith.constant dense<0.000000e+00> : vector<8x8xf32>
    %81 = tpu.matmul %79, %80, %cst_49 {dimension_numbers = #tpu.dot_dimension_numbers<[1], [1], [0], [0], [0, 0, 1, 0], [], []>} : vector<8x8xf32>, vector<8x8xf32>, vector<8x8xf32> -> vector<8x8xf32>
    %82 = vector.extract_strided_slice %73 {offsets = [0, 16], sizes = [8, 8], strides = [1, 1]} : vector<8x32xf32> to vector<8x8xf32>
    %83 = vector.extract_strided_slice %74 {offsets = [0, 16], sizes = [8, 8], strides = [1, 1]} : vector<8x32xf32> to vector<8x8xf32>
    %cst_50 = arith.constant dense<0.000000e+00> : vector<8x8xf32>
    %84 = tpu.matmul %82, %83, %cst_50 {dimension_numbers = #tpu.dot_dimension_numbers<[1], [1], [0], [0], [0, 0, 1, 0], [], []>} : vector<8x8xf32>, vector<8x8xf32>, vector<8x8xf32> -> vector<8x8xf32>
    %85 = vector.extract_strided_slice %73 {offsets = [0, 24], sizes = [8, 8], strides = [1, 1]} : vector<8x32xf32> to vector<8x8xf32>
    %86 = vector.extract_strided_slice %74 {offsets = [0, 24], sizes = [8, 8], strides = [1, 1]} : vector<8x32xf32> to vector<8x8xf32>
    %cst_51 = arith.constant dense<0.000000e+00> : vector<8x8xf32>
    %87 = tpu.matmul %85, %86, %cst_51 {dimension_numbers = #tpu.dot_dimension_numbers<[1], [1], [0], [0], [0, 0, 1, 0], [], []>} : vector<8x8xf32>, vector<8x8xf32>, vector<8x8xf32> -> vector<8x8xf32>
    %88 = tpu.concatenate %78, %81, %84, %87 in 0 : vector<8x8xf32>, vector<8x8xf32>, vector<8x8xf32>, vector<8x8xf32> -> vector<32x8xf32>
    %cst_52 = arith.constant 0.353553385 : f32
    %89 = vector.broadcast %cst_52 : f32 to vector<32x8xf32>
    %90 = arith.mulf %88, %89 : vector<32x8xf32>
    %91 = vector.broadcast %46 : vector<1x8xf32> to vector<32x8xf32>
    %92 = arith.addf %90, %91 : vector<32x8xf32>
    %cst_53 = arith.constant dense<0xFF800000> : vector<32xf32>
    %93 = vector.multi_reduction <maximumf>, %92, %cst_53 [1] : vector<32x8xf32> to vector<32xf32>
    %94 = vector.shape_cast %93 : vector<32xf32> to vector<32x1xf32>
    %95 = vector.broadcast %94 : vector<32x1xf32> to vector<32x8xf32>
    %96 = arith.subf %92, %95 : vector<32x8xf32>
    %97 = math.exp %96 : vector<32x8xf32>
    %cst_54 = arith.constant dense<0.000000e+00> : vector<32xf32>
    %98 = vector.multi_reduction <add>, %97, %cst_54 [1] : vector<32x8xf32> to vector<32xf32>
    %99 = vector.shape_cast %98 : vector<32xf32> to vector<32x1xf32>
    %100 = tpu.reciprocal %99 {approx = true} : vector<32x1xf32> -> vector<32x1xf32>
    %101 = vector.broadcast %100 : vector<32x1xf32> to vector<32x8xf32>
    %102 = arith.mulf %97, %101 : vector<32x8xf32>
    %103 = vector.extract_strided_slice %102 {offsets = [0, 0], sizes = [8, 8], strides = [1, 1]} : vector<32x8xf32> to vector<8x8xf32>
    %104 = vector.extract_strided_slice %75 {offsets = [0, 0], sizes = [8, 8], strides = [1, 1]} : vector<8x32xf32> to vector<8x8xf32>
    %cst_55 = arith.constant dense<0.000000e+00> : vector<8x8xf32>
    %105 = tpu.matmul %103, %104, %cst_55 {dimension_numbers = #tpu.dot_dimension_numbers<[1], [0], [0], [1], [0, 0, 1, 1], [], []>} : vector<8x8xf32>, vector<8x8xf32>, vector<8x8xf32> -> vector<8x8xf32>
    %106 = vector.extract_strided_slice %102 {offsets = [8, 0], sizes = [8, 8], strides = [1, 1]} : vector<32x8xf32> to vector<8x8xf32>
    %107 = vector.extract_strided_slice %75 {offsets = [0, 8], sizes = [8, 8], strides = [1, 1]} : vector<8x32xf32> to vector<8x8xf32>
    %cst_56 = arith.constant dense<0.000000e+00> : vector<8x8xf32>
    %108 = tpu.matmul %106, %107, %cst_56 {dimension_numbers = #tpu.dot_dimension_numbers<[1], [0], [0], [1], [0, 0, 1, 1], [], []>} : vector<8x8xf32>, vector<8x8xf32>, vector<8x8xf32> -> vector<8x8xf32>
    %109 = vector.extract_strided_slice %102 {offsets = [16, 0], sizes = [8, 8], strides = [1, 1]} : vector<32x8xf32> to vector<8x8xf32>
    %110 = vector.extract_strided_slice %75 {offsets = [0, 16], sizes = [8, 8], strides = [1, 1]} : vector<8x32xf32> to vector<8x8xf32>
    %cst_57 = arith.constant dense<0.000000e+00> : vector<8x8xf32>
    %111 = tpu.matmul %109, %110, %cst_57 {dimension_numbers = #tpu.dot_dimension_numbers<[1], [0], [0], [1], [0, 0, 1, 1], [], []>} : vector<8x8xf32>, vector<8x8xf32>, vector<8x8xf32> -> vector<8x8xf32>
    %112 = vector.extract_strided_slice %102 {offsets = [24, 0], sizes = [8, 8], strides = [1, 1]} : vector<32x8xf32> to vector<8x8xf32>
    %113 = vector.extract_strided_slice %75 {offsets = [0, 24], sizes = [8, 8], strides = [1, 1]} : vector<8x32xf32> to vector<8x8xf32>
    %cst_58 = arith.constant dense<0.000000e+00> : vector<8x8xf32>
    %114 = tpu.matmul %112, %113, %cst_58 {dimension_numbers = #tpu.dot_dimension_numbers<[1], [0], [0], [1], [0, 0, 1, 1], [], []>} : vector<8x8xf32>, vector<8x8xf32>, vector<8x8xf32> -> vector<8x8xf32>
    %115 = tpu.concatenate %105, %108, %111, %114 in 1 : vector<8x8xf32>, vector<8x8xf32>, vector<8x8xf32>, vector<8x8xf32> -> vector<8x32xf32>
    %cst_59 = arith.constant dense<0.000000e+00> : vector<8x32xf32>
    %116 = tpu.matmul %115, %63, %cst_59 {dimension_numbers = #tpu.dot_dimension_numbers<[1], [0], [0], [1], [0, 0, 1, 1], [], []>} : vector<8x32xf32>, vector<32x32xf32>, vector<8x32xf32> -> vector<8x32xf32>
    %117 = vector.broadcast %65 : vector<1x32xf32> to vector<8x32xf32>
    %118 = arith.addf %116, %117 : vector<8x32xf32>
    %119 = arith.addf %118, %20 : vector<8x32xf32>
    %cst_60 = arith.constant dense<0.000000e+00> : vector<8xf32>
    %120 = vector.multi_reduction <add>, %119, %cst_60 [1] : vector<8x32xf32> to vector<8xf32>
    %121 = vector.shape_cast %120 : vector<8xf32> to vector<8x1xf32>
    %cst_61 = arith.constant 3.200000e+01 : f32
    %122 = vector.broadcast %cst_61 : f32 to vector<8x1xf32>
    %123 = arith.divf %121, %122 : vector<8x1xf32>
    %124 = arith.mulf %119, %119 : vector<8x32xf32>
    %cst_62 = arith.constant dense<0.000000e+00> : vector<8xf32>
    %125 = vector.multi_reduction <add>, %124, %cst_62 [1] : vector<8x32xf32> to vector<8xf32>
    %126 = vector.shape_cast %125 : vector<8xf32> to vector<8x1xf32>
    %cst_63 = arith.constant 3.200000e+01 : f32
    %127 = vector.broadcast %cst_63 : f32 to vector<8x1xf32>
    %128 = arith.divf %126, %127 : vector<8x1xf32>
    %129 = arith.mulf %123, %123 : vector<8x1xf32>
    %130 = arith.subf %128, %129 : vector<8x1xf32>
    %131 = vector.broadcast %123 : vector<8x1xf32> to vector<8x32xf32>
    %132 = arith.subf %119, %131 : vector<8x32xf32>
    %cst_64 = arith.constant 9.99999974E-6 : f32
    %133 = vector.broadcast %cst_64 : f32 to vector<8x1xf32>
    %134 = arith.addf %130, %133 : vector<8x1xf32>
    %135 = math.rsqrt %134 : vector<8x1xf32>
    %136 = vector.broadcast %135 : vector<8x1xf32> to vector<8x32xf32>
    %137 = arith.mulf %132, %136 : vector<8x32xf32>
    %138 = vector.broadcast %67 : vector<1x32xf32> to vector<8x32xf32>
    %139 = arith.mulf %137, %138 : vector<8x32xf32>
    %140 = vector.broadcast %69 : vector<1x32xf32> to vector<8x32xf32>
    %141 = arith.addf %139, %140 : vector<8x32xf32>
    %142 = vector.broadcast %40 : vector<8x1xf32> to vector<8x32xf32>
    %143 = arith.mulf %141, %142 : vector<8x32xf32>
    %c0_65 = arith.constant 0 : index
    %c0_66 = arith.constant 0 : index
    %c0_67 = arith.constant 0 : index
    %144 = vector.load %arg16[%c0_65, %c0_66, %c0_67] : memref<2x32x64xf32, #tpu.memory_space<vmem>>, vector<1x32x64xf32>
    %145 = vector.shape_cast %144 : vector<1x32x64xf32> to vector<32x64xf32>
    %c0_68 = arith.constant 0 : index
    %c0_69 = arith.constant 0 : index
    %c0_70 = arith.constant 0 : index
    %146 = vector.load %arg17[%c0_68, %c0_69, %c0_70] : memref<2x1x64xf32, #tpu.memory_space<vmem>>, vector<1x1x64xf32>
    %147 = vector.shape_cast %146 : vector<1x1x64xf32> to vector<1x64xf32>
    %c0_71 = arith.constant 0 : index
    %c0_72 = arith.constant 0 : index
    %c0_73 = arith.constant 0 : index
    %148 = vector.load %arg18[%c0_71, %c0_72, %c0_73] : memref<2x64x32xf32, #tpu.memory_space<vmem>>, vector<1x64x32xf32>
    %149 = vector.shape_cast %148 : vector<1x64x32xf32> to vector<64x32xf32>
    %c0_74 = arith.constant 0 : index
    %c0_75 = arith.constant 0 : index
    %c0_76 = arith.constant 0 : index
    %150 = vector.load %arg19[%c0_74, %c0_75, %c0_76] : memref<2x1x32xf32, #tpu.memory_space<vmem>>, vector<1x1x32xf32>
    %151 = vector.shape_cast %150 : vector<1x1x32xf32> to vector<1x32xf32>
    %c0_77 = arith.constant 0 : index
    %c0_78 = arith.constant 0 : index
    %c0_79 = arith.constant 0 : index
    %152 = vector.load %arg20[%c0_77, %c0_78, %c0_79] : memref<2x1x32xf32, #tpu.memory_space<vmem>>, vector<1x1x32xf32>
    %153 = vector.shape_cast %152 : vector<1x1x32xf32> to vector<1x32xf32>
    %c0_80 = arith.constant 0 : index
    %c0_81 = arith.constant 0 : index
    %c0_82 = arith.constant 0 : index
    %154 = vector.load %arg21[%c0_80, %c0_81, %c0_82] : memref<2x1x32xf32, #tpu.memory_space<vmem>>, vector<1x1x32xf32>
    %155 = vector.shape_cast %154 : vector<1x1x32xf32> to vector<1x32xf32>
    %cst_83 = arith.constant dense<0.000000e+00> : vector<8x64xf32>
    %156 = tpu.matmul %143, %145, %cst_83 {dimension_numbers = #tpu.dot_dimension_numbers<[1], [0], [0], [1], [0, 0, 1, 1], [], []>} : vector<8x32xf32>, vector<32x64xf32>, vector<8x64xf32> -> vector<8x64xf32>
    %157 = vector.broadcast %147 : vector<1x64xf32> to vector<8x64xf32>
    %158 = arith.addf %156, %157 : vector<8x64xf32>
    %cst_84 = arith.constant 0.000000e+00 : f32
    %159 = vector.broadcast %cst_84 : f32 to vector<8x64xf32>
    %160 = arith.maximumf %158, %159 : vector<8x64xf32>
    %cst_85 = arith.constant dense<0.000000e+00> : vector<8x32xf32>
    %161 = tpu.matmul %160, %149, %cst_85 {dimension_numbers = #tpu.dot_dimension_numbers<[1], [0], [0], [1], [0, 0, 1, 1], [], []>} : vector<8x64xf32>, vector<64x32xf32>, vector<8x32xf32> -> vector<8x32xf32>
    %162 = vector.broadcast %151 : vector<1x32xf32> to vector<8x32xf32>
    %163 = arith.addf %161, %162 : vector<8x32xf32>
    %164 = arith.addf %163, %143 : vector<8x32xf32>
    %cst_86 = arith.constant dense<0.000000e+00> : vector<8xf32>
    %165 = vector.multi_reduction <add>, %164, %cst_86 [1] : vector<8x32xf32> to vector<8xf32>
    %166 = vector.shape_cast %165 : vector<8xf32> to vector<8x1xf32>
    %cst_87 = arith.constant 3.200000e+01 : f32
    %167 = vector.broadcast %cst_87 : f32 to vector<8x1xf32>
    %168 = arith.divf %166, %167 : vector<8x1xf32>
    %169 = arith.mulf %164, %164 : vector<8x32xf32>
    %cst_88 = arith.constant dense<0.000000e+00> : vector<8xf32>
    %170 = vector.multi_reduction <add>, %169, %cst_88 [1] : vector<8x32xf32> to vector<8xf32>
    %171 = vector.shape_cast %170 : vector<8xf32> to vector<8x1xf32>
    %cst_89 = arith.constant 3.200000e+01 : f32
    %172 = vector.broadcast %cst_89 : f32 to vector<8x1xf32>
    %173 = arith.divf %171, %172 : vector<8x1xf32>
    %174 = arith.mulf %168, %168 : vector<8x1xf32>
    %175 = arith.subf %173, %174 : vector<8x1xf32>
    %176 = vector.broadcast %168 : vector<8x1xf32> to vector<8x32xf32>
    %177 = arith.subf %164, %176 : vector<8x32xf32>
    %cst_90 = arith.constant 9.99999974E-6 : f32
    %178 = vector.broadcast %cst_90 : f32 to vector<8x1xf32>
    %179 = arith.addf %175, %178 : vector<8x1xf32>
    %180 = math.rsqrt %179 : vector<8x1xf32>
    %181 = vector.broadcast %180 : vector<8x1xf32> to vector<8x32xf32>
    %182 = arith.mulf %177, %181 : vector<8x32xf32>
    %183 = vector.broadcast %153 : vector<1x32xf32> to vector<8x32xf32>
    %184 = arith.mulf %182, %183 : vector<8x32xf32>
    %185 = vector.broadcast %155 : vector<1x32xf32> to vector<8x32xf32>
    %186 = arith.addf %184, %185 : vector<8x32xf32>
    %187 = vector.broadcast %40 : vector<8x1xf32> to vector<8x32xf32>
    %188 = arith.mulf %186, %187 : vector<8x32xf32>
    %c1 = arith.constant 1 : index
    %c0_91 = arith.constant 0 : index
    %c0_92 = arith.constant 0 : index
    %189 = vector.load %arg10[%c1, %c0_91, %c0_92] : memref<2x32x96xf32, #tpu.memory_space<vmem>>, vector<1x32x96xf32>
    %190 = vector.shape_cast %189 : vector<1x32x96xf32> to vector<32x96xf32>
    %c1_93 = arith.constant 1 : index
    %c0_94 = arith.constant 0 : index
    %c0_95 = arith.constant 0 : index
    %191 = vector.load %arg11[%c1_93, %c0_94, %c0_95] : memref<2x1x96xf32, #tpu.memory_space<vmem>>, vector<1x1x96xf32>
    %192 = vector.shape_cast %191 : vector<1x1x96xf32> to vector<1x96xf32>
    %c1_96 = arith.constant 1 : index
    %c0_97 = arith.constant 0 : index
    %c0_98 = arith.constant 0 : index
    %193 = vector.load %arg12[%c1_96, %c0_97, %c0_98] : memref<2x32x32xf32, #tpu.memory_space<vmem>>, vector<1x32x32xf32>
    %194 = vector.shape_cast %193 : vector<1x32x32xf32> to vector<32x32xf32>
    %c1_99 = arith.constant 1 : index
    %c0_100 = arith.constant 0 : index
    %c0_101 = arith.constant 0 : index
    %195 = vector.load %arg13[%c1_99, %c0_100, %c0_101] : memref<2x1x32xf32, #tpu.memory_space<vmem>>, vector<1x1x32xf32>
    %196 = vector.shape_cast %195 : vector<1x1x32xf32> to vector<1x32xf32>
    %c1_102 = arith.constant 1 : index
    %c0_103 = arith.constant 0 : index
    %c0_104 = arith.constant 0 : index
    %197 = vector.load %arg14[%c1_102, %c0_103, %c0_104] : memref<2x1x32xf32, #tpu.memory_space<vmem>>, vector<1x1x32xf32>
    %198 = vector.shape_cast %197 : vector<1x1x32xf32> to vector<1x32xf32>
    %c1_105 = arith.constant 1 : index
    %c0_106 = arith.constant 0 : index
    %c0_107 = arith.constant 0 : index
    %199 = vector.load %arg15[%c1_105, %c0_106, %c0_107] : memref<2x1x32xf32, #tpu.memory_space<vmem>>, vector<1x1x32xf32>
    %200 = vector.shape_cast %199 : vector<1x1x32xf32> to vector<1x32xf32>
    %cst_108 = arith.constant dense<0.000000e+00> : vector<8x96xf32>
    %201 = tpu.matmul %188, %190, %cst_108 {dimension_numbers = #tpu.dot_dimension_numbers<[1], [0], [0], [1], [0, 0, 1, 1], [], []>} : vector<8x32xf32>, vector<32x96xf32>, vector<8x96xf32> -> vector<8x96xf32>
    %202 = vector.broadcast %192 : vector<1x96xf32> to vector<8x96xf32>
    %203 = arith.addf %201, %202 : vector<8x96xf32>
    %204 = vector.extract_strided_slice %203 {offsets = [0, 0], sizes = [8, 32], strides = [1, 1]} : vector<8x96xf32> to vector<8x32xf32>
    %205 = vector.extract_strided_slice %203 {offsets = [0, 32], sizes = [8, 32], strides = [1, 1]} : vector<8x96xf32> to vector<8x32xf32>
    %206 = vector.extract_strided_slice %203 {offsets = [0, 64], sizes = [8, 32], strides = [1, 1]} : vector<8x96xf32> to vector<8x32xf32>
    %207 = vector.extract_strided_slice %204 {offsets = [0, 0], sizes = [8, 8], strides = [1, 1]} : vector<8x32xf32> to vector<8x8xf32>
    %208 = vector.extract_strided_slice %205 {offsets = [0, 0], sizes = [8, 8], strides = [1, 1]} : vector<8x32xf32> to vector<8x8xf32>
    %cst_109 = arith.constant dense<0.000000e+00> : vector<8x8xf32>
    %209 = tpu.matmul %207, %208, %cst_109 {dimension_numbers = #tpu.dot_dimension_numbers<[1], [1], [0], [0], [0, 0, 1, 0], [], []>} : vector<8x8xf32>, vector<8x8xf32>, vector<8x8xf32> -> vector<8x8xf32>
    %210 = vector.extract_strided_slice %204 {offsets = [0, 8], sizes = [8, 8], strides = [1, 1]} : vector<8x32xf32> to vector<8x8xf32>
    %211 = vector.extract_strided_slice %205 {offsets = [0, 8], sizes = [8, 8], strides = [1, 1]} : vector<8x32xf32> to vector<8x8xf32>
    %cst_110 = arith.constant dense<0.000000e+00> : vector<8x8xf32>
    %212 = tpu.matmul %210, %211, %cst_110 {dimension_numbers = #tpu.dot_dimension_numbers<[1], [1], [0], [0], [0, 0, 1, 0], [], []>} : vector<8x8xf32>, vector<8x8xf32>, vector<8x8xf32> -> vector<8x8xf32>
    %213 = vector.extract_strided_slice %204 {offsets = [0, 16], sizes = [8, 8], strides = [1, 1]} : vector<8x32xf32> to vector<8x8xf32>
    %214 = vector.extract_strided_slice %205 {offsets = [0, 16], sizes = [8, 8], strides = [1, 1]} : vector<8x32xf32> to vector<8x8xf32>
    %cst_111 = arith.constant dense<0.000000e+00> : vector<8x8xf32>
    %215 = tpu.matmul %213, %214, %cst_111 {dimension_numbers = #tpu.dot_dimension_numbers<[1], [1], [0], [0], [0, 0, 1, 0], [], []>} : vector<8x8xf32>, vector<8x8xf32>, vector<8x8xf32> -> vector<8x8xf32>
    %216 = vector.extract_strided_slice %204 {offsets = [0, 24], sizes = [8, 8], strides = [1, 1]} : vector<8x32xf32> to vector<8x8xf32>
    %217 = vector.extract_strided_slice %205 {offsets = [0, 24], sizes = [8, 8], strides = [1, 1]} : vector<8x32xf32> to vector<8x8xf32>
    %cst_112 = arith.constant dense<0.000000e+00> : vector<8x8xf32>
    %218 = tpu.matmul %216, %217, %cst_112 {dimension_numbers = #tpu.dot_dimension_numbers<[1], [1], [0], [0], [0, 0, 1, 0], [], []>} : vector<8x8xf32>, vector<8x8xf32>, vector<8x8xf32> -> vector<8x8xf32>
    %219 = tpu.concatenate %209, %212, %215, %218 in 0 : vector<8x8xf32>, vector<8x8xf32>, vector<8x8xf32>, vector<8x8xf32> -> vector<32x8xf32>
    %cst_113 = arith.constant 0.353553385 : f32
    %220 = vector.broadcast %cst_113 : f32 to vector<32x8xf32>
    %221 = arith.mulf %219, %220 : vector<32x8xf32>
    %222 = vector.broadcast %46 : vector<1x8xf32> to vector<32x8xf32>
    %223 = arith.addf %221, %222 : vector<32x8xf32>
    %cst_114 = arith.constant dense<0xFF800000> : vector<32xf32>
    %224 = vector.multi_reduction <maximumf>, %223, %cst_114 [1] : vector<32x8xf32> to vector<32xf32>
    %225 = vector.shape_cast %224 : vector<32xf32> to vector<32x1xf32>
    %226 = vector.broadcast %225 : vector<32x1xf32> to vector<32x8xf32>
    %227 = arith.subf %223, %226 : vector<32x8xf32>
    %228 = math.exp %227 : vector<32x8xf32>
    %cst_115 = arith.constant dense<0.000000e+00> : vector<32xf32>
    %229 = vector.multi_reduction <add>, %228, %cst_115 [1] : vector<32x8xf32> to vector<32xf32>
    %230 = vector.shape_cast %229 : vector<32xf32> to vector<32x1xf32>
    %231 = tpu.reciprocal %230 {approx = true} : vector<32x1xf32> -> vector<32x1xf32>
    %232 = vector.broadcast %231 : vector<32x1xf32> to vector<32x8xf32>
    %233 = arith.mulf %228, %232 : vector<32x8xf32>
    %234 = vector.extract_strided_slice %233 {offsets = [0, 0], sizes = [8, 8], strides = [1, 1]} : vector<32x8xf32> to vector<8x8xf32>
    %235 = vector.extract_strided_slice %206 {offsets = [0, 0], sizes = [8, 8], strides = [1, 1]} : vector<8x32xf32> to vector<8x8xf32>
    %cst_116 = arith.constant dense<0.000000e+00> : vector<8x8xf32>
    %236 = tpu.matmul %234, %235, %cst_116 {dimension_numbers = #tpu.dot_dimension_numbers<[1], [0], [0], [1], [0, 0, 1, 1], [], []>} : vector<8x8xf32>, vector<8x8xf32>, vector<8x8xf32> -> vector<8x8xf32>
    %237 = vector.extract_strided_slice %233 {offsets = [8, 0], sizes = [8, 8], strides = [1, 1]} : vector<32x8xf32> to vector<8x8xf32>
    %238 = vector.extract_strided_slice %206 {offsets = [0, 8], sizes = [8, 8], strides = [1, 1]} : vector<8x32xf32> to vector<8x8xf32>
    %cst_117 = arith.constant dense<0.000000e+00> : vector<8x8xf32>
    %239 = tpu.matmul %237, %238, %cst_117 {dimension_numbers = #tpu.dot_dimension_numbers<[1], [0], [0], [1], [0, 0, 1, 1], [], []>} : vector<8x8xf32>, vector<8x8xf32>, vector<8x8xf32> -> vector<8x8xf32>
    %240 = vector.extract_strided_slice %233 {offsets = [16, 0], sizes = [8, 8], strides = [1, 1]} : vector<32x8xf32> to vector<8x8xf32>
    %241 = vector.extract_strided_slice %206 {offsets = [0, 16], sizes = [8, 8], strides = [1, 1]} : vector<8x32xf32> to vector<8x8xf32>
    %cst_118 = arith.constant dense<0.000000e+00> : vector<8x8xf32>
    %242 = tpu.matmul %240, %241, %cst_118 {dimension_numbers = #tpu.dot_dimension_numbers<[1], [0], [0], [1], [0, 0, 1, 1], [], []>} : vector<8x8xf32>, vector<8x8xf32>, vector<8x8xf32> -> vector<8x8xf32>
    %243 = vector.extract_strided_slice %233 {offsets = [24, 0], sizes = [8, 8], strides = [1, 1]} : vector<32x8xf32> to vector<8x8xf32>
    %244 = vector.extract_strided_slice %206 {offsets = [0, 24], sizes = [8, 8], strides = [1, 1]} : vector<8x32xf32> to vector<8x8xf32>
    %cst_119 = arith.constant dense<0.000000e+00> : vector<8x8xf32>
    %245 = tpu.matmul %243, %244, %cst_119 {dimension_numbers = #tpu.dot_dimension_numbers<[1], [0], [0], [1], [0, 0, 1, 1], [], []>} : vector<8x8xf32>, vector<8x8xf32>, vector<8x8xf32> -> vector<8x8xf32>
    %246 = tpu.concatenate %236, %239, %242, %245 in 1 : vector<8x8xf32>, vector<8x8xf32>, vector<8x8xf32>, vector<8x8xf32> -> vector<8x32xf32>
    %cst_120 = arith.constant dense<0.000000e+00> : vector<8x32xf32>
    %247 = tpu.matmul %246, %194, %cst_120 {dimension_numbers = #tpu.dot_dimension_numbers<[1], [0], [0], [1], [0, 0, 1, 1], [], []>} : vector<8x32xf32>, vector<32x32xf32>, vector<8x32xf32> -> vector<8x32xf32>
    %248 = vector.broadcast %196 : vector<1x32xf32> to vector<8x32xf32>
    %249 = arith.addf %247, %248 : vector<8x32xf32>
    %250 = arith.addf %249, %188 : vector<8x32xf32>
    %cst_121 = arith.constant dense<0.000000e+00> : vector<8xf32>
    %251 = vector.multi_reduction <add>, %250, %cst_121 [1] : vector<8x32xf32> to vector<8xf32>
    %252 = vector.shape_cast %251 : vector<8xf32> to vector<8x1xf32>
    %cst_122 = arith.constant 3.200000e+01 : f32
    %253 = vector.broadcast %cst_122 : f32 to vector<8x1xf32>
    %254 = arith.divf %252, %253 : vector<8x1xf32>
    %255 = arith.mulf %250, %250 : vector<8x32xf32>
    %cst_123 = arith.constant dense<0.000000e+00> : vector<8xf32>
    %256 = vector.multi_reduction <add>, %255, %cst_123 [1] : vector<8x32xf32> to vector<8xf32>
    %257 = vector.shape_cast %256 : vector<8xf32> to vector<8x1xf32>
    %cst_124 = arith.constant 3.200000e+01 : f32
    %258 = vector.broadcast %cst_124 : f32 to vector<8x1xf32>
    %259 = arith.divf %257, %258 : vector<8x1xf32>
    %260 = arith.mulf %254, %254 : vector<8x1xf32>
    %261 = arith.subf %259, %260 : vector<8x1xf32>
    %262 = vector.broadcast %254 : vector<8x1xf32> to vector<8x32xf32>
    %263 = arith.subf %250, %262 : vector<8x32xf32>
    %cst_125 = arith.constant 9.99999974E-6 : f32
    %264 = vector.broadcast %cst_125 : f32 to vector<8x1xf32>
    %265 = arith.addf %261, %264 : vector<8x1xf32>
    %266 = math.rsqrt %265 : vector<8x1xf32>
    %267 = vector.broadcast %266 : vector<8x1xf32> to vector<8x32xf32>
    %268 = arith.mulf %263, %267 : vector<8x32xf32>
    %269 = vector.broadcast %198 : vector<1x32xf32> to vector<8x32xf32>
    %270 = arith.mulf %268, %269 : vector<8x32xf32>
    %271 = vector.broadcast %200 : vector<1x32xf32> to vector<8x32xf32>
    %272 = arith.addf %270, %271 : vector<8x32xf32>
    %273 = vector.broadcast %40 : vector<8x1xf32> to vector<8x32xf32>
    %274 = arith.mulf %272, %273 : vector<8x32xf32>
    %c1_126 = arith.constant 1 : index
    %c0_127 = arith.constant 0 : index
    %c0_128 = arith.constant 0 : index
    %275 = vector.load %arg16[%c1_126, %c0_127, %c0_128] : memref<2x32x64xf32, #tpu.memory_space<vmem>>, vector<1x32x64xf32>
    %276 = vector.shape_cast %275 : vector<1x32x64xf32> to vector<32x64xf32>
    %c1_129 = arith.constant 1 : index
    %c0_130 = arith.constant 0 : index
    %c0_131 = arith.constant 0 : index
    %277 = vector.load %arg17[%c1_129, %c0_130, %c0_131] : memref<2x1x64xf32, #tpu.memory_space<vmem>>, vector<1x1x64xf32>
    %278 = vector.shape_cast %277 : vector<1x1x64xf32> to vector<1x64xf32>
    %c1_132 = arith.constant 1 : index
    %c0_133 = arith.constant 0 : index
    %c0_134 = arith.constant 0 : index
    %279 = vector.load %arg18[%c1_132, %c0_133, %c0_134] : memref<2x64x32xf32, #tpu.memory_space<vmem>>, vector<1x64x32xf32>
    %280 = vector.shape_cast %279 : vector<1x64x32xf32> to vector<64x32xf32>
    %c1_135 = arith.constant 1 : index
    %c0_136 = arith.constant 0 : index
    %c0_137 = arith.constant 0 : index
    %281 = vector.load %arg19[%c1_135, %c0_136, %c0_137] : memref<2x1x32xf32, #tpu.memory_space<vmem>>, vector<1x1x32xf32>
    %282 = vector.shape_cast %281 : vector<1x1x32xf32> to vector<1x32xf32>
    %c1_138 = arith.constant 1 : index
    %c0_139 = arith.constant 0 : index
    %c0_140 = arith.constant 0 : index
    %283 = vector.load %arg20[%c1_138, %c0_139, %c0_140] : memref<2x1x32xf32, #tpu.memory_space<vmem>>, vector<1x1x32xf32>
    %284 = vector.shape_cast %283 : vector<1x1x32xf32> to vector<1x32xf32>
    %c1_141 = arith.constant 1 : index
    %c0_142 = arith.constant 0 : index
    %c0_143 = arith.constant 0 : index
    %285 = vector.load %arg21[%c1_141, %c0_142, %c0_143] : memref<2x1x32xf32, #tpu.memory_space<vmem>>, vector<1x1x32xf32>
    %286 = vector.shape_cast %285 : vector<1x1x32xf32> to vector<1x32xf32>
    %cst_144 = arith.constant dense<0.000000e+00> : vector<8x64xf32>
    %287 = tpu.matmul %274, %276, %cst_144 {dimension_numbers = #tpu.dot_dimension_numbers<[1], [0], [0], [1], [0, 0, 1, 1], [], []>} : vector<8x32xf32>, vector<32x64xf32>, vector<8x64xf32> -> vector<8x64xf32>
    %288 = vector.broadcast %278 : vector<1x64xf32> to vector<8x64xf32>
    %289 = arith.addf %287, %288 : vector<8x64xf32>
    %cst_145 = arith.constant 0.000000e+00 : f32
    %290 = vector.broadcast %cst_145 : f32 to vector<8x64xf32>
    %291 = arith.maximumf %289, %290 : vector<8x64xf32>
    %cst_146 = arith.constant dense<0.000000e+00> : vector<8x32xf32>
    %292 = tpu.matmul %291, %280, %cst_146 {dimension_numbers = #tpu.dot_dimension_numbers<[1], [0], [0], [1], [0, 0, 1, 1], [], []>} : vector<8x64xf32>, vector<64x32xf32>, vector<8x32xf32> -> vector<8x32xf32>
    %293 = vector.broadcast %282 : vector<1x32xf32> to vector<8x32xf32>
    %294 = arith.addf %292, %293 : vector<8x32xf32>
    %295 = arith.addf %294, %274 : vector<8x32xf32>
    %cst_147 = arith.constant dense<0.000000e+00> : vector<8xf32>
    %296 = vector.multi_reduction <add>, %295, %cst_147 [1] : vector<8x32xf32> to vector<8xf32>
    %297 = vector.shape_cast %296 : vector<8xf32> to vector<8x1xf32>
    %cst_148 = arith.constant 3.200000e+01 : f32
    %298 = vector.broadcast %cst_148 : f32 to vector<8x1xf32>
    %299 = arith.divf %297, %298 : vector<8x1xf32>
    %300 = arith.mulf %295, %295 : vector<8x32xf32>
    %cst_149 = arith.constant dense<0.000000e+00> : vector<8xf32>
    %301 = vector.multi_reduction <add>, %300, %cst_149 [1] : vector<8x32xf32> to vector<8xf32>
    %302 = vector.shape_cast %301 : vector<8xf32> to vector<8x1xf32>
    %cst_150 = arith.constant 3.200000e+01 : f32
    %303 = vector.broadcast %cst_150 : f32 to vector<8x1xf32>
    %304 = arith.divf %302, %303 : vector<8x1xf32>
    %305 = arith.mulf %299, %299 : vector<8x1xf32>
    %306 = arith.subf %304, %305 : vector<8x1xf32>
    %307 = vector.broadcast %299 : vector<8x1xf32> to vector<8x32xf32>
    %308 = arith.subf %295, %307 : vector<8x32xf32>
    %cst_151 = arith.constant 9.99999974E-6 : f32
    %309 = vector.broadcast %cst_151 : f32 to vector<8x1xf32>
    %310 = arith.addf %306, %309 : vector<8x1xf32>
    %311 = math.rsqrt %310 : vector<8x1xf32>
    %312 = vector.broadcast %311 : vector<8x1xf32> to vector<8x32xf32>
    %313 = arith.mulf %308, %312 : vector<8x32xf32>
    %314 = vector.broadcast %284 : vector<1x32xf32> to vector<8x32xf32>
    %315 = arith.mulf %313, %314 : vector<8x32xf32>
    %316 = vector.broadcast %286 : vector<1x32xf32> to vector<8x32xf32>
    %317 = arith.addf %315, %316 : vector<8x32xf32>
    %318 = vector.broadcast %40 : vector<8x1xf32> to vector<8x32xf32>
    %319 = arith.mulf %317, %318 : vector<8x32xf32>
    %c0_152 = arith.constant 0 : index
    %c0_153 = arith.constant 0 : index
    %c0_154 = arith.constant 0 : index
    %320 = vector.load %arg22[%c0_152, %c0_153, %c0_154] : memref<2x32x96xf32, #tpu.memory_space<vmem>>, vector<1x32x96xf32>
    %321 = vector.shape_cast %320 : vector<1x32x96xf32> to vector<32x96xf32>
    %c0_155 = arith.constant 0 : index
    %c0_156 = arith.constant 0 : index
    %c0_157 = arith.constant 0 : index
    %322 = vector.load %arg23[%c0_155, %c0_156, %c0_157] : memref<2x1x96xf32, #tpu.memory_space<vmem>>, vector<1x1x96xf32>
    %323 = vector.shape_cast %322 : vector<1x1x96xf32> to vector<1x96xf32>
    %c0_158 = arith.constant 0 : index
    %c0_159 = arith.constant 0 : index
    %c0_160 = arith.constant 0 : index
    %324 = vector.load %arg24[%c0_158, %c0_159, %c0_160] : memref<2x32x32xf32, #tpu.memory_space<vmem>>, vector<1x32x32xf32>
    %325 = vector.shape_cast %324 : vector<1x32x32xf32> to vector<32x32xf32>
    %c0_161 = arith.constant 0 : index
    %c0_162 = arith.constant 0 : index
    %c0_163 = arith.constant 0 : index
    %326 = vector.load %arg25[%c0_161, %c0_162, %c0_163] : memref<2x1x32xf32, #tpu.memory_space<vmem>>, vector<1x1x32xf32>
    %327 = vector.shape_cast %326 : vector<1x1x32xf32> to vector<1x32xf32>
    %c0_164 = arith.constant 0 : index
    %c0_165 = arith.constant 0 : index
    %c0_166 = arith.constant 0 : index
    %328 = vector.load %arg26[%c0_164, %c0_165, %c0_166] : memref<2x1x32xf32, #tpu.memory_space<vmem>>, vector<1x1x32xf32>
    %329 = vector.shape_cast %328 : vector<1x1x32xf32> to vector<1x32xf32>
    %c0_167 = arith.constant 0 : index
    %c0_168 = arith.constant 0 : index
    %c0_169 = arith.constant 0 : index
    %330 = vector.load %arg27[%c0_167, %c0_168, %c0_169] : memref<2x1x32xf32, #tpu.memory_space<vmem>>, vector<1x1x32xf32>
    %331 = vector.shape_cast %330 : vector<1x1x32xf32> to vector<1x32xf32>
    %cst_170 = arith.constant dense<0.000000e+00> : vector<8x96xf32>
    %332 = tpu.matmul %36, %321, %cst_170 {dimension_numbers = #tpu.dot_dimension_numbers<[1], [0], [0], [1], [0, 0, 1, 1], [], []>} : vector<8x32xf32>, vector<32x96xf32>, vector<8x96xf32> -> vector<8x96xf32>
    %333 = vector.broadcast %323 : vector<1x96xf32> to vector<8x96xf32>
    %334 = arith.addf %332, %333 : vector<8x96xf32>
    %335 = vector.extract_strided_slice %334 {offsets = [0, 0], sizes = [8, 32], strides = [1, 1]} : vector<8x96xf32> to vector<8x32xf32>
    %336 = vector.extract_strided_slice %334 {offsets = [0, 32], sizes = [8, 32], strides = [1, 1]} : vector<8x96xf32> to vector<8x32xf32>
    %337 = vector.extract_strided_slice %334 {offsets = [0, 64], sizes = [8, 32], strides = [1, 1]} : vector<8x96xf32> to vector<8x32xf32>
    %338 = vector.extract_strided_slice %335 {offsets = [0, 0], sizes = [8, 8], strides = [1, 1]} : vector<8x32xf32> to vector<8x8xf32>
    %339 = vector.extract_strided_slice %336 {offsets = [0, 0], sizes = [8, 8], strides = [1, 1]} : vector<8x32xf32> to vector<8x8xf32>
    %cst_171 = arith.constant dense<0.000000e+00> : vector<8x8xf32>
    %340 = tpu.matmul %338, %339, %cst_171 {dimension_numbers = #tpu.dot_dimension_numbers<[1], [1], [0], [0], [0, 0, 1, 0], [], []>} : vector<8x8xf32>, vector<8x8xf32>, vector<8x8xf32> -> vector<8x8xf32>
    %341 = vector.extract_strided_slice %335 {offsets = [0, 8], sizes = [8, 8], strides = [1, 1]} : vector<8x32xf32> to vector<8x8xf32>
    %342 = vector.extract_strided_slice %336 {offsets = [0, 8], sizes = [8, 8], strides = [1, 1]} : vector<8x32xf32> to vector<8x8xf32>
    %cst_172 = arith.constant dense<0.000000e+00> : vector<8x8xf32>
    %343 = tpu.matmul %341, %342, %cst_172 {dimension_numbers = #tpu.dot_dimension_numbers<[1], [1], [0], [0], [0, 0, 1, 0], [], []>} : vector<8x8xf32>, vector<8x8xf32>, vector<8x8xf32> -> vector<8x8xf32>
    %344 = vector.extract_strided_slice %335 {offsets = [0, 16], sizes = [8, 8], strides = [1, 1]} : vector<8x32xf32> to vector<8x8xf32>
    %345 = vector.extract_strided_slice %336 {offsets = [0, 16], sizes = [8, 8], strides = [1, 1]} : vector<8x32xf32> to vector<8x8xf32>
    %cst_173 = arith.constant dense<0.000000e+00> : vector<8x8xf32>
    %346 = tpu.matmul %344, %345, %cst_173 {dimension_numbers = #tpu.dot_dimension_numbers<[1], [1], [0], [0], [0, 0, 1, 0], [], []>} : vector<8x8xf32>, vector<8x8xf32>, vector<8x8xf32> -> vector<8x8xf32>
    %347 = vector.extract_strided_slice %335 {offsets = [0, 24], sizes = [8, 8], strides = [1, 1]} : vector<8x32xf32> to vector<8x8xf32>
    %348 = vector.extract_strided_slice %336 {offsets = [0, 24], sizes = [8, 8], strides = [1, 1]} : vector<8x32xf32> to vector<8x8xf32>
    %cst_174 = arith.constant dense<0.000000e+00> : vector<8x8xf32>
    %349 = tpu.matmul %347, %348, %cst_174 {dimension_numbers = #tpu.dot_dimension_numbers<[1], [1], [0], [0], [0, 0, 1, 0], [], []>} : vector<8x8xf32>, vector<8x8xf32>, vector<8x8xf32> -> vector<8x8xf32>
    %350 = tpu.concatenate %340, %343, %346, %349 in 0 : vector<8x8xf32>, vector<8x8xf32>, vector<8x8xf32>, vector<8x8xf32> -> vector<32x8xf32>
    %cst_175 = arith.constant 0.353553385 : f32
    %351 = vector.broadcast %cst_175 : f32 to vector<32x8xf32>
    %352 = arith.mulf %350, %351 : vector<32x8xf32>
    %353 = arith.addf %352, %57 : vector<32x8xf32>
    %cst_176 = arith.constant dense<0xFF800000> : vector<32xf32>
    %354 = vector.multi_reduction <maximumf>, %353, %cst_176 [1] : vector<32x8xf32> to vector<32xf32>
    %355 = vector.shape_cast %354 : vector<32xf32> to vector<32x1xf32>
    %356 = vector.broadcast %355 : vector<32x1xf32> to vector<32x8xf32>
    %357 = arith.subf %353, %356 : vector<32x8xf32>
    %358 = math.exp %357 : vector<32x8xf32>
    %cst_177 = arith.constant dense<0.000000e+00> : vector<32xf32>
    %359 = vector.multi_reduction <add>, %358, %cst_177 [1] : vector<32x8xf32> to vector<32xf32>
    %360 = vector.shape_cast %359 : vector<32xf32> to vector<32x1xf32>
    %361 = tpu.reciprocal %360 {approx = true} : vector<32x1xf32> -> vector<32x1xf32>
    %362 = vector.broadcast %361 : vector<32x1xf32> to vector<32x8xf32>
    %363 = arith.mulf %358, %362 : vector<32x8xf32>
    %364 = vector.extract_strided_slice %363 {offsets = [0, 0], sizes = [8, 8], strides = [1, 1]} : vector<32x8xf32> to vector<8x8xf32>
    %365 = vector.extract_strided_slice %337 {offsets = [0, 0], sizes = [8, 8], strides = [1, 1]} : vector<8x32xf32> to vector<8x8xf32>
    %cst_178 = arith.constant dense<0.000000e+00> : vector<8x8xf32>
    %366 = tpu.matmul %364, %365, %cst_178 {dimension_numbers = #tpu.dot_dimension_numbers<[1], [0], [0], [1], [0, 0, 1, 1], [], []>} : vector<8x8xf32>, vector<8x8xf32>, vector<8x8xf32> -> vector<8x8xf32>
    %367 = vector.extract_strided_slice %363 {offsets = [8, 0], sizes = [8, 8], strides = [1, 1]} : vector<32x8xf32> to vector<8x8xf32>
    %368 = vector.extract_strided_slice %337 {offsets = [0, 8], sizes = [8, 8], strides = [1, 1]} : vector<8x32xf32> to vector<8x8xf32>
    %cst_179 = arith.constant dense<0.000000e+00> : vector<8x8xf32>
    %369 = tpu.matmul %367, %368, %cst_179 {dimension_numbers = #tpu.dot_dimension_numbers<[1], [0], [0], [1], [0, 0, 1, 1], [], []>} : vector<8x8xf32>, vector<8x8xf32>, vector<8x8xf32> -> vector<8x8xf32>
    %370 = vector.extract_strided_slice %363 {offsets = [16, 0], sizes = [8, 8], strides = [1, 1]} : vector<32x8xf32> to vector<8x8xf32>
    %371 = vector.extract_strided_slice %337 {offsets = [0, 16], sizes = [8, 8], strides = [1, 1]} : vector<8x32xf32> to vector<8x8xf32>
    %cst_180 = arith.constant dense<0.000000e+00> : vector<8x8xf32>
    %372 = tpu.matmul %370, %371, %cst_180 {dimension_numbers = #tpu.dot_dimension_numbers<[1], [0], [0], [1], [0, 0, 1, 1], [], []>} : vector<8x8xf32>, vector<8x8xf32>, vector<8x8xf32> -> vector<8x8xf32>
    %373 = vector.extract_strided_slice %363 {offsets = [24, 0], sizes = [8, 8], strides = [1, 1]} : vector<32x8xf32> to vector<8x8xf32>
    %374 = vector.extract_strided_slice %337 {offsets = [0, 24], sizes = [8, 8], strides = [1, 1]} : vector<8x32xf32> to vector<8x8xf32>
    %cst_181 = arith.constant dense<0.000000e+00> : vector<8x8xf32>
    %375 = tpu.matmul %373, %374, %cst_181 {dimension_numbers = #tpu.dot_dimension_numbers<[1], [0], [0], [1], [0, 0, 1, 1], [], []>} : vector<8x8xf32>, vector<8x8xf32>, vector<8x8xf32> -> vector<8x8xf32>
    %376 = tpu.concatenate %366, %369, %372, %375 in 1 : vector<8x8xf32>, vector<8x8xf32>, vector<8x8xf32>, vector<8x8xf32> -> vector<8x32xf32>
    %cst_182 = arith.constant dense<0.000000e+00> : vector<8x32xf32>
    %377 = tpu.matmul %376, %325, %cst_182 {dimension_numbers = #tpu.dot_dimension_numbers<[1], [0], [0], [1], [0, 0, 1, 1], [], []>} : vector<8x32xf32>, vector<32x32xf32>, vector<8x32xf32> -> vector<8x32xf32>
    %378 = vector.broadcast %327 : vector<1x32xf32> to vector<8x32xf32>
    %379 = arith.addf %377, %378 : vector<8x32xf32>
    %380 = arith.addf %379, %36 : vector<8x32xf32>
    %cst_183 = arith.constant dense<0.000000e+00> : vector<8xf32>
    %381 = vector.multi_reduction <add>, %380, %cst_183 [1] : vector<8x32xf32> to vector<8xf32>
    %382 = vector.shape_cast %381 : vector<8xf32> to vector<8x1xf32>
    %cst_184 = arith.constant 3.200000e+01 : f32
    %383 = vector.broadcast %cst_184 : f32 to vector<8x1xf32>
    %384 = arith.divf %382, %383 : vector<8x1xf32>
    %385 = arith.mulf %380, %380 : vector<8x32xf32>
    %cst_185 = arith.constant dense<0.000000e+00> : vector<8xf32>
    %386 = vector.multi_reduction <add>, %385, %cst_185 [1] : vector<8x32xf32> to vector<8xf32>
    %387 = vector.shape_cast %386 : vector<8xf32> to vector<8x1xf32>
    %cst_186 = arith.constant 3.200000e+01 : f32
    %388 = vector.broadcast %cst_186 : f32 to vector<8x1xf32>
    %389 = arith.divf %387, %388 : vector<8x1xf32>
    %390 = arith.mulf %384, %384 : vector<8x1xf32>
    %391 = arith.subf %389, %390 : vector<8x1xf32>
    %392 = vector.broadcast %384 : vector<8x1xf32> to vector<8x32xf32>
    %393 = arith.subf %380, %392 : vector<8x32xf32>
    %cst_187 = arith.constant 9.99999974E-6 : f32
    %394 = vector.broadcast %cst_187 : f32 to vector<8x1xf32>
    %395 = arith.addf %391, %394 : vector<8x1xf32>
    %396 = math.rsqrt %395 : vector<8x1xf32>
    %397 = vector.broadcast %396 : vector<8x1xf32> to vector<8x32xf32>
    %398 = arith.mulf %393, %397 : vector<8x32xf32>
    %399 = vector.broadcast %329 : vector<1x32xf32> to vector<8x32xf32>
    %400 = arith.mulf %398, %399 : vector<8x32xf32>
    %401 = vector.broadcast %331 : vector<1x32xf32> to vector<8x32xf32>
    %402 = arith.addf %400, %401 : vector<8x32xf32>
    %403 = vector.broadcast %44 : vector<8x1xf32> to vector<8x32xf32>
    %404 = arith.mulf %402, %403 : vector<8x32xf32>
    %c0_188 = arith.constant 0 : index
    %c0_189 = arith.constant 0 : index
    %c0_190 = arith.constant 0 : index
    %405 = vector.load %arg28[%c0_188, %c0_189, %c0_190] : memref<2x32x32xf32, #tpu.memory_space<vmem>>, vector<1x32x32xf32>
    %406 = vector.shape_cast %405 : vector<1x32x32xf32> to vector<32x32xf32>
    %c0_191 = arith.constant 0 : index
    %c0_192 = arith.constant 0 : index
    %c0_193 = arith.constant 0 : index
    %407 = vector.load %arg29[%c0_191, %c0_192, %c0_193] : memref<2x1x32xf32, #tpu.memory_space<vmem>>, vector<1x1x32xf32>
    %408 = vector.shape_cast %407 : vector<1x1x32xf32> to vector<1x32xf32>
    %c0_194 = arith.constant 0 : index
    %c0_195 = arith.constant 0 : index
    %c0_196 = arith.constant 0 : index
    %409 = vector.load %arg30[%c0_194, %c0_195, %c0_196] : memref<2x32x64xf32, #tpu.memory_space<vmem>>, vector<1x32x64xf32>
    %410 = vector.shape_cast %409 : vector<1x32x64xf32> to vector<32x64xf32>
    %c0_197 = arith.constant 0 : index
    %c0_198 = arith.constant 0 : index
    %c0_199 = arith.constant 0 : index
    %411 = vector.load %arg31[%c0_197, %c0_198, %c0_199] : memref<2x1x64xf32, #tpu.memory_space<vmem>>, vector<1x1x64xf32>
    %412 = vector.shape_cast %411 : vector<1x1x64xf32> to vector<1x64xf32>
    %c0_200 = arith.constant 0 : index
    %c0_201 = arith.constant 0 : index
    %c0_202 = arith.constant 0 : index
    %413 = vector.load %arg32[%c0_200, %c0_201, %c0_202] : memref<2x32x32xf32, #tpu.memory_space<vmem>>, vector<1x32x32xf32>
    %414 = vector.shape_cast %413 : vector<1x32x32xf32> to vector<32x32xf32>
    %c0_203 = arith.constant 0 : index
    %c0_204 = arith.constant 0 : index
    %c0_205 = arith.constant 0 : index
    %415 = vector.load %arg33[%c0_203, %c0_204, %c0_205] : memref<2x1x32xf32, #tpu.memory_space<vmem>>, vector<1x1x32xf32>
    %416 = vector.shape_cast %415 : vector<1x1x32xf32> to vector<1x32xf32>
    %c0_206 = arith.constant 0 : index
    %c0_207 = arith.constant 0 : index
    %c0_208 = arith.constant 0 : index
    %417 = vector.load %arg34[%c0_206, %c0_207, %c0_208] : memref<2x1x32xf32, #tpu.memory_space<vmem>>, vector<1x1x32xf32>
    %418 = vector.shape_cast %417 : vector<1x1x32xf32> to vector<1x32xf32>
    %c0_209 = arith.constant 0 : index
    %c0_210 = arith.constant 0 : index
    %c0_211 = arith.constant 0 : index
    %419 = vector.load %arg35[%c0_209, %c0_210, %c0_211] : memref<2x1x32xf32, #tpu.memory_space<vmem>>, vector<1x1x32xf32>
    %420 = vector.shape_cast %419 : vector<1x1x32xf32> to vector<1x32xf32>
    %cst_212 = arith.constant dense<0.000000e+00> : vector<8x32xf32>
    %421 = tpu.matmul %404, %406, %cst_212 {dimension_numbers = #tpu.dot_dimension_numbers<[1], [0], [0], [1], [0, 0, 1, 1], [], []>} : vector<8x32xf32>, vector<32x32xf32>, vector<8x32xf32> -> vector<8x32xf32>
    %422 = vector.broadcast %408 : vector<1x32xf32> to vector<8x32xf32>
    %423 = arith.addf %421, %422 : vector<8x32xf32>
    %cst_213 = arith.constant dense<0.000000e+00> : vector<8x64xf32>
    %424 = tpu.matmul %319, %410, %cst_213 {dimension_numbers = #tpu.dot_dimension_numbers<[1], [0], [0], [1], [0, 0, 1, 1], [], []>} : vector<8x32xf32>, vector<32x64xf32>, vector<8x64xf32> -> vector<8x64xf32>
    %425 = vector.broadcast %412 : vector<1x64xf32> to vector<8x64xf32>
    %426 = arith.addf %424, %425 : vector<8x64xf32>
    %427 = vector.extract_strided_slice %426 {offsets = [0, 0], sizes = [8, 32], strides = [1, 1]} : vector<8x64xf32> to vector<8x32xf32>
    %428 = vector.extract_strided_slice %426 {offsets = [0, 32], sizes = [8, 32], strides = [1, 1]} : vector<8x64xf32> to vector<8x32xf32>
    %429 = vector.extract_strided_slice %423 {offsets = [0, 0], sizes = [8, 8], strides = [1, 1]} : vector<8x32xf32> to vector<8x8xf32>
    %430 = vector.extract_strided_slice %427 {offsets = [0, 0], sizes = [8, 8], strides = [1, 1]} : vector<8x32xf32> to vector<8x8xf32>
    %cst_214 = arith.constant dense<0.000000e+00> : vector<8x8xf32>
    %431 = tpu.matmul %429, %430, %cst_214 {dimension_numbers = #tpu.dot_dimension_numbers<[1], [1], [0], [0], [0, 0, 1, 0], [], []>} : vector<8x8xf32>, vector<8x8xf32>, vector<8x8xf32> -> vector<8x8xf32>
    %432 = vector.extract_strided_slice %423 {offsets = [0, 8], sizes = [8, 8], strides = [1, 1]} : vector<8x32xf32> to vector<8x8xf32>
    %433 = vector.extract_strided_slice %427 {offsets = [0, 8], sizes = [8, 8], strides = [1, 1]} : vector<8x32xf32> to vector<8x8xf32>
    %cst_215 = arith.constant dense<0.000000e+00> : vector<8x8xf32>
    %434 = tpu.matmul %432, %433, %cst_215 {dimension_numbers = #tpu.dot_dimension_numbers<[1], [1], [0], [0], [0, 0, 1, 0], [], []>} : vector<8x8xf32>, vector<8x8xf32>, vector<8x8xf32> -> vector<8x8xf32>
    %435 = vector.extract_strided_slice %423 {offsets = [0, 16], sizes = [8, 8], strides = [1, 1]} : vector<8x32xf32> to vector<8x8xf32>
    %436 = vector.extract_strided_slice %427 {offsets = [0, 16], sizes = [8, 8], strides = [1, 1]} : vector<8x32xf32> to vector<8x8xf32>
    %cst_216 = arith.constant dense<0.000000e+00> : vector<8x8xf32>
    %437 = tpu.matmul %435, %436, %cst_216 {dimension_numbers = #tpu.dot_dimension_numbers<[1], [1], [0], [0], [0, 0, 1, 0], [], []>} : vector<8x8xf32>, vector<8x8xf32>, vector<8x8xf32> -> vector<8x8xf32>
    %438 = vector.extract_strided_slice %423 {offsets = [0, 24], sizes = [8, 8], strides = [1, 1]} : vector<8x32xf32> to vector<8x8xf32>
    %439 = vector.extract_strided_slice %427 {offsets = [0, 24], sizes = [8, 8], strides = [1, 1]} : vector<8x32xf32> to vector<8x8xf32>
    %cst_217 = arith.constant dense<0.000000e+00> : vector<8x8xf32>
    %440 = tpu.matmul %438, %439, %cst_217 {dimension_numbers = #tpu.dot_dimension_numbers<[1], [1], [0], [0], [0, 0, 1, 0], [], []>} : vector<8x8xf32>, vector<8x8xf32>, vector<8x8xf32> -> vector<8x8xf32>
    %441 = tpu.concatenate %431, %434, %437, %440 in 0 : vector<8x8xf32>, vector<8x8xf32>, vector<8x8xf32>, vector<8x8xf32> -> vector<32x8xf32>
    %cst_218 = arith.constant 0.353553385 : f32
    %442 = vector.broadcast %cst_218 : f32 to vector<32x8xf32>
    %443 = arith.mulf %441, %442 : vector<32x8xf32>
    %444 = vector.broadcast %46 : vector<1x8xf32> to vector<32x8xf32>
    %445 = arith.addf %443, %444 : vector<32x8xf32>
    %cst_219 = arith.constant dense<0xFF800000> : vector<32xf32>
    %446 = vector.multi_reduction <maximumf>, %445, %cst_219 [1] : vector<32x8xf32> to vector<32xf32>
    %447 = vector.shape_cast %446 : vector<32xf32> to vector<32x1xf32>
    %448 = vector.broadcast %447 : vector<32x1xf32> to vector<32x8xf32>
    %449 = arith.subf %445, %448 : vector<32x8xf32>
    %450 = math.exp %449 : vector<32x8xf32>
    %cst_220 = arith.constant dense<0.000000e+00> : vector<32xf32>
    %451 = vector.multi_reduction <add>, %450, %cst_220 [1] : vector<32x8xf32> to vector<32xf32>
    %452 = vector.shape_cast %451 : vector<32xf32> to vector<32x1xf32>
    %453 = tpu.reciprocal %452 {approx = true} : vector<32x1xf32> -> vector<32x1xf32>
    %454 = vector.broadcast %453 : vector<32x1xf32> to vector<32x8xf32>
    %455 = arith.mulf %450, %454 : vector<32x8xf32>
    %456 = vector.extract_strided_slice %455 {offsets = [0, 0], sizes = [8, 8], strides = [1, 1]} : vector<32x8xf32> to vector<8x8xf32>
    %457 = vector.extract_strided_slice %428 {offsets = [0, 0], sizes = [8, 8], strides = [1, 1]} : vector<8x32xf32> to vector<8x8xf32>
    %cst_221 = arith.constant dense<0.000000e+00> : vector<8x8xf32>
    %458 = tpu.matmul %456, %457, %cst_221 {dimension_numbers = #tpu.dot_dimension_numbers<[1], [0], [0], [1], [0, 0, 1, 1], [], []>} : vector<8x8xf32>, vector<8x8xf32>, vector<8x8xf32> -> vector<8x8xf32>
    %459 = vector.extract_strided_slice %455 {offsets = [8, 0], sizes = [8, 8], strides = [1, 1]} : vector<32x8xf32> to vector<8x8xf32>
    %460 = vector.extract_strided_slice %428 {offsets = [0, 8], sizes = [8, 8], strides = [1, 1]} : vector<8x32xf32> to vector<8x8xf32>
    %cst_222 = arith.constant dense<0.000000e+00> : vector<8x8xf32>
    %461 = tpu.matmul %459, %460, %cst_222 {dimension_numbers = #tpu.dot_dimension_numbers<[1], [0], [0], [1], [0, 0, 1, 1], [], []>} : vector<8x8xf32>, vector<8x8xf32>, vector<8x8xf32> -> vector<8x8xf32>
    %462 = vector.extract_strided_slice %455 {offsets = [16, 0], sizes = [8, 8], strides = [1, 1]} : vector<32x8xf32> to vector<8x8xf32>
    %463 = vector.extract_strided_slice %428 {offsets = [0, 16], sizes = [8, 8], strides = [1, 1]} : vector<8x32xf32> to vector<8x8xf32>
    %cst_223 = arith.constant dense<0.000000e+00> : vector<8x8xf32>
    %464 = tpu.matmul %462, %463, %cst_223 {dimension_numbers = #tpu.dot_dimension_numbers<[1], [0], [0], [1], [0, 0, 1, 1], [], []>} : vector<8x8xf32>, vector<8x8xf32>, vector<8x8xf32> -> vector<8x8xf32>
    %465 = vector.extract_strided_slice %455 {offsets = [24, 0], sizes = [8, 8], strides = [1, 1]} : vector<32x8xf32> to vector<8x8xf32>
    %466 = vector.extract_strided_slice %428 {offsets = [0, 24], sizes = [8, 8], strides = [1, 1]} : vector<8x32xf32> to vector<8x8xf32>
    %cst_224 = arith.constant dense<0.000000e+00> : vector<8x8xf32>
    %467 = tpu.matmul %465, %466, %cst_224 {dimension_numbers = #tpu.dot_dimension_numbers<[1], [0], [0], [1], [0, 0, 1, 1], [], []>} : vector<8x8xf32>, vector<8x8xf32>, vector<8x8xf32> -> vector<8x8xf32>
    %468 = tpu.concatenate %458, %461, %464, %467 in 1 : vector<8x8xf32>, vector<8x8xf32>, vector<8x8xf32>, vector<8x8xf32> -> vector<8x32xf32>
    %cst_225 = arith.constant dense<0.000000e+00> : vector<8x32xf32>
    %469 = tpu.matmul %468, %414, %cst_225 {dimension_numbers = #tpu.dot_dimension_numbers<[1], [0], [0], [1], [0, 0, 1, 1], [], []>} : vector<8x32xf32>, vector<32x32xf32>, vector<8x32xf32> -> vector<8x32xf32>
    %470 = vector.broadcast %416 : vector<1x32xf32> to vector<8x32xf32>
    %471 = arith.addf %469, %470 : vector<8x32xf32>
    %472 = arith.addf %471, %404 : vector<8x32xf32>
    %cst_226 = arith.constant dense<0.000000e+00> : vector<8xf32>
    %473 = vector.multi_reduction <add>, %472, %cst_226 [1] : vector<8x32xf32> to vector<8xf32>
    %474 = vector.shape_cast %473 : vector<8xf32> to vector<8x1xf32>
    %cst_227 = arith.constant 3.200000e+01 : f32
    %475 = vector.broadcast %cst_227 : f32 to vector<8x1xf32>
    %476 = arith.divf %474, %475 : vector<8x1xf32>
    %477 = arith.mulf %472, %472 : vector<8x32xf32>
    %cst_228 = arith.constant dense<0.000000e+00> : vector<8xf32>
    %478 = vector.multi_reduction <add>, %477, %cst_228 [1] : vector<8x32xf32> to vector<8xf32>
    %479 = vector.shape_cast %478 : vector<8xf32> to vector<8x1xf32>
    %cst_229 = arith.constant 3.200000e+01 : f32
    %480 = vector.broadcast %cst_229 : f32 to vector<8x1xf32>
    %481 = arith.divf %479, %480 : vector<8x1xf32>
    %482 = arith.mulf %476, %476 : vector<8x1xf32>
    %483 = arith.subf %481, %482 : vector<8x1xf32>
    %484 = vector.broadcast %476 : vector<8x1xf32> to vector<8x32xf32>
    %485 = arith.subf %472, %484 : vector<8x32xf32>
    %cst_230 = arith.constant 9.99999974E-6 : f32
    %486 = vector.broadcast %cst_230 : f32 to vector<8x1xf32>
    %487 = arith.addf %483, %486 : vector<8x1xf32>
    %488 = math.rsqrt %487 : vector<8x1xf32>
    %489 = vector.broadcast %488 : vector<8x1xf32> to vector<8x32xf32>
    %490 = arith.mulf %485, %489 : vector<8x32xf32>
    %491 = vector.broadcast %418 : vector<1x32xf32> to vector<8x32xf32>
    %492 = arith.mulf %490, %491 : vector<8x32xf32>
    %493 = vector.broadcast %420 : vector<1x32xf32> to vector<8x32xf32>
    %494 = arith.addf %492, %493 : vector<8x32xf32>
    %495 = vector.broadcast %44 : vector<8x1xf32> to vector<8x32xf32>
    %496 = arith.mulf %494, %495 : vector<8x32xf32>
    %c0_231 = arith.constant 0 : index
    %c0_232 = arith.constant 0 : index
    %c0_233 = arith.constant 0 : index
    %497 = vector.load %arg36[%c0_231, %c0_232, %c0_233] : memref<2x32x64xf32, #tpu.memory_space<vmem>>, vector<1x32x64xf32>
    %498 = vector.shape_cast %497 : vector<1x32x64xf32> to vector<32x64xf32>
    %c0_234 = arith.constant 0 : index
    %c0_235 = arith.constant 0 : index
    %c0_236 = arith.constant 0 : index
    %499 = vector.load %arg37[%c0_234, %c0_235, %c0_236] : memref<2x1x64xf32, #tpu.memory_space<vmem>>, vector<1x1x64xf32>
    %500 = vector.shape_cast %499 : vector<1x1x64xf32> to vector<1x64xf32>
    %c0_237 = arith.constant 0 : index
    %c0_238 = arith.constant 0 : index
    %c0_239 = arith.constant 0 : index
    %501 = vector.load %arg38[%c0_237, %c0_238, %c0_239] : memref<2x64x32xf32, #tpu.memory_space<vmem>>, vector<1x64x32xf32>
    %502 = vector.shape_cast %501 : vector<1x64x32xf32> to vector<64x32xf32>
    %c0_240 = arith.constant 0 : index
    %c0_241 = arith.constant 0 : index
    %c0_242 = arith.constant 0 : index
    %503 = vector.load %arg39[%c0_240, %c0_241, %c0_242] : memref<2x1x32xf32, #tpu.memory_space<vmem>>, vector<1x1x32xf32>
    %504 = vector.shape_cast %503 : vector<1x1x32xf32> to vector<1x32xf32>
    %c0_243 = arith.constant 0 : index
    %c0_244 = arith.constant 0 : index
    %c0_245 = arith.constant 0 : index
    %505 = vector.load %arg40[%c0_243, %c0_244, %c0_245] : memref<2x1x32xf32, #tpu.memory_space<vmem>>, vector<1x1x32xf32>
    %506 = vector.shape_cast %505 : vector<1x1x32xf32> to vector<1x32xf32>
    %c0_246 = arith.constant 0 : index
    %c0_247 = arith.constant 0 : index
    %c0_248 = arith.constant 0 : index
    %507 = vector.load %arg41[%c0_246, %c0_247, %c0_248] : memref<2x1x32xf32, #tpu.memory_space<vmem>>, vector<1x1x32xf32>
    %508 = vector.shape_cast %507 : vector<1x1x32xf32> to vector<1x32xf32>
    %cst_249 = arith.constant dense<0.000000e+00> : vector<8x64xf32>
    %509 = tpu.matmul %496, %498, %cst_249 {dimension_numbers = #tpu.dot_dimension_numbers<[1], [0], [0], [1], [0, 0, 1, 1], [], []>} : vector<8x32xf32>, vector<32x64xf32>, vector<8x64xf32> -> vector<8x64xf32>
    %510 = vector.broadcast %500 : vector<1x64xf32> to vector<8x64xf32>
    %511 = arith.addf %509, %510 : vector<8x64xf32>
    %cst_250 = arith.constant 0.000000e+00 : f32
    %512 = vector.broadcast %cst_250 : f32 to vector<8x64xf32>
    %513 = arith.maximumf %511, %512 : vector<8x64xf32>
    %cst_251 = arith.constant dense<0.000000e+00> : vector<8x32xf32>
    %514 = tpu.matmul %513, %502, %cst_251 {dimension_numbers = #tpu.dot_dimension_numbers<[1], [0], [0], [1], [0, 0, 1, 1], [], []>} : vector<8x64xf32>, vector<64x32xf32>, vector<8x32xf32> -> vector<8x32xf32>
    %515 = vector.broadcast %504 : vector<1x32xf32> to vector<8x32xf32>
    %516 = arith.addf %514, %515 : vector<8x32xf32>
    %517 = arith.addf %516, %496 : vector<8x32xf32>
    %cst_252 = arith.constant dense<0.000000e+00> : vector<8xf32>
    %518 = vector.multi_reduction <add>, %517, %cst_252 [1] : vector<8x32xf32> to vector<8xf32>
    %519 = vector.shape_cast %518 : vector<8xf32> to vector<8x1xf32>
    %cst_253 = arith.constant 3.200000e+01 : f32
    %520 = vector.broadcast %cst_253 : f32 to vector<8x1xf32>
    %521 = arith.divf %519, %520 : vector<8x1xf32>
    %522 = arith.mulf %517, %517 : vector<8x32xf32>
    %cst_254 = arith.constant dense<0.000000e+00> : vector<8xf32>
    %523 = vector.multi_reduction <add>, %522, %cst_254 [1] : vector<8x32xf32> to vector<8xf32>
    %524 = vector.shape_cast %523 : vector<8xf32> to vector<8x1xf32>
    %cst_255 = arith.constant 3.200000e+01 : f32
    %525 = vector.broadcast %cst_255 : f32 to vector<8x1xf32>
    %526 = arith.divf %524, %525 : vector<8x1xf32>
    %527 = arith.mulf %521, %521 : vector<8x1xf32>
    %528 = arith.subf %526, %527 : vector<8x1xf32>
    %529 = vector.broadcast %521 : vector<8x1xf32> to vector<8x32xf32>
    %530 = arith.subf %517, %529 : vector<8x32xf32>
    %cst_256 = arith.constant 9.99999974E-6 : f32
    %531 = vector.broadcast %cst_256 : f32 to vector<8x1xf32>
    %532 = arith.addf %528, %531 : vector<8x1xf32>
    %533 = math.rsqrt %532 : vector<8x1xf32>
    %534 = vector.broadcast %533 : vector<8x1xf32> to vector<8x32xf32>
    %535 = arith.mulf %530, %534 : vector<8x32xf32>
    %536 = vector.broadcast %506 : vector<1x32xf32> to vector<8x32xf32>
    %537 = arith.mulf %535, %536 : vector<8x32xf32>
    %538 = vector.broadcast %508 : vector<1x32xf32> to vector<8x32xf32>
    %539 = arith.addf %537, %538 : vector<8x32xf32>
    %540 = vector.broadcast %44 : vector<8x1xf32> to vector<8x32xf32>
    %541 = arith.mulf %539, %540 : vector<8x32xf32>
    %c1_257 = arith.constant 1 : index
    %c0_258 = arith.constant 0 : index
    %c0_259 = arith.constant 0 : index
    %542 = vector.load %arg22[%c1_257, %c0_258, %c0_259] : memref<2x32x96xf32, #tpu.memory_space<vmem>>, vector<1x32x96xf32>
    %543 = vector.shape_cast %542 : vector<1x32x96xf32> to vector<32x96xf32>
    %c1_260 = arith.constant 1 : index
    %c0_261 = arith.constant 0 : index
    %c0_262 = arith.constant 0 : index
    %544 = vector.load %arg23[%c1_260, %c0_261, %c0_262] : memref<2x1x96xf32, #tpu.memory_space<vmem>>, vector<1x1x96xf32>
    %545 = vector.shape_cast %544 : vector<1x1x96xf32> to vector<1x96xf32>
    %c1_263 = arith.constant 1 : index
    %c0_264 = arith.constant 0 : index
    %c0_265 = arith.constant 0 : index
    %546 = vector.load %arg24[%c1_263, %c0_264, %c0_265] : memref<2x32x32xf32, #tpu.memory_space<vmem>>, vector<1x32x32xf32>
    %547 = vector.shape_cast %546 : vector<1x32x32xf32> to vector<32x32xf32>
    %c1_266 = arith.constant 1 : index
    %c0_267 = arith.constant 0 : index
    %c0_268 = arith.constant 0 : index
    %548 = vector.load %arg25[%c1_266, %c0_267, %c0_268] : memref<2x1x32xf32, #tpu.memory_space<vmem>>, vector<1x1x32xf32>
    %549 = vector.shape_cast %548 : vector<1x1x32xf32> to vector<1x32xf32>
    %c1_269 = arith.constant 1 : index
    %c0_270 = arith.constant 0 : index
    %c0_271 = arith.constant 0 : index
    %550 = vector.load %arg26[%c1_269, %c0_270, %c0_271] : memref<2x1x32xf32, #tpu.memory_space<vmem>>, vector<1x1x32xf32>
    %551 = vector.shape_cast %550 : vector<1x1x32xf32> to vector<1x32xf32>
    %c1_272 = arith.constant 1 : index
    %c0_273 = arith.constant 0 : index
    %c0_274 = arith.constant 0 : index
    %552 = vector.load %arg27[%c1_272, %c0_273, %c0_274] : memref<2x1x32xf32, #tpu.memory_space<vmem>>, vector<1x1x32xf32>
    %553 = vector.shape_cast %552 : vector<1x1x32xf32> to vector<1x32xf32>
    %cst_275 = arith.constant dense<0.000000e+00> : vector<8x96xf32>
    %554 = tpu.matmul %541, %543, %cst_275 {dimension_numbers = #tpu.dot_dimension_numbers<[1], [0], [0], [1], [0, 0, 1, 1], [], []>} : vector<8x32xf32>, vector<32x96xf32>, vector<8x96xf32> -> vector<8x96xf32>
    %555 = vector.broadcast %545 : vector<1x96xf32> to vector<8x96xf32>
    %556 = arith.addf %554, %555 : vector<8x96xf32>
    %557 = vector.extract_strided_slice %556 {offsets = [0, 0], sizes = [8, 32], strides = [1, 1]} : vector<8x96xf32> to vector<8x32xf32>
    %558 = vector.extract_strided_slice %556 {offsets = [0, 32], sizes = [8, 32], strides = [1, 1]} : vector<8x96xf32> to vector<8x32xf32>
    %559 = vector.extract_strided_slice %556 {offsets = [0, 64], sizes = [8, 32], strides = [1, 1]} : vector<8x96xf32> to vector<8x32xf32>
    %560 = vector.extract_strided_slice %557 {offsets = [0, 0], sizes = [8, 8], strides = [1, 1]} : vector<8x32xf32> to vector<8x8xf32>
    %561 = vector.extract_strided_slice %558 {offsets = [0, 0], sizes = [8, 8], strides = [1, 1]} : vector<8x32xf32> to vector<8x8xf32>
    %cst_276 = arith.constant dense<0.000000e+00> : vector<8x8xf32>
    %562 = tpu.matmul %560, %561, %cst_276 {dimension_numbers = #tpu.dot_dimension_numbers<[1], [1], [0], [0], [0, 0, 1, 0], [], []>} : vector<8x8xf32>, vector<8x8xf32>, vector<8x8xf32> -> vector<8x8xf32>
    %563 = vector.extract_strided_slice %557 {offsets = [0, 8], sizes = [8, 8], strides = [1, 1]} : vector<8x32xf32> to vector<8x8xf32>
    %564 = vector.extract_strided_slice %558 {offsets = [0, 8], sizes = [8, 8], strides = [1, 1]} : vector<8x32xf32> to vector<8x8xf32>
    %cst_277 = arith.constant dense<0.000000e+00> : vector<8x8xf32>
    %565 = tpu.matmul %563, %564, %cst_277 {dimension_numbers = #tpu.dot_dimension_numbers<[1], [1], [0], [0], [0, 0, 1, 0], [], []>} : vector<8x8xf32>, vector<8x8xf32>, vector<8x8xf32> -> vector<8x8xf32>
    %566 = vector.extract_strided_slice %557 {offsets = [0, 16], sizes = [8, 8], strides = [1, 1]} : vector<8x32xf32> to vector<8x8xf32>
    %567 = vector.extract_strided_slice %558 {offsets = [0, 16], sizes = [8, 8], strides = [1, 1]} : vector<8x32xf32> to vector<8x8xf32>
    %cst_278 = arith.constant dense<0.000000e+00> : vector<8x8xf32>
    %568 = tpu.matmul %566, %567, %cst_278 {dimension_numbers = #tpu.dot_dimension_numbers<[1], [1], [0], [0], [0, 0, 1, 0], [], []>} : vector<8x8xf32>, vector<8x8xf32>, vector<8x8xf32> -> vector<8x8xf32>
    %569 = vector.extract_strided_slice %557 {offsets = [0, 24], sizes = [8, 8], strides = [1, 1]} : vector<8x32xf32> to vector<8x8xf32>
    %570 = vector.extract_strided_slice %558 {offsets = [0, 24], sizes = [8, 8], strides = [1, 1]} : vector<8x32xf32> to vector<8x8xf32>
    %cst_279 = arith.constant dense<0.000000e+00> : vector<8x8xf32>
    %571 = tpu.matmul %569, %570, %cst_279 {dimension_numbers = #tpu.dot_dimension_numbers<[1], [1], [0], [0], [0, 0, 1, 0], [], []>} : vector<8x8xf32>, vector<8x8xf32>, vector<8x8xf32> -> vector<8x8xf32>
    %572 = tpu.concatenate %562, %565, %568, %571 in 0 : vector<8x8xf32>, vector<8x8xf32>, vector<8x8xf32>, vector<8x8xf32> -> vector<32x8xf32>
    %cst_280 = arith.constant 0.353553385 : f32
    %573 = vector.broadcast %cst_280 : f32 to vector<32x8xf32>
    %574 = arith.mulf %572, %573 : vector<32x8xf32>
    %575 = arith.addf %574, %57 : vector<32x8xf32>
    %cst_281 = arith.constant dense<0xFF800000> : vector<32xf32>
    %576 = vector.multi_reduction <maximumf>, %575, %cst_281 [1] : vector<32x8xf32> to vector<32xf32>
    %577 = vector.shape_cast %576 : vector<32xf32> to vector<32x1xf32>
    %578 = vector.broadcast %577 : vector<32x1xf32> to vector<32x8xf32>
    %579 = arith.subf %575, %578 : vector<32x8xf32>
    %580 = math.exp %579 : vector<32x8xf32>
    %cst_282 = arith.constant dense<0.000000e+00> : vector<32xf32>
    %581 = vector.multi_reduction <add>, %580, %cst_282 [1] : vector<32x8xf32> to vector<32xf32>
    %582 = vector.shape_cast %581 : vector<32xf32> to vector<32x1xf32>
    %583 = tpu.reciprocal %582 {approx = true} : vector<32x1xf32> -> vector<32x1xf32>
    %584 = vector.broadcast %583 : vector<32x1xf32> to vector<32x8xf32>
    %585 = arith.mulf %580, %584 : vector<32x8xf32>
    %586 = vector.extract_strided_slice %585 {offsets = [0, 0], sizes = [8, 8], strides = [1, 1]} : vector<32x8xf32> to vector<8x8xf32>
    %587 = vector.extract_strided_slice %559 {offsets = [0, 0], sizes = [8, 8], strides = [1, 1]} : vector<8x32xf32> to vector<8x8xf32>
    %cst_283 = arith.constant dense<0.000000e+00> : vector<8x8xf32>
    %588 = tpu.matmul %586, %587, %cst_283 {dimension_numbers = #tpu.dot_dimension_numbers<[1], [0], [0], [1], [0, 0, 1, 1], [], []>} : vector<8x8xf32>, vector<8x8xf32>, vector<8x8xf32> -> vector<8x8xf32>
    %589 = vector.extract_strided_slice %585 {offsets = [8, 0], sizes = [8, 8], strides = [1, 1]} : vector<32x8xf32> to vector<8x8xf32>
    %590 = vector.extract_strided_slice %559 {offsets = [0, 8], sizes = [8, 8], strides = [1, 1]} : vector<8x32xf32> to vector<8x8xf32>
    %cst_284 = arith.constant dense<0.000000e+00> : vector<8x8xf32>
    %591 = tpu.matmul %589, %590, %cst_284 {dimension_numbers = #tpu.dot_dimension_numbers<[1], [0], [0], [1], [0, 0, 1, 1], [], []>} : vector<8x8xf32>, vector<8x8xf32>, vector<8x8xf32> -> vector<8x8xf32>
    %592 = vector.extract_strided_slice %585 {offsets = [16, 0], sizes = [8, 8], strides = [1, 1]} : vector<32x8xf32> to vector<8x8xf32>
    %593 = vector.extract_strided_slice %559 {offsets = [0, 16], sizes = [8, 8], strides = [1, 1]} : vector<8x32xf32> to vector<8x8xf32>
    %cst_285 = arith.constant dense<0.000000e+00> : vector<8x8xf32>
    %594 = tpu.matmul %592, %593, %cst_285 {dimension_numbers = #tpu.dot_dimension_numbers<[1], [0], [0], [1], [0, 0, 1, 1], [], []>} : vector<8x8xf32>, vector<8x8xf32>, vector<8x8xf32> -> vector<8x8xf32>
    %595 = vector.extract_strided_slice %585 {offsets = [24, 0], sizes = [8, 8], strides = [1, 1]} : vector<32x8xf32> to vector<8x8xf32>
    %596 = vector.extract_strided_slice %559 {offsets = [0, 24], sizes = [8, 8], strides = [1, 1]} : vector<8x32xf32> to vector<8x8xf32>
    %cst_286 = arith.constant dense<0.000000e+00> : vector<8x8xf32>
    %597 = tpu.matmul %595, %596, %cst_286 {dimension_numbers = #tpu.dot_dimension_numbers<[1], [0], [0], [1], [0, 0, 1, 1], [], []>} : vector<8x8xf32>, vector<8x8xf32>, vector<8x8xf32> -> vector<8x8xf32>
    %598 = tpu.concatenate %588, %591, %594, %597 in 1 : vector<8x8xf32>, vector<8x8xf32>, vector<8x8xf32>, vector<8x8xf32> -> vector<8x32xf32>
    %cst_287 = arith.constant dense<0.000000e+00> : vector<8x32xf32>
    %599 = tpu.matmul %598, %547, %cst_287 {dimension_numbers = #tpu.dot_dimension_numbers<[1], [0], [0], [1], [0, 0, 1, 1], [], []>} : vector<8x32xf32>, vector<32x32xf32>, vector<8x32xf32> -> vector<8x32xf32>
    %600 = vector.broadcast %549 : vector<1x32xf32> to vector<8x32xf32>
    %601 = arith.addf %599, %600 : vector<8x32xf32>
    %602 = arith.addf %601, %541 : vector<8x32xf32>
    %cst_288 = arith.constant dense<0.000000e+00> : vector<8xf32>
    %603 = vector.multi_reduction <add>, %602, %cst_288 [1] : vector<8x32xf32> to vector<8xf32>
    %604 = vector.shape_cast %603 : vector<8xf32> to vector<8x1xf32>
    %cst_289 = arith.constant 3.200000e+01 : f32
    %605 = vector.broadcast %cst_289 : f32 to vector<8x1xf32>
    %606 = arith.divf %604, %605 : vector<8x1xf32>
    %607 = arith.mulf %602, %602 : vector<8x32xf32>
    %cst_290 = arith.constant dense<0.000000e+00> : vector<8xf32>
    %608 = vector.multi_reduction <add>, %607, %cst_290 [1] : vector<8x32xf32> to vector<8xf32>
    %609 = vector.shape_cast %608 : vector<8xf32> to vector<8x1xf32>
    %cst_291 = arith.constant 3.200000e+01 : f32
    %610 = vector.broadcast %cst_291 : f32 to vector<8x1xf32>
    %611 = arith.divf %609, %610 : vector<8x1xf32>
    %612 = arith.mulf %606, %606 : vector<8x1xf32>
    %613 = arith.subf %611, %612 : vector<8x1xf32>
    %614 = vector.broadcast %606 : vector<8x1xf32> to vector<8x32xf32>
    %615 = arith.subf %602, %614 : vector<8x32xf32>
    %cst_292 = arith.constant 9.99999974E-6 : f32
    %616 = vector.broadcast %cst_292 : f32 to vector<8x1xf32>
    %617 = arith.addf %613, %616 : vector<8x1xf32>
    %618 = math.rsqrt %617 : vector<8x1xf32>
    %619 = vector.broadcast %618 : vector<8x1xf32> to vector<8x32xf32>
    %620 = arith.mulf %615, %619 : vector<8x32xf32>
    %621 = vector.broadcast %551 : vector<1x32xf32> to vector<8x32xf32>
    %622 = arith.mulf %620, %621 : vector<8x32xf32>
    %623 = vector.broadcast %553 : vector<1x32xf32> to vector<8x32xf32>
    %624 = arith.addf %622, %623 : vector<8x32xf32>
    %625 = vector.broadcast %44 : vector<8x1xf32> to vector<8x32xf32>
    %626 = arith.mulf %624, %625 : vector<8x32xf32>
    %c1_293 = arith.constant 1 : index
    %c0_294 = arith.constant 0 : index
    %c0_295 = arith.constant 0 : index
    %627 = vector.load %arg28[%c1_293, %c0_294, %c0_295] : memref<2x32x32xf32, #tpu.memory_space<vmem>>, vector<1x32x32xf32>
    %628 = vector.shape_cast %627 : vector<1x32x32xf32> to vector<32x32xf32>
    %c1_296 = arith.constant 1 : index
    %c0_297 = arith.constant 0 : index
    %c0_298 = arith.constant 0 : index
    %629 = vector.load %arg29[%c1_296, %c0_297, %c0_298] : memref<2x1x32xf32, #tpu.memory_space<vmem>>, vector<1x1x32xf32>
    %630 = vector.shape_cast %629 : vector<1x1x32xf32> to vector<1x32xf32>
    %c1_299 = arith.constant 1 : index
    %c0_300 = arith.constant 0 : index
    %c0_301 = arith.constant 0 : index
    %631 = vector.load %arg30[%c1_299, %c0_300, %c0_301] : memref<2x32x64xf32, #tpu.memory_space<vmem>>, vector<1x32x64xf32>
    %632 = vector.shape_cast %631 : vector<1x32x64xf32> to vector<32x64xf32>
    %c1_302 = arith.constant 1 : index
    %c0_303 = arith.constant 0 : index
    %c0_304 = arith.constant 0 : index
    %633 = vector.load %arg31[%c1_302, %c0_303, %c0_304] : memref<2x1x64xf32, #tpu.memory_space<vmem>>, vector<1x1x64xf32>
    %634 = vector.shape_cast %633 : vector<1x1x64xf32> to vector<1x64xf32>
    %c1_305 = arith.constant 1 : index
    %c0_306 = arith.constant 0 : index
    %c0_307 = arith.constant 0 : index
    %635 = vector.load %arg32[%c1_305, %c0_306, %c0_307] : memref<2x32x32xf32, #tpu.memory_space<vmem>>, vector<1x32x32xf32>
    %636 = vector.shape_cast %635 : vector<1x32x32xf32> to vector<32x32xf32>
    %c1_308 = arith.constant 1 : index
    %c0_309 = arith.constant 0 : index
    %c0_310 = arith.constant 0 : index
    %637 = vector.load %arg33[%c1_308, %c0_309, %c0_310] : memref<2x1x32xf32, #tpu.memory_space<vmem>>, vector<1x1x32xf32>
    %638 = vector.shape_cast %637 : vector<1x1x32xf32> to vector<1x32xf32>
    %c1_311 = arith.constant 1 : index
    %c0_312 = arith.constant 0 : index
    %c0_313 = arith.constant 0 : index
    %639 = vector.load %arg34[%c1_311, %c0_312, %c0_313] : memref<2x1x32xf32, #tpu.memory_space<vmem>>, vector<1x1x32xf32>
    %640 = vector.shape_cast %639 : vector<1x1x32xf32> to vector<1x32xf32>
    %c1_314 = arith.constant 1 : index
    %c0_315 = arith.constant 0 : index
    %c0_316 = arith.constant 0 : index
    %641 = vector.load %arg35[%c1_314, %c0_315, %c0_316] : memref<2x1x32xf32, #tpu.memory_space<vmem>>, vector<1x1x32xf32>
    %642 = vector.shape_cast %641 : vector<1x1x32xf32> to vector<1x32xf32>
    %cst_317 = arith.constant dense<0.000000e+00> : vector<8x32xf32>
    %643 = tpu.matmul %626, %628, %cst_317 {dimension_numbers = #tpu.dot_dimension_numbers<[1], [0], [0], [1], [0, 0, 1, 1], [], []>} : vector<8x32xf32>, vector<32x32xf32>, vector<8x32xf32> -> vector<8x32xf32>
    %644 = vector.broadcast %630 : vector<1x32xf32> to vector<8x32xf32>
    %645 = arith.addf %643, %644 : vector<8x32xf32>
    %cst_318 = arith.constant dense<0.000000e+00> : vector<8x64xf32>
    %646 = tpu.matmul %319, %632, %cst_318 {dimension_numbers = #tpu.dot_dimension_numbers<[1], [0], [0], [1], [0, 0, 1, 1], [], []>} : vector<8x32xf32>, vector<32x64xf32>, vector<8x64xf32> -> vector<8x64xf32>
    %647 = vector.broadcast %634 : vector<1x64xf32> to vector<8x64xf32>
    %648 = arith.addf %646, %647 : vector<8x64xf32>
    %649 = vector.extract_strided_slice %648 {offsets = [0, 0], sizes = [8, 32], strides = [1, 1]} : vector<8x64xf32> to vector<8x32xf32>
    %650 = vector.extract_strided_slice %648 {offsets = [0, 32], sizes = [8, 32], strides = [1, 1]} : vector<8x64xf32> to vector<8x32xf32>
    %651 = vector.extract_strided_slice %645 {offsets = [0, 0], sizes = [8, 8], strides = [1, 1]} : vector<8x32xf32> to vector<8x8xf32>
    %652 = vector.extract_strided_slice %649 {offsets = [0, 0], sizes = [8, 8], strides = [1, 1]} : vector<8x32xf32> to vector<8x8xf32>
    %cst_319 = arith.constant dense<0.000000e+00> : vector<8x8xf32>
    %653 = tpu.matmul %651, %652, %cst_319 {dimension_numbers = #tpu.dot_dimension_numbers<[1], [1], [0], [0], [0, 0, 1, 0], [], []>} : vector<8x8xf32>, vector<8x8xf32>, vector<8x8xf32> -> vector<8x8xf32>
    %654 = vector.extract_strided_slice %645 {offsets = [0, 8], sizes = [8, 8], strides = [1, 1]} : vector<8x32xf32> to vector<8x8xf32>
    %655 = vector.extract_strided_slice %649 {offsets = [0, 8], sizes = [8, 8], strides = [1, 1]} : vector<8x32xf32> to vector<8x8xf32>
    %cst_320 = arith.constant dense<0.000000e+00> : vector<8x8xf32>
    %656 = tpu.matmul %654, %655, %cst_320 {dimension_numbers = #tpu.dot_dimension_numbers<[1], [1], [0], [0], [0, 0, 1, 0], [], []>} : vector<8x8xf32>, vector<8x8xf32>, vector<8x8xf32> -> vector<8x8xf32>
    %657 = vector.extract_strided_slice %645 {offsets = [0, 16], sizes = [8, 8], strides = [1, 1]} : vector<8x32xf32> to vector<8x8xf32>
    %658 = vector.extract_strided_slice %649 {offsets = [0, 16], sizes = [8, 8], strides = [1, 1]} : vector<8x32xf32> to vector<8x8xf32>
    %cst_321 = arith.constant dense<0.000000e+00> : vector<8x8xf32>
    %659 = tpu.matmul %657, %658, %cst_321 {dimension_numbers = #tpu.dot_dimension_numbers<[1], [1], [0], [0], [0, 0, 1, 0], [], []>} : vector<8x8xf32>, vector<8x8xf32>, vector<8x8xf32> -> vector<8x8xf32>
    %660 = vector.extract_strided_slice %645 {offsets = [0, 24], sizes = [8, 8], strides = [1, 1]} : vector<8x32xf32> to vector<8x8xf32>
    %661 = vector.extract_strided_slice %649 {offsets = [0, 24], sizes = [8, 8], strides = [1, 1]} : vector<8x32xf32> to vector<8x8xf32>
    %cst_322 = arith.constant dense<0.000000e+00> : vector<8x8xf32>
    %662 = tpu.matmul %660, %661, %cst_322 {dimension_numbers = #tpu.dot_dimension_numbers<[1], [1], [0], [0], [0, 0, 1, 0], [], []>} : vector<8x8xf32>, vector<8x8xf32>, vector<8x8xf32> -> vector<8x8xf32>
    %663 = tpu.concatenate %653, %656, %659, %662 in 0 : vector<8x8xf32>, vector<8x8xf32>, vector<8x8xf32>, vector<8x8xf32> -> vector<32x8xf32>
    %cst_323 = arith.constant 0.353553385 : f32
    %664 = vector.broadcast %cst_323 : f32 to vector<32x8xf32>
    %665 = arith.mulf %663, %664 : vector<32x8xf32>
    %666 = vector.broadcast %46 : vector<1x8xf32> to vector<32x8xf32>
    %667 = arith.addf %665, %666 : vector<32x8xf32>
    %cst_324 = arith.constant dense<0xFF800000> : vector<32xf32>
    %668 = vector.multi_reduction <maximumf>, %667, %cst_324 [1] : vector<32x8xf32> to vector<32xf32>
    %669 = vector.shape_cast %668 : vector<32xf32> to vector<32x1xf32>
    %670 = vector.broadcast %669 : vector<32x1xf32> to vector<32x8xf32>
    %671 = arith.subf %667, %670 : vector<32x8xf32>
    %672 = math.exp %671 : vector<32x8xf32>
    %cst_325 = arith.constant dense<0.000000e+00> : vector<32xf32>
    %673 = vector.multi_reduction <add>, %672, %cst_325 [1] : vector<32x8xf32> to vector<32xf32>
    %674 = vector.shape_cast %673 : vector<32xf32> to vector<32x1xf32>
    %675 = tpu.reciprocal %674 {approx = true} : vector<32x1xf32> -> vector<32x1xf32>
    %676 = vector.broadcast %675 : vector<32x1xf32> to vector<32x8xf32>
    %677 = arith.mulf %672, %676 : vector<32x8xf32>
    %678 = vector.extract_strided_slice %677 {offsets = [0, 0], sizes = [8, 8], strides = [1, 1]} : vector<32x8xf32> to vector<8x8xf32>
    %679 = vector.extract_strided_slice %650 {offsets = [0, 0], sizes = [8, 8], strides = [1, 1]} : vector<8x32xf32> to vector<8x8xf32>
    %cst_326 = arith.constant dense<0.000000e+00> : vector<8x8xf32>
    %680 = tpu.matmul %678, %679, %cst_326 {dimension_numbers = #tpu.dot_dimension_numbers<[1], [0], [0], [1], [0, 0, 1, 1], [], []>} : vector<8x8xf32>, vector<8x8xf32>, vector<8x8xf32> -> vector<8x8xf32>
    %681 = vector.extract_strided_slice %677 {offsets = [8, 0], sizes = [8, 8], strides = [1, 1]} : vector<32x8xf32> to vector<8x8xf32>
    %682 = vector.extract_strided_slice %650 {offsets = [0, 8], sizes = [8, 8], strides = [1, 1]} : vector<8x32xf32> to vector<8x8xf32>
    %cst_327 = arith.constant dense<0.000000e+00> : vector<8x8xf32>
    %683 = tpu.matmul %681, %682, %cst_327 {dimension_numbers = #tpu.dot_dimension_numbers<[1], [0], [0], [1], [0, 0, 1, 1], [], []>} : vector<8x8xf32>, vector<8x8xf32>, vector<8x8xf32> -> vector<8x8xf32>
    %684 = vector.extract_strided_slice %677 {offsets = [16, 0], sizes = [8, 8], strides = [1, 1]} : vector<32x8xf32> to vector<8x8xf32>
    %685 = vector.extract_strided_slice %650 {offsets = [0, 16], sizes = [8, 8], strides = [1, 1]} : vector<8x32xf32> to vector<8x8xf32>
    %cst_328 = arith.constant dense<0.000000e+00> : vector<8x8xf32>
    %686 = tpu.matmul %684, %685, %cst_328 {dimension_numbers = #tpu.dot_dimension_numbers<[1], [0], [0], [1], [0, 0, 1, 1], [], []>} : vector<8x8xf32>, vector<8x8xf32>, vector<8x8xf32> -> vector<8x8xf32>
    %687 = vector.extract_strided_slice %677 {offsets = [24, 0], sizes = [8, 8], strides = [1, 1]} : vector<32x8xf32> to vector<8x8xf32>
    %688 = vector.extract_strided_slice %650 {offsets = [0, 24], sizes = [8, 8], strides = [1, 1]} : vector<8x32xf32> to vector<8x8xf32>
    %cst_329 = arith.constant dense<0.000000e+00> : vector<8x8xf32>
    %689 = tpu.matmul %687, %688, %cst_329 {dimension_numbers = #tpu.dot_dimension_numbers<[1], [0], [0], [1], [0, 0, 1, 1], [], []>} : vector<8x8xf32>, vector<8x8xf32>, vector<8x8xf32> -> vector<8x8xf32>
    %690 = tpu.concatenate %680, %683, %686, %689 in 1 : vector<8x8xf32>, vector<8x8xf32>, vector<8x8xf32>, vector<8x8xf32> -> vector<8x32xf32>
    %cst_330 = arith.constant dense<0.000000e+00> : vector<8x32xf32>
    %691 = tpu.matmul %690, %636, %cst_330 {dimension_numbers = #tpu.dot_dimension_numbers<[1], [0], [0], [1], [0, 0, 1, 1], [], []>} : vector<8x32xf32>, vector<32x32xf32>, vector<8x32xf32> -> vector<8x32xf32>
    %692 = vector.broadcast %638 : vector<1x32xf32> to vector<8x32xf32>
    %693 = arith.addf %691, %692 : vector<8x32xf32>
    %694 = arith.addf %693, %626 : vector<8x32xf32>
    %cst_331 = arith.constant dense<0.000000e+00> : vector<8xf32>
    %695 = vector.multi_reduction <add>, %694, %cst_331 [1] : vector<8x32xf32> to vector<8xf32>
    %696 = vector.shape_cast %695 : vector<8xf32> to vector<8x1xf32>
    %cst_332 = arith.constant 3.200000e+01 : f32
    %697 = vector.broadcast %cst_332 : f32 to vector<8x1xf32>
    %698 = arith.divf %696, %697 : vector<8x1xf32>
    %699 = arith.mulf %694, %694 : vector<8x32xf32>
    %cst_333 = arith.constant dense<0.000000e+00> : vector<8xf32>
    %700 = vector.multi_reduction <add>, %699, %cst_333 [1] : vector<8x32xf32> to vector<8xf32>
    %701 = vector.shape_cast %700 : vector<8xf32> to vector<8x1xf32>
    %cst_334 = arith.constant 3.200000e+01 : f32
    %702 = vector.broadcast %cst_334 : f32 to vector<8x1xf32>
    %703 = arith.divf %701, %702 : vector<8x1xf32>
    %704 = arith.mulf %698, %698 : vector<8x1xf32>
    %705 = arith.subf %703, %704 : vector<8x1xf32>
    %706 = vector.broadcast %698 : vector<8x1xf32> to vector<8x32xf32>
    %707 = arith.subf %694, %706 : vector<8x32xf32>
    %cst_335 = arith.constant 9.99999974E-6 : f32
    %708 = vector.broadcast %cst_335 : f32 to vector<8x1xf32>
    %709 = arith.addf %705, %708 : vector<8x1xf32>
    %710 = math.rsqrt %709 : vector<8x1xf32>
    %711 = vector.broadcast %710 : vector<8x1xf32> to vector<8x32xf32>
    %712 = arith.mulf %707, %711 : vector<8x32xf32>
    %713 = vector.broadcast %640 : vector<1x32xf32> to vector<8x32xf32>
    %714 = arith.mulf %712, %713 : vector<8x32xf32>
    %715 = vector.broadcast %642 : vector<1x32xf32> to vector<8x32xf32>
    %716 = arith.addf %714, %715 : vector<8x32xf32>
    %717 = vector.broadcast %44 : vector<8x1xf32> to vector<8x32xf32>
    %718 = arith.mulf %716, %717 : vector<8x32xf32>
    %c1_336 = arith.constant 1 : index
    %c0_337 = arith.constant 0 : index
    %c0_338 = arith.constant 0 : index
    %719 = vector.load %arg36[%c1_336, %c0_337, %c0_338] : memref<2x32x64xf32, #tpu.memory_space<vmem>>, vector<1x32x64xf32>
    %720 = vector.shape_cast %719 : vector<1x32x64xf32> to vector<32x64xf32>
    %c1_339 = arith.constant 1 : index
    %c0_340 = arith.constant 0 : index
    %c0_341 = arith.constant 0 : index
    %721 = vector.load %arg37[%c1_339, %c0_340, %c0_341] : memref<2x1x64xf32, #tpu.memory_space<vmem>>, vector<1x1x64xf32>
    %722 = vector.shape_cast %721 : vector<1x1x64xf32> to vector<1x64xf32>
    %c1_342 = arith.constant 1 : index
    %c0_343 = arith.constant 0 : index
    %c0_344 = arith.constant 0 : index
    %723 = vector.load %arg38[%c1_342, %c0_343, %c0_344] : memref<2x64x32xf32, #tpu.memory_space<vmem>>, vector<1x64x32xf32>
    %724 = vector.shape_cast %723 : vector<1x64x32xf32> to vector<64x32xf32>
    %c1_345 = arith.constant 1 : index
    %c0_346 = arith.constant 0 : index
    %c0_347 = arith.constant 0 : index
    %725 = vector.load %arg39[%c1_345, %c0_346, %c0_347] : memref<2x1x32xf32, #tpu.memory_space<vmem>>, vector<1x1x32xf32>
    %726 = vector.shape_cast %725 : vector<1x1x32xf32> to vector<1x32xf32>
    %c1_348 = arith.constant 1 : index
    %c0_349 = arith.constant 0 : index
    %c0_350 = arith.constant 0 : index
    %727 = vector.load %arg40[%c1_348, %c0_349, %c0_350] : memref<2x1x32xf32, #tpu.memory_space<vmem>>, vector<1x1x32xf32>
    %728 = vector.shape_cast %727 : vector<1x1x32xf32> to vector<1x32xf32>
    %c1_351 = arith.constant 1 : index
    %c0_352 = arith.constant 0 : index
    %c0_353 = arith.constant 0 : index
    %729 = vector.load %arg41[%c1_351, %c0_352, %c0_353] : memref<2x1x32xf32, #tpu.memory_space<vmem>>, vector<1x1x32xf32>
    %730 = vector.shape_cast %729 : vector<1x1x32xf32> to vector<1x32xf32>
    %cst_354 = arith.constant dense<0.000000e+00> : vector<8x64xf32>
    %731 = tpu.matmul %718, %720, %cst_354 {dimension_numbers = #tpu.dot_dimension_numbers<[1], [0], [0], [1], [0, 0, 1, 1], [], []>} : vector<8x32xf32>, vector<32x64xf32>, vector<8x64xf32> -> vector<8x64xf32>
    %732 = vector.broadcast %722 : vector<1x64xf32> to vector<8x64xf32>
    %733 = arith.addf %731, %732 : vector<8x64xf32>
    %cst_355 = arith.constant 0.000000e+00 : f32
    %734 = vector.broadcast %cst_355 : f32 to vector<8x64xf32>
    %735 = arith.maximumf %733, %734 : vector<8x64xf32>
    %cst_356 = arith.constant dense<0.000000e+00> : vector<8x32xf32>
    %736 = tpu.matmul %735, %724, %cst_356 {dimension_numbers = #tpu.dot_dimension_numbers<[1], [0], [0], [1], [0, 0, 1, 1], [], []>} : vector<8x64xf32>, vector<64x32xf32>, vector<8x32xf32> -> vector<8x32xf32>
    %737 = vector.broadcast %726 : vector<1x32xf32> to vector<8x32xf32>
    %738 = arith.addf %736, %737 : vector<8x32xf32>
    %739 = arith.addf %738, %718 : vector<8x32xf32>
    %cst_357 = arith.constant dense<0.000000e+00> : vector<8xf32>
    %740 = vector.multi_reduction <add>, %739, %cst_357 [1] : vector<8x32xf32> to vector<8xf32>
    %741 = vector.shape_cast %740 : vector<8xf32> to vector<8x1xf32>
    %cst_358 = arith.constant 3.200000e+01 : f32
    %742 = vector.broadcast %cst_358 : f32 to vector<8x1xf32>
    %743 = arith.divf %741, %742 : vector<8x1xf32>
    %744 = arith.mulf %739, %739 : vector<8x32xf32>
    %cst_359 = arith.constant dense<0.000000e+00> : vector<8xf32>
    %745 = vector.multi_reduction <add>, %744, %cst_359 [1] : vector<8x32xf32> to vector<8xf32>
    %746 = vector.shape_cast %745 : vector<8xf32> to vector<8x1xf32>
    %cst_360 = arith.constant 3.200000e+01 : f32
    %747 = vector.broadcast %cst_360 : f32 to vector<8x1xf32>
    %748 = arith.divf %746, %747 : vector<8x1xf32>
    %749 = arith.mulf %743, %743 : vector<8x1xf32>
    %750 = arith.subf %748, %749 : vector<8x1xf32>
    %751 = vector.broadcast %743 : vector<8x1xf32> to vector<8x32xf32>
    %752 = arith.subf %739, %751 : vector<8x32xf32>
    %cst_361 = arith.constant 9.99999974E-6 : f32
    %753 = vector.broadcast %cst_361 : f32 to vector<8x1xf32>
    %754 = arith.addf %750, %753 : vector<8x1xf32>
    %755 = math.rsqrt %754 : vector<8x1xf32>
    %756 = vector.broadcast %755 : vector<8x1xf32> to vector<8x32xf32>
    %757 = arith.mulf %752, %756 : vector<8x32xf32>
    %758 = vector.broadcast %728 : vector<1x32xf32> to vector<8x32xf32>
    %759 = arith.mulf %757, %758 : vector<8x32xf32>
    %760 = vector.broadcast %730 : vector<1x32xf32> to vector<8x32xf32>
    %761 = arith.addf %759, %760 : vector<8x32xf32>
    %762 = vector.broadcast %44 : vector<8x1xf32> to vector<8x32xf32>
    %763 = arith.mulf %761, %762 : vector<8x32xf32>
    %c0_362 = arith.constant 0 : index
    %c0_363 = arith.constant 0 : index
    %764 = vector.load %arg42[%c0_362, %c0_363] : memref<32x128xf32, #tpu.memory_space<vmem>>, vector<32x128xf32>
    %cst_364 = arith.constant dense<0.000000e+00> : vector<8x128xf32>
    %765 = tpu.matmul %763, %764, %cst_364 {dimension_numbers = #tpu.dot_dimension_numbers<[1], [0], [0], [1], [0, 0, 1, 1], [], []>} : vector<8x32xf32>, vector<32x128xf32>, vector<8x128xf32> -> vector<8x128xf32>
    %c0_365 = arith.constant 0 : index
    %c0_366 = arith.constant 0 : index
    %766 = vector.load %arg43[%c0_365, %c0_366] : memref<1x128xf32, #tpu.memory_space<vmem>>, vector<1x128xf32>
    %767 = vector.broadcast %766 : vector<1x128xf32> to vector<8x128xf32>
    %768 = arith.addf %765, %767 : vector<8x128xf32>
    %c0_367 = arith.constant 0 : index
    %c0_368 = arith.constant 0 : index
    %c0_369 = arith.constant 0 : index
    %769 = vector.load %arg44[%c0_367, %c0_368, %c0_369] : memref<1x8x128xf32, #tpu.memory_space<vmem>>, vector<1x8x128xf32>
    %770 = vector.shape_cast %769 : vector<1x8x128xf32> to vector<8x128xf32>
    %771 = vector.shape_cast %768 : vector<8x128xf32> to vector<1x8x128xf32>
    tpu.vector_store %arg44[%c0_367, %c0_368, %c0_369], %771 {strides = array<i32>} : memref<1x8x128xf32, #tpu.memory_space<vmem>>, vector<1x8x128xf32>,
    return
  }
  func.func @transform_0(%arg0: i32) -> (i32, i32, i32) {
    %c0_i32 = arith.constant 0 : i32
    %c0_i32_0 = arith.constant 0 : i32
    %c0_i32_1 = arith.constant 0 : i32
    return %arg0, %c0_i32, %c0_i32_0 : i32, i32, i32
  }
  func.func @transform_1(%arg0: i32) -> (i32, i32, i32) {
    %c0_i32 = arith.constant 0 : i32
    %c0_i32_0 = arith.constant 0 : i32
    %c0_i32_1 = arith.constant 0 : i32
    return %arg0, %c0_i32, %c0_i32_0 : i32, i32, i32
  }
  func.func @transform_2(%arg0: i32) -> (i32, i32, i32) {
    %c0_i32 = arith.constant 0 : i32
    %c0_i32_0 = arith.constant 0 : i32
    %c0_i32_1 = arith.constant 0 : i32
    return %arg0, %c0_i32, %c0_i32_0 : i32, i32, i32
  }
  func.func @transform_3(%arg0: i32) -> (i32, i32, i32) {
    %c0_i32 = arith.constant 0 : i32
    %c0_i32_0 = arith.constant 0 : i32
    %c0_i32_1 = arith.constant 0 : i32
    return %arg0, %c0_i32, %c0_i32_0 : i32, i32, i32
  }
  func.func @transform_4(%arg0: i32) -> (i32, i32, i32) {
    %c0_i32 = arith.constant 0 : i32
    %c0_i32_0 = arith.constant 0 : i32
    %c0_i32_1 = arith.constant 0 : i32
    return %arg0, %c0_i32, %c0_i32_0 : i32, i32, i32
  }
  func.func @transform_5(%arg0: i32) -> (i32, i32, i32) {
    %c0_i32 = arith.constant 0 : i32
    %c0_i32_0 = arith.constant 0 : i32
    %c0_i32_1 = arith.constant 0 : i32
    return %arg0, %c0_i32, %c0_i32_0 : i32, i32, i32
  }
  func.func @transform_6(%arg0: i32) -> (i32, i32) {
    %c0_i32 = arith.constant 0 : i32
    %c0_i32_0 = arith.constant 0 : i32
    %c0_i32_1 = arith.constant 0 : i32
    return %c0_i32, %c0_i32_0 : i32, i32
  }
  func.func @transform_7(%arg0: i32) -> (i32, i32) {
    %c0_i32 = arith.constant 0 : i32
    %c0_i32_0 = arith.constant 0 : i32
    %c0_i32_1 = arith.constant 0 : i32
    return %c0_i32, %c0_i32_0 : i32, i32
  }
  func.func @transform_8(%arg0: i32) -> (i32, i32) {
    %c0_i32 = arith.constant 0 : i32
    %c0_i32_0 = arith.constant 0 : i32
    %c0_i32_1 = arith.constant 0 : i32
    return %c0_i32, %c0_i32_0 : i32, i32
  }
  func.func @transform_9(%arg0: i32) -> (i32, i32, i32) {
    %c0_i32 = arith.constant 0 : i32
    %c0_i32_0 = arith.constant 0 : i32
    %c0_i32_1 = arith.constant 0 : i32
    %c0_i32_2 = arith.constant 0 : i32
    return %c0_i32, %c0_i32_0, %c0_i32_1 : i32, i32, i32
  }
  func.func @transform_10(%arg0: i32) -> (i32, i32, i32) {
    %c0_i32 = arith.constant 0 : i32
    %c0_i32_0 = arith.constant 0 : i32
    %c0_i32_1 = arith.constant 0 : i32
    %c0_i32_2 = arith.constant 0 : i32
    return %c0_i32, %c0_i32_0, %c0_i32_1 : i32, i32, i32
  }
  func.func @transform_11(%arg0: i32) -> (i32, i32, i32) {
    %c0_i32 = arith.constant 0 : i32
    %c0_i32_0 = arith.constant 0 : i32
    %c0_i32_1 = arith.constant 0 : i32
    %c0_i32_2 = arith.constant 0 : i32
    return %c0_i32, %c0_i32_0, %c0_i32_1 : i32, i32, i32
  }
  func.func @transform_12(%arg0: i32) -> (i32, i32, i32) {
    %c0_i32 = arith.constant 0 : i32
    %c0_i32_0 = arith.constant 0 : i32
    %c0_i32_1 = arith.constant 0 : i32
    %c0_i32_2 = arith.constant 0 : i32
    return %c0_i32, %c0_i32_0, %c0_i32_1 : i32, i32, i32
  }
  func.func @transform_13(%arg0: i32) -> (i32, i32, i32) {
    %c0_i32 = arith.constant 0 : i32
    %c0_i32_0 = arith.constant 0 : i32
    %c0_i32_1 = arith.constant 0 : i32
    %c0_i32_2 = arith.constant 0 : i32
    return %c0_i32, %c0_i32_0, %c0_i32_1 : i32, i32, i32
  }
  func.func @transform_14(%arg0: i32) -> (i32, i32, i32) {
    %c0_i32 = arith.constant 0 : i32
    %c0_i32_0 = arith.constant 0 : i32
    %c0_i32_1 = arith.constant 0 : i32
    %c0_i32_2 = arith.constant 0 : i32
    return %c0_i32, %c0_i32_0, %c0_i32_1 : i32, i32, i32
  }
  func.func @transform_15(%arg0: i32) -> (i32, i32, i32) {
    %c0_i32 = arith.constant 0 : i32
    %c0_i32_0 = arith.constant 0 : i32
    %c0_i32_1 = arith.constant 0 : i32
    %c0_i32_2 = arith.constant 0 : i32
    return %c0_i32, %c0_i32_0, %c0_i32_1 : i32, i32, i32
  }
  func.func @transform_16(%arg0: i32) -> (i32, i32, i32) {
    %c0_i32 = arith.constant 0 : i32
    %c0_i32_0 = arith.constant 0 : i32
    %c0_i32_1 = arith.constant 0 : i32
    %c0_i32_2 = arith.constant 0 : i32
    return %c0_i32, %c0_i32_0, %c0_i32_1 : i32, i32, i32
  }
  func.func @transform_17(%arg0: i32) -> (i32, i32, i32) {
    %c0_i32 = arith.constant 0 : i32
    %c0_i32_0 = arith.constant 0 : i32
    %c0_i32_1 = arith.constant 0 : i32
    %c0_i32_2 = arith.constant 0 : i32
    return %c0_i32, %c0_i32_0, %c0_i32_1 : i32, i32, i32
  }
  func.func @transform_18(%arg0: i32) -> (i32, i32, i32) {
    %c0_i32 = arith.constant 0 : i32
    %c0_i32_0 = arith.constant 0 : i32
    %c0_i32_1 = arith.constant 0 : i32
    %c0_i32_2 = arith.constant 0 : i32
    return %c0_i32, %c0_i32_0, %c0_i32_1 : i32, i32, i32
  }
  func.func @transform_19(%arg0: i32) -> (i32, i32, i32) {
    %c0_i32 = arith.constant 0 : i32
    %c0_i32_0 = arith.constant 0 : i32
    %c0_i32_1 = arith.constant 0 : i32
    %c0_i32_2 = arith.constant 0 : i32
    return %c0_i32, %c0_i32_0, %c0_i32_1 : i32, i32, i32
  }
  func.func @transform_20(%arg0: i32) -> (i32, i32, i32) {
    %c0_i32 = arith.constant 0 : i32
    %c0_i32_0 = arith.constant 0 : i32
    %c0_i32_1 = arith.constant 0 : i32
    %c0_i32_2 = arith.constant 0 : i32
    return %c0_i32, %c0_i32_0, %c0_i32_1 : i32, i32, i32
  }
  func.func @transform_21(%arg0: i32) -> (i32, i32, i32) {
    %c0_i32 = arith.constant 0 : i32
    %c0_i32_0 = arith.constant 0 : i32
    %c0_i32_1 = arith.constant 0 : i32
    %c0_i32_2 = arith.constant 0 : i32
    return %c0_i32, %c0_i32_0, %c0_i32_1 : i32, i32, i32
  }
  func.func @transform_22(%arg0: i32) -> (i32, i32, i32) {
    %c0_i32 = arith.constant 0 : i32
    %c0_i32_0 = arith.constant 0 : i32
    %c0_i32_1 = arith.constant 0 : i32
    %c0_i32_2 = arith.constant 0 : i32
    return %c0_i32, %c0_i32_0, %c0_i32_1 : i32, i32, i32
  }
  func.func @transform_23(%arg0: i32) -> (i32, i32, i32) {
    %c0_i32 = arith.constant 0 : i32
    %c0_i32_0 = arith.constant 0 : i32
    %c0_i32_1 = arith.constant 0 : i32
    %c0_i32_2 = arith.constant 0 : i32
    return %c0_i32, %c0_i32_0, %c0_i32_1 : i32, i32, i32
  }
  func.func @transform_24(%arg0: i32) -> (i32, i32, i32) {
    %c0_i32 = arith.constant 0 : i32
    %c0_i32_0 = arith.constant 0 : i32
    %c0_i32_1 = arith.constant 0 : i32
    %c0_i32_2 = arith.constant 0 : i32
    return %c0_i32, %c0_i32_0, %c0_i32_1 : i32, i32, i32
  }
  func.func @transform_25(%arg0: i32) -> (i32, i32, i32) {
    %c0_i32 = arith.constant 0 : i32
    %c0_i32_0 = arith.constant 0 : i32
    %c0_i32_1 = arith.constant 0 : i32
    %c0_i32_2 = arith.constant 0 : i32
    return %c0_i32, %c0_i32_0, %c0_i32_1 : i32, i32, i32
  }
  func.func @transform_26(%arg0: i32) -> (i32, i32, i32) {
    %c0_i32 = arith.constant 0 : i32
    %c0_i32_0 = arith.constant 0 : i32
    %c0_i32_1 = arith.constant 0 : i32
    %c0_i32_2 = arith.constant 0 : i32
    return %c0_i32, %c0_i32_0, %c0_i32_1 : i32, i32, i32
  }
  func.func @transform_27(%arg0: i32) -> (i32, i32, i32) {
    %c0_i32 = arith.constant 0 : i32
    %c0_i32_0 = arith.constant 0 : i32
    %c0_i32_1 = arith.constant 0 : i32
    %c0_i32_2 = arith.constant 0 : i32
    return %c0_i32, %c0_i32_0, %c0_i32_1 : i32, i32, i32
  }
  func.func @transform_28(%arg0: i32) -> (i32, i32, i32) {
    %c0_i32 = arith.constant 0 : i32
    %c0_i32_0 = arith.constant 0 : i32
    %c0_i32_1 = arith.constant 0 : i32
    %c0_i32_2 = arith.constant 0 : i32
    return %c0_i32, %c0_i32_0, %c0_i32_1 : i32, i32, i32
  }
  func.func @transform_29(%arg0: i32) -> (i32, i32, i32) {
    %c0_i32 = arith.constant 0 : i32
    %c0_i32_0 = arith.constant 0 : i32
    %c0_i32_1 = arith.constant 0 : i32
    %c0_i32_2 = arith.constant 0 : i32
    return %c0_i32, %c0_i32_0, %c0_i32_1 : i32, i32, i32
  }
  func.func @transform_30(%arg0: i32) -> (i32, i32, i32) {
    %c0_i32 = arith.constant 0 : i32
    %c0_i32_0 = arith.constant 0 : i32
    %c0_i32_1 = arith.constant 0 : i32
    %c0_i32_2 = arith.constant 0 : i32
    return %c0_i32, %c0_i32_0, %c0_i32_1 : i32, i32, i32
  }
  func.func @transform_31(%arg0: i32) -> (i32, i32, i32) {
    %c0_i32 = arith.constant 0 : i32
    %c0_i32_0 = arith.constant 0 : i32
    %c0_i32_1 = arith.constant 0 : i32
    %c0_i32_2 = arith.constant 0 : i32
    return %c0_i32, %c0_i32_0, %c0_i32_1 : i32, i32, i32
  }
  func.func @transform_32(%arg0: i32) -> (i32, i32, i32) {
    %c0_i32 = arith.constant 0 : i32
    %c0_i32_0 = arith.constant 0 : i32
    %c0_i32_1 = arith.constant 0 : i32
    %c0_i32_2 = arith.constant 0 : i32
    return %c0_i32, %c0_i32_0, %c0_i32_1 : i32, i32, i32
  }
  func.func @transform_33(%arg0: i32) -> (i32, i32, i32) {
    %c0_i32 = arith.constant 0 : i32
    %c0_i32_0 = arith.constant 0 : i32
    %c0_i32_1 = arith.constant 0 : i32
    %c0_i32_2 = arith.constant 0 : i32
    return %c0_i32, %c0_i32_0, %c0_i32_1 : i32, i32, i32
  }
  func.func @transform_34(%arg0: i32) -> (i32, i32, i32) {
    %c0_i32 = arith.constant 0 : i32
    %c0_i32_0 = arith.constant 0 : i32
    %c0_i32_1 = arith.constant 0 : i32
    %c0_i32_2 = arith.constant 0 : i32
    return %c0_i32, %c0_i32_0, %c0_i32_1 : i32, i32, i32
  }
  func.func @transform_35(%arg0: i32) -> (i32, i32, i32) {
    %c0_i32 = arith.constant 0 : i32
    %c0_i32_0 = arith.constant 0 : i32
    %c0_i32_1 = arith.constant 0 : i32
    %c0_i32_2 = arith.constant 0 : i32
    return %c0_i32, %c0_i32_0, %c0_i32_1 : i32, i32, i32
  }
  func.func @transform_36(%arg0: i32) -> (i32, i32, i32) {
    %c0_i32 = arith.constant 0 : i32
    %c0_i32_0 = arith.constant 0 : i32
    %c0_i32_1 = arith.constant 0 : i32
    %c0_i32_2 = arith.constant 0 : i32
    return %c0_i32, %c0_i32_0, %c0_i32_1 : i32, i32, i32
  }
  func.func @transform_37(%arg0: i32) -> (i32, i32, i32) {
    %c0_i32 = arith.constant 0 : i32
    %c0_i32_0 = arith.constant 0 : i32
    %c0_i32_1 = arith.constant 0 : i32
    %c0_i32_2 = arith.constant 0 : i32
    return %c0_i32, %c0_i32_0, %c0_i32_1 : i32, i32, i32
  }
  func.func @transform_38(%arg0: i32) -> (i32, i32, i32) {
    %c0_i32 = arith.constant 0 : i32
    %c0_i32_0 = arith.constant 0 : i32
    %c0_i32_1 = arith.constant 0 : i32
    %c0_i32_2 = arith.constant 0 : i32
    return %c0_i32, %c0_i32_0, %c0_i32_1 : i32, i32, i32
  }
  func.func @transform_39(%arg0: i32) -> (i32, i32, i32) {
    %c0_i32 = arith.constant 0 : i32
    %c0_i32_0 = arith.constant 0 : i32
    %c0_i32_1 = arith.constant 0 : i32
    %c0_i32_2 = arith.constant 0 : i32
    return %c0_i32, %c0_i32_0, %c0_i32_1 : i32, i32, i32
  }
  func.func @transform_40(%arg0: i32) -> (i32, i32, i32) {
    %c0_i32 = arith.constant 0 : i32
    %c0_i32_0 = arith.constant 0 : i32
    %c0_i32_1 = arith.constant 0 : i32
    %c0_i32_2 = arith.constant 0 : i32
    return %c0_i32, %c0_i32_0, %c0_i32_1 : i32, i32, i32
  }
  func.func @transform_41(%arg0: i32) -> (i32, i32) {
    %c0_i32 = arith.constant 0 : i32
    %c0_i32_0 = arith.constant 0 : i32
    %c0_i32_1 = arith.constant 0 : i32
    return %c0_i32, %c0_i32_0 : i32, i32
  }
  func.func @transform_42(%arg0: i32) -> (i32, i32) {
    %c0_i32 = arith.constant 0 : i32
    %c0_i32_0 = arith.constant 0 : i32
    %c0_i32_1 = arith.constant 0 : i32
    return %c0_i32, %c0_i32_0 : i32, i32
  }
  func.func @transform_43(%arg0: i32) -> (i32, i32, i32) {
    %c0_i32 = arith.constant 0 : i32
    %c0_i32_0 = arith.constant 0 : i32
    %c0_i32_1 = arith.constant 0 : i32
    return %arg0, %c0_i32, %c0_i32_0 : i32, i32, i32
  }
}

</mosaic_0001>

<llo_original>
// kernel: transformer_forward.1
$region0: #{transformer_forward.1}
  #allocation0 [shape = 'u32[]', space=smem, size = 0x4, offset = 0x4, fixed_abs, tag = 'smem constant byte address 0x4 - core index']
  #allocation1 [shape = 'u32[144,128]{1,0:T(1,128)}', space=vmem, size = 0x12000, scoped, tag = 'internal scratch']
  %s0 = inlined_call_operand.smem [shape: u32[44], index: -1, kind: input, shape index: {}]
  %s1 = sld [smem:[%s0]]
  %s2 = scalar_lea.smem %s0, 1
  %s3 = sld [smem:[%s2]]
  %s4 = scalar_lea.smem %s0, 2
  %s5 = sld [smem:[%s4]]
  %s6 = scalar_lea.smem %s0, 3
  %s7 = sld [smem:[%s6]]
  %s8 = scalar_lea.smem %s0, 4
  %s9 = sld [smem:[%s8]]
  %s10 = scalar_lea.smem %s0, 5
  %s11 = sld [smem:[%s10]]
  %s12 = scalar_lea.smem %s0, 6
  %s13 = sld [smem:[%s12]]
  %s14 = scalar_lea.smem %s0, 7
  %s15 = sld [smem:[%s14]]
  %s16 = scalar_lea.smem %s0, 8
  %s17 = sld [smem:[%s16]]
  %s18 = scalar_lea.smem %s0, 9
  %s19 = sld [smem:[%s18]]
  %s20 = scalar_lea.smem %s0, 10
  %s21 = sld [smem:[%s20]]
  %s22 = scalar_lea.smem %s0, 11
  %s23 = sld [smem:[%s22]]
  %s24 = scalar_lea.smem %s0, 12
  %s25 = sld [smem:[%s24]]
  %s26 = scalar_lea.smem %s0, 13
  %s27 = sld [smem:[%s26]]
  %s28 = scalar_lea.smem %s0, 14
  %s29 = sld [smem:[%s28]]
  %s30 = scalar_lea.smem %s0, 15
  %s31 = sld [smem:[%s30]]
  %s32 = scalar_lea.smem %s0, 16
  %s33 = sld [smem:[%s32]]
  %s34 = scalar_lea.smem %s0, 17
  %s35 = sld [smem:[%s34]]
  %s36 = scalar_lea.smem %s0, 18
  %s37 = sld [smem:[%s36]]
  %s38 = scalar_lea.smem %s0, 19
  %s39 = sld [smem:[%s38]]
  %s40 = scalar_lea.smem %s0, 20
  %s41 = sld [smem:[%s40]]
  %s42 = scalar_lea.smem %s0, 21
  %s43 = sld [smem:[%s42]]
  %s44 = scalar_lea.smem %s0, 22
  %s45 = sld [smem:[%s44]]
  %s46 = scalar_lea.smem %s0, 23
  %s47 = sld [smem:[%s46]]
  %s48 = scalar_lea.smem %s0, 24
  %s49 = sld [smem:[%s48]]
  %s50 = scalar_lea.smem %s0, 25
  %s51 = sld [smem:[%s50]]
  %s52 = scalar_lea.smem %s0, 26
  %s53 = sld [smem:[%s52]]
  %s54 = scalar_lea.smem %s0, 27
  %s55 = sld [smem:[%s54]]
  %s56 = scalar_lea.smem %s0, 28
  %s57 = sld [smem:[%s56]]
  %s58 = scalar_lea.smem %s0, 29
  %s59 = sld [smem:[%s58]]
  %s60 = scalar_lea.smem %s0, 30
  %s61 = sld [smem:[%s60]]
  %s62 = scalar_lea.smem %s0, 31
  %s63 = sld [smem:[%s62]]
  %s64 = scalar_lea.smem %s0, 32
  %s65 = sld [smem:[%s64]]
  %s66 = scalar_lea.smem %s0, 33
  %s67 = sld [smem:[%s66]]
  %s68 = scalar_lea.smem %s0, 34
  %s69 = sld [smem:[%s68]]
  %s70 = scalar_lea.smem %s0, 35
  %s71 = sld [smem:[%s70]]
  %s72 = scalar_lea.smem %s0, 36
  %s73 = sld [smem:[%s72]]
  %s74 = scalar_lea.smem %s0, 37
  %s75 = sld [smem:[%s74]]
  %s76 = scalar_lea.smem %s0, 38
  %s77 = sld [smem:[%s76]]
  %s78 = scalar_lea.smem %s0, 39
  %s79 = sld [smem:[%s78]]
  %s80 = scalar_lea.smem %s0, 40
  %s81 = sld [smem:[%s80]]
  %s82 = scalar_lea.smem %s0, 41
  %s83 = sld [smem:[%s82]]
  %s84 = scalar_lea.smem %s0, 42
  %s85 = sld [smem:[%s84]]
  %s86 = scalar_lea.smem %s0, 43
  %s87 = sld [smem:[%s86]]
  %s88 = sld [smem:[#allocation0]]
  $region265: #{transformer_forward.1} parent=0
    _
  %s90 = ssub.s32 1, %s88
  %s91 = scalar_select 0, %s90, %s88
  $region1: #{transformer_forward.1} parent=0
    #allocation2 [shape = 'u8[1024]{0}', space=vmem, size = 0x400, scoped, tag = 'input window, operand 10, single buffered']
    #allocation3 [shape = 's32[2]{0}', space=sflag, size = 0x8, scoped, tag = 'scoped memory for transformer_forward.1']
    #allocation4 [shape = 'u8[1024]{0}', space=vmem, size = 0x400, scoped, tag = 'input window, operand 12, single buffered']
    #allocation5 [shape = 's32[1]{0}', space=sflag, size = 0x4, scoped, tag = 'scoped memory for transformer_forward.1']
    #allocation6 [shape = 'u8[1024]{0}', space=vmem, size = 0x400, scoped, tag = 'input window, operand 13, single buffered']
    #allocation7 [shape = 'u8[1024]{0}', space=vmem, size = 0x400, scoped, tag = 'input window, operand 14, single buffered']
    #allocation8 [shape = 's32[1]{0}', space=sflag, size = 0x4, scoped, tag = 'scoped memory for transformer_forward.1']
    #allocation9 [shape = 'u8[1024]{0}', space=vmem, size = 0x400, scoped, tag = 'input window, operand 16, single buffered']
    #allocation10 [shape = 'u8[1024]{0}', space=vmem, size = 0x400, scoped, tag = 'input window, operand 18, single buffered']
    #allocation11 [shape = 's32[1]{0}', space=sflag, size = 0x4, scoped, tag = 'scoped memory for transformer_forward.1']
    #allocation12 [shape = 'u8[1024]{0}', space=vmem, size = 0x400, scoped, tag = 'input window, operand 19, single buffered']
    #allocation13 [shape = 'u8[1024]{0}', space=vmem, size = 0x400, scoped, tag = 'input window, operand 20, single buffered']
    #allocation14 [shape = 's32[1]{0}', space=sflag, size = 0x4, scoped, tag = 'scoped memory for transformer_forward.1']
    #allocation15 [shape = 'u8[1024]{0}', space=vmem, size = 0x400, scoped, tag = 'input window, operand 28, single buffered']
    #allocation16 [shape = 'u8[1024]{0}', space=vmem, size = 0x400, scoped, tag = 'input window, operand 30, single buffered']
    #allocation17 [shape = 's32[1]{0}', space=sflag, size = 0x4, scoped, tag = 'scoped memory for transformer_forward.1']
    #allocation18 [shape = 'u8[1024]{0}', space=vmem, size = 0x400, scoped, tag = 'input window, operand 32, single buffered']
    #allocation19 [shape = 'u8[1024]{0}', space=vmem, size = 0x400, scoped, tag = 'input window, operand 33, single buffered']
    #allocation20 [shape = 's32[1]{0}', space=sflag, size = 0x4, scoped, tag = 'scoped memory for transformer_forward.1']
    #allocation21 [shape = 'u8[1024]{0}', space=vmem, size = 0x400, scoped, tag = 'input window, operand 34, single buffered']
    #allocation22 [shape = 'u8[1024]{0}', space=vmem, size = 0x400, scoped, tag = 'input window, operand 38, single buffered']
    #allocation23 [shape = 's32[1]{0}', space=sflag, size = 0x4, scoped, tag = 'scoped memory for transformer_forward.1']
    #allocation24 [shape = 'u8[1024]{0}', space=vmem, size = 0x400, scoped, tag = 'input window, operand 40, single buffered']
    %92 = vsyncpa [#allocation3], 0
    %93 = vsyncpa [#allocation5], 0
    %94 = vsyncpa [#allocation8], 0
    %95 = vsyncpa [#allocation11], 0
    %96 = vsyncpa [#allocation14], 0
    %97 = vsyncpa [#allocation17], 0
    %98 = vsyncpa [#allocation20], 0
    %99 = vsyncpa [#allocation23], 0
    loop: start=0, step=1, limit=4
    $region2: #{transformer_forward.1} parent=1 // loop_pre_header
      _
    $region3: #{transformer_forward.1} parent=1 // loop_header
      %s101 = sphi 0, %s105
      %p102 = scmp.ge.s32.totalorder %s101, 4
      %s111 = sphi 0, %s113
      %s114 = sphi 0, %s111
      %s115 = sphi 0, %s114
      %s131 = sphi 0, %s115
      %s137 = sphi 0, %s139
      %s140 = sphi 0, %s137
      %s141 = sphi 0, %s140
      %s157 = sphi 0, %s141
      %s163 = sphi 0, %s165
      %s166 = sphi 0, %s163
      %s167 = sphi 0, %s166
      %s183 = sphi 0, %s167
      %s189 = sphi 0, %s191
      %s192 = sphi 0, %s189
      %s193 = sphi 0, %s192
      %s209 = sphi 0, %s193
      %s215 = sphi 0, %s217
      %s218 = sphi 0, %s215
      %s219 = sphi 0, %s218
      %s235 = sphi 0, %s219
      %s241 = sphi 0, %s243
      %s244 = sphi 0, %s241
      %s245 = sphi 0, %s244
      %s261 = sphi 0, %s245
      %s265 = sphi 0, %s265
      %s267 = sphi 0, %s265
      %s268 = sphi 0, %s267
      %s282 = sphi 0, %s268
      %s286 = sphi 0, %s286
      %s288 = sphi 0, %s286
      %s289 = sphi 0, %s288
      %s303 = sphi 0, %s289
      %s307 = sphi 0, %s307
      %s309 = sphi 0, %s307
      %s310 = sphi 0, %s309
      %s324 = sphi 0, %s310
      %s328 = sphi 0, %s328
      %s330 = sphi 0, %s328
      %s331 = sphi 0, %s330
      %s345 = sphi 0, %s331
      %s349 = sphi 0, %s349
      %s351 = sphi 0, %s349
      %s352 = sphi 0, %s351
      %s366 = sphi 0, %s352
      %s370 = sphi 0, %s370
      %s372 = sphi 0, %s370
      %s373 = sphi 0, %s372
      %s387 = sphi 0, %s373
      %s391 = sphi 0, %s391
      %s393 = sphi 0, %s391
      %s394 = sphi 0, %s393
      %s408 = sphi 0, %s394
      %s412 = sphi 0, %s412
      %s414 = sphi 0, %s412
      %s415 = sphi 0, %s414
      %s429 = sphi 0, %s415
      %s433 = sphi 0, %s433
      %s435 = sphi 0, %s433
      %s436 = sphi 0, %s435
      %s450 = sphi 0, %s436
      %s454 = sphi 0, %s454
      %s456 = sphi 0, %s454
      %s457 = sphi 0, %s456
      %s471 = sphi 0, %s457
      %s475 = sphi 0, %s475
      %s477 = sphi 0, %s475
      %s478 = sphi 0, %s477
      %s492 = sphi 0, %s478
      %s496 = sphi 0, %s496
      %s498 = sphi 0, %s496
      %s499 = sphi 0, %s498
      %s513 = sphi 0, %s499
      %s517 = sphi 0, %s517
      %s519 = sphi 0, %s517
      %s520 = sphi 0, %s519
      %s534 = sphi 0, %s520
      %s538 = sphi 0, %s538
      %s540 = sphi 0, %s538
      %s541 = sphi 0, %s540
      %s555 = sphi 0, %s541
      %s559 = sphi 0, %s559
      %s561 = sphi 0, %s559
      %s562 = sphi 0, %s561
      %s576 = sphi 0, %s562
      %s580 = sphi 0, %s580
      %s582 = sphi 0, %s580
      %s583 = sphi 0, %s582
      %s597 = sphi 0, %s583
      %s601 = sphi 0, %s601
      %s603 = sphi 0, %s601
      %s604 = sphi 0, %s603
      %s618 = sphi 0, %s604
      %s622 = sphi 0, %s622
      %s624 = sphi 0, %s622
      %s625 = sphi 0, %s624
      %s639 = sphi 0, %s625
      %s643 = sphi 0, %s643
      %s645 = sphi 0, %s643
      %s646 = sphi 0, %s645
      %s660 = sphi 0, %s646
      %s664 = sphi 0, %s664
      %s666 = sphi 0, %s664
      %s667 = sphi 0, %s666
      %s681 = sphi 0, %s667
      %s685 = sphi 0, %s685
      %s687 = sphi 0, %s685
      %s688 = sphi 0, %s687
      %s702 = sphi 0, %s688
      %s706 = sphi 0, %s706
      %s708 = sphi 0, %s706
      %s709 = sphi 0, %s708
      %s723 = sphi 0, %s709
      %s727 = sphi 0, %s727
      %s729 = sphi 0, %s727
      %s730 = sphi 0, %s729
      %s744 = sphi 0, %s730
      %s748 = sphi 0, %s748
      %s750 = sphi 0, %s748
      %s751 = sphi 0, %s750
      %s765 = sphi 0, %s751
      %s769 = sphi 0, %s769
      %s771 = sphi 0, %s769
      %s772 = sphi 0, %s771
      %s786 = sphi 0, %s772
      %s790 = sphi 0, %s790
      %s792 = sphi 0, %s790
      %s793 = sphi 0, %s792
      %s807 = sphi 0, %s793
      %s811 = sphi 0, %s811
      %s813 = sphi 0, %s811
      %s814 = sphi 0, %s813
      %s828 = sphi 0, %s814
      %s832 = sphi 0, %s832
      %s834 = sphi 0, %s832
      %s835 = sphi 0, %s834
      %s849 = sphi 0, %s835
      %s853 = sphi 0, %s853
      %s855 = sphi 0, %s853
      %s856 = sphi 0, %s855
      %s870 = sphi 0, %s856
      %s874 = sphi 0, %s874
      %s876 = sphi 0, %s874
      %s877 = sphi 0, %s876
      %s891 = sphi 0, %s877
      %s895 = sphi 0, %s895
      %s897 = sphi 0, %s895
      %s898 = sphi 0, %s897
      %s912 = sphi 0, %s898
      %s916 = sphi 0, %s916
      %s918 = sphi 0, %s916
      %s919 = sphi 0, %s918
      %s933 = sphi 0, %s919
      %s937 = sphi 0, %s937
      %s939 = sphi 0, %s937
      %s940 = sphi 0, %s939
      %s954 = sphi 0, %s940
      %s958 = sphi 0, %s958
      %s960 = sphi 0, %s958
      %s961 = sphi 0, %s960
      %s975 = sphi 0, %s961
      %s979 = sphi 0, %s979
      %s981 = sphi 0, %s979
      %s982 = sphi 0, %s981
      %s996 = sphi 0, %s982
      %s1000 = sphi 0, %s1000
      %s1002 = sphi 0, %s1000
      %s1003 = sphi 0, %s1002
      %s1017 = sphi 0, %s1003
      %s1021 = sphi 0, %s1021
      %s1023 = sphi 0, %s1021
      %s1024 = sphi 0, %s1023
      %s1038 = sphi 0, %s1024
      %s1044 = sphi 0, %s1046
      %s1047 = sphi 0, %s1044
      %s1048 = sphi 0, %s1047
      %s1064 = sphi 0, %s1048
    $region4: #{transformer_forward.1} parent=1 // loop_header_branch
      %104 = sbr.rel (%p102) target = $region8
    $region5: #{transformer_forward.1} parent=1 // loop_body
      %s106 = ssub.s32 %s101, 1
      %s107 = ssub.s32 %s101, 2
      %s108 = sadd.s32 %s101, 1
      %s109 = ssub.s32 %s101, %s108
      %p110 = scmp.eq.s32.totalorder %s109, 0
      %s112 = sadd.s32 %s111, 1
      %s113 = scalar_select %p110, %s111, %s112
      %p116 = pneg %p110
      %p117 = scmp.eq.s32.totalorder %s101, 1
      %p118 = por %p116, %p117
      %p119 = scmp.ne.s32.totalorder %s111, %s114
      %p120 = scmp.eq.s32.totalorder %s101, 0
      %p121 = por %p119, %p120
      %p122 = scmp.ne.s32.totalorder %s111, %s114
      %p123 = scmp.eq.s32.totalorder %s106, 1
      %p124 = por %p122, %p123
      %p125 = scmp.ne.s32.totalorder %s114, %s115
      %p126 = scmp.eq.s32.totalorder %s106, 0
      %p127 = por %p125, %p126
      %p128 = scmp.ne.s32.totalorder %s114, %s115
      %p129 = scmp.eq.s32.totalorder %s107, 1
      %p130 = por %p128, %p129
      %p132 = scmp.ne.s32.totalorder %s115, %s131
      %p133 = scmp.eq.s32.totalorder %s107, 0
      %p134 = por %p132, %p133
      %s135 = ssub.s32 %s101, %s108
      %p136 = scmp.eq.s32.totalorder %s135, 0
      %s138 = sadd.s32 %s137, 1
      %s139 = scalar_select %p136, %s137, %s138
      %p142 = pneg %p136
      %p143 = scmp.eq.s32.totalorder %s101, 1
      %p144 = por %p142, %p143
      %p145 = scmp.ne.s32.totalorder %s137, %s140
      %p146 = scmp.eq.s32.totalorder %s101, 0
      %p147 = por %p145, %p146
      %p148 = scmp.ne.s32.totalorder %s137, %s140
      %p149 = scmp.eq.s32.totalorder %s106, 1
      %p150 = por %p148, %p149
      %p151 = scmp.ne.s32.totalorder %s140, %s141
      %p152 = scmp.eq.s32.totalorder %s106, 0
      %p153 = por %p151, %p152
      %p154 = scmp.ne.s32.totalorder %s140, %s141
      %p155 = scmp.eq.s32.totalorder %s107, 1
      %p156 = por %p154, %p155
      %p158 = scmp.ne.s32.totalorder %s141, %s157
      %p159 = scmp.eq.s32.totalorder %s107, 0
      %p160 = por %p158, %p159
      %s161 = ssub.s32 %s101, %s108
      %p162 = scmp.eq.s32.totalorder %s161, 0
      %s164 = sadd.s32 %s163, 1
      %s165 = scalar_select %p162, %s163, %s164
      %p168 = pneg %p162
      %p169 = scmp.eq.s32.totalorder %s101, 1
      %p170 = por %p168, %p169
      %p171 = scmp.ne.s32.totalorder %s163, %s166
      %p172 = scmp.eq.s32.totalorder %s101, 0
      %p173 = por %p171, %p172
      %p174 = scmp.ne.s32.totalorder %s163, %s166
      %p175 = scmp.eq.s32.totalorder %s106, 1
      %p176 = por %p174, %p175
      %p177 = scmp.ne.s32.totalorder %s166, %s167
      %p178 = scmp.eq.s32.totalorder %s106, 0
      %p179 = por %p177, %p178
      %p180 = scmp.ne.s32.totalorder %s166, %s167
      %p181 = scmp.eq.s32.totalorder %s107, 1
      %p182 = por %p180, %p181
      %p184 = scmp.ne.s32.totalorder %s167, %s183
      %p185 = scmp.eq.s32.totalorder %s107, 0
      %p186 = por %p184, %p185
      %s187 = ssub.s32 %s101, %s108
      %p188 = scmp.eq.s32.totalorder %s187, 0
      %s190 = sadd.s32 %s189, 1
      %s191 = scalar_select %p188, %s189, %s190
      %p194 = pneg %p188
      %p195 = scmp.eq.s32.totalorder %s101, 1
      %p196 = por %p194, %p195
      %p197 = scmp.ne.s32.totalorder %s189, %s192
      %p198 = scmp.eq.s32.totalorder %s101, 0
      %p199 = por %p197, %p198
      %p200 = scmp.ne.s32.totalorder %s189, %s192
      %p201 = scmp.eq.s32.totalorder %s106, 1
      %p202 = por %p200, %p201
      %p203 = scmp.ne.s32.totalorder %s192, %s193
      %p204 = scmp.eq.s32.totalorder %s106, 0
      %p205 = por %p203, %p204
      %p206 = scmp.ne.s32.totalorder %s192, %s193
      %p207 = scmp.eq.s32.totalorder %s107, 1
      %p208 = por %p206, %p207
      %p210 = scmp.ne.s32.totalorder %s193, %s209
      %p211 = scmp.eq.s32.totalorder %s107, 0
      %p212 = por %p210, %p211
      %s213 = ssub.s32 %s101, %s108
      %p214 = scmp.eq.s32.totalorder %s213, 0
      %s216 = sadd.s32 %s215, 1
      %s217 = scalar_select %p214, %s215, %s216
      %p220 = pneg %p214
      %p221 = scmp.eq.s32.totalorder %s101, 1
      %p222 = por %p220, %p221
      %p223 = scmp.ne.s32.totalorder %s215, %s218
      %p224 = scmp.eq.s32.totalorder %s101, 0
      %p225 = por %p223, %p224
      %p226 = scmp.ne.s32.totalorder %s215, %s218
      %p227 = scmp.eq.s32.totalorder %s106, 1
      %p228 = por %p226, %p227
      %p229 = scmp.ne.s32.totalorder %s218, %s219
      %p230 = scmp.eq.s32.totalorder %s106, 0
      %p231 = por %p229, %p230
      %p232 = scmp.ne.s32.totalorder %s218, %s219
      %p233 = scmp.eq.s32.totalorder %s107, 1
      %p234 = por %p232, %p233
      %p236 = scmp.ne.s32.totalorder %s219, %s235
      %p237 = scmp.eq.s32.totalorder %s107, 0
      %p238 = por %p236, %p237
      %s239 = ssub.s32 %s101, %s108
      %p240 = scmp.eq.s32.totalorder %s239, 0
      %s242 = sadd.s32 %s241, 1
      %s243 = scalar_select %p240, %s241, %s242
      %p246 = pneg %p240
      %p247 = scmp.eq.s32.totalorder %s101, 1
      %p248 = por %p246, %p247
      %p249 = scmp.ne.s32.totalorder %s241, %s244
      %p250 = scmp.eq.s32.totalorder %s101, 0
      %p251 = por %p249, %p250
      %p252 = scmp.ne.s32.totalorder %s241, %s244
      %p253 = scmp.eq.s32.totalorder %s106, 1
      %p254 = por %p252, %p253
      %p255 = scmp.ne.s32.totalorder %s244, %s245
      %p256 = scmp.eq.s32.totalorder %s106, 0
      %p257 = por %p255, %p256
      %p258 = scmp.ne.s32.totalorder %s244, %s245
      %p259 = scmp.eq.s32.totalorder %s107, 1
      %p260 = por %p258, %p259
      %p262 = scmp.ne.s32.totalorder %s245, %s261
      %p263 = scmp.eq.s32.totalorder %s107, 0
      %p264 = por %p262, %p263
      %s266 = sadd.s32 %s265, 1
      %p269 = scmp.eq.s32.totalorder %s101, 1
      %p270 = scmp.ne.s32.totalorder %s265, %s267
      %p271 = scmp.eq.s32.totalorder %s101, 0
      %p272 = por %p270, %p271
      %p273 = scmp.ne.s32.totalorder %s265, %s267
      %p274 = scmp.eq.s32.totalorder %s106, 1
      %p275 = por %p273, %p274
      %p276 = scmp.ne.s32.totalorder %s267, %s268
      %p277 = scmp.eq.s32.totalorder %s106, 0
      %p278 = por %p276, %p277
      %p279 = scmp.ne.s32.totalorder %s267, %s268
      %p280 = scmp.eq.s32.totalorder %s107, 1
      %p281 = por %p279, %p280
      %p283 = scmp.ne.s32.totalorder %s268, %s282
      %p284 = scmp.eq.s32.totalorder %s107, 0
      %p285 = por %p283, %p284
      %s287 = sadd.s32 %s286, 1
      %p290 = scmp.eq.s32.totalorder %s101, 1
      %p291 = scmp.ne.s32.totalorder %s286, %s288
      %p292 = scmp.eq.s32.totalorder %s101, 0
      %p293 = por %p291, %p292
      %p294 = scmp.ne.s32.totalorder %s286, %s288
      %p295 = scmp.eq.s32.totalorder %s106, 1
      %p296 = por %p294, %p295
      %p297 = scmp.ne.s32.totalorder %s288, %s289
      %p298 = scmp.eq.s32.totalorder %s106, 0
      %p299 = por %p297, %p298
      %p300 = scmp.ne.s32.totalorder %s288, %s289
      %p301 = scmp.eq.s32.totalorder %s107, 1
      %p302 = por %p300, %p301
      %p304 = scmp.ne.s32.totalorder %s289, %s303
      %p305 = scmp.eq.s32.totalorder %s107, 0
      %p306 = por %p304, %p305
      %s308 = sadd.s32 %s307, 1
      %p311 = scmp.eq.s32.totalorder %s101, 1
      %p312 = scmp.ne.s32.totalorder %s307, %s309
      %p313 = scmp.eq.s32.totalorder %s101, 0
      %p314 = por %p312, %p313
      %p315 = scmp.ne.s32.totalorder %s307, %s309
      %p316 = scmp.eq.s32.totalorder %s106, 1
      %p317 = por %p315, %p316
      %p318 = scmp.ne.s32.totalorder %s309, %s310
      %p319 = scmp.eq.s32.totalorder %s106, 0
      %p320 = por %p318, %p319
      %p321 = scmp.ne.s32.totalorder %s309, %s310
      %p322 = scmp.eq.s32.totalorder %s107, 1
      %p323 = por %p321, %p322
      %p325 = scmp.ne.s32.totalorder %s310, %s324
      %p326 = scmp.eq.s32.totalorder %s107, 0
      %p327 = por %p325, %p326
      %s329 = sadd.s32 %s328, 1
      %p332 = scmp.eq.s32.totalorder %s101, 1
      %p333 = scmp.ne.s32.totalorder %s328, %s330
      %p334 = scmp.eq.s32.totalorder %s101, 0
      %p335 = por %p333, %p334
      %p336 = scmp.ne.s32.totalorder %s328, %s330
      %p337 = scmp.eq.s32.totalorder %s106, 1
      %p338 = por %p336, %p337
      %p339 = scmp.ne.s32.totalorder %s330, %s331
      %p340 = scmp.eq.s32.totalorder %s106, 0
      %p341 = por %p339, %p340
      %p342 = scmp.ne.s32.totalorder %s330, %s331
      %p343 = scmp.eq.s32.totalorder %s107, 1
      %p344 = por %p342, %p343
      %p346 = scmp.ne.s32.totalorder %s331, %s345
      %p347 = scmp.eq.s32.totalorder %s107, 0
      %p348 = por %p346, %p347
      %s350 = sadd.s32 %s349, 1
      %p353 = scmp.eq.s32.totalorder %s101, 1
      %p354 = scmp.ne.s32.totalorder %s349, %s351
      %p355 = scmp.eq.s32.totalorder %s101, 0
      %p356 = por %p354, %p355
      %p357 = scmp.ne.s32.totalorder %s349, %s351
      %p358 = scmp.eq.s32.totalorder %s106, 1
      %p359 = por %p357, %p358
      %p360 = scmp.ne.s32.totalorder %s351, %s352
      %p361 = scmp.eq.s32.totalorder %s106, 0
      %p362 = por %p360, %p361
      %p363 = scmp.ne.s32.totalorder %s351, %s352
      %p364 = scmp.eq.s32.totalorder %s107, 1
      %p365 = por %p363, %p364
      %p367 = scmp.ne.s32.totalorder %s352, %s366
      %p368 = scmp.eq.s32.totalorder %s107, 0
      %p369 = por %p367, %p368
      %s371 = sadd.s32 %s370, 1
      %p374 = scmp.eq.s32.totalorder %s101, 1
      %p375 = scmp.ne.s32.totalorder %s370, %s372
      %p376 = scmp.eq.s32.totalorder %s101, 0
      %p377 = por %p375, %p376
      %p378 = scmp.ne.s32.totalorder %s370, %s372
      %p379 = scmp.eq.s32.totalorder %s106, 1
      %p380 = por %p378, %p379
      %p381 = scmp.ne.s32.totalorder %s372, %s373
      %p382 = scmp.eq.s32.totalorder %s106, 0
      %p383 = por %p381, %p382
      %p384 = scmp.ne.s32.totalorder %s372, %s373
      %p385 = scmp.eq.s32.totalorder %s107, 1
      %p386 = por %p384, %p385
      %p388 = scmp.ne.s32.totalorder %s373, %s387
      %p389 = scmp.eq.s32.totalorder %s107, 0
      %p390 = por %p388, %p389
      %s392 = sadd.s32 %s391, 1
      %p395 = scmp.eq.s32.totalorder %s101, 1
      %p396 = scmp.ne.s32.totalorder %s391, %s393
      %p397 = scmp.eq.s32.totalorder %s101, 0
      %p398 = por %p396, %p397
      %p399 = scmp.ne.s32.totalorder %s391, %s393
      %p400 = scmp.eq.s32.totalorder %s106, 1
      %p401 = por %p399, %p400
      %p402 = scmp.ne.s32.totalorder %s393, %s394
      %p403 = scmp.eq.s32.totalorder %s106, 0
      %p404 = por %p402, %p403
      %p405 = scmp.ne.s32.totalorder %s393, %s394
      %p406 = scmp.eq.s32.totalorder %s107, 1
      %p407 = por %p405, %p406
      %p409 = scmp.ne.s32.totalorder %s394, %s408
      %p410 = scmp.eq.s32.totalorder %s107, 0
      %p411 = por %p409, %p410
      %s413 = sadd.s32 %s412, 1
      %p416 = scmp.eq.s32.totalorder %s101, 1
      %p417 = scmp.ne.s32.totalorder %s412, %s414
      %p418 = scmp.eq.s32.totalorder %s101, 0
      %p419 = por %p417, %p418
      %p420 = scmp.ne.s32.totalorder %s412, %s414
      %p421 = scmp.eq.s32.totalorder %s106, 1
      %p422 = por %p420, %p421
      %p423 = scmp.ne.s32.totalorder %s414, %s415
      %p424 = scmp.eq.s32.totalorder %s106, 0
      %p425 = por %p423, %p424
      %p426 = scmp.ne.s32.totalorder %s414, %s415
      %p427 = scmp.eq.s32.totalorder %s107, 1
      %p428 = por %p426, %p427
      %p430 = scmp.ne.s32.totalorder %s415, %s429
      %p431 = scmp.eq.s32.totalorder %s107, 0
      %p432 = por %p430, %p431
      %s434 = sadd.s32 %s433, 1
      %p437 = scmp.eq.s32.totalorder %s101, 1
      %p438 = scmp.ne.s32.totalorder %s433, %s435
      %p439 = scmp.eq.s32.totalorder %s101, 0
      %p440 = por %p438, %p439
      %p441 = scmp.ne.s32.totalorder %s433, %s435
      %p442 = scmp.eq.s32.totalorder %s106, 1
      %p443 = por %p441, %p442
      %p444 = scmp.ne.s32.totalorder %s435, %s436
      %p445 = scmp.eq.s32.totalorder %s106, 0
      %p446 = por %p444, %p445
      %p447 = scmp.ne.s32.totalorder %s435, %s436
      %p448 = scmp.eq.s32.totalorder %s107, 1
      %p449 = por %p447, %p448
      %p451 = scmp.ne.s32.totalorder %s436, %s450
      %p452 = scmp.eq.s32.totalorder %s107, 0
      %p453 = por %p451, %p452
      %s455 = sadd.s32 %s454, 1
      %p458 = scmp.eq.s32.totalorder %s101, 1
      %p459 = scmp.ne.s32.totalorder %s454, %s456
      %p460 = scmp.eq.s32.totalorder %s101, 0
      %p461 = por %p459, %p460
      %p462 = scmp.ne.s32.totalorder %s454, %s456
      %p463 = scmp.eq.s32.totalorder %s106, 1
      %p464 = por %p462, %p463
      %p465 = scmp.ne.s32.totalorder %s456, %s457
      %p466 = scmp.eq.s32.totalorder %s106, 0
      %p467 = por %p465, %p466
      %p468 = scmp.ne.s32.totalorder %s456, %s457
      %p469 = scmp.eq.s32.totalorder %s107, 1
      %p470 = por %p468, %p469
      %p472 = scmp.ne.s32.totalorder %s457, %s471
      %p473 = scmp.eq.s32.totalorder %s107, 0
      %p474 = por %p472, %p473
      %s476 = sadd.s32 %s475, 1
      %p479 = scmp.eq.s32.totalorder %s101, 1
      %p480 = scmp.ne.s32.totalorder %s475, %s477
      %p481 = scmp.eq.s32.totalorder %s101, 0
      %p482 = por %p480, %p481
      %p483 = scmp.ne.s32.totalorder %s475, %s477
      %p484 = scmp.eq.s32.totalorder %s106, 1
      %p485 = por %p483, %p484
      %p486 = scmp.ne.s32.totalorder %s477, %s478
      %p487 = scmp.eq.s32.totalorder %s106, 0
      %p488 = por %p486, %p487
      %p489 = scmp.ne.s32.totalorder %s477, %s478
      %p490 = scmp.eq.s32.totalorder %s107, 1
      %p491 = por %p489, %p490
      %p493 = scmp.ne.s32.totalorder %s478, %s492
      %p494 = scmp.eq.s32.totalorder %s107, 0
      %p495 = por %p493, %p494
      %s497 = sadd.s32 %s496, 1
      %p500 = scmp.eq.s32.totalorder %s101, 1
      %p501 = scmp.ne.s32.totalorder %s496, %s498
      %p502 = scmp.eq.s32.totalorder %s101, 0
      %p503 = por %p501, %p502
      %p504 = scmp.ne.s32.totalorder %s496, %s498
      %p505 = scmp.eq.s32.totalorder %s106, 1
      %p506 = por %p504, %p505
      %p507 = scmp.ne.s32.totalorder %s498, %s499
      %p508 = scmp.eq.s32.totalorder %s106, 0
      %p509 = por %p507, %p508
      %p510 = scmp.ne.s32.totalorder %s498, %s499
      %p511 = scmp.eq.s32.totalorder %s107, 1
      %p512 = por %p510, %p511
      %p514 = scmp.ne.s32.totalorder %s499, %s513
      %p515 = scmp.eq.s32.totalorder %s107, 0
      %p516 = por %p514, %p515
      %s518 = sadd.s32 %s517, 1
      %p521 = scmp.eq.s32.totalorder %s101, 1
      %p522 = scmp.ne.s32.totalorder %s517, %s519
      %p523 = scmp.eq.s32.totalorder %s101, 0
      %p524 = por %p522, %p523
      %p525 = scmp.ne.s32.totalorder %s517, %s519
      %p526 = scmp.eq.s32.totalorder %s106, 1
      %p527 = por %p525, %p526
      %p528 = scmp.ne.s32.totalorder %s519, %s520
      %p529 = scmp.eq.s32.totalorder %s106, 0
      %p530 = por %p528, %p529
      %p531 = scmp.ne.s32.totalorder %s519, %s520
      %p532 = scmp.eq.s32.totalorder %s107, 1
      %p533 = por %p531, %p532
      %p535 = scmp.ne.s32.totalorder %s520, %s534
      %p536 = scmp.eq.s32.totalorder %s107, 0
      %p537 = por %p535, %p536
      %s539 = sadd.s32 %s538, 1
      %p542 = scmp.eq.s32.totalorder %s101, 1
      %p543 = scmp.ne.s32.totalorder %s538, %s540
      %p544 = scmp.eq.s32.totalorder %s101, 0
      %p545 = por %p543, %p544
      %p546 = scmp.ne.s32.totalorder %s538, %s540
      %p547 = scmp.eq.s32.totalorder %s106, 1
      %p548 = por %p546, %p547
      %p549 = scmp.ne.s32.totalorder %s540, %s541
      %p550 = scmp.eq.s32.totalorder %s106, 0
      %p551 = por %p549, %p550
      %p552 = scmp.ne.s32.totalorder %s540, %s541
      %p553 = scmp.eq.s32.totalorder %s107, 1
      %p554 = por %p552, %p553
      %p556 = scmp.ne.s32.totalorder %s541, %s555
      %p557 = scmp.eq.s32.totalorder %s107, 0
      %p558 = por %p556, %p557
      %s560 = sadd.s32 %s559, 1
      %p563 = scmp.eq.s32.totalorder %s101, 1
      %p564 = scmp.ne.s32.totalorder %s559, %s561
      %p565 = scmp.eq.s32.totalorder %s101, 0
      %p566 = por %p564, %p565
      %p567 = scmp.ne.s32.totalorder %s559, %s561
      %p568 = scmp.eq.s32.totalorder %s106, 1
      %p569 = por %p567, %p568
      %p570 = scmp.ne.s32.totalorder %s561, %s562
      %p571 = scmp.eq.s32.totalorder %s106, 0
      %p572 = por %p570, %p571
      %p573 = scmp.ne.s32.totalorder %s561, %s562
      %p574 = scmp.eq.s32.totalorder %s107, 1
      %p575 = por %p573, %p574
      %p577 = scmp.ne.s32.totalorder %s562, %s576
      %p578 = scmp.eq.s32.totalorder %s107, 0
      %p579 = por %p577, %p578
      %s581 = sadd.s32 %s580, 1
      %p584 = scmp.eq.s32.totalorder %s101, 1
      %p585 = scmp.ne.s32.totalorder %s580, %s582
      %p586 = scmp.eq.s32.totalorder %s101, 0
      %p587 = por %p585, %p586
      %p588 = scmp.ne.s32.totalorder %s580, %s582
      %p589 = scmp.eq.s32.totalorder %s106, 1
      %p590 = por %p588, %p589
      %p591 = scmp.ne.s32.totalorder %s582, %s583
      %p592 = scmp.eq.s32.totalorder %s106, 0
      %p593 = por %p591, %p592
      %p594 = scmp.ne.s32.totalorder %s582, %s583
      %p595 = scmp.eq.s32.totalorder %s107, 1
      %p596 = por %p594, %p595
      %p598 = scmp.ne.s32.totalorder %s583, %s597
      %p599 = scmp.eq.s32.totalorder %s107, 0
      %p600 = por %p598, %p599
      %s602 = sadd.s32 %s601, 1
      %p605 = scmp.eq.s32.totalorder %s101, 1
      %p606 = scmp.ne.s32.totalorder %s601, %s603
      %p607 = scmp.eq.s32.totalorder %s101, 0
      %p608 = por %p606, %p607
      %p609 = scmp.ne.s32.totalorder %s601, %s603
      %p610 = scmp.eq.s32.totalorder %s106, 1
      %p611 = por %p609, %p610
      %p612 = scmp.ne.s32.totalorder %s603, %s604
      %p613 = scmp.eq.s32.totalorder %s106, 0
      %p614 = por %p612, %p613
      %p615 = scmp.ne.s32.totalorder %s603, %s604
      %p616 = scmp.eq.s32.totalorder %s107, 1
      %p617 = por %p615, %p616
      %p619 = scmp.ne.s32.totalorder %s604, %s618
      %p620 = scmp.eq.s32.totalorder %s107, 0
      %p621 = por %p619, %p620
      %s623 = sadd.s32 %s622, 1
      %p626 = scmp.eq.s32.totalorder %s101, 1
      %p627 = scmp.ne.s32.totalorder %s622, %s624
      %p628 = scmp.eq.s32.totalorder %s101, 0
      %p629 = por %p627, %p628
      %p630 = scmp.ne.s32.totalorder %s622, %s624
      %p631 = scmp.eq.s32.totalorder %s106, 1
      %p632 = por %p630, %p631
      %p633 = scmp.ne.s32.totalorder %s624, %s625
      %p634 = scmp.eq.s32.totalorder %s106, 0
      %p635 = por %p633, %p634
      %p636 = scmp.ne.s32.totalorder %s624, %s625
      %p637 = scmp.eq.s32.totalorder %s107, 1
      %p638 = por %p636, %p637
      %p640 = scmp.ne.s32.totalorder %s625, %s639
      %p641 = scmp.eq.s32.totalorder %s107, 0
      %p642 = por %p640, %p641
      %s644 = sadd.s32 %s643, 1
      %p647 = scmp.eq.s32.totalorder %s101, 1
      %p648 = scmp.ne.s32.totalorder %s643, %s645
      %p649 = scmp.eq.s32.totalorder %s101, 0
      %p650 = por %p648, %p649
      %p651 = scmp.ne.s32.totalorder %s643, %s645
      %p652 = scmp.eq.s32.totalorder %s106, 1
      %p653 = por %p651, %p652
      %p654 = scmp.ne.s32.totalorder %s645, %s646
      %p655 = scmp.eq.s32.totalorder %s106, 0
      %p656 = por %p654, %p655
      %p657 = scmp.ne.s32.totalorder %s645, %s646
      %p658 = scmp.eq.s32.totalorder %s107, 1
      %p659 = por %p657, %p658
      %p661 = scmp.ne.s32.totalorder %s646, %s660
      %p662 = scmp.eq.s32.totalorder %s107, 0
      %p663 = por %p661, %p662
      %s665 = sadd.s32 %s664, 1
      %p668 = scmp.eq.s32.totalorder %s101, 1
      %p669 = scmp.ne.s32.totalorder %s664, %s666
      %p670 = scmp.eq.s32.totalorder %s101, 0
      %p671 = por %p669, %p670
      %p672 = scmp.ne.s32.totalorder %s664, %s666
      %p673 = scmp.eq.s32.totalorder %s106, 1
      %p674 = por %p672, %p673
      %p675 = scmp.ne.s32.totalorder %s666, %s667
      %p676 = scmp.eq.s32.totalorder %s106, 0
      %p677 = por %p675, %p676
      %p678 = scmp.ne.s32.totalorder %s666, %s667
      %p679 = scmp.eq.s32.totalorder %s107, 1
      %p680 = por %p678, %p679
      %p682 = scmp.ne.s32.totalorder %s667, %s681
      %p683 = scmp.eq.s32.totalorder %s107, 0
      %p684 = por %p682, %p683
      %s686 = sadd.s32 %s685, 1
      %p689 = scmp.eq.s32.totalorder %s101, 1
      %p690 = scmp.ne.s32.totalorder %s685, %s687
      %p691 = scmp.eq.s32.totalorder %s101, 0
      %p692 = por %p690, %p691
      %p693 = scmp.ne.s32.totalorder %s685, %s687
      %p694 = scmp.eq.s32.totalorder %s106, 1
      %p695 = por %p693, %p694
      %p696 = scmp.ne.s32.totalorder %s687, %s688
      %p697 = scmp.eq.s32.totalorder %s106, 0
      %p698 = por %p696, %p697
      %p699 = scmp.ne.s32.totalorder %s687, %s688
      %p700 = scmp.eq.s32.totalorder %s107, 1
      %p701 = por %p699, %p700
      %p703 = scmp.ne.s32.totalorder %s688, %s702
      %p704 = scmp.eq.s32.totalorder %s107, 0
      %p705 = por %p703, %p704
      %s707 = sadd.s32 %s706, 1
      %p710 = scmp.eq.s32.totalorder %s101, 1
      %p711 = scmp.ne.s32.totalorder %s706, %s708
      %p712 = scmp.eq.s32.totalorder %s101, 0
      %p713 = por %p711, %p712
      %p714 = scmp.ne.s32.totalorder %s706, %s708
      %p715 = scmp.eq.s32.totalorder %s106, 1
      %p716 = por %p714, %p715
      %p717 = scmp.ne.s32.totalorder %s708, %s709
      %p718 = scmp.eq.s32.totalorder %s106, 0
      %p719 = por %p717, %p718
      %p720 = scmp.ne.s32.totalorder %s708, %s709
      %p721 = scmp.eq.s32.totalorder %s107, 1
      %p722 = por %p720, %p721
      %p724 = scmp.ne.s32.totalorder %s709, %s723
      %p725 = scmp.eq.s32.totalorder %s107, 0
      %p726 = por %p724, %p725
      %s728 = sadd.s32 %s727, 1
      %p731 = scmp.eq.s32.totalorder %s101, 1
      %p732 = scmp.ne.s32.totalorder %s727, %s729
      %p733 = scmp.eq.s32.totalorder %s101, 0
      %p734 = por %p732, %p733
      %p735 = scmp.ne.s32.totalorder %s727, %s729
      %p736 = scmp.eq.s32.totalorder %s106, 1
      %p737 = por %p735, %p736
      %p738 = scmp.ne.s32.totalorder %s729, %s730
      %p739 = scmp.eq.s32.totalorder %s106, 0
      %p740 = por %p738, %p739
      %p741 = scmp.ne.s32.totalorder %s729, %s730
      %p742 = scmp.eq.s32.totalorder %s107, 1
      %p743 = por %p741, %p742
      %p745 = scmp.ne.s32.totalorder %s730, %s744
      %p746 = scmp.eq.s32.totalorder %s107, 0
      %p747 = por %p745, %p746
      %s749 = sadd.s32 %s748, 1
      %p752 = scmp.eq.s32.totalorder %s101, 1
      %p753 = scmp.ne.s32.totalorder %s748, %s750
      %p754 = scmp.eq.s32.totalorder %s101, 0
      %p755 = por %p753, %p754
      %p756 = scmp.ne.s32.totalorder %s748, %s750
      %p757 = scmp.eq.s32.totalorder %s106, 1
      %p758 = por %p756, %p757
      %p759 = scmp.ne.s32.totalorder %s750, %s751
      %p760 = scmp.eq.s32.totalorder %s106, 0
      %p761 = por %p759, %p760
      %p762 = scmp.ne.s32.totalorder %s750, %s751
      %p763 = scmp.eq.s32.totalorder %s107, 1
      %p764 = por %p762, %p763
      %p766 = scmp.ne.s32.totalorder %s751, %s765
      %p767 = scmp.eq.s32.totalorder %s107, 0
      %p768 = por %p766, %p767
      %s770 = sadd.s32 %s769, 1
      %p773 = scmp.eq.s32.totalorder %s101, 1
      %p774 = scmp.ne.s32.totalorder %s769, %s771
      %p775 = scmp.eq.s32.totalorder %s101, 0
      %p776 = por %p774, %p775
      %p777 = scmp.ne.s32.totalorder %s769, %s771
      %p778 = scmp.eq.s32.totalorder %s106, 1
      %p779 = por %p777, %p778
      %p780 = scmp.ne.s32.totalorder %s771, %s772
      %p781 = scmp.eq.s32.totalorder %s106, 0
      %p782 = por %p780, %p781
      %p783 = scmp.ne.s32.totalorder %s771, %s772
      %p784 = scmp.eq.s32.totalorder %s107, 1
      %p785 = por %p783, %p784
      %p787 = scmp.ne.s32.totalorder %s772, %s786
      %p788 = scmp.eq.s32.totalorder %s107, 0
      %p789 = por %p787, %p788
      %s791 = sadd.s32 %s790, 1
      %p794 = scmp.eq.s32.totalorder %s101, 1
      %p795 = scmp.ne.s32.totalorder %s790, %s792
      %p796 = scmp.eq.s32.totalorder %s101, 0
      %p797 = por %p795, %p796
      %p798 = scmp.ne.s32.totalorder %s790, %s792
      %p799 = scmp.eq.s32.totalorder %s106, 1
      %p800 = por %p798, %p799
      %p801 = scmp.ne.s32.totalorder %s792, %s793
      %p802 = scmp.eq.s32.totalorder %s106, 0
      %p803 = por %p801, %p802
      %p804 = scmp.ne.s32.totalorder %s792, %s793
      %p805 = scmp.eq.s32.totalorder %s107, 1
      %p806 = por %p804, %p805
      %p808 = scmp.ne.s32.totalorder %s793, %s807
      %p809 = scmp.eq.s32.totalorder %s107, 0
      %p810 = por %p808, %p809
      %s812 = sadd.s32 %s811, 1
      %p815 = scmp.eq.s32.totalorder %s101, 1
      %p816 = scmp.ne.s32.totalorder %s811, %s813
      %p817 = scmp.eq.s32.totalorder %s101, 0
      %p818 = por %p816, %p817
      %p819 = scmp.ne.s32.totalorder %s811, %s813
      %p820 = scmp.eq.s32.totalorder %s106, 1
      %p821 = por %p819, %p820
      %p822 = scmp.ne.s32.totalorder %s813, %s814
      %p823 = scmp.eq.s32.totalorder %s106, 0
      %p824 = por %p822, %p823
      %p825 = scmp.ne.s32.totalorder %s813, %s814
      %p826 = scmp.eq.s32.totalorder %s107, 1
      %p827 = por %p825, %p826
      %p829 = scmp.ne.s32.totalorder %s814, %s828
      %p830 = scmp.eq.s32.totalorder %s107, 0
      %p831 = por %p829, %p830
      %s833 = sadd.s32 %s832, 1
      %p836 = scmp.eq.s32.totalorder %s101, 1
      %p837 = scmp.ne.s32.totalorder %s832, %s834
      %p838 = scmp.eq.s32.totalorder %s101, 0
      %p839 = por %p837, %p838
      %p840 = scmp.ne.s32.totalorder %s832, %s834
      %p841 = scmp.eq.s32.totalorder %s106, 1
      %p842 = por %p840, %p841
      %p843 = scmp.ne.s32.totalorder %s834, %s835
      %p844 = scmp.eq.s32.totalorder %s106, 0
      %p845 = por %p843, %p844
      %p846 = scmp.ne.s32.totalorder %s834, %s835
      %p847 = scmp.eq.s32.totalorder %s107, 1
      %p848 = por %p846, %p847
      %p850 = scmp.ne.s32.totalorder %s835, %s849
      %p851 = scmp.eq.s32.totalorder %s107, 0
      %p852 = por %p850, %p851
      %s854 = sadd.s32 %s853, 1
      %p857 = scmp.eq.s32.totalorder %s101, 1
      %p858 = scmp.ne.s32.totalorder %s853, %s855
      %p859 = scmp.eq.s32.totalorder %s101, 0
      %p860 = por %p858, %p859
      %p861 = scmp.ne.s32.totalorder %s853, %s855
      %p862 = scmp.eq.s32.totalorder %s106, 1
      %p863 = por %p861, %p862
      %p864 = scmp.ne.s32.totalorder %s855, %s856
      %p865 = scmp.eq.s32.totalorder %s106, 0
      %p866 = por %p864, %p865
      %p867 = scmp.ne.s32.totalorder %s855, %s856
      %p868 = scmp.eq.s32.totalorder %s107, 1
      %p869 = por %p867, %p868
      %p871 = scmp.ne.s32.totalorder %s856, %s870
      %p872 = scmp.eq.s32.totalorder %s107, 0
      %p873 = por %p871, %p872
      %s875 = sadd.s32 %s874, 1
      %p878 = scmp.eq.s32.totalorder %s101, 1
      %p879 = scmp.ne.s32.totalorder %s874, %s876
      %p880 = scmp.eq.s32.totalorder %s101, 0
      %p881 = por %p879, %p880
      %p882 = scmp.ne.s32.totalorder %s874, %s876
      %p883 = scmp.eq.s32.totalorder %s106, 1
      %p884 = por %p882, %p883
      %p885 = scmp.ne.s32.totalorder %s876, %s877
      %p886 = scmp.eq.s32.totalorder %s106, 0
      %p887 = por %p885, %p886
      %p888 = scmp.ne.s32.totalorder %s876, %s877
      %p889 = scmp.eq.s32.totalorder %s107, 1
      %p890 = por %p888, %p889
      %p892 = scmp.ne.s32.totalorder %s877, %s891
      %p893 = scmp.eq.s32.totalorder %s107, 0
      %p894 = por %p892, %p893
      %s896 = sadd.s32 %s895, 1
      %p899 = scmp.eq.s32.totalorder %s101, 1
      %p900 = scmp.ne.s32.totalorder %s895, %s897
      %p901 = scmp.eq.s32.totalorder %s101, 0
      %p902 = por %p900, %p901
      %p903 = scmp.ne.s32.totalorder %s895, %s897
      %p904 = scmp.eq.s32.totalorder %s106, 1
      %p905 = por %p903, %p904
      %p906 = scmp.ne.s32.totalorder %s897, %s898
      %p907 = scmp.eq.s32.totalorder %s106, 0
      %p908 = por %p906, %p907
      %p909 = scmp.ne.s32.totalorder %s897, %s898
      %p910 = scmp.eq.s32.totalorder %s107, 1
      %p911 = por %p909, %p910
      %p913 = scmp.ne.s32.totalorder %s898, %s912
      %p914 = scmp.eq.s32.totalorder %s107, 0
      %p915 = por %p913, %p914
      %s917 = sadd.s32 %s916, 1
      %p920 = scmp.eq.s32.totalorder %s101, 1
      %p921 = scmp.ne.s32.totalorder %s916, %s918
      %p922 = scmp.eq.s32.totalorder %s101, 0
      %p923 = por %p921, %p922
      %p924 = scmp.ne.s32.totalorder %s916, %s918
      %p925 = scmp.eq.s32.totalorder %s106, 1
      %p926 = por %p924, %p925
      %p927 = scmp.ne.s32.totalorder %s918, %s919
      %p928 = scmp.eq.s32.totalorder %s106, 0
      %p929 = por %p927, %p928
      %p930 = scmp.ne.s32.totalorder %s918, %s919
      %p931 = scmp.eq.s32.totalorder %s107, 1
      %p932 = por %p930, %p931
      %p934 = scmp.ne.s32.totalorder %s919, %s933
      %p935 = scmp.eq.s32.totalorder %s107, 0
      %p936 = por %p934, %p935
      %s938 = sadd.s32 %s937, 1
      %p941 = scmp.eq.s32.totalorder %s101, 1
      %p942 = scmp.ne.s32.totalorder %s937, %s939
      %p943 = scmp.eq.s32.totalorder %s101, 0
      %p944 = por %p942, %p943
      %p945 = scmp.ne.s32.totalorder %s937, %s939
      %p946 = scmp.eq.s32.totalorder %s106, 1
      %p947 = por %p945, %p946
      %p948 = scmp.ne.s32.totalorder %s939, %s940
      %p949 = scmp.eq.s32.totalorder %s106, 0
      %p950 = por %p948, %p949
      %p951 = scmp.ne.s32.totalorder %s939, %s940
      %p952 = scmp.eq.s32.totalorder %s107, 1
      %p953 = por %p951, %p952
      %p955 = scmp.ne.s32.totalorder %s940, %s954
      %p956 = scmp.eq.s32.totalorder %s107, 0
      %p957 = por %p955, %p956
      %s959 = sadd.s32 %s958, 1
      %p962 = scmp.eq.s32.totalorder %s101, 1
      %p963 = scmp.ne.s32.totalorder %s958, %s960
      %p964 = scmp.eq.s32.totalorder %s101, 0
      %p965 = por %p963, %p964
      %p966 = scmp.ne.s32.totalorder %s958, %s960
      %p967 = scmp.eq.s32.totalorder %s106, 1
      %p968 = por %p966, %p967
      %p969 = scmp.ne.s32.totalorder %s960, %s961
      %p970 = scmp.eq.s32.totalorder %s106, 0
      %p971 = por %p969, %p970
      %p972 = scmp.ne.s32.totalorder %s960, %s961
      %p973 = scmp.eq.s32.totalorder %s107, 1
      %p974 = por %p972, %p973
      %p976 = scmp.ne.s32.totalorder %s961, %s975
      %p977 = scmp.eq.s32.totalorder %s107, 0
      %p978 = por %p976, %p977
      %s980 = sadd.s32 %s979, 1
      %p983 = scmp.eq.s32.totalorder %s101, 1
      %p984 = scmp.ne.s32.totalorder %s979, %s981
      %p985 = scmp.eq.s32.totalorder %s101, 0
      %p986 = por %p984, %p985
      %p987 = scmp.ne.s32.totalorder %s979, %s981
      %p988 = scmp.eq.s32.totalorder %s106, 1
      %p989 = por %p987, %p988
      %p990 = scmp.ne.s32.totalorder %s981, %s982
      %p991 = scmp.eq.s32.totalorder %s106, 0
      %p992 = por %p990, %p991
      %p993 = scmp.ne.s32.totalorder %s981, %s982
      %p994 = scmp.eq.s32.totalorder %s107, 1
      %p995 = por %p993, %p994
      %p997 = scmp.ne.s32.totalorder %s982, %s996
      %p998 = scmp.eq.s32.totalorder %s107, 0
      %p999 = por %p997, %p998
      %s1001 = sadd.s32 %s1000, 1
      %p1004 = scmp.eq.s32.totalorder %s101, 1
      %p1005 = scmp.ne.s32.totalorder %s1000, %s1002
      %p1006 = scmp.eq.s32.totalorder %s101, 0
      %p1007 = por %p1005, %p1006
      %p1008 = scmp.ne.s32.totalorder %s1000, %s1002
      %p1009 = scmp.eq.s32.totalorder %s106, 1
      %p1010 = por %p1008, %p1009
      %p1011 = scmp.ne.s32.totalorder %s1002, %s1003
      %p1012 = scmp.eq.s32.totalorder %s106, 0
      %p1013 = por %p1011, %p1012
      %p1014 = scmp.ne.s32.totalorder %s1002, %s1003
      %p1015 = scmp.eq.s32.totalorder %s107, 1
      %p1016 = por %p1014, %p1015
      %p1018 = scmp.ne.s32.totalorder %s1003, %s1017
      %p1019 = scmp.eq.s32.totalorder %s107, 0
      %p1020 = por %p1018, %p1019
      %s1022 = sadd.s32 %s1021, 1
      %p1025 = scmp.eq.s32.totalorder %s101, 1
      %p1026 = scmp.ne.s32.totalorder %s1021, %s1023
      %p1027 = scmp.eq.s32.totalorder %s101, 0
      %p1028 = por %p1026, %p1027
      %p1029 = scmp.ne.s32.totalorder %s1021, %s1023
      %p1030 = scmp.eq.s32.totalorder %s106, 1
      %p1031 = por %p1029, %p1030
      %p1032 = scmp.ne.s32.totalorder %s1023, %s1024
      %p1033 = scmp.eq.s32.totalorder %s106, 0
      %p1034 = por %p1032, %p1033
      %p1035 = scmp.ne.s32.totalorder %s1023, %s1024
      %p1036 = scmp.eq.s32.totalorder %s107, 1
      %p1037 = por %p1035, %p1036
      %p1039 = scmp.ne.s32.totalorder %s1024, %s1038
      %p1040 = scmp.eq.s32.totalorder %s107, 0
      %p1041 = por %p1039, %p1040
      %s1042 = ssub.s32 %s101, %s108
      %p1043 = scmp.eq.s32.totalorder %s1042, 0
      %s1045 = sadd.s32 %s1044, 1
      %s1046 = scalar_select %p1043, %s1044, %s1045
      %p1049 = pneg %p1043
      %p1050 = scmp.eq.s32.totalorder %s101, 1
      %p1051 = por %p1049, %p1050
      %p1052 = scmp.ne.s32.totalorder %s1044, %s1047
      %p1053 = scmp.eq.s32.totalorder %s101, 0
      %p1054 = por %p1052, %p1053
      %p1055 = scmp.ne.s32.totalorder %s1044, %s1047
      %p1056 = scmp.eq.s32.totalorder %s106, 1
      %p1057 = por %p1055, %p1056
      %p1058 = scmp.ne.s32.totalorder %s1047, %s1048
      %p1059 = scmp.eq.s32.totalorder %s106, 0
      %p1060 = por %p1058, %p1059
      %p1061 = scmp.ne.s32.totalorder %s1047, %s1048
      %p1062 = scmp.eq.s32.totalorder %s107, 1
      %p1063 = por %p1061, %p1062
      %p1065 = scmp.ne.s32.totalorder %s1048, %s1064
      %p1066 = scmp.eq.s32.totalorder %s107, 0
      %p1067 = por %p1065, %p1066
      %p1068 = scmp.le.s32.totalorder 1, %s101
      %p1069 = scmp.lt.s32.totalorder %s101, 3
      %p1070 = pnand %p1068, %p1069
      %p1071 = pneg %p1070
      // Predicated region
      $region9: #{transformer_forward.1} parent=5 // pred_check
        _
      $region10: #{transformer_forward.1} parent=5 // pred_check_branch
        %1073 = sbr.rel (%p1070) target = $region12
      $region11: #{transformer_forward.1} parent=5 // pred_region
        %s1074 = ssub.s32 %s101, 1
        // Predicated region
        $region13: #{transformer_forward.1} parent=11 // pred_check
          %p1075 = pneg %p278
        $region14: #{transformer_forward.1} parent=11 // pred_check_branch
          %1077 = sbr.rel (%p1075) target = $region16
        $region15: #{transformer_forward.1} parent=11 // pred_region
          _
        $region16: #{transformer_forward.1} parent=11 // pred_fallthru
          _
        // Predicated region
        $region17: #{transformer_forward.1} parent=11 // pred_check
          %p1078 = pneg %p299
        $region18: #{transformer_forward.1} parent=11 // pred_check_branch
          %1080 = sbr.rel (%p1078) target = $region20
        $region19: #{transformer_forward.1} parent=11 // pred_region
          _
        $region20: #{transformer_forward.1} parent=11 // pred_fallthru
          _
        // Predicated region
        $region21: #{transformer_forward.1} parent=11 // pred_check
          %p1081 = pneg %p320
        $region22: #{transformer_forward.1} parent=11 // pred_check_branch
          %1083 = sbr.rel (%p1081) target = $region24
        $region23: #{transformer_forward.1} parent=11 // pred_region
          _
        $region24: #{transformer_forward.1} parent=11 // pred_fallthru
          _
        // Predicated region
        $region25: #{transformer_forward.1} parent=11 // pred_check
          %p1084 = pneg %p341
        $region26: #{transformer_forward.1} parent=11 // pred_check_branch
          %1086 = sbr.rel (%p1084) target = $region28
        $region27: #{transformer_forward.1} parent=11 // pred_region
          _
        $region28: #{transformer_forward.1} parent=11 // pred_fallthru
          _
        // Predicated region
        $region29: #{transformer_forward.1} parent=11 // pred_check
          %p1087 = pneg %p362
        $region30: #{transformer_forward.1} parent=11 // pred_check_branch
          %1089 = sbr.rel (%p1087) target = $region32
        $region31: #{transformer_forward.1} parent=11 // pred_region
          %s1091 = ssub.s32 32, 32
          %1092 = vsyncadd [#allocation3], %s1091
          %s1093 = sshll.u32 [#allocation2], 4
          %s1094 = int_to_ptr.vmem [resolvable:$true] %s1093
          %1099 = dma.hbm_to_vmem [thread:$0]  %s21, 32, %s1094, [#allocation3], 16, 16, 1
        $region32: #{transformer_forward.1} parent=11 // pred_fallthru
          _
        // Predicated region
        $region33: #{transformer_forward.1} parent=11 // pred_check
          %p1100 = pneg %p383
        $region34: #{transformer_forward.1} parent=11 // pred_check_branch
          %1102 = sbr.rel (%p1100) target = $region36
        $region35: #{transformer_forward.1} parent=11 // pred_region
          _
        $region36: #{transformer_forward.1} parent=11 // pred_fallthru
          _
        // Predicated region
        $region37: #{transformer_forward.1} parent=11 // pred_check
          %p1103 = pneg %p404
        $region38: #{transformer_forward.1} parent=11 // pred_check_branch
          %1105 = sbr.rel (%p1103) target = $region40
        $region39: #{transformer_forward.1} parent=11 // pred_region
          %s1107 = ssub.s32 32, 32
          %1108 = vsyncadd [#allocation5], %s1107
          %s1109 = sshll.u32 [#allocation4], 4
          %s1110 = int_to_ptr.vmem [resolvable:$true] %s1109
          %1115 = dma.hbm_to_vmem [thread:$0]  %s25, 32, %s1110, [#allocation5], 16, 16, 1
        $region40: #{transformer_forward.1} parent=11 // pred_fallthru
          _
        // Predicated region
        $region41: #{transformer_forward.1} parent=11 // pred_check
          %p1116 = pneg %p425
        $region42: #{transformer_forward.1} parent=11 // pred_check_branch
          %1118 = sbr.rel (%p1116) target = $region44
        $region43: #{transformer_forward.1} parent=11 // pred_region
          %s1120 = ssub.s32 32, 32
          %1121 = vsyncadd [#allocation5], %s1120
          %s1122 = sshll.u32 [#allocation6], 4
          %s1123 = int_to_ptr.vmem [resolvable:$true] %s1122
          %1128 = dma.hbm_to_vmem [thread:$0]  %s27, 32, %s1123, [#allocation5], 16, 16, 1
        $region44: #{transformer_forward.1} parent=11 // pred_fallthru
          _
        // Predicated region
        $region45: #{transformer_forward.1} parent=11 // pred_check
          %p1129 = pneg %p446
        $region46: #{transformer_forward.1} parent=11 // pred_check_branch
          %1131 = sbr.rel (%p1129) target = $region48
        $region47: #{transformer_forward.1} parent=11 // pred_region
          %s1133 = ssub.s32 32, 32
          %1134 = vsyncadd [#allocation8], %s1133
          %s1135 = sshll.u32 [#allocation7], 4
          %s1136 = int_to_ptr.vmem [resolvable:$true] %s1135
          %1141 = dma.hbm_to_vmem [thread:$0]  %s29, 32, %s1136, [#allocation8], 16, 16, 1
        $region48: #{transformer_forward.1} parent=11 // pred_fallthru
          _
        // Predicated region
        $region49: #{transformer_forward.1} parent=11 // pred_check
          %p1142 = pneg %p467
        $region50: #{transformer_forward.1} parent=11 // pred_check_branch
          %1144 = sbr.rel (%p1142) target = $region52
        $region51: #{transformer_forward.1} parent=11 // pred_region
          _
        $region52: #{transformer_forward.1} parent=11 // pred_fallthru
          _
        // Predicated region
        $region53: #{transformer_forward.1} parent=11 // pred_check
          %p1145 = pneg %p488
        $region54: #{transformer_forward.1} parent=11 // pred_check_branch
          %1147 = sbr.rel (%p1145) target = $region56
        $region55: #{transformer_forward.1} parent=11 // pred_region
          %s1149 = ssub.s32 32, 32
          %1150 = vsyncadd [#allocation8], %s1149
          %s1151 = sshll.u32 [#allocation9], 4
          %s1152 = int_to_ptr.vmem [resolvable:$true] %s1151
          %1157 = dma.hbm_to_vmem [thread:$0]  %s33, 32, %s1152, [#allocation8], 16, 16, 1
        $region56: #{transformer_forward.1} parent=11 // pred_fallthru
          _
        // Predicated region
        $region57: #{transformer_forward.1} parent=11 // pred_check
          %p1158 = pneg %p509
        $region58: #{transformer_forward.1} parent=11 // pred_check_branch
          %1160 = sbr.rel (%p1158) target = $region60
        $region59: #{transformer_forward.1} parent=11 // pred_region
          _
        $region60: #{transformer_forward.1} parent=11 // pred_fallthru
          _
        // Predicated region
        $region61: #{transformer_forward.1} parent=11 // pred_check
          %p1161 = pneg %p530
        $region62: #{transformer_forward.1} parent=11 // pred_check_branch
          %1163 = sbr.rel (%p1161) target = $region64
        $region63: #{transformer_forward.1} parent=11 // pred_region
          %s1165 = ssub.s32 32, 32
          %1166 = vsyncadd [#allocation11], %s1165
          %s1167 = sshll.u32 [#allocation10], 4
          %s1168 = int_to_ptr.vmem [resolvable:$true] %s1167
          %1173 = dma.hbm_to_vmem [thread:$0]  %s37, 32, %s1168, [#allocation11], 16, 16, 1
        $region64: #{transformer_forward.1} parent=11 // pred_fallthru
          _
        // Predicated region
        $region65: #{transformer_forward.1} parent=11 // pred_check
          %p1174 = pneg %p551
        $region66: #{transformer_forward.1} parent=11 // pred_check_branch
          %1176 = sbr.rel (%p1174) target = $region68
        $region67: #{transformer_forward.1} parent=11 // pred_region
          %s1178 = ssub.s32 32, 32
          %1179 = vsyncadd [#allocation11], %s1178
          %s1180 = sshll.u32 [#allocation12], 4
          %s1181 = int_to_ptr.vmem [resolvable:$true] %s1180
          %1186 = dma.hbm_to_vmem [thread:$0]  %s39, 32, %s1181, [#allocation11], 16, 16, 1
        $region68: #{transformer_forward.1} parent=11 // pred_fallthru
          _
        // Predicated region
        $region69: #{transformer_forward.1} parent=11 // pred_check
          %p1187 = pneg %p572
        $region70: #{transformer_forward.1} parent=11 // pred_check_branch
          %1189 = sbr.rel (%p1187) target = $region72
        $region71: #{transformer_forward.1} parent=11 // pred_region
          %s1191 = ssub.s32 32, 32
          %1192 = vsyncadd [#allocation14], %s1191
          %s1193 = sshll.u32 [#allocation13], 4
          %s1194 = int_to_ptr.vmem [resolvable:$true] %s1193
          %1199 = dma.hbm_to_vmem [thread:$0]  %s41, 32, %s1194, [#allocation14], 16, 16, 1
        $region72: #{transformer_forward.1} parent=11 // pred_fallthru
          _
        // Predicated region
        $region73: #{transformer_forward.1} parent=11 // pred_check
          %p1200 = pneg %p593
        $region74: #{transformer_forward.1} parent=11 // pred_check_branch
          %1202 = sbr.rel (%p1200) target = $region76
        $region75: #{transformer_forward.1} parent=11 // pred_region
          _
        $region76: #{transformer_forward.1} parent=11 // pred_fallthru
          _
        // Predicated region
        $region77: #{transformer_forward.1} parent=11 // pred_check
          %p1203 = pneg %p614
        $region78: #{transformer_forward.1} parent=11 // pred_check_branch
          %1205 = sbr.rel (%p1203) target = $region80
        $region79: #{transformer_forward.1} parent=11 // pred_region
          _
        $region80: #{transformer_forward.1} parent=11 // pred_fallthru
          _
        // Predicated region
        $region81: #{transformer_forward.1} parent=11 // pred_check
          %p1206 = pneg %p635
        $region82: #{transformer_forward.1} parent=11 // pred_check_branch
          %1208 = sbr.rel (%p1206) target = $region84
        $region83: #{transformer_forward.1} parent=11 // pred_region
          _
        $region84: #{transformer_forward.1} parent=11 // pred_fallthru
          _
        // Predicated region
        $region85: #{transformer_forward.1} parent=11 // pred_check
          %p1209 = pneg %p656
        $region86: #{transformer_forward.1} parent=11 // pred_check_branch
          %1211 = sbr.rel (%p1209) target = $region88
        $region87: #{transformer_forward.1} parent=11 // pred_region
          _
        $region88: #{transformer_forward.1} parent=11 // pred_fallthru
          _
        // Predicated region
        $region89: #{transformer_forward.1} parent=11 // pred_check
          %p1212 = pneg %p677
        $region90: #{transformer_forward.1} parent=11 // pred_check_branch
          %1214 = sbr.rel (%p1212) target = $region92
        $region91: #{transformer_forward.1} parent=11 // pred_region
          _
        $region92: #{transformer_forward.1} parent=11 // pred_fallthru
          _
        // Predicated region
        $region93: #{transformer_forward.1} parent=11 // pred_check
          %p1215 = pneg %p698
        $region94: #{transformer_forward.1} parent=11 // pred_check_branch
          %1217 = sbr.rel (%p1215) target = $region96
        $region95: #{transformer_forward.1} parent=11 // pred_region
          _
        $region96: #{transformer_forward.1} parent=11 // pred_fallthru
          _
        // Predicated region
        $region97: #{transformer_forward.1} parent=11 // pred_check
          %p1218 = pneg %p719
        $region98: #{transformer_forward.1} parent=11 // pred_check_branch
          %1220 = sbr.rel (%p1218) target = $region100
        $region99: #{transformer_forward.1} parent=11 // pred_region
          _
        $region100: #{transformer_forward.1} parent=11 // pred_fallthru
          _
        // Predicated region
        $region101: #{transformer_forward.1} parent=11 // pred_check
          %p1221 = pneg %p740
        $region102: #{transformer_forward.1} parent=11 // pred_check_branch
          %1223 = sbr.rel (%p1221) target = $region104
        $region103: #{transformer_forward.1} parent=11 // pred_region
          %s1225 = ssub.s32 32, 32
          %1226 = vsyncadd [#allocation14], %s1225
          %s1227 = sshll.u32 [#allocation15], 4
          %s1228 = int_to_ptr.vmem [resolvable:$true] %s1227
          %1233 = dma.hbm_to_vmem [thread:$0]  %s57, 32, %s1228, [#allocation14], 16, 16, 1
        $region104: #{transformer_forward.1} parent=11 // pred_fallthru
          _
        // Predicated region
        $region105: #{transformer_forward.1} parent=11 // pred_check
          %p1234 = pneg %p761
        $region106: #{transformer_forward.1} parent=11 // pred_check_branch
          %1236 = sbr.rel (%p1234) target = $region108
        $region107: #{transformer_forward.1} parent=11 // pred_region
          _
        $region108: #{transformer_forward.1} parent=11 // pred_fallthru
          _
        // Predicated region
        $region109: #{transformer_forward.1} parent=11 // pred_check
          %p1237 = pneg %p782
        $region110: #{transformer_forward.1} parent=11 // pred_check_branch
          %1239 = sbr.rel (%p1237) target = $region112
        $region111: #{transformer_forward.1} parent=11 // pred_region
          %s1241 = ssub.s32 32, 32
          %1242 = vsyncadd [#allocation17], %s1241
          %s1243 = sshll.u32 [#allocation16], 4
          %s1244 = int_to_ptr.vmem [resolvable:$true] %s1243
          %1249 = dma.hbm_to_vmem [thread:$0]  %s61, 32, %s1244, [#allocation17], 16, 16, 1
        $region112: #{transformer_forward.1} parent=11 // pred_fallthru
          _
        // Predicated region
        $region113: #{transformer_forward.1} parent=11 // pred_check
          %p1250 = pneg %p803
        $region114: #{transformer_forward.1} parent=11 // pred_check_branch
          %1252 = sbr.rel (%p1250) target = $region116
        $region115: #{transformer_forward.1} parent=11 // pred_region
          _
        $region116: #{transformer_forward.1} parent=11 // pred_fallthru
          _
        // Predicated region
        $region117: #{transformer_forward.1} parent=11 // pred_check
          %p1253 = pneg %p824
        $region118: #{transformer_forward.1} parent=11 // pred_check_branch
          %1255 = sbr.rel (%p1253) target = $region120
        $region119: #{transformer_forward.1} parent=11 // pred_region
          %s1257 = ssub.s32 32, 32
          %1258 = vsyncadd [#allocation17], %s1257
          %s1259 = sshll.u32 [#allocation18], 4
          %s1260 = int_to_ptr.vmem [resolvable:$true] %s1259
          %1265 = dma.hbm_to_vmem [thread:$0]  %s65, 32, %s1260, [#allocation17], 16, 16, 1
        $region120: #{transformer_forward.1} parent=11 // pred_fallthru
          _
        // Predicated region
        $region121: #{transformer_forward.1} parent=11 // pred_check
          %p1266 = pneg %p845
        $region122: #{transformer_forward.1} parent=11 // pred_check_branch
          %1268 = sbr.rel (%p1266) target = $region124
        $region123: #{transformer_forward.1} parent=11 // pred_region
          %s1270 = ssub.s32 32, 32
          %1271 = vsyncadd [#allocation20], %s1270
          %s1272 = sshll.u32 [#allocation19], 4
          %s1273 = int_to_ptr.vmem [resolvable:$true] %s1272
          %1278 = dma.hbm_to_vmem [thread:$0]  %s67, 32, %s1273, [#allocation20], 16, 16, 1
        $region124: #{transformer_forward.1} parent=11 // pred_fallthru
          _
        // Predicated region
        $region125: #{transformer_forward.1} parent=11 // pred_check
          %p1279 = pneg %p866
        $region126: #{transformer_forward.1} parent=11 // pred_check_branch
          %1281 = sbr.rel (%p1279) target = $region128
        $region127: #{transformer_forward.1} parent=11 // pred_region
          %s1283 = ssub.s32 32, 32
          %1284 = vsyncadd [#allocation20], %s1283
          %s1285 = sshll.u32 [#allocation21], 4
          %s1286 = int_to_ptr.vmem [resolvable:$true] %s1285
          %1291 = dma.hbm_to_vmem [thread:$0]  %s69, 32, %s1286, [#allocation20], 16, 16, 1
        $region128: #{transformer_forward.1} parent=11 // pred_fallthru
          _
        // Predicated region
        $region129: #{transformer_forward.1} parent=11 // pred_check
          %p1292 = pneg %p887
        $region130: #{transformer_forward.1} parent=11 // pred_check_branch
          %1294 = sbr.rel (%p1292) target = $region132
        $region131: #{transformer_forward.1} parent=11 // pred_region
          _
        $region132: #{transformer_forward.1} parent=11 // pred_fallthru
          _
        // Predicated region
        $region133: #{transformer_forward.1} parent=11 // pred_check
          %p1295 = pneg %p908
        $region134: #{transformer_forward.1} parent=11 // pred_check_branch
          %1297 = sbr.rel (%p1295) target = $region136
        $region135: #{transformer_forward.1} parent=11 // pred_region
          _
        $region136: #{transformer_forward.1} parent=11 // pred_fallthru
          _
        // Predicated region
        $region137: #{transformer_forward.1} parent=11 // pred_check
          %p1298 = pneg %p929
        $region138: #{transformer_forward.1} parent=11 // pred_check_branch
          %1300 = sbr.rel (%p1298) target = $region140
        $region139: #{transformer_forward.1} parent=11 // pred_region
          _
        $region140: #{transformer_forward.1} parent=11 // pred_fallthru
          _
        // Predicated region
        $region141: #{transformer_forward.1} parent=11 // pred_check
          %p1301 = pneg %p950
        $region142: #{transformer_forward.1} parent=11 // pred_check_branch
          %1303 = sbr.rel (%p1301) target = $region144
        $region143: #{transformer_forward.1} parent=11 // pred_region
          %s1305 = ssub.s32 32, 32
          %1306 = vsyncadd [#allocation23], %s1305
          %s1307 = sshll.u32 [#allocation22], 4
          %s1308 = int_to_ptr.vmem [resolvable:$true] %s1307
          %1313 = dma.hbm_to_vmem [thread:$0]  %s77, 32, %s1308, [#allocation23], 16, 16, 1
        $region144: #{transformer_forward.1} parent=11 // pred_fallthru
          _
        // Predicated region
        $region145: #{transformer_forward.1} parent=11 // pred_check
          %p1314 = pneg %p971
        $region146: #{transformer_forward.1} parent=11 // pred_check_branch
          %1316 = sbr.rel (%p1314) target = $region148
        $region147: #{transformer_forward.1} parent=11 // pred_region
          _
        $region148: #{transformer_forward.1} parent=11 // pred_fallthru
          _
        // Predicated region
        $region149: #{transformer_forward.1} parent=11 // pred_check
          %p1317 = pneg %p992
        $region150: #{transformer_forward.1} parent=11 // pred_check_branch
          %1319 = sbr.rel (%p1317) target = $region152
        $region151: #{transformer_forward.1} parent=11 // pred_region
          %s1321 = ssub.s32 32, 32
          %1322 = vsyncadd [#allocation23], %s1321
          %s1323 = sshll.u32 [#allocation24], 4
          %s1324 = int_to_ptr.vmem [resolvable:$true] %s1323
          %1329 = dma.hbm_to_vmem [thread:$0]  %s81, 32, %s1324, [#allocation23], 16, 16, 1
        $region152: #{transformer_forward.1} parent=11 // pred_fallthru
          _
        // Predicated region
        $region153: #{transformer_forward.1} parent=11 // pred_check
          %p1330 = pneg %p1013
        $region154: #{transformer_forward.1} parent=11 // pred_check_branch
          %1332 = sbr.rel (%p1330) target = $region156
        $region155: #{transformer_forward.1} parent=11 // pred_region
          _
        $region156: #{transformer_forward.1} parent=11 // pred_fallthru
          _
        // Predicated region
        $region157: #{transformer_forward.1} parent=11 // pred_check
          %p1333 = pneg %p1034
        $region158: #{transformer_forward.1} parent=11 // pred_check_branch
          %1335 = sbr.rel (%p1333) target = $region160
        $region159: #{transformer_forward.1} parent=11 // pred_region
          _
        $region160: #{transformer_forward.1} parent=11 // pred_fallthru
          _
      $region12: #{transformer_forward.1} parent=5 // pred_fallthru
        _
      %p1336 = scmp.lt.s32.totalorder %s101, 2
      // Predicated region
      $region161: #{transformer_forward.1} parent=5 // pred_check
        %p1337 = pneg %p1336
      $region162: #{transformer_forward.1} parent=5 // pred_check_branch
        %1339 = sbr.rel (%p1337) target = $region164
      $region163: #{transformer_forward.1} parent=5 // pred_region
        // Predicated region
        $region165: #{transformer_forward.1} parent=163 // pred_check
          %p1340 = pneg %p121
        $region166: #{transformer_forward.1} parent=163 // pred_check_branch
          %1342 = sbr.rel (%p1340) target = $region168
        $region167: #{transformer_forward.1} parent=163 // pred_region
          %p1343 = scmp.lt.s32.totalorder %s101, 1
          %s1344 = scalar_select %p1343, %s101, 1
          %s1345 = smul.addr %s1344, 8
          %s1346 = scalar_lea.vmem %s1, %s1345
        $region168: #{transformer_forward.1} parent=163 // pred_fallthru
          _
        // Predicated region
        $region169: #{transformer_forward.1} parent=163 // pred_check
          %p1347 = pneg %p147
        $region170: #{transformer_forward.1} parent=163 // pred_check_branch
          %1349 = sbr.rel (%p1347) target = $region172
        $region171: #{transformer_forward.1} parent=163 // pred_region
          %p1350 = scmp.lt.s32.totalorder %s101, 1
          %s1351 = scalar_select %p1350, %s101, 1
          %s1352 = smul.addr %s1351, 8
          %s1353 = scalar_lea.vmem %s3, %s1352
        $region172: #{transformer_forward.1} parent=163 // pred_fallthru
          _
        // Predicated region
        $region173: #{transformer_forward.1} parent=163 // pred_check
          %p1354 = pneg %p173
        $region174: #{transformer_forward.1} parent=163 // pred_check_branch
          %1356 = sbr.rel (%p1354) target = $region176
        $region175: #{transformer_forward.1} parent=163 // pred_region
          %p1357 = scmp.lt.s32.totalorder %s101, 1
          %s1358 = scalar_select %p1357, %s101, 1
          %s1359 = smul.addr %s1358, 8
          %s1360 = scalar_lea.vmem %s5, %s1359
        $region176: #{transformer_forward.1} parent=163 // pred_fallthru
          _
        // Predicated region
        $region177: #{transformer_forward.1} parent=163 // pred_check
          %p1361 = pneg %p199
        $region178: #{transformer_forward.1} parent=163 // pred_check_branch
          %1363 = sbr.rel (%p1361) target = $region180
        $region179: #{transformer_forward.1} parent=163 // pred_region
          %p1364 = scmp.lt.s32.totalorder %s101, 1
          %s1365 = scalar_select %p1364, %s101, 1
          %s1366 = smul.addr %s1365, 8
          %s1367 = scalar_lea.vmem %s7, %s1366
        $region180: #{transformer_forward.1} parent=163 // pred_fallthru
          _
        // Predicated region
        $region181: #{transformer_forward.1} parent=163 // pred_check
          %p1368 = pneg %p225
        $region182: #{transformer_forward.1} parent=163 // pred_check_branch
          %1370 = sbr.rel (%p1368) target = $region184
        $region183: #{transformer_forward.1} parent=163 // pred_region
          %p1371 = scmp.lt.s32.totalorder %s101, 1
          %s1372 = scalar_select %p1371, %s101, 1
          %s1373 = scalar_lea.vmem %s9, %s1372
        $region184: #{transformer_forward.1} parent=163 // pred_fallthru
          _
        // Predicated region
        $region185: #{transformer_forward.1} parent=163 // pred_check
          %p1374 = pneg %p251
        $region186: #{transformer_forward.1} parent=163 // pred_check_branch
          %1376 = sbr.rel (%p1374) target = $region188
        $region187: #{transformer_forward.1} parent=163 // pred_region
          %p1377 = scmp.lt.s32.totalorder %s101, 1
          %s1378 = scalar_select %p1377, %s101, 1
          %s1379 = scalar_lea.vmem %s11, %s1378
        $region188: #{transformer_forward.1} parent=163 // pred_fallthru
          _
      $region164: #{transformer_forward.1} parent=5 // pred_fallthru
        _
      %p1380 = scmp.le.s32.totalorder 1, %s101
      %p1381 = scmp.lt.s32.totalorder %s101, 3
      %p1382 = pnand %p1380, %p1381
      %p1383 = pneg %p1382
      // Predicated region
      $region189: #{transformer_forward.1} parent=5 // pred_check
        _
      $region190: #{transformer_forward.1} parent=5 // pred_check_branch
        %1385 = sbr.rel (%p1382) target = $region192
      $region191: #{transformer_forward.1} parent=5 // pred_region
        %s1386 = ssub.s32 %s101, 1
        // Predicated region
        $region193: #{transformer_forward.1} parent=191 // pred_check
          %p1387 = pneg %p362
        $region194: #{transformer_forward.1} parent=191 // pred_check_branch
          %1389 = sbr.rel (%p1387) target = $region196
        $region195: #{transformer_forward.1} parent=191 // pred_region
          %1390 = dma.done [#allocation3], 32
        $region196: #{transformer_forward.1} parent=191 // pred_fallthru
          _
        // Predicated region
        $region197: #{transformer_forward.1} parent=191 // pred_check
          %p1391 = pneg %p404
        $region198: #{transformer_forward.1} parent=191 // pred_check_branch
          %1393 = sbr.rel (%p1391) target = $region200
        $region199: #{transformer_forward.1} parent=191 // pred_region
          %1394 = dma.done [#allocation5], 32
        $region200: #{transformer_forward.1} parent=191 // pred_fallthru
          _
        // Predicated region
        $region201: #{transformer_forward.1} parent=191 // pred_check
          %p1395 = pneg %p425
        $region202: #{transformer_forward.1} parent=191 // pred_check_branch
          %1397 = sbr.rel (%p1395) target = $region204
        $region203: #{transformer_forward.1} parent=191 // pred_region
          %1398 = dma.done [#allocation5], 32
        $region204: #{transformer_forward.1} parent=191 // pred_fallthru
          _
        // Predicated region
        $region205: #{transformer_forward.1} parent=191 // pred_check
          %p1399 = pneg %p446
        $region206: #{transformer_forward.1} parent=191 // pred_check_branch
          %1401 = sbr.rel (%p1399) target = $region208
        $region207: #{transformer_forward.1} parent=191 // pred_region
          %1402 = dma.done [#allocation8], 32
        $region208: #{transformer_forward.1} parent=191 // pred_fallthru
          _
        // Predicated region
        $region209: #{transformer_forward.1} parent=191 // pred_check
          %p1403 = pneg %p488
        $region210: #{transformer_forward.1} parent=191 // pred_check_branch
          %1405 = sbr.rel (%p1403) target = $region212
        $region211: #{transformer_forward.1} parent=191 // pred_region
          %1406 = dma.done [#allocation8], 32
        $region212: #{transformer_forward.1} parent=191 // pred_fallthru
          _
        // Predicated region
        $region213: #{transformer_forward.1} parent=191 // pred_check
          %p1407 = pneg %p530
        $region214: #{transformer_forward.1} parent=191 // pred_check_branch
          %1409 = sbr.rel (%p1407) target = $region216
        $region215: #{transformer_forward.1} parent=191 // pred_region
          %1410 = dma.done [#allocation11], 32
        $region216: #{transformer_forward.1} parent=191 // pred_fallthru
          _
        // Predicated region
        $region217: #{transformer_forward.1} parent=191 // pred_check
          %p1411 = pneg %p551
        $region218: #{transformer_forward.1} parent=191 // pred_check_branch
          %1413 = sbr.rel (%p1411) target = $region220
        $region219: #{transformer_forward.1} parent=191 // pred_region
          %1414 = dma.done [#allocation11], 32
        $region220: #{transformer_forward.1} parent=191 // pred_fallthru
          _
        // Predicated region
        $region221: #{transformer_forward.1} parent=191 // pred_check
          %p1415 = pneg %p572
        $region222: #{transformer_forward.1} parent=191 // pred_check_branch
          %1417 = sbr.rel (%p1415) target = $region224
        $region223: #{transformer_forward.1} parent=191 // pred_region
          %1418 = dma.done [#allocation14], 32
        $region224: #{transformer_forward.1} parent=191 // pred_fallthru
          _
        // Predicated region
        $region225: #{transformer_forward.1} parent=191 // pred_check
          %p1419 = pneg %p740
        $region226: #{transformer_forward.1} parent=191 // pred_check_branch
          %1421 = sbr.rel (%p1419) target = $region228
        $region227: #{transformer_forward.1} parent=191 // pred_region
          %1422 = dma.done [#allocation14], 32
        $region228: #{transformer_forward.1} parent=191 // pred_fallthru
          _
        // Predicated region
        $region229: #{transformer_forward.1} parent=191 // pred_check
          %p1423 = pneg %p782
        $region230: #{transformer_forward.1} parent=191 // pred_check_branch
          %1425 = sbr.rel (%p1423) target = $region232
        $region231: #{transformer_forward.1} parent=191 // pred_region
          %1426 = dma.done [#allocation17], 32
        $region232: #{transformer_forward.1} parent=191 // pred_fallthru
          _
        // Predicated region
        $region233: #{transformer_forward.1} parent=191 // pred_check
          %p1427 = pneg %p824
        $region234: #{transformer_forward.1} parent=191 // pred_check_branch
          %1429 = sbr.rel (%p1427) target = $region236
        $region235: #{transformer_forward.1} parent=191 // pred_region
          %1430 = dma.done [#allocation17], 32
        $region236: #{transformer_forward.1} parent=191 // pred_fallthru
          _
        // Predicated region
        $region237: #{transformer_forward.1} parent=191 // pred_check
          %p1431 = pneg %p845
        $region238: #{transformer_forward.1} parent=191 // pred_check_branch
          %1433 = sbr.rel (%p1431) target = $region240
        $region239: #{transformer_forward.1} parent=191 // pred_region
          %1434 = dma.done [#allocation20], 32
        $region240: #{transformer_forward.1} parent=191 // pred_fallthru
          _
        // Predicated region
        $region241: #{transformer_forward.1} parent=191 // pred_check
          %p1435 = pneg %p866
        $region242: #{transformer_forward.1} parent=191 // pred_check_branch
          %1437 = sbr.rel (%p1435) target = $region244
        $region243: #{transformer_forward.1} parent=191 // pred_region
          %1438 = dma.done [#allocation20], 32
        $region244: #{transformer_forward.1} parent=191 // pred_fallthru
          _
        // Predicated region
        $region245: #{transformer_forward.1} parent=191 // pred_check
          %p1439 = pneg %p950
        $region246: #{transformer_forward.1} parent=191 // pred_check_branch
          %1441 = sbr.rel (%p1439) target = $region248
        $region247: #{transformer_forward.1} parent=191 // pred_region
          %1442 = dma.done [#allocation23], 32
        $region248: #{transformer_forward.1} parent=191 // pred_fallthru
          _
        // Predicated region
        $region249: #{transformer_forward.1} parent=191 // pred_check
          %p1443 = pneg %p992
        $region250: #{transformer_forward.1} parent=191 // pred_check_branch
          %1445 = sbr.rel (%p1443) target = $region252
        $region251: #{transformer_forward.1} parent=191 // pred_region
          %1446 = dma.done [#allocation23], 32
        $region252: #{transformer_forward.1} parent=191 // pred_fallthru
          _
        %p1447 = scmp.lt.s32.totalorder %s106, 1
        %s1448 = scalar_select %p1447, %s106, 1
        %s1449 = smul.addr %s1448, 8
        %s1450 = scalar_lea.vmem %s1, %s1449
        %p1451 = pneg %p127
        %p1452 = pneg %p124
        %p1453 = scmp.lt.s32.totalorder %s106, 1
        %s1454 = scalar_select %p1453, %s106, 1
        %s1455 = smul.addr %s1454, 8
        %s1456 = scalar_lea.vmem %s3, %s1455
        %p1457 = pneg %p153
        %p1458 = pneg %p150
        %p1459 = scmp.lt.s32.totalorder %s106, 1
        %s1460 = scalar_select %p1459, %s106, 1
        %s1461 = smul.addr %s1460, 8
        %s1462 = scalar_lea.vmem %s5, %s1461
        %p1463 = pneg %p179
        %p1464 = pneg %p176
        %p1465 = scmp.lt.s32.totalorder %s106, 1
        %s1466 = scalar_select %p1465, %s106, 1
        %s1467 = smul.addr %s1466, 8
        %s1468 = scalar_lea.vmem %s7, %s1467
        %p1469 = pneg %p205
        %p1470 = pneg %p202
        %p1471 = scmp.lt.s32.totalorder %s106, 1
        %s1472 = scalar_select %p1471, %s106, 1
        %s1473 = scalar_lea.vmem %s9, %s1472
        %p1474 = pneg %p231
        %p1475 = pneg %p228
        %p1476 = scmp.lt.s32.totalorder %s106, 1
        %s1477 = scalar_select %p1476, %s106, 1
        %s1478 = scalar_lea.vmem %s11, %s1477
        %p1479 = pneg %p257
        %p1480 = pneg %p254
        %p1481 = pneg %p278
        %p1482 = pneg %p275
        %p1483 = pneg %p299
        %p1484 = pneg %p296
        %p1485 = pneg %p320
        %p1486 = pneg %p317
        %p1487 = pneg %p341
        %p1488 = pneg %p338
        %p1489 = pneg %p362
        %p1490 = pneg %p359
        %p1491 = pneg %p383
        %p1492 = pneg %p380
        %p1493 = pneg %p404
        %p1494 = pneg %p401
        %p1495 = pneg %p425
        %p1496 = pneg %p422
        %p1497 = pneg %p446
        %p1498 = pneg %p443
        %p1499 = pneg %p467
        %p1500 = pneg %p464
        %p1501 = pneg %p488
        %p1502 = pneg %p485
        %p1503 = pneg %p509
        %p1504 = pneg %p506
        %p1505 = pneg %p530
        %p1506 = pneg %p527
        %p1507 = pneg %p551
        %p1508 = pneg %p548
        %p1509 = pneg %p572
        %p1510 = pneg %p569
        %p1511 = pneg %p593
        %p1512 = pneg %p590
        %p1513 = pneg %p614
        %p1514 = pneg %p611
        %p1515 = pneg %p635
        %p1516 = pneg %p632
        %p1517 = pneg %p656
        %p1518 = pneg %p653
        %p1519 = pneg %p677
        %p1520 = pneg %p674
        %p1521 = pneg %p698
        %p1522 = pneg %p695
        %p1523 = pneg %p719
        %p1524 = pneg %p716
        %p1525 = pneg %p740
        %p1526 = pneg %p737
        %p1527 = pneg %p761
        %p1528 = pneg %p758
        %p1529 = pneg %p782
        %p1530 = pneg %p779
        %p1531 = pneg %p803
        %p1532 = pneg %p800
        %p1533 = pneg %p824
        %p1534 = pneg %p821
        %p1535 = pneg %p845
        %p1536 = pneg %p842
        %p1537 = pneg %p866
        %p1538 = pneg %p863
        %p1539 = pneg %p887
        %p1540 = pneg %p884
        %p1541 = pneg %p908
        %p1542 = pneg %p905
        %p1543 = pneg %p929
        %p1544 = pneg %p926
        %p1545 = pneg %p950
        %p1546 = pneg %p947
        %p1547 = pneg %p971
        %p1548 = pneg %p968
        %p1549 = pneg %p992
        %p1550 = pneg %p989
        %p1551 = pneg %p1013
        %p1552 = pneg %p1010
        %p1553 = pneg %p1034
        %p1554 = pneg %p1031
        %p1555 = pneg %p1060
        %p1556 = pneg %p1057
        %p1557 = scmp.lt.s32.totalorder %s106, 1
        %s1558 = scalar_select %p1557, %s106, 1
        %s1559 = smul.addr %s1558, 8
        %s1560 = scalar_lea.vmem %s87, %s1559
        %p1561 = scmp.lt.s32.totalorder %s106, 1
        %s1562 = scalar_select %p1561, %s106, 1
        %s1563 = smul.addr %s1562, 8
        %s1564 = scalar_lea.vmem %s1, %s1563
        %p1565 = scmp.lt.s32.totalorder %s106, 1
        %s1566 = scalar_select %p1565, %s106, 1
        %s1567 = smul.addr %s1566, 8
        %s1568 = scalar_lea.vmem %s3, %s1567
        %p1569 = scmp.lt.s32.totalorder %s106, 1
        %s1570 = scalar_select %p1569, %s106, 1
        %s1571 = smul.addr %s1570, 8
        %s1572 = scalar_lea.vmem %s5, %s1571
        %p1573 = scmp.lt.s32.totalorder %s106, 1
        %s1574 = scalar_select %p1573, %s106, 1
        %s1575 = smul.addr %s1574, 8
        %s1576 = scalar_lea.vmem %s7, %s1575
        %p1577 = scmp.lt.s32.totalorder %s106, 1
        %s1578 = scalar_select %p1577, %s106, 1
        %s1579 = scalar_lea.vmem %s9, %s1578
        %p1580 = scmp.lt.s32.totalorder %s106, 1
        %s1581 = scalar_select %p1580, %s106, 1
        %s1582 = scalar_lea.vmem %s11, %s1581
        %p1583 = scmp.lt.s32.totalorder %s106, 1
        %s1584 = scalar_select %p1583, %s106, 1
        %s1585 = smul.addr %s1584, 8
        %s1586 = scalar_lea.vmem %s87, %s1585
        %v1587 = vld [vmem:[%s17] sm:$0xff]
        %v1588 = vld [vmem:[%s17 + $0x8] sm:$0xff]
        %v1589 = vld [vmem:[%s17 + $0x10] sm:$0xff]
        %v1590 = vld [vmem:[%s17 + $0x18] sm:$0xff]
        %v1591 = vld [vmem:[%s17 + $0x20] sm:$0xff]
        %v1592 = vld [vmem:[%s17 + $0x28] sm:$0xff]
        %v1593 = vld [vmem:[%s17 + $0x30] sm:$0xff]
        %v1594 = vld [vmem:[%s17 + $0x38] sm:$0xff]
        %v1595 = vld [vmem:[%s1564] sm:$0xff]
        %v1596 = vld [vmem:[%s1572] sm:$0xff]
        %v1597 = vld [vmem:[%s1568] sm:$0xff]
        %v1598 = vld [vmem:[%s13] sm:$0xff]
        %v1599 = vld [vmem:[%s13 + $0x8] sm:$0xff]
        %v1600 = vld [vmem:[%s13 + $0x10] sm:$0xff]
        %v1601 = vld [vmem:[%s13 + $0x18] sm:$0xff]
        %v1602 = vld [vmem:[%s13 + $0x20] sm:$0xff]
        %v1603 = vld [vmem:[%s13 + $0x28] sm:$0xff]
        %v1604 = vld [vmem:[%s13 + $0x30] sm:$0xff]
        %v1605 = vlaneseq
        %v1606 = vand.u32 %v1605, 127
        %1607 = vset.pattern.permute.xlu0 0
        %1608 = vperm.xlu0 %1607, %v1595
        %v1609 = vpop.permute.xlu0 %1608
        %vm1610 = vcmp.eq.s32.totalorder %v1606, %v1609
        %v1611 = vsel %vm1610, 1, 0
        %v1612 = vcvt.s32.f32 %v1611
        %1613 = vset.pattern.permute.xlu0 0
        %1614 = vperm.xlu0 %1613, %v1597
        %v1615 = vpop.permute.xlu0 %1614
        %vm1616 = vcmp.eq.s32.totalorder %v1606, %v1615
        %v1617 = vsel %vm1616, 1, 0
        %v1618 = vcvt.s32.f32 %v1617
        %vm1619 = vcmask 523264
        %v1621 = vsel %vm1619, %v1618, 0
        %1623 = vmatprep.subr.mxu0 0.0
        %1624 = vmatpush1.msra.mxu0 %v1587
        %1625 = vmatprep.subr.mxu0 0.0
        %1626 = vmatpush1.msra.mxu0 %v1588
        %1627 = vmatprep.subr.mxu0 0.0
        %1628 = vmatpush1.msra.mxu0 %v1589
        %1629 = vmatprep.subr.mxu0 0.0
        %1630 = vmatpush1.msra.mxu0 %v1590
        %1631 = vmatprep.subr.mxu0 0.0
        %1632 = vmatpush1.msra.mxu0 %v1591
        %1633 = vmatprep.subr.mxu0 0.0
        %1634 = vmatpush1.msra.mxu0 %v1592
        %1635 = vmatprep.subr.mxu0 0.0
        %1636 = vmatpush1.msra.mxu0 %v1593
        %1637 = vmatprep.subr.mxu0 0.0
        %1638 = vmatpush1.msra.mxu0 %v1594
        %1639 = vmatprep.subr.mxu0 0.0
        %1640 = vmatpush1.msra.mxu0 0.0
        %1641 = vmatprep.subr.mxu0 0.0
        %1642 = vmatpush1.msra.mxu0 0.0
        %1643 = vmatprep.subr.mxu0 0.0
        %1644 = vmatpush1.msra.mxu0 0.0
        %1645 = vmatprep.subr.mxu0 0.0
        %1646 = vmatpush1.msra.mxu0 0.0
        %1647 = vmatprep.subr.mxu0 0.0
        %1648 = vmatpush1.msra.mxu0 0.0
        %1649 = vmatprep.subr.mxu0 0.0
        %1650 = vmatpush1.msra.mxu0 0.0
        %1651 = vmatprep.subr.mxu0 0.0
        %1652 = vmatpush1.msra.mxu0 0.0
        %1653 = vmatprep.subr.mxu0 0.0
        %1654 = vmatpush1.msra.mxu0 0.0
        %1655 = vmatprep.subr.mxu0 0.0
        %1656 = vmatpush1.msra.mxu0 0.0
        %1657 = vmatprep.subr.mxu0 0.0
        %1658 = vmatpush1.msra.mxu0 0.0
        %1659 = vmatprep.subr.mxu0 0.0
        %1660 = vmatpush1.msra.mxu0 0.0
        %1661 = vmatprep.subr.mxu0 0.0
        %1662 = vmatpush1.msra.mxu0 0.0
        %1663 = vmatprep.subr.mxu0 0.0
        %1664 = vmatpush1.msra.mxu0 0.0
        %1665 = vmatprep.subr.mxu0 0.0
        %1666 = vmatpush1.msra.mxu0 0.0
        %1667 = vmatprep.subr.mxu0 0.0
        %1668 = vmatpush1.msra.mxu0 0.0
        %1669 = vmatprep.subr.mxu0 0.0
        %1670 = vmatpush1.msra.mxu0 0.0
        %1671 = vmatprep.subr.mxu0 0.0
        %1672 = vmatpush1.msra.mxu0 0.0
        %1673 = vmatprep.subr.mxu0 0.0
        %1674 = vmatpush1.msra.mxu0 0.0
        %1675 = vmatprep.subr.mxu0 0.0
        %1676 = vmatpush1.msra.mxu0 0.0
        %1677 = vmatprep.subr.mxu0 0.0
        %1678 = vmatpush1.msra.mxu0 0.0
        %1679 = vmatprep.subr.mxu0 0.0
        %1680 = vmatpush1.msra.mxu0 0.0
        %1681 = vmatprep.subr.mxu0 0.0
        %1682 = vmatpush1.msra.mxu0 0.0
        %1683 = vmatprep.subr.mxu0 0.0
        %1684 = vmatpush1.msra.mxu0 0.0
        %1685 = vmatprep.subr.mxu0 0.0
        %1686 = vmatpush1.msra.mxu0 0.0
        %1687 = vmatprep.mubr.f32.mxu0 0.0
        %1688 = vmatmul.mubr.f32.gmra.mrb[0].mxu0 %v1621
        %v1689 = vpop.f32.mrb[0].mxu0
        %v1690 = vadd.f32 0.0, %v1689
        %v1691 = vpop.f32.mrb[0].mxu0
        %1692 = vdwg.mxu0
        %vm1693 = vcmask 457728
        %v1695 = vsel %vm1693, %v1612, 0
        %1697 = vmatprep.subr.mxu0 0.0
        %1698 = vmatpush1.msra.mxu0 %v1598
        %1699 = vmatprep.subr.mxu0 0.0
        %1700 = vmatpush1.msra.mxu0 %v1599
        %1701 = vmatprep.subr.mxu0 0.0
        %1702 = vmatpush1.msra.mxu0 %v1600
        %1703 = vmatprep.subr.mxu0 0.0
        %1704 = vmatpush1.msra.mxu0 %v1601
        %1705 = vmatprep.subr.mxu0 0.0
        %1706 = vmatpush1.msra.mxu0 %v1602
        %1707 = vmatprep.subr.mxu0 0.0
        %1708 = vmatpush1.msra.mxu0 %v1603
        %1709 = vmatprep.subr.mxu0 0.0
        %1710 = vmatpush1.msra.mxu0 %v1604
        %1711 = vmatprep.subr.mxu0 0.0
        %1712 = vmatpush1.msra.mxu0 0.0
        %1713 = vmatprep.subr.mxu0 0.0
        %1714 = vmatpush1.msra.mxu0 0.0
        %1715 = vmatprep.subr.mxu0 0.0
        %1716 = vmatpush1.msra.mxu0 0.0
        %1717 = vmatprep.subr.mxu0 0.0
        %1718 = vmatpush1.msra.mxu0 0.0
        %1719 = vmatprep.subr.mxu0 0.0
        %1720 = vmatpush1.msra.mxu0 0.0
        %1721 = vmatprep.subr.mxu0 0.0
        %1722 = vmatpush1.msra.mxu0 0.0
        %1723 = vmatprep.subr.mxu0 0.0
        %1724 = vmatpush1.msra.mxu0 0.0
        %1725 = vmatprep.subr.mxu0 0.0
        %1726 = vmatpush1.msra.mxu0 0.0
        %1727 = vmatprep.subr.mxu0 0.0
        %1728 = vmatpush1.msra.mxu0 0.0
        %1729 = vmatprep.subr.mxu0 0.0
        %1730 = vmatpush1.msra.mxu0 0.0
        %1731 = vmatprep.subr.mxu0 0.0
        %1732 = vmatpush1.msra.mxu0 0.0
        %1733 = vmatprep.subr.mxu0 0.0
        %1734 = vmatpush1.msra.mxu0 0.0
        %1735 = vmatprep.subr.mxu0 0.0
        %1736 = vmatpush1.msra.mxu0 0.0
        %1737 = vmatprep.subr.mxu0 0.0
        %1738 = vmatpush1.msra.mxu0 0.0
        %1739 = vmatprep.subr.mxu0 0.0
        %1740 = vmatpush1.msra.mxu0 0.0
        %1741 = vmatprep.subr.mxu0 0.0
        %1742 = vmatpush1.msra.mxu0 0.0
        %1743 = vmatprep.subr.mxu0 0.0
        %1744 = vmatpush1.msra.mxu0 0.0
        %1745 = vmatprep.subr.mxu0 0.0
        %1746 = vmatpush1.msra.mxu0 0.0
        %1747 = vmatprep.subr.mxu0 0.0
        %1748 = vmatpush1.msra.mxu0 0.0
        %1749 = vmatprep.subr.mxu0 0.0
        %1750 = vmatpush1.msra.mxu0 0.0
        %1751 = vmatprep.subr.mxu0 0.0
        %1752 = vmatpush1.msra.mxu0 0.0
        %1753 = vmatprep.subr.mxu0 0.0
        %1754 = vmatpush1.msra.mxu0 0.0
        %1755 = vmatprep.subr.mxu0 0.0
        %1756 = vmatpush1.msra.mxu0 0.0
        %1757 = vmatprep.subr.mxu0 0.0
        %1758 = vmatpush1.msra.mxu0 0.0
        %1759 = vmatprep.subr.mxu0 0.0
        %1760 = vmatpush1.msra.mxu0 0.0
        %1761 = vmatprep.mubr.f32.mxu0 0.0
        %1762 = vmatmul.mubr.f32.gmra.mrb[0].mxu0 %v1695
        %v1763 = vpop.f32.mrb[0].mxu0
        %v1764 = vadd.f32 %v1690, %v1763
        %v1765 = vpop.f32.mrb[0].mxu0
        %1766 = vdwg.mxu0
        %v1767 = vld [vmem:[%s1576] sm:$0xff]
        %v1768 = vld [vmem:[%s15] sm:$0xff]
        %v1769 = vld [vmem:[%s15 + $0x8] sm:$0xff]
        %v1770 = vld [vmem:[%s15 + $0x10] sm:$0xff]
        %v1771 = vld [vmem:[%s15 + $0x18] sm:$0xff]
        %v1772 = vld [vmem:[%s15 + $0x20] sm:$0xff]
        %v1773 = vld [vmem:[%s15 + $0x28] sm:$0xff]
        %v1774 = vld [vmem:[%s15 + $0x30] sm:$0xff]
        %1775 = vset.pattern.permute.xlu0 0
        %1776 = vperm.xlu0 %1775, %v1596
        %v1777 = vpop.permute.xlu0 %1776
        %vm1778 = vcmp.eq.s32.totalorder %v1606, %v1777
        %v1779 = vsel %vm1778, 1, 0
        %v1780 = vcvt.s32.f32 %v1779
        %1781 = vset.pattern.permute.xlu0 0
        %1782 = vperm.xlu0 %1781, %v1767
        %v1783 = vpop.permute.xlu0 %1782
        %vm1784 = vcmp.eq.s32.totalorder %v1606, %v1783
        %v1785 = vsel %vm1784, 1, 0
        %v1786 = vcvt.s32.f32 %v1785
        %v1788 = vsel %vm1619, %v1786, 0
        %1790 = vmatprep.subr.mxu0 0.0
        %1791 = vmatpush1.msra.mxu0 %v1587
        %1792 = vmatprep.subr.mxu0 0.0
        %1793 = vmatpush1.msra.mxu0 %v1588
        %1794 = vmatprep.subr.mxu0 0.0
        %1795 = vmatpush1.msra.mxu0 %v1589
        %1796 = vmatprep.subr.mxu0 0.0
        %1797 = vmatpush1.msra.mxu0 %v1590
        %1798 = vmatprep.subr.mxu0 0.0
        %1799 = vmatpush1.msra.mxu0 %v1591
        %1800 = vmatprep.subr.mxu0 0.0
        %1801 = vmatpush1.msra.mxu0 %v1592
        %1802 = vmatprep.subr.mxu0 0.0
        %1803 = vmatpush1.msra.mxu0 %v1593
        %1804 = vmatprep.subr.mxu0 0.0
        %1805 = vmatpush1.msra.mxu0 %v1594
        %1806 = vmatprep.subr.mxu0 0.0
        %1807 = vmatpush1.msra.mxu0 0.0
        %1808 = vmatprep.subr.mxu0 0.0
        %1809 = vmatpush1.msra.mxu0 0.0
        %1810 = vmatprep.subr.mxu0 0.0
        %1811 = vmatpush1.msra.mxu0 0.0
        %1812 = vmatprep.subr.mxu0 0.0
        %1813 = vmatpush1.msra.mxu0 0.0
        %1814 = vmatprep.subr.mxu0 0.0
        %1815 = vmatpush1.msra.mxu0 0.0
        %1816 = vmatprep.subr.mxu0 0.0
        %1817 = vmatpush1.msra.mxu0 0.0
        %1818 = vmatprep.subr.mxu0 0.0
        %1819 = vmatpush1.msra.mxu0 0.0
        %1820 = vmatprep.subr.mxu0 0.0
        %1821 = vmatpush1.msra.mxu0 0.0
        %1822 = vmatprep.subr.mxu0 0.0
        %1823 = vmatpush1.msra.mxu0 0.0
        %1824 = vmatprep.subr.mxu0 0.0
        %1825 = vmatpush1.msra.mxu0 0.0
        %1826 = vmatprep.subr.mxu0 0.0
        %1827 = vmatpush1.msra.mxu0 0.0
        %1828 = vmatprep.subr.mxu0 0.0
        %1829 = vmatpush1.msra.mxu0 0.0
        %1830 = vmatprep.subr.mxu0 0.0
        %1831 = vmatpush1.msra.mxu0 0.0
        %1832 = vmatprep.subr.mxu0 0.0
        %1833 = vmatpush1.msra.mxu0 0.0
        %1834 = vmatprep.subr.mxu0 0.0
        %1835 = vmatpush1.msra.mxu0 0.0
        %1836 = vmatprep.subr.mxu0 0.0
        %1837 = vmatpush1.msra.mxu0 0.0
        %1838 = vmatprep.subr.mxu0 0.0
        %1839 = vmatpush1.msra.mxu0 0.0
        %1840 = vmatprep.subr.mxu0 0.0
        %1841 = vmatpush1.msra.mxu0 0.0
        %1842 = vmatprep.subr.mxu0 0.0
        %1843 = vmatpush1.msra.mxu0 0.0
        %1844 = vmatprep.subr.mxu0 0.0
        %1845 = vmatpush1.msra.mxu0 0.0
        %1846 = vmatprep.subr.mxu0 0.0
        %1847 = vmatpush1.msra.mxu0 0.0
        %1848 = vmatprep.subr.mxu0 0.0
        %1849 = vmatpush1.msra.mxu0 0.0
        %1850 = vmatprep.subr.mxu0 0.0
        %1851 = vmatpush1.msra.mxu0 0.0
        %1852 = vmatprep.subr.mxu0 0.0
        %1853 = vmatpush1.msra.mxu0 0.0
        %1854 = vmatprep.mubr.f32.mxu0 0.0
        %1855 = vmatmul.mubr.f32.gmra.mrb[0].mxu0 %v1788
        %v1856 = vpop.f32.mrb[0].mxu0
        %v1857 = vadd.f32 0.0, %v1856
        %v1858 = vpop.f32.mrb[0].mxu0
        %1859 = vdwg.mxu0
        %v1861 = vsel %vm1693, %v1780, 0
        %1863 = vmatprep.subr.mxu0 0.0
        %1864 = vmatpush1.msra.mxu0 %v1768
        %1865 = vmatprep.subr.mxu0 0.0
        %1866 = vmatpush1.msra.mxu0 %v1769
        %1867 = vmatprep.subr.mxu0 0.0
        %1868 = vmatpush1.msra.mxu0 %v1770
        %1869 = vmatprep.subr.mxu0 0.0
        %1870 = vmatpush1.msra.mxu0 %v1771
        %1871 = vmatprep.subr.mxu0 0.0
        %1872 = vmatpush1.msra.mxu0 %v1772
        %1873 = vmatprep.subr.mxu0 0.0
        %1874 = vmatpush1.msra.mxu0 %v1773
        %1875 = vmatprep.subr.mxu0 0.0
        %1876 = vmatpush1.msra.mxu0 %v1774
        %1877 = vmatprep.subr.mxu0 0.0
        %1878 = vmatpush1.msra.mxu0 0.0
        %1879 = vmatprep.subr.mxu0 0.0
        %1880 = vmatpush1.msra.mxu0 0.0
        %1881 = vmatprep.subr.mxu0 0.0
        %1882 = vmatpush1.msra.mxu0 0.0
        %1883 = vmatprep.subr.mxu0 0.0
        %1884 = vmatpush1.msra.mxu0 0.0
        %1885 = vmatprep.subr.mxu0 0.0
        %1886 = vmatpush1.msra.mxu0 0.0
        %1887 = vmatprep.subr.mxu0 0.0
        %1888 = vmatpush1.msra.mxu0 0.0
        %1889 = vmatprep.subr.mxu0 0.0
        %1890 = vmatpush1.msra.mxu0 0.0
        %1891 = vmatprep.subr.mxu0 0.0
        %1892 = vmatpush1.msra.mxu0 0.0
        %1893 = vmatprep.subr.mxu0 0.0
        %1894 = vmatpush1.msra.mxu0 0.0
        %1895 = vmatprep.subr.mxu0 0.0
        %1896 = vmatpush1.msra.mxu0 0.0
        %1897 = vmatprep.subr.mxu0 0.0
        %1898 = vmatpush1.msra.mxu0 0.0
        %1899 = vmatprep.subr.mxu0 0.0
        %1900 = vmatpush1.msra.mxu0 0.0
        %1901 = vmatprep.subr.mxu0 0.0
        %1902 = vmatpush1.msra.mxu0 0.0
        %1903 = vmatprep.subr.mxu0 0.0
        %1904 = vmatpush1.msra.mxu0 0.0
        %1905 = vmatprep.subr.mxu0 0.0
        %1906 = vmatpush1.msra.mxu0 0.0
        %1907 = vmatprep.subr.mxu0 0.0
        %1908 = vmatpush1.msra.mxu0 0.0
        %1909 = vmatprep.subr.mxu0 0.0
        %1910 = vmatpush1.msra.mxu0 0.0
        %1911 = vmatprep.subr.mxu0 0.0
        %1912 = vmatpush1.msra.mxu0 0.0
        %1913 = vmatprep.subr.mxu0 0.0
        %1914 = vmatpush1.msra.mxu0 0.0
        %1915 = vmatprep.subr.mxu0 0.0
        %1916 = vmatpush1.msra.mxu0 0.0
        %1917 = vmatprep.subr.mxu0 0.0
        %1918 = vmatpush1.msra.mxu0 0.0
        %1919 = vmatprep.subr.mxu0 0.0
        %1920 = vmatpush1.msra.mxu0 0.0
        %1921 = vmatprep.subr.mxu0 0.0
        %1922 = vmatpush1.msra.mxu0 0.0
        %1923 = vmatprep.subr.mxu0 0.0
        %1924 = vmatpush1.msra.mxu0 0.0
        %1925 = vmatprep.subr.mxu0 0.0
        %1926 = vmatpush1.msra.mxu0 0.0
        %1927 = vmatprep.mubr.f32.mxu0 0.0
        %1928 = vmatmul.mubr.f32.gmra.mrb[0].mxu0 %v1861
        %v1929 = vpop.f32.mrb[0].mxu0
        %v1930 = vadd.f32 %v1857, %v1929
        %v1931 = vpop.f32.mrb[0].mxu0
        %1932 = vdwg.mxu0
        %vm1933 = vcmp.ne.s32.totalorder %v1595, 0
        %v1934 = vsel %vm1933, 1, 0
        %v1935 = vcvt.s32.f32 %v1934
        %vm1936 = vcmp.ne.s32.totalorder %v1596, 0
        %v1937 = vsel %vm1936, 1, 0
        %v1938 = vcvt.s32.f32 %v1937
        %v1939 = vld [vmem:[%s1579] sm:$0x1]
        %v1940 = vld [vmem:[%s1582] sm:$0x1]
        %v1941 = vlaneseq
        %v1942 = vshrl.u32 %v1941, 7
        %vm1943 = vcmp.le.s32.totalorder %v1606, %v1942
        %v1944 = vsel %vm1943, 0.0, -1e+09
        %v1946 = vlaneseq
        %v1947 = vshrl.u32 %v1946, 7
        %v1948 = vsub.s32 0, %v1947
        %v1949 = vrot.slane %v1940, %v1948
        %v1951 = vadd.f32 %v1944, %v1949
        %v1952 = vld [vmem:[%s19] sm:$0xff]
        %v1953 = vld [vmem:[%s19 + $0x8] sm:$0xff]
        %v1954 = vld [vmem:[%s19 + $0x10] sm:$0xff]
        %v1955 = vld [vmem:[%s19 + $0x18] sm:$0xff]
        %v1956 = vld [vmem:[#allocation2] sm:$0x1]
        %v1957 = vld [vmem:[%s23] sm:$0xff]
        %v1958 = vld [vmem:[%s23 + $0x8] sm:$0xff]
        %v1959 = vld [vmem:[%s23 + $0x10] sm:$0xff]
        %v1960 = vld [vmem:[%s23 + $0x18] sm:$0xff]
        %v1961 = vld [vmem:[#allocation4] sm:$0x1]
        %v1962 = vld [vmem:[#allocation6] sm:$0x1]
        %v1963 = vld [vmem:[#allocation7] sm:$0x1]
        %v1965 = vlaneseq
        %v1966 = vshrl.u32 %v1965, 7
        %v1967 = vsub.s32 0, %v1966
        %v1968 = vrot.slane %v1956, %v1967
        %vm1970 = vcmask 261120
        %v1972 = vsel %vm1970, %v1764, 0
        %1974 = vmatprep.subr.mxu0 0.0
        %1975 = vmatpush1.msra.mxu0 %v1952
        %1976 = vmatprep.subr.mxu0 0.0
        %1977 = vmatpush1.msra.mxu0 %v1953
        %1978 = vmatprep.subr.mxu0 0.0
        %1979 = vmatpush1.msra.mxu0 %v1954
        %1980 = vmatprep.subr.mxu0 0.0
        %1981 = vmatpush1.msra.mxu0 %v1955
        %1982 = vmatprep.subr.mxu0 0.0
        %1983 = vmatpush1.msra.mxu0 0.0
        %1984 = vmatprep.subr.mxu0 0.0
        %1985 = vmatpush1.msra.mxu0 0.0
        %1986 = vmatprep.subr.mxu0 0.0
        %1987 = vmatpush1.msra.mxu0 0.0
        %1988 = vmatprep.subr.mxu0 0.0
        %1989 = vmatpush1.msra.mxu0 0.0
        %1990 = vmatprep.subr.mxu0 0.0
        %1991 = vmatpush1.msra.mxu0 0.0
        %1992 = vmatprep.subr.mxu0 0.0
        %1993 = vmatpush1.msra.mxu0 0.0
        %1994 = vmatprep.subr.mxu0 0.0
        %1995 = vmatpush1.msra.mxu0 0.0
        %1996 = vmatprep.subr.mxu0 0.0
        %1997 = vmatpush1.msra.mxu0 0.0
        %1998 = vmatprep.subr.mxu0 0.0
        %1999 = vmatpush1.msra.mxu0 0.0
        %2000 = vmatprep.subr.mxu0 0.0
        %2001 = vmatpush1.msra.mxu0 0.0
        %2002 = vmatprep.subr.mxu0 0.0
        %2003 = vmatpush1.msra.mxu0 0.0
        %2004 = vmatprep.subr.mxu0 0.0
        %2005 = vmatpush1.msra.mxu0 0.0
        %2006 = vmatprep.subr.mxu0 0.0
        %2007 = vmatpush1.msra.mxu0 0.0
        %2008 = vmatprep.subr.mxu0 0.0
        %2009 = vmatpush1.msra.mxu0 0.0
        %2010 = vmatprep.subr.mxu0 0.0
        %2011 = vmatpush1.msra.mxu0 0.0
        %2012 = vmatprep.subr.mxu0 0.0
        %2013 = vmatpush1.msra.mxu0 0.0
        %2014 = vmatprep.subr.mxu0 0.0
        %2015 = vmatpush1.msra.mxu0 0.0
        %2016 = vmatprep.subr.mxu0 0.0
        %2017 = vmatpush1.msra.mxu0 0.0
        %2018 = vmatprep.subr.mxu0 0.0
        %2019 = vmatpush1.msra.mxu0 0.0
        %2020 = vmatprep.subr.mxu0 0.0
        %2021 = vmatpush1.msra.mxu0 0.0
        %2022 = vmatprep.subr.mxu0 0.0
        %2023 = vmatpush1.msra.mxu0 0.0
        %2024 = vmatprep.subr.mxu0 0.0
        %2025 = vmatpush1.msra.mxu0 0.0
        %2026 = vmatprep.subr.mxu0 0.0
        %2027 = vmatpush1.msra.mxu0 0.0
        %2028 = vmatprep.subr.mxu0 0.0
        %2029 = vmatpush1.msra.mxu0 0.0
        %2030 = vmatprep.subr.mxu0 0.0
        %2031 = vmatpush1.msra.mxu0 0.0
        %2032 = vmatprep.subr.mxu0 0.0
        %2033 = vmatpush1.msra.mxu0 0.0
        %2034 = vmatprep.subr.mxu0 0.0
        %2035 = vmatpush1.msra.mxu0 0.0
        %2036 = vmatprep.subr.mxu0 0.0
        %2037 = vmatpush1.msra.mxu0 0.0
        %2038 = vmatprep.mubr.f32.mxu0 0.0
        %2039 = vmatmul.mubr.f32.gmra.mrb[0].mxu0 %v1972
        %v2040 = vpop.f32.mrb[0].mxu0
        %v2041 = vadd.f32 %v1968, %v2040
        %v2042 = vpop.f32.mrb[0].mxu0
        %2043 = vdwg.mxu0
        %2045 = vrot.lane.b32.xlu0 %v2041, 96
        %v2046 = vpop.permute.xlu0 %2045
        %vm2047 = vcmask 64512
        %v2048 = vsel %vm2047, %v2041, 0
        %v2050 = vsel %vm2047, %v2046, 0
        %2052 = vmatprep.subr.mxu0 0.0
        %2053 = vmatpush1.xpose.msra.mxu0 %v2050
        %2054 = vmatprep.subr.mxu0 0.0
        %2055 = vmatpush1.xpose.msra.mxu0 0.0
        %2056 = vmatprep.subr.mxu0 0.0
        %2057 = vmatpush1.xpose.msra.mxu0 0.0
        %2058 = vmatprep.subr.mxu0 0.0
        %2059 = vmatpush1.xpose.msra.mxu0 0.0
        %2060 = vmatprep.subr.mxu0 0.0
        %2061 = vmatpush1.xpose.msra.mxu0 0.0
        %2062 = vmatprep.subr.mxu0 0.0
        %2063 = vmatpush1.xpose.msra.mxu0 0.0
        %2064 = vmatprep.subr.mxu0 0.0
        %2065 = vmatpush1.xpose.msra.mxu0 0.0
        %2066 = vmatprep.subr.mxu0 0.0
        %2067 = vmatpush1.xpose.msra.mxu0 0.0
        %2068 = vmatprep.subr.mxu0 0.0
        %2069 = vmatpush1.xpose.msra.mxu0 0.0
        %2070 = vmatprep.subr.mxu0 0.0
        %2071 = vmatpush1.xpose.msra.mxu0 0.0
        %2072 = vmatprep.subr.mxu0 0.0
        %2073 = vmatpush1.xpose.msra.mxu0 0.0
        %2074 = vmatprep.subr.mxu0 0.0
        %2075 = vmatpush1.xpose.msra.mxu0 0.0
        %2076 = vmatprep.subr.mxu0 0.0
        %2077 = vmatpush1.xpose.msra.mxu0 0.0
        %2078 = vmatprep.subr.mxu0 0.0
        %2079 = vmatpush1.xpose.msra.mxu0 0.0
        %2080 = vmatprep.subr.mxu0 0.0
        %2081 = vmatpush1.xpose.msra.mxu0 0.0
        %2082 = vmatprep.subr.mxu0 0.0
        %2083 = vmatpush1.xpose.msra.mxu0 0.0
        %2084 = vmatprep.subr.mxu0 0.0
        %2085 = vmatpush1.xpose.msra.mxu0 0.0
        %2086 = vmatprep.subr.mxu0 0.0
        %2087 = vmatpush1.xpose.msra.mxu0 0.0
        %2088 = vmatprep.subr.mxu0 0.0
        %2089 = vmatpush1.xpose.msra.mxu0 0.0
        %2090 = vmatprep.subr.mxu0 0.0
        %2091 = vmatpush1.xpose.msra.mxu0 0.0
        %2092 = vmatprep.subr.mxu0 0.0
        %2093 = vmatpush1.xpose.msra.mxu0 0.0
        %2094 = vmatprep.subr.mxu0 0.0
        %2095 = vmatpush1.xpose.msra.mxu0 0.0
        %2096 = vmatprep.subr.mxu0 0.0
        %2097 = vmatpush1.xpose.msra.mxu0 0.0
        %2098 = vmatprep.subr.mxu0 0.0
        %2099 = vmatpush1.xpose.msra.mxu0 0.0
        %2100 = vmatprep.subr.mxu0 0.0
        %2101 = vmatpush1.xpose.msra.mxu0 0.0
        %2102 = vmatprep.subr.mxu0 0.0
        %2103 = vmatpush1.xpose.msra.mxu0 0.0
        %2104 = vmatprep.subr.mxu0 0.0
        %2105 = vmatpush1.xpose.msra.mxu0 0.0
        %2106 = vmatprep.subr.mxu0 0.0
        %2107 = vmatpush1.xpose.msra.mxu0 0.0
        %2108 = vmatprep.subr.mxu0 0.0
        %2109 = vmatpush1.xpose.msra.mxu0 0.0
        %2110 = vmatprep.subr.mxu0 0.0
        %2111 = vmatpush1.xpose.msra.mxu0 0.0
        %2112 = vmatprep.subr.mxu0 0.0
        %2113 = vmatpush1.xpose.msra.mxu0 0.0
        %2114 = vmatprep.subr.mxu0 0.0
        %2115 = vmatpush1.xpose.msra.mxu0 0.0
        %2116 = vmatprep.mubr.f32.mxu0 0.0
        %2117 = vmatmul.mubr.f32.gmra.mrb[0].mxu0 %v2048
        %v2118 = vpop.f32.mrb[0].mxu0
        %v2119 = vadd.f32 0.0, %v2118
        %v2120 = vpop.f32.mrb[0].mxu0
        %2121 = vdwg.mxu0
        %2122 = vrot.lane.b32.xlu0 %v2041, 120
        %v2123 = vpop.permute.xlu0 %2122
        %2124 = vrot.lane.b32.xlu0 %v2041, 88
        %v2125 = vpop.permute.xlu0 %2124
        %v2126 = vsel %vm2047, %v2123, 0
        %v2128 = vsel %vm2047, %v2125, 0
        %2130 = vmatprep.subr.mxu0 0.0
        %2131 = vmatpush1.xpose.msra.mxu0 %v2128
        %2132 = vmatprep.subr.mxu0 0.0
        %2133 = vmatpush1.xpose.msra.mxu0 0.0
        %2134 = vmatprep.subr.mxu0 0.0
        %2135 = vmatpush1.xpose.msra.mxu0 0.0
        %2136 = vmatprep.subr.mxu0 0.0
        %2137 = vmatpush1.xpose.msra.mxu0 0.0
        %2138 = vmatprep.subr.mxu0 0.0
        %2139 = vmatpush1.xpose.msra.mxu0 0.0
        %2140 = vmatprep.subr.mxu0 0.0
        %2141 = vmatpush1.xpose.msra.mxu0 0.0
        %2142 = vmatprep.subr.mxu0 0.0
        %2143 = vmatpush1.xpose.msra.mxu0 0.0
        %2144 = vmatprep.subr.mxu0 0.0
        %2145 = vmatpush1.xpose.msra.mxu0 0.0
        %2146 = vmatprep.subr.mxu0 0.0
        %2147 = vmatpush1.xpose.msra.mxu0 0.0
        %2148 = vmatprep.subr.mxu0 0.0
        %2149 = vmatpush1.xpose.msra.mxu0 0.0
        %2150 = vmatprep.subr.mxu0 0.0
        %2151 = vmatpush1.xpose.msra.mxu0 0.0
        %2152 = vmatprep.subr.mxu0 0.0
        %2153 = vmatpush1.xpose.msra.mxu0 0.0
        %2154 = vmatprep.subr.mxu0 0.0
        %2155 = vmatpush1.xpose.msra.mxu0 0.0
        %2156 = vmatprep.subr.mxu0 0.0
        %2157 = vmatpush1.xpose.msra.mxu0 0.0
        %2158 = vmatprep.subr.mxu0 0.0
        %2159 = vmatpush1.xpose.msra.mxu0 0.0
        %2160 = vmatprep.subr.mxu0 0.0
        %2161 = vmatpush1.xpose.msra.mxu0 0.0
        %2162 = vmatprep.subr.mxu0 0.0
        %2163 = vmatpush1.xpose.msra.mxu0 0.0
        %2164 = vmatprep.subr.mxu0 0.0
        %2165 = vmatpush1.xpose.msra.mxu0 0.0
        %2166 = vmatprep.subr.mxu0 0.0
        %2167 = vmatpush1.xpose.msra.mxu0 0.0
        %2168 = vmatprep.subr.mxu0 0.0
        %2169 = vmatpush1.xpose.msra.mxu0 0.0
        %2170 = vmatprep.subr.mxu0 0.0
        %2171 = vmatpush1.xpose.msra.mxu0 0.0
        %2172 = vmatprep.subr.mxu0 0.0
        %2173 = vmatpush1.xpose.msra.mxu0 0.0
        %2174 = vmatprep.subr.mxu0 0.0
        %2175 = vmatpush1.xpose.msra.mxu0 0.0
        %2176 = vmatprep.subr.mxu0 0.0
        %2177 = vmatpush1.xpose.msra.mxu0 0.0
        %2178 = vmatprep.subr.mxu0 0.0
        %2179 = vmatpush1.xpose.msra.mxu0 0.0
        %2180 = vmatprep.subr.mxu0 0.0
        %2181 = vmatpush1.xpose.msra.mxu0 0.0
        %2182 = vmatprep.subr.mxu0 0.0
        %2183 = vmatpush1.xpose.msra.mxu0 0.0
        %2184 = vmatprep.subr.mxu0 0.0
        %2185 = vmatpush1.xpose.msra.mxu0 0.0
        %2186 = vmatprep.subr.mxu0 0.0
        %2187 = vmatpush1.xpose.msra.mxu0 0.0
        %2188 = vmatprep.subr.mxu0 0.0
        %2189 = vmatpush1.xpose.msra.mxu0 0.0
        %2190 = vmatprep.subr.mxu0 0.0
        %2191 = vmatpush1.xpose.msra.mxu0 0.0
        %2192 = vmatprep.subr.mxu0 0.0
        %2193 = vmatpush1.xpose.msra.mxu0 0.0
        %2194 = vmatprep.mubr.f32.mxu0 0.0
        %2195 = vmatmul.mubr.f32.gmra.mrb[0].mxu0 %v2126
        %v2196 = vpop.f32.mrb[0].mxu0
        %v2197 = vadd.f32 0.0, %v2196
        %v2198 = vpop.f32.mrb[0].mxu0
        %2199 = vdwg.mxu0
        %2200 = vrot.lane.b32.xlu0 %v2041, 112
        %v2201 = vpop.permute.xlu0 %2200
        %2202 = vrot.lane.b32.xlu0 %v2041, 80
        %v2203 = vpop.permute.xlu0 %2202
        %v2204 = vsel %vm2047, %v2201, 0
        %v2206 = vsel %vm2047, %v2203, 0
        %2208 = vmatprep.subr.mxu0 0.0
        %2209 = vmatpush1.xpose.msra.mxu0 %v2206
        %2210 = vmatprep.subr.mxu0 0.0
        %2211 = vmatpush1.xpose.msra.mxu0 0.0
        %2212 = vmatprep.subr.mxu0 0.0
        %2213 = vmatpush1.xpose.msra.mxu0 0.0
        %2214 = vmatprep.subr.mxu0 0.0
        %2215 = vmatpush1.xpose.msra.mxu0 0.0
        %2216 = vmatprep.subr.mxu0 0.0
        %2217 = vmatpush1.xpose.msra.mxu0 0.0
        %2218 = vmatprep.subr.mxu0 0.0
        %2219 = vmatpush1.xpose.msra.mxu0 0.0
        %2220 = vmatprep.subr.mxu0 0.0
        %2221 = vmatpush1.xpose.msra.mxu0 0.0
        %2222 = vmatprep.subr.mxu0 0.0
        %2223 = vmatpush1.xpose.msra.mxu0 0.0
        %2224 = vmatprep.subr.mxu0 0.0
        %2225 = vmatpush1.xpose.msra.mxu0 0.0
        %2226 = vmatprep.subr.mxu0 0.0
        %2227 = vmatpush1.xpose.msra.mxu0 0.0
        %2228 = vmatprep.subr.mxu0 0.0
        %2229 = vmatpush1.xpose.msra.mxu0 0.0
        %2230 = vmatprep.subr.mxu0 0.0
        %2231 = vmatpush1.xpose.msra.mxu0 0.0
        %2232 = vmatprep.subr.mxu0 0.0
        %2233 = vmatpush1.xpose.msra.mxu0 0.0
        %2234 = vmatprep.subr.mxu0 0.0
        %2235 = vmatpush1.xpose.msra.mxu0 0.0
        %2236 = vmatprep.subr.mxu0 0.0
        %2237 = vmatpush1.xpose.msra.mxu0 0.0
        %2238 = vmatprep.subr.mxu0 0.0
        %2239 = vmatpush1.xpose.msra.mxu0 0.0
        %2240 = vmatprep.subr.mxu0 0.0
        %2241 = vmatpush1.xpose.msra.mxu0 0.0
        %2242 = vmatprep.subr.mxu0 0.0
        %2243 = vmatpush1.xpose.msra.mxu0 0.0
        %2244 = vmatprep.subr.mxu0 0.0
        %2245 = vmatpush1.xpose.msra.mxu0 0.0
        %2246 = vmatprep.subr.mxu0 0.0
        %2247 = vmatpush1.xpose.msra.mxu0 0.0
        %2248 = vmatprep.subr.mxu0 0.0
        %2249 = vmatpush1.xpose.msra.mxu0 0.0
        %2250 = vmatprep.subr.mxu0 0.0
        %2251 = vmatpush1.xpose.msra.mxu0 0.0
        %2252 = vmatprep.subr.mxu0 0.0
        %2253 = vmatpush1.xpose.msra.mxu0 0.0
        %2254 = vmatprep.subr.mxu0 0.0
        %2255 = vmatpush1.xpose.msra.mxu0 0.0
        %2256 = vmatprep.subr.mxu0 0.0
        %2257 = vmatpush1.xpose.msra.mxu0 0.0
        %2258 = vmatprep.subr.mxu0 0.0
        %2259 = vmatpush1.xpose.msra.mxu0 0.0
        %2260 = vmatprep.subr.mxu0 0.0
        %2261 = vmatpush1.xpose.msra.mxu0 0.0
        %2262 = vmatprep.subr.mxu0 0.0
        %2263 = vmatpush1.xpose.msra.mxu0 0.0
        %2264 = vmatprep.subr.mxu0 0.0
        %2265 = vmatpush1.xpose.msra.mxu0 0.0
        %2266 = vmatprep.subr.mxu0 0.0
        %2267 = vmatpush1.xpose.msra.mxu0 0.0
        %2268 = vmatprep.subr.mxu0 0.0
        %2269 = vmatpush1.xpose.msra.mxu0 0.0
        %2270 = vmatprep.subr.mxu0 0.0
        %2271 = vmatpush1.xpose.msra.mxu0 0.0
        %2272 = vmatprep.mubr.f32.mxu0 0.0
        %2273 = vmatmul.mubr.f32.gmra.mrb[0].mxu0 %v2204
        %v2274 = vpop.f32.mrb[0].mxu0
        %v2275 = vadd.f32 0.0, %v2274
        %v2276 = vpop.f32.mrb[0].mxu0
        %2277 = vdwg.mxu0
        %2278 = vrot.lane.b32.xlu0 %v2041, 104
        %v2279 = vpop.permute.xlu0 %2278
        %2280 = vrot.lane.b32.xlu0 %v2041, 72
        %v2281 = vpop.permute.xlu0 %2280
        %v2282 = vsel %vm2047, %v2279, 0
        %v2284 = vsel %vm2047, %v2281, 0
        %2286 = vmatprep.subr.mxu0 0.0
        %2287 = vmatpush1.xpose.msra.mxu0 %v2284
        %2288 = vmatprep.subr.mxu0 0.0
        %2289 = vmatpush1.xpose.msra.mxu0 0.0
        %2290 = vmatprep.subr.mxu0 0.0
        %2291 = vmatpush1.xpose.msra.mxu0 0.0
        %2292 = vmatprep.subr.mxu0 0.0
        %2293 = vmatpush1.xpose.msra.mxu0 0.0
        %2294 = vmatprep.subr.mxu0 0.0
        %2295 = vmatpush1.xpose.msra.mxu0 0.0
        %2296 = vmatprep.subr.mxu0 0.0
        %2297 = vmatpush1.xpose.msra.mxu0 0.0
        %2298 = vmatprep.subr.mxu0 0.0
        %2299 = vmatpush1.xpose.msra.mxu0 0.0
        %2300 = vmatprep.subr.mxu0 0.0
        %2301 = vmatpush1.xpose.msra.mxu0 0.0
        %2302 = vmatprep.subr.mxu0 0.0
        %2303 = vmatpush1.xpose.msra.mxu0 0.0
        %2304 = vmatprep.subr.mxu0 0.0
        %2305 = vmatpush1.xpose.msra.mxu0 0.0
        %2306 = vmatprep.subr.mxu0 0.0
        %2307 = vmatpush1.xpose.msra.mxu0 0.0
        %2308 = vmatprep.subr.mxu0 0.0
        %2309 = vmatpush1.xpose.msra.mxu0 0.0
        %2310 = vmatprep.subr.mxu0 0.0
        %2311 = vmatpush1.xpose.msra.mxu0 0.0
        %2312 = vmatprep.subr.mxu0 0.0
        %2313 = vmatpush1.xpose.msra.mxu0 0.0
        %2314 = vmatprep.subr.mxu0 0.0
        %2315 = vmatpush1.xpose.msra.mxu0 0.0
        %2316 = vmatprep.subr.mxu0 0.0
        %2317 = vmatpush1.xpose.msra.mxu0 0.0
        %2318 = vmatprep.subr.mxu0 0.0
        %2319 = vmatpush1.xpose.msra.mxu0 0.0
        %2320 = vmatprep.subr.mxu0 0.0
        %2321 = vmatpush1.xpose.msra.mxu0 0.0
        %2322 = vmatprep.subr.mxu0 0.0
        %2323 = vmatpush1.xpose.msra.mxu0 0.0
        %2324 = vmatprep.subr.mxu0 0.0
        %2325 = vmatpush1.xpose.msra.mxu0 0.0
        %2326 = vmatprep.subr.mxu0 0.0
        %2327 = vmatpush1.xpose.msra.mxu0 0.0
        %2328 = vmatprep.subr.mxu0 0.0
        %2329 = vmatpush1.xpose.msra.mxu0 0.0
        %2330 = vmatprep.subr.mxu0 0.0
        %2331 = vmatpush1.xpose.msra.mxu0 0.0
        %2332 = vmatprep.subr.mxu0 0.0
        %2333 = vmatpush1.xpose.msra.mxu0 0.0
        %2334 = vmatprep.subr.mxu0 0.0
        %2335 = vmatpush1.xpose.msra.mxu0 0.0
        %2336 = vmatprep.subr.mxu0 0.0
        %2337 = vmatpush1.xpose.msra.mxu0 0.0
        %2338 = vmatprep.subr.mxu0 0.0
        %2339 = vmatpush1.xpose.msra.mxu0 0.0
        %2340 = vmatprep.subr.mxu0 0.0
        %2341 = vmatpush1.xpose.msra.mxu0 0.0
        %2342 = vmatprep.subr.mxu0 0.0
        %2343 = vmatpush1.xpose.msra.mxu0 0.0
        %2344 = vmatprep.subr.mxu0 0.0
        %2345 = vmatpush1.xpose.msra.mxu0 0.0
        %2346 = vmatprep.subr.mxu0 0.0
        %2347 = vmatpush1.xpose.msra.mxu0 0.0
        %2348 = vmatprep.subr.mxu0 0.0
        %2349 = vmatpush1.xpose.msra.mxu0 0.0
        %2350 = vmatprep.mubr.f32.mxu0 0.0
        %2351 = vmatmul.mubr.f32.gmra.mrb[0].mxu0 %v2282
        %v2352 = vpop.f32.mrb[0].mxu0
        %v2353 = vadd.f32 0.0, %v2352
        %v2354 = vpop.f32.mrb[0].mxu0
        %2355 = vdwg.mxu0
        %v2356 = vmul.f32 %v2119, 0.35355338
        %v2357 = vmul.f32 %v2197, 0.35355338
        %v2358 = vmul.f32 %v2275, 0.35355338
        %v2359 = vmul.f32 %v2353, 0.35355338
        %v2361 = vlaneseq
        %v2362 = vshrl.u32 %v2361, 7
        %v2363 = vsub.s32 0, %v2362
        %v2364 = vrot.slane %v1939, %v2363
        %v2366 = vadd.f32 %v2356, %v2364
        %v2367 = vadd.f32 %v2357, %v2364
        %v2368 = vadd.f32 %v2358, %v2364
        %v2369 = vadd.f32 %v2359, %v2364
        %v2370 = vsel %vm2047, %v2366, -inf
        %2371 = vmax.xlane.f32.xlu0 %v2370
        %v2372 = vpop.xlane.xlu0 %2371
        %v2373 = vsel %vm2047, %v2367, -inf
        %2374 = vmax.xlane.f32.xlu0 %v2373
        %v2375 = vpop.xlane.xlu0 %2374
        %v2376 = vsel %vm2047, %v2368, -inf
        %2377 = vmax.xlane.f32.xlu0 %v2376
        %v2378 = vpop.xlane.xlu0 %2377
        %v2379 = vsel %vm2047, %v2369, -inf
        %2380 = vmax.xlane.f32.xlu0 %v2379
        %v2381 = vpop.xlane.xlu0 %2380
        %v2382 = vsub.f32 %v2366, %v2372
        %v2383 = vsub.f32 %v2367, %v2375
        %v2384 = vsub.f32 %v2368, %v2378
        %v2385 = vsub.f32 %v2369, %v2381
        %v2386 = vmul.f32 %v2382, 1.442695
        %v2387 = vpow.pop %v2386
        %v2388 = vmul.f32 %v2383, 1.442695
        %v2389 = vpow.pop %v2388
        %v2390 = vmul.f32 %v2384, 1.442695
        %v2391 = vpow.pop %v2390
        %v2392 = vmul.f32 %v2385, 1.442695
        %v2393 = vpow.pop %v2392
        %v2394 = vsel %vm2047, %v2387, 0.0
        %2395 = vadd.xlane.f32.xlu0 %v2394
        %v2396 = vpop.xlane.xlu0 %2395
        %v2397 = vsel %vm2047, %v2389, 0.0
        %2398 = vadd.xlane.f32.xlu0 %v2397
        %v2399 = vpop.xlane.xlu0 %2398
        %v2400 = vsel %vm2047, %v2391, 0.0
        %2401 = vadd.xlane.f32.xlu0 %v2400
        %v2402 = vpop.xlane.xlu0 %2401
        %v2403 = vsel %vm2047, %v2393, 0.0
        %2404 = vadd.xlane.f32.xlu0 %v2403
        %v2405 = vpop.xlane.xlu0 %2404
        %v2406 = vrcp.pop %v2396
        %v2407 = vrcp.pop %v2399
        %v2408 = vrcp.pop %v2402
        %v2409 = vrcp.pop %v2405
        %v2410 = vmul.f32 %v2387, %v2406
        %v2411 = vmul.f32 %v2389, %v2407
        %v2412 = vmul.f32 %v2391, %v2408
        %v2413 = vmul.f32 %v2393, %v2409
        %2414 = vrot.lane.b32.xlu0 %v2041, 64
        %v2415 = vpop.permute.xlu0 %2414
        %v2418 = vsel %vm2047, %v2410, 0
        %2420 = vmatprep.subr.mxu0 0.0
        %2421 = vmatpush1.msra.mxu0 %v2415
        %2422 = vmatprep.subr.mxu0 0.0
        %2423 = vmatpush1.msra.mxu0 0.0
        %2424 = vmatprep.subr.mxu0 0.0
        %2425 = vmatpush1.msra.mxu0 0.0
        %2426 = vmatprep.subr.mxu0 0.0
        %2427 = vmatpush1.msra.mxu0 0.0
        %2428 = vmatprep.subr.mxu0 0.0
        %2429 = vmatpush1.msra.mxu0 0.0
        %2430 = vmatprep.subr.mxu0 0.0
        %2431 = vmatpush1.msra.mxu0 0.0
        %2432 = vmatprep.subr.mxu0 0.0
        %2433 = vmatpush1.msra.mxu0 0.0
        %2434 = vmatprep.subr.mxu0 0.0
        %2435 = vmatpush1.msra.mxu0 0.0
        %2436 = vmatprep.subr.mxu0 0.0
        %2437 = vmatpush1.msra.mxu0 0.0
        %2438 = vmatprep.subr.mxu0 0.0
        %2439 = vmatpush1.msra.mxu0 0.0
        %2440 = vmatprep.subr.mxu0 0.0
        %2441 = vmatpush1.msra.mxu0 0.0
        %2442 = vmatprep.subr.mxu0 0.0
        %2443 = vmatpush1.msra.mxu0 0.0
        %2444 = vmatprep.subr.mxu0 0.0
        %2445 = vmatpush1.msra.mxu0 0.0
        %2446 = vmatprep.subr.mxu0 0.0
        %2447 = vmatpush1.msra.mxu0 0.0
        %2448 = vmatprep.subr.mxu0 0.0
        %2449 = vmatpush1.msra.mxu0 0.0
        %2450 = vmatprep.subr.mxu0 0.0
        %2451 = vmatpush1.msra.mxu0 0.0
        %2452 = vmatprep.subr.mxu0 0.0
        %2453 = vmatpush1.msra.mxu0 0.0
        %2454 = vmatprep.subr.mxu0 0.0
        %2455 = vmatpush1.msra.mxu0 0.0
        %2456 = vmatprep.subr.mxu0 0.0
        %2457 = vmatpush1.msra.mxu0 0.0
        %2458 = vmatprep.subr.mxu0 0.0
        %2459 = vmatpush1.msra.mxu0 0.0
        %2460 = vmatprep.subr.mxu0 0.0
        %2461 = vmatpush1.msra.mxu0 0.0
        %2462 = vmatprep.subr.mxu0 0.0
        %2463 = vmatpush1.msra.mxu0 0.0
        %2464 = vmatprep.subr.mxu0 0.0
        %2465 = vmatpush1.msra.mxu0 0.0
        %2466 = vmatprep.subr.mxu0 0.0
        %2467 = vmatpush1.msra.mxu0 0.0
        %2468 = vmatprep.subr.mxu0 0.0
        %2469 = vmatpush1.msra.mxu0 0.0
        %2470 = vmatprep.subr.mxu0 0.0
        %2471 = vmatpush1.msra.mxu0 0.0
        %2472 = vmatprep.subr.mxu0 0.0
        %2473 = vmatpush1.msra.mxu0 0.0
        %2474 = vmatprep.subr.mxu0 0.0
        %2475 = vmatpush1.msra.mxu0 0.0
        %2476 = vmatprep.subr.mxu0 0.0
        %2477 = vmatpush1.msra.mxu0 0.0
        %2478 = vmatprep.subr.mxu0 0.0
        %2479 = vmatpush1.msra.mxu0 0.0
        %2480 = vmatprep.subr.mxu0 0.0
        %2481 = vmatpush1.msra.mxu0 0.0
        %2482 = vmatprep.subr.mxu0 0.0
        %2483 = vmatpush1.msra.mxu0 0.0
        %2484 = vmatprep.mubr.f32.mxu0 0.0
        %2485 = vmatmul.mubr.f32.gmra.mrb[0].mxu0 %v2418
        %v2486 = vpop.f32.mrb[0].mxu0
        %v2487 = vadd.f32 0.0, %v2486
        %v2488 = vpop.f32.mrb[0].mxu0
        %2489 = vdwg.mxu0
        %2490 = vrot.lane.b32.xlu0 %v2041, 56
        %v2491 = vpop.permute.xlu0 %2490
        %v2494 = vsel %vm2047, %v2411, 0
        %2496 = vmatprep.subr.mxu0 0.0
        %2497 = vmatpush1.msra.mxu0 %v2491
        %2498 = vmatprep.subr.mxu0 0.0
        %2499 = vmatpush1.msra.mxu0 0.0
        %2500 = vmatprep.subr.mxu0 0.0
        %2501 = vmatpush1.msra.mxu0 0.0
        %2502 = vmatprep.subr.mxu0 0.0
        %2503 = vmatpush1.msra.mxu0 0.0
        %2504 = vmatprep.subr.mxu0 0.0
        %2505 = vmatpush1.msra.mxu0 0.0
        %2506 = vmatprep.subr.mxu0 0.0
        %2507 = vmatpush1.msra.mxu0 0.0
        %2508 = vmatprep.subr.mxu0 0.0
        %2509 = vmatpush1.msra.mxu0 0.0
        %2510 = vmatprep.subr.mxu0 0.0
        %2511 = vmatpush1.msra.mxu0 0.0
        %2512 = vmatprep.subr.mxu0 0.0
        %2513 = vmatpush1.msra.mxu0 0.0
        %2514 = vmatprep.subr.mxu0 0.0
        %2515 = vmatpush1.msra.mxu0 0.0
        %2516 = vmatprep.subr.mxu0 0.0
        %2517 = vmatpush1.msra.mxu0 0.0
        %2518 = vmatprep.subr.mxu0 0.0
        %2519 = vmatpush1.msra.mxu0 0.0
        %2520 = vmatprep.subr.mxu0 0.0
        %2521 = vmatpush1.msra.mxu0 0.0
        %2522 = vmatprep.subr.mxu0 0.0
        %2523 = vmatpush1.msra.mxu0 0.0
        %2524 = vmatprep.subr.mxu0 0.0
        %2525 = vmatpush1.msra.mxu0 0.0
        %2526 = vmatprep.subr.mxu0 0.0
        %2527 = vmatpush1.msra.mxu0 0.0
        %2528 = vmatprep.subr.mxu0 0.0
        %2529 = vmatpush1.msra.mxu0 0.0
        %2530 = vmatprep.subr.mxu0 0.0
        %2531 = vmatpush1.msra.mxu0 0.0
        %2532 = vmatprep.subr.mxu0 0.0
        %2533 = vmatpush1.msra.mxu0 0.0
        %2534 = vmatprep.subr.mxu0 0.0
        %2535 = vmatpush1.msra.mxu0 0.0
        %2536 = vmatprep.subr.mxu0 0.0
        %2537 = vmatpush1.msra.mxu0 0.0
        %2538 = vmatprep.subr.mxu0 0.0
        %2539 = vmatpush1.msra.mxu0 0.0
        %2540 = vmatprep.subr.mxu0 0.0
        %2541 = vmatpush1.msra.mxu0 0.0
        %2542 = vmatprep.subr.mxu0 0.0
        %2543 = vmatpush1.msra.mxu0 0.0
        %2544 = vmatprep.subr.mxu0 0.0
        %2545 = vmatpush1.msra.mxu0 0.0
        %2546 = vmatprep.subr.mxu0 0.0
        %2547 = vmatpush1.msra.mxu0 0.0
        %2548 = vmatprep.subr.mxu0 0.0
        %2549 = vmatpush1.msra.mxu0 0.0
        %2550 = vmatprep.subr.mxu0 0.0
        %2551 = vmatpush1.msra.mxu0 0.0
        %2552 = vmatprep.subr.mxu0 0.0
        %2553 = vmatpush1.msra.mxu0 0.0
        %2554 = vmatprep.subr.mxu0 0.0
        %2555 = vmatpush1.msra.mxu0 0.0
        %2556 = vmatprep.subr.mxu0 0.0
        %2557 = vmatpush1.msra.mxu0 0.0
        %2558 = vmatprep.subr.mxu0 0.0
        %2559 = vmatpush1.msra.mxu0 0.0
        %2560 = vmatprep.mubr.f32.mxu0 0.0
        %2561 = vmatmul.mubr.f32.gmra.mrb[0].mxu0 %v2494
        %v2562 = vpop.f32.mrb[0].mxu0
        %v2563 = vadd.f32 0.0, %v2562
        %v2564 = vpop.f32.mrb[0].mxu0
        %2565 = vdwg.mxu0
        %2566 = vrot.lane.b32.xlu0 %v2041, 48
        %v2567 = vpop.permute.xlu0 %2566
        %v2570 = vsel %vm2047, %v2412, 0
        %2572 = vmatprep.subr.mxu0 0.0
        %2573 = vmatpush1.msra.mxu0 %v2567
        %2574 = vmatprep.subr.mxu0 0.0
        %2575 = vmatpush1.msra.mxu0 0.0
        %2576 = vmatprep.subr.mxu0 0.0
        %2577 = vmatpush1.msra.mxu0 0.0
        %2578 = vmatprep.subr.mxu0 0.0
        %2579 = vmatpush1.msra.mxu0 0.0
        %2580 = vmatprep.subr.mxu0 0.0
        %2581 = vmatpush1.msra.mxu0 0.0
        %2582 = vmatprep.subr.mxu0 0.0
        %2583 = vmatpush1.msra.mxu0 0.0
        %2584 = vmatprep.subr.mxu0 0.0
        %2585 = vmatpush1.msra.mxu0 0.0
        %2586 = vmatprep.subr.mxu0 0.0
        %2587 = vmatpush1.msra.mxu0 0.0
        %2588 = vmatprep.subr.mxu0 0.0
        %2589 = vmatpush1.msra.mxu0 0.0
        %2590 = vmatprep.subr.mxu0 0.0
        %2591 = vmatpush1.msra.mxu0 0.0
        %2592 = vmatprep.subr.mxu0 0.0
        %2593 = vmatpush1.msra.mxu0 0.0
        %2594 = vmatprep.subr.mxu0 0.0
        %2595 = vmatpush1.msra.mxu0 0.0
        %2596 = vmatprep.subr.mxu0 0.0
        %2597 = vmatpush1.msra.mxu0 0.0
        %2598 = vmatprep.subr.mxu0 0.0
        %2599 = vmatpush1.msra.mxu0 0.0
        %2600 = vmatprep.subr.mxu0 0.0
        %2601 = vmatpush1.msra.mxu0 0.0
        %2602 = vmatprep.subr.mxu0 0.0
        %2603 = vmatpush1.msra.mxu0 0.0
        %2604 = vmatprep.subr.mxu0 0.0
        %2605 = vmatpush1.msra.mxu0 0.0
        %2606 = vmatprep.subr.mxu0 0.0
        %2607 = vmatpush1.msra.mxu0 0.0
        %2608 = vmatprep.subr.mxu0 0.0
        %2609 = vmatpush1.msra.mxu0 0.0
        %2610 = vmatprep.subr.mxu0 0.0
        %2611 = vmatpush1.msra.mxu0 0.0
        %2612 = vmatprep.subr.mxu0 0.0
        %2613 = vmatpush1.msra.mxu0 0.0
        %2614 = vmatprep.subr.mxu0 0.0
        %2615 = vmatpush1.msra.mxu0 0.0
        %2616 = vmatprep.subr.mxu0 0.0
        %2617 = vmatpush1.msra.mxu0 0.0
        %2618 = vmatprep.subr.mxu0 0.0
        %2619 = vmatpush1.msra.mxu0 0.0
        %2620 = vmatprep.subr.mxu0 0.0
        %2621 = vmatpush1.msra.mxu0 0.0
        %2622 = vmatprep.subr.mxu0 0.0
        %2623 = vmatpush1.msra.mxu0 0.0
        %2624 = vmatprep.subr.mxu0 0.0
        %2625 = vmatpush1.msra.mxu0 0.0
        %2626 = vmatprep.subr.mxu0 0.0
        %2627 = vmatpush1.msra.mxu0 0.0
        %2628 = vmatprep.subr.mxu0 0.0
        %2629 = vmatpush1.msra.mxu0 0.0
        %2630 = vmatprep.subr.mxu0 0.0
        %2631 = vmatpush1.msra.mxu0 0.0
        %2632 = vmatprep.subr.mxu0 0.0
        %2633 = vmatpush1.msra.mxu0 0.0
        %2634 = vmatprep.subr.mxu0 0.0
        %2635 = vmatpush1.msra.mxu0 0.0
        %2636 = vmatprep.mubr.f32.mxu0 0.0
        %2637 = vmatmul.mubr.f32.gmra.mrb[0].mxu0 %v2570
        %v2638 = vpop.f32.mrb[0].mxu0
        %v2639 = vadd.f32 0.0, %v2638
        %v2640 = vpop.f32.mrb[0].mxu0
        %2641 = vdwg.mxu0
        %2642 = vrot.lane.b32.xlu0 %v2041, 40
        %v2643 = vpop.permute.xlu0 %2642
        %v2646 = vsel %vm2047, %v2413, 0
        %2648 = vmatprep.subr.mxu0 0.0
        %2649 = vmatpush1.msra.mxu0 %v2643
        %2650 = vmatprep.subr.mxu0 0.0
        %2651 = vmatpush1.msra.mxu0 0.0
        %2652 = vmatprep.subr.mxu0 0.0
        %2653 = vmatpush1.msra.mxu0 0.0
        %2654 = vmatprep.subr.mxu0 0.0
        %2655 = vmatpush1.msra.mxu0 0.0
        %2656 = vmatprep.subr.mxu0 0.0
        %2657 = vmatpush1.msra.mxu0 0.0
        %2658 = vmatprep.subr.mxu0 0.0
        %2659 = vmatpush1.msra.mxu0 0.0
        %2660 = vmatprep.subr.mxu0 0.0
        %2661 = vmatpush1.msra.mxu0 0.0
        %2662 = vmatprep.subr.mxu0 0.0
        %2663 = vmatpush1.msra.mxu0 0.0
        %2664 = vmatprep.subr.mxu0 0.0
        %2665 = vmatpush1.msra.mxu0 0.0
        %2666 = vmatprep.subr.mxu0 0.0
        %2667 = vmatpush1.msra.mxu0 0.0
        %2668 = vmatprep.subr.mxu0 0.0
        %2669 = vmatpush1.msra.mxu0 0.0
        %2670 = vmatprep.subr.mxu0 0.0
        %2671 = vmatpush1.msra.mxu0 0.0
        %2672 = vmatprep.subr.mxu0 0.0
        %2673 = vmatpush1.msra.mxu0 0.0
        %2674 = vmatprep.subr.mxu0 0.0
        %2675 = vmatpush1.msra.mxu0 0.0
        %2676 = vmatprep.subr.mxu0 0.0
        %2677 = vmatpush1.msra.mxu0 0.0
        %2678 = vmatprep.subr.mxu0 0.0
        %2679 = vmatpush1.msra.mxu0 0.0
        %2680 = vmatprep.subr.mxu0 0.0
        %2681 = vmatpush1.msra.mxu0 0.0
        %2682 = vmatprep.subr.mxu0 0.0
        %2683 = vmatpush1.msra.mxu0 0.0
        %2684 = vmatprep.subr.mxu0 0.0
        %2685 = vmatpush1.msra.mxu0 0.0
        %2686 = vmatprep.subr.mxu0 0.0
        %2687 = vmatpush1.msra.mxu0 0.0
        %2688 = vmatprep.subr.mxu0 0.0
        %2689 = vmatpush1.msra.mxu0 0.0
        %2690 = vmatprep.subr.mxu0 0.0
        %2691 = vmatpush1.msra.mxu0 0.0
        %2692 = vmatprep.subr.mxu0 0.0
        %2693 = vmatpush1.msra.mxu0 0.0
        %2694 = vmatprep.subr.mxu0 0.0
        %2695 = vmatpush1.msra.mxu0 0.0
        %2696 = vmatprep.subr.mxu0 0.0
        %2697 = vmatpush1.msra.mxu0 0.0
        %2698 = vmatprep.subr.mxu0 0.0
        %2699 = vmatpush1.msra.mxu0 0.0
        %2700 = vmatprep.subr.mxu0 0.0
        %2701 = vmatpush1.msra.mxu0 0.0
        %2702 = vmatprep.subr.mxu0 0.0
        %2703 = vmatpush1.msra.mxu0 0.0
        %2704 = vmatprep.subr.mxu0 0.0
        %2705 = vmatpush1.msra.mxu0 0.0
        %2706 = vmatprep.subr.mxu0 0.0
        %2707 = vmatpush1.msra.mxu0 0.0
        %2708 = vmatprep.subr.mxu0 0.0
        %2709 = vmatpush1.msra.mxu0 0.0
        %2710 = vmatprep.subr.mxu0 0.0
        %2711 = vmatpush1.msra.mxu0 0.0
        %2712 = vmatprep.mubr.f32.mxu0 0.0
        %2713 = vmatmul.mubr.f32.gmra.mrb[0].mxu0 %v2646
        %v2714 = vpop.f32.mrb[0].mxu0
        %v2715 = vadd.f32 0.0, %v2714
        %v2716 = vpop.f32.mrb[0].mxu0
        %2717 = vdwg.mxu0
        %2719 = vrot.lane.b32.xlu0 %v2563, 8
        %v2720 = vpop.permute.xlu0 %2719
        %2723 = vrot.lane.b32.xlu0 %v2639, 16
        %v2724 = vpop.permute.xlu0 %2723
        %2727 = vrot.lane.b32.xlu0 %v2715, 24
        %v2728 = vpop.permute.xlu0 %2727
        %v2730 = vsel %vm2047, %v2487, %v2720
        %vm2731 = vcmask 130048
        %v2732 = vsel %vm2731, %v2730, %v2724
        %vm2733 = vcmask 195584
        %v2734 = vsel %vm2733, %v2732, %v2728
        %v2736 = vlaneseq
        %v2737 = vshrl.u32 %v2736, 7
        %v2738 = vsub.s32 0, %v2737
        %v2739 = vrot.slane %v1961, %v2738
        %v2742 = vsel %vm1970, %v2734, 0
        %2744 = vmatprep.subr.mxu0 0.0
        %2745 = vmatpush1.msra.mxu0 %v1957
        %2746 = vmatprep.subr.mxu0 0.0
        %2747 = vmatpush1.msra.mxu0 %v1958
        %2748 = vmatprep.subr.mxu0 0.0
        %2749 = vmatpush1.msra.mxu0 %v1959
        %2750 = vmatprep.subr.mxu0 0.0
        %2751 = vmatpush1.msra.mxu0 %v1960
        %2752 = vmatprep.subr.mxu0 0.0
        %2753 = vmatpush1.msra.mxu0 0.0
        %2754 = vmatprep.subr.mxu0 0.0
        %2755 = vmatpush1.msra.mxu0 0.0
        %2756 = vmatprep.subr.mxu0 0.0
        %2757 = vmatpush1.msra.mxu0 0.0
        %2758 = vmatprep.subr.mxu0 0.0
        %2759 = vmatpush1.msra.mxu0 0.0
        %2760 = vmatprep.subr.mxu0 0.0
        %2761 = vmatpush1.msra.mxu0 0.0
        %2762 = vmatprep.subr.mxu0 0.0
        %2763 = vmatpush1.msra.mxu0 0.0
        %2764 = vmatprep.subr.mxu0 0.0
        %2765 = vmatpush1.msra.mxu0 0.0
        %2766 = vmatprep.subr.mxu0 0.0
        %2767 = vmatpush1.msra.mxu0 0.0
        %2768 = vmatprep.subr.mxu0 0.0
        %2769 = vmatpush1.msra.mxu0 0.0
        %2770 = vmatprep.subr.mxu0 0.0
        %2771 = vmatpush1.msra.mxu0 0.0
        %2772 = vmatprep.subr.mxu0 0.0
        %2773 = vmatpush1.msra.mxu0 0.0
        %2774 = vmatprep.subr.mxu0 0.0
        %2775 = vmatpush1.msra.mxu0 0.0
        %2776 = vmatprep.subr.mxu0 0.0
        %2777 = vmatpush1.msra.mxu0 0.0
        %2778 = vmatprep.subr.mxu0 0.0
        %2779 = vmatpush1.msra.mxu0 0.0
        %2780 = vmatprep.subr.mxu0 0.0
        %2781 = vmatpush1.msra.mxu0 0.0
        %2782 = vmatprep.subr.mxu0 0.0
        %2783 = vmatpush1.msra.mxu0 0.0
        %2784 = vmatprep.subr.mxu0 0.0
        %2785 = vmatpush1.msra.mxu0 0.0
        %2786 = vmatprep.subr.mxu0 0.0
        %2787 = vmatpush1.msra.mxu0 0.0
        %2788 = vmatprep.subr.mxu0 0.0
        %2789 = vmatpush1.msra.mxu0 0.0
        %2790 = vmatprep.subr.mxu0 0.0
        %2791 = vmatpush1.msra.mxu0 0.0
        %2792 = vmatprep.subr.mxu0 0.0
        %2793 = vmatpush1.msra.mxu0 0.0
        %2794 = vmatprep.subr.mxu0 0.0
        %2795 = vmatpush1.msra.mxu0 0.0
        %2796 = vmatprep.subr.mxu0 0.0
        %2797 = vmatpush1.msra.mxu0 0.0
        %2798 = vmatprep.subr.mxu0 0.0
        %2799 = vmatpush1.msra.mxu0 0.0
        %2800 = vmatprep.subr.mxu0 0.0
        %2801 = vmatpush1.msra.mxu0 0.0
        %2802 = vmatprep.subr.mxu0 0.0
        %2803 = vmatpush1.msra.mxu0 0.0
        %2804 = vmatprep.subr.mxu0 0.0
        %2805 = vmatpush1.msra.mxu0 0.0
        %2806 = vmatprep.subr.mxu0 0.0
        %2807 = vmatpush1.msra.mxu0 0.0
        %2808 = vmatprep.mubr.f32.mxu0 0.0
        %2809 = vmatmul.mubr.f32.gmra.mrb[0].mxu0 %v2742
        %v2810 = vpop.f32.mrb[0].mxu0
        %v2811 = vadd.f32 %v2739, %v2810
        %v2812 = vpop.f32.mrb[0].mxu0
        %2813 = vdwg.mxu0
        %v2814 = vadd.f32 %v2811, %v1764
        %v2815 = vsel %vm1970, %v2814, 0.0
        %2816 = vadd.xlane.f32.xlu0 %v2815
        %v2817 = vpop.xlane.xlu0 %2816
        %v2818 = vrcp.pop 32.0
        %v2819 = vmul.f32 %v2817, %v2818
        %v2820 = vmul.f32 %v2814, %v2814
        %v2821 = vsel %vm1970, %v2820, 0.0
        %2822 = vadd.xlane.f32.xlu0 %v2821
        %v2823 = vpop.xlane.xlu0 %2822
        %v2824 = vmul.f32 %v2823, %v2818
        %v2825 = vmul.f32 %v2819, %v2819
        %v2826 = vsub.f32 %v2824, %v2825
        %v2827 = vsub.f32 %v2814, %v2819
        %v2828 = vadd.f32 %v2826, 1e-05
        %v2829 = vrsqrt.pop %v2828
        %v2830 = vmul.f32 %v2827, %v2829
        %v2832 = vlaneseq
        %v2833 = vshrl.u32 %v2832, 7
        %v2834 = vsub.s32 0, %v2833
        %v2835 = vrot.slane %v1962, %v2834
        %v2837 = vmul.f32 %v2830, %v2835
        %v2839 = vlaneseq
        %v2840 = vshrl.u32 %v2839, 7
        %v2841 = vsub.s32 0, %v2840
        %v2842 = vrot.slane %v1963, %v2841
        %v2844 = vadd.f32 %v2837, %v2842
        %2846 = vset.pattern.permute.xlu0 0
        %2847 = vperm.xlu0 %2846, %v1935
        %v2848 = vpop.permute.xlu0 %2847
        %v2850 = vmul.f32 %v2844, %v2848
        %v2851 = vld [vmem:[%s31] sm:$0xff]
        %v2852 = vld [vmem:[%s31 + $0x8] sm:$0xff]
        %v2853 = vld [vmem:[%s31 + $0x10] sm:$0xff]
        %v2854 = vld [vmem:[%s31 + $0x18] sm:$0xff]
        %v2855 = vld [vmem:[#allocation9] sm:$0x1]
        %v2856 = vld [vmem:[%s35] sm:$0xff]
        %v2857 = vld [vmem:[%s35 + $0x8] sm:$0xff]
        %v2858 = vld [vmem:[%s35 + $0x10] sm:$0xff]
        %v2859 = vld [vmem:[%s35 + $0x18] sm:$0xff]
        %v2860 = vld [vmem:[%s35 + $0x20] sm:$0xff]
        %v2861 = vld [vmem:[%s35 + $0x28] sm:$0xff]
        %v2862 = vld [vmem:[%s35 + $0x30] sm:$0xff]
        %v2863 = vld [vmem:[%s35 + $0x38] sm:$0xff]
        %v2864 = vld [vmem:[#allocation10] sm:$0x1]
        %v2865 = vld [vmem:[#allocation12] sm:$0x1]
        %v2866 = vld [vmem:[#allocation13] sm:$0x1]
        %v2868 = vlaneseq
        %v2869 = vshrl.u32 %v2868, 7
        %v2870 = vsub.s32 0, %v2869
        %v2871 = vrot.slane %v2855, %v2870
        %v2874 = vsel %vm1970, %v2850, 0
        %2876 = vmatprep.subr.mxu0 0.0
        %2877 = vmatpush1.msra.mxu0 %v2851
        %2878 = vmatprep.subr.mxu0 0.0
        %2879 = vmatpush1.msra.mxu0 %v2852
        %2880 = vmatprep.subr.mxu0 0.0
        %2881 = vmatpush1.msra.mxu0 %v2853
        %2882 = vmatprep.subr.mxu0 0.0
        %2883 = vmatpush1.msra.mxu0 %v2854
        %2884 = vmatprep.subr.mxu0 0.0
        %2885 = vmatpush1.msra.mxu0 0.0
        %2886 = vmatprep.subr.mxu0 0.0
        %2887 = vmatpush1.msra.mxu0 0.0
        %2888 = vmatprep.subr.mxu0 0.0
        %2889 = vmatpush1.msra.mxu0 0.0
        %2890 = vmatprep.subr.mxu0 0.0
        %2891 = vmatpush1.msra.mxu0 0.0
        %2892 = vmatprep.subr.mxu0 0.0
        %2893 = vmatpush1.msra.mxu0 0.0
        %2894 = vmatprep.subr.mxu0 0.0
        %2895 = vmatpush1.msra.mxu0 0.0
        %2896 = vmatprep.subr.mxu0 0.0
        %2897 = vmatpush1.msra.mxu0 0.0
        %2898 = vmatprep.subr.mxu0 0.0
        %2899 = vmatpush1.msra.mxu0 0.0
        %2900 = vmatprep.subr.mxu0 0.0
        %2901 = vmatpush1.msra.mxu0 0.0
        %2902 = vmatprep.subr.mxu0 0.0
        %2903 = vmatpush1.msra.mxu0 0.0
        %2904 = vmatprep.subr.mxu0 0.0
        %2905 = vmatpush1.msra.mxu0 0.0
        %2906 = vmatprep.subr.mxu0 0.0
        %2907 = vmatpush1.msra.mxu0 0.0
        %2908 = vmatprep.subr.mxu0 0.0
        %2909 = vmatpush1.msra.mxu0 0.0
        %2910 = vmatprep.subr.mxu0 0.0
        %2911 = vmatpush1.msra.mxu0 0.0
        %2912 = vmatprep.subr.mxu0 0.0
        %2913 = vmatpush1.msra.mxu0 0.0
        %2914 = vmatprep.subr.mxu0 0.0
        %2915 = vmatpush1.msra.mxu0 0.0
        %2916 = vmatprep.subr.mxu0 0.0
        %2917 = vmatpush1.msra.mxu0 0.0
        %2918 = vmatprep.subr.mxu0 0.0
        %2919 = vmatpush1.msra.mxu0 0.0
        %2920 = vmatprep.subr.mxu0 0.0
        %2921 = vmatpush1.msra.mxu0 0.0
        %2922 = vmatprep.subr.mxu0 0.0
        %2923 = vmatpush1.msra.mxu0 0.0
        %2924 = vmatprep.subr.mxu0 0.0
        %2925 = vmatpush1.msra.mxu0 0.0
        %2926 = vmatprep.subr.mxu0 0.0
        %2927 = vmatpush1.msra.mxu0 0.0
        %2928 = vmatprep.subr.mxu0 0.0
        %2929 = vmatpush1.msra.mxu0 0.0
        %2930 = vmatprep.subr.mxu0 0.0
        %2931 = vmatpush1.msra.mxu0 0.0
        %2932 = vmatprep.subr.mxu0 0.0
        %2933 = vmatpush1.msra.mxu0 0.0
        %2934 = vmatprep.subr.mxu0 0.0
        %2935 = vmatpush1.msra.mxu0 0.0
        %2936 = vmatprep.subr.mxu0 0.0
        %2937 = vmatpush1.msra.mxu0 0.0
        %2938 = vmatprep.subr.mxu0 0.0
        %2939 = vmatpush1.msra.mxu0 0.0
        %2940 = vmatprep.mubr.f32.mxu0 0.0
        %2941 = vmatmul.mubr.f32.gmra.mrb[0].mxu0 %v2874
        %v2942 = vpop.f32.mrb[0].mxu0
        %v2943 = vadd.f32 %v2871, %v2942
        %v2944 = vpop.f32.mrb[0].mxu0
        %2945 = vdwg.mxu0
        %v2946 = vmax.f32 %v2943, 0.0
        %v2948 = vlaneseq
        %v2949 = vshrl.u32 %v2948, 7
        %v2950 = vsub.s32 0, %v2949
        %v2951 = vrot.slane %v2864, %v2950
        %v2954 = vsel %vm1619, %v2946, 0
        %2956 = vmatprep.subr.mxu0 0.0
        %2957 = vmatpush1.msra.mxu0 %v2856
        %2958 = vmatprep.subr.mxu0 0.0
        %2959 = vmatpush1.msra.mxu0 %v2857
        %2960 = vmatprep.subr.mxu0 0.0
        %2961 = vmatpush1.msra.mxu0 %v2858
        %2962 = vmatprep.subr.mxu0 0.0
        %2963 = vmatpush1.msra.mxu0 %v2859
        %2964 = vmatprep.subr.mxu0 0.0
        %2965 = vmatpush1.msra.mxu0 %v2860
        %2966 = vmatprep.subr.mxu0 0.0
        %2967 = vmatpush1.msra.mxu0 %v2861
        %2968 = vmatprep.subr.mxu0 0.0
        %2969 = vmatpush1.msra.mxu0 %v2862
        %2970 = vmatprep.subr.mxu0 0.0
        %2971 = vmatpush1.msra.mxu0 %v2863
        %2972 = vmatprep.subr.mxu0 0.0
        %2973 = vmatpush1.msra.mxu0 0.0
        %2974 = vmatprep.subr.mxu0 0.0
        %2975 = vmatpush1.msra.mxu0 0.0
        %2976 = vmatprep.subr.mxu0 0.0
        %2977 = vmatpush1.msra.mxu0 0.0
        %2978 = vmatprep.subr.mxu0 0.0
        %2979 = vmatpush1.msra.mxu0 0.0
        %2980 = vmatprep.subr.mxu0 0.0
        %2981 = vmatpush1.msra.mxu0 0.0
        %2982 = vmatprep.subr.mxu0 0.0
        %2983 = vmatpush1.msra.mxu0 0.0
        %2984 = vmatprep.subr.mxu0 0.0
        %2985 = vmatpush1.msra.mxu0 0.0
        %2986 = vmatprep.subr.mxu0 0.0
        %2987 = vmatpush1.msra.mxu0 0.0
        %2988 = vmatprep.subr.mxu0 0.0
        %2989 = vmatpush1.msra.mxu0 0.0
        %2990 = vmatprep.subr.mxu0 0.0
        %2991 = vmatpush1.msra.mxu0 0.0
        %2992 = vmatprep.subr.mxu0 0.0
        %2993 = vmatpush1.msra.mxu0 0.0
        %2994 = vmatprep.subr.mxu0 0.0
        %2995 = vmatpush1.msra.mxu0 0.0
        %2996 = vmatprep.subr.mxu0 0.0
        %2997 = vmatpush1.msra.mxu0 0.0
        %2998 = vmatprep.subr.mxu0 0.0
        %2999 = vmatpush1.msra.mxu0 0.0
        %3000 = vmatprep.subr.mxu0 0.0
        %3001 = vmatpush1.msra.mxu0 0.0
        %3002 = vmatprep.subr.mxu0 0.0
        %3003 = vmatpush1.msra.mxu0 0.0
        %3004 = vmatprep.subr.mxu0 0.0
        %3005 = vmatpush1.msra.mxu0 0.0
        %3006 = vmatprep.subr.mxu0 0.0
        %3007 = vmatpush1.msra.mxu0 0.0
        %3008 = vmatprep.subr.mxu0 0.0
        %3009 = vmatpush1.msra.mxu0 0.0
        %3010 = vmatprep.subr.mxu0 0.0
        %3011 = vmatpush1.msra.mxu0 0.0
        %3012 = vmatprep.subr.mxu0 0.0
        %3013 = vmatpush1.msra.mxu0 0.0
        %3014 = vmatprep.subr.mxu0 0.0
        %3015 = vmatpush1.msra.mxu0 0.0
        %3016 = vmatprep.subr.mxu0 0.0
        %3017 = vmatpush1.msra.mxu0 0.0
        %3018 = vmatprep.subr.mxu0 0.0
        %3019 = vmatpush1.msra.mxu0 0.0
        %3020 = vmatprep.mubr.f32.mxu0 0.0
        %3021 = vmatmul.mubr.f32.gmra.mrb[0].mxu0 %v2954
        %v3022 = vpop.f32.mrb[0].mxu0
        %v3023 = vadd.f32 %v2951, %v3022
        %v3024 = vpop.f32.mrb[0].mxu0
        %3025 = vdwg.mxu0
        %v3026 = vadd.f32 %v3023, %v2850
        %v3027 = vsel %vm1970, %v3026, 0.0
        %3028 = vadd.xlane.f32.xlu0 %v3027
        %v3029 = vpop.xlane.xlu0 %3028
        %v3030 = vmul.f32 %v3029, %v2818
        %v3031 = vmul.f32 %v3026, %v3026
        %v3032 = vsel %vm1970, %v3031, 0.0
        %3033 = vadd.xlane.f32.xlu0 %v3032
        %v3034 = vpop.xlane.xlu0 %3033
        %v3035 = vmul.f32 %v3034, %v2818
        %v3036 = vmul.f32 %v3030, %v3030
        %v3037 = vsub.f32 %v3035, %v3036
        %v3038 = vsub.f32 %v3026, %v3030
        %v3039 = vadd.f32 %v3037, 1e-05
        %v3040 = vrsqrt.pop %v3039
        %v3041 = vmul.f32 %v3038, %v3040
        %v3043 = vlaneseq
        %v3044 = vshrl.u32 %v3043, 7
        %v3045 = vsub.s32 0, %v3044
        %v3046 = vrot.slane %v2865, %v3045
        %v3048 = vmul.f32 %v3041, %v3046
        %v3050 = vlaneseq
        %v3051 = vshrl.u32 %v3050, 7
        %v3052 = vsub.s32 0, %v3051
        %v3053 = vrot.slane %v2866, %v3052
        %v3055 = vadd.f32 %v3048, %v3053
        %v3056 = vmul.f32 %v3055, %v2848
        %s3057 = scalar_lea.vmem %s19, 32
        %v3058 = vld [vmem:[%s3057] sm:$0xff]
        %v3059 = vld [vmem:[%s3057 + $0x8] sm:$0xff]
        %v3060 = vld [vmem:[%s3057 + $0x10] sm:$0xff]
        %v3061 = vld [vmem:[%s3057 + $0x18] sm:$0xff]
        %s3062 = scalar_lea.vmem [#allocation2], 1
        %v3063 = vld [vmem:[%s3062] sm:$0x1]
        %s3064 = scalar_lea.vmem %s23, 32
        %v3065 = vld [vmem:[%s3064] sm:$0xff]
        %v3066 = vld [vmem:[%s3064 + $0x8] sm:$0xff]
        %v3067 = vld [vmem:[%s3064 + $0x10] sm:$0xff]
        %v3068 = vld [vmem:[%s3064 + $0x18] sm:$0xff]
        %s3069 = scalar_lea.vmem [#allocation4], 1
        %v3070 = vld [vmem:[%s3069] sm:$0x1]
        %s3071 = scalar_lea.vmem [#allocation6], 1
        %v3072 = vld [vmem:[%s3071] sm:$0x1]
        %s3073 = scalar_lea.vmem [#allocation7], 1
        %v3074 = vld [vmem:[%s3073] sm:$0x1]
        %v3076 = vlaneseq
        %v3077 = vshrl.u32 %v3076, 7
        %v3078 = vsub.s32 0, %v3077
        %v3079 = vrot.slane %v3063, %v3078
        %v3082 = vsel %vm1970, %v3056, 0
        %3084 = vmatprep.subr.mxu0 0.0
        %3085 = vmatpush1.msra.mxu0 %v3058
        %3086 = vmatprep.subr.mxu0 0.0
        %3087 = vmatpush1.msra.mxu0 %v3059
        %3088 = vmatprep.subr.mxu0 0.0
        %3089 = vmatpush1.msra.mxu0 %v3060
        %3090 = vmatprep.subr.mxu0 0.0
        %3091 = vmatpush1.msra.mxu0 %v3061
        %3092 = vmatprep.subr.mxu0 0.0
        %3093 = vmatpush1.msra.mxu0 0.0
        %3094 = vmatprep.subr.mxu0 0.0
        %3095 = vmatpush1.msra.mxu0 0.0
        %3096 = vmatprep.subr.mxu0 0.0
        %3097 = vmatpush1.msra.mxu0 0.0
        %3098 = vmatprep.subr.mxu0 0.0
        %3099 = vmatpush1.msra.mxu0 0.0
        %3100 = vmatprep.subr.mxu0 0.0
        %3101 = vmatpush1.msra.mxu0 0.0
        %3102 = vmatprep.subr.mxu0 0.0
        %3103 = vmatpush1.msra.mxu0 0.0
        %3104 = vmatprep.subr.mxu0 0.0
        %3105 = vmatpush1.msra.mxu0 0.0
        %3106 = vmatprep.subr.mxu0 0.0
        %3107 = vmatpush1.msra.mxu0 0.0
        %3108 = vmatprep.subr.mxu0 0.0
        %3109 = vmatpush1.msra.mxu0 0.0
        %3110 = vmatprep.subr.mxu0 0.0
        %3111 = vmatpush1.msra.mxu0 0.0
        %3112 = vmatprep.subr.mxu0 0.0
        %3113 = vmatpush1.msra.mxu0 0.0
        %3114 = vmatprep.subr.mxu0 0.0
        %3115 = vmatpush1.msra.mxu0 0.0
        %3116 = vmatprep.subr.mxu0 0.0
        %3117 = vmatpush1.msra.mxu0 0.0
        %3118 = vmatprep.subr.mxu0 0.0
        %3119 = vmatpush1.msra.mxu0 0.0
        %3120 = vmatprep.subr.mxu0 0.0
        %3121 = vmatpush1.msra.mxu0 0.0
        %3122 = vmatprep.subr.mxu0 0.0
        %3123 = vmatpush1.msra.mxu0 0.0
        %3124 = vmatprep.subr.mxu0 0.0
        %3125 = vmatpush1.msra.mxu0 0.0
        %3126 = vmatprep.subr.mxu0 0.0
        %3127 = vmatpush1.msra.mxu0 0.0
        %3128 = vmatprep.subr.mxu0 0.0
        %3129 = vmatpush1.msra.mxu0 0.0
        %3130 = vmatprep.subr.mxu0 0.0
        %3131 = vmatpush1.msra.mxu0 0.0
        %3132 = vmatprep.subr.mxu0 0.0
        %3133 = vmatpush1.msra.mxu0 0.0
        %3134 = vmatprep.subr.mxu0 0.0
        %3135 = vmatpush1.msra.mxu0 0.0
        %3136 = vmatprep.subr.mxu0 0.0
        %3137 = vmatpush1.msra.mxu0 0.0
        %3138 = vmatprep.subr.mxu0 0.0
        %3139 = vmatpush1.msra.mxu0 0.0
        %3140 = vmatprep.subr.mxu0 0.0
        %3141 = vmatpush1.msra.mxu0 0.0
        %3142 = vmatprep.subr.mxu0 0.0
        %3143 = vmatpush1.msra.mxu0 0.0
        %3144 = vmatprep.subr.mxu0 0.0
        %3145 = vmatpush1.msra.mxu0 0.0
        %3146 = vmatprep.subr.mxu0 0.0
        %3147 = vmatpush1.msra.mxu0 0.0
        %3148 = vmatprep.mubr.f32.mxu0 0.0
        %3149 = vmatmul.mubr.f32.gmra.mrb[0].mxu0 %v3082
        %v3150 = vpop.f32.mrb[0].mxu0
        %v3151 = vadd.f32 %v3079, %v3150
        %v3152 = vpop.f32.mrb[0].mxu0
        %3153 = vdwg.mxu0
        %3155 = vrot.lane.b32.xlu0 %v3151, 96
        %v3156 = vpop.permute.xlu0 %3155
        %v3157 = vsel %vm2047, %v3151, 0
        %v3159 = vsel %vm2047, %v3156, 0
        %3161 = vmatprep.subr.mxu0 0.0
        %3162 = vmatpush1.xpose.msra.mxu0 %v3159
        %3163 = vmatprep.subr.mxu0 0.0
        %3164 = vmatpush1.xpose.msra.mxu0 0.0
        %3165 = vmatprep.subr.mxu0 0.0
        %3166 = vmatpush1.xpose.msra.mxu0 0.0
        %3167 = vmatprep.subr.mxu0 0.0
        %3168 = vmatpush1.xpose.msra.mxu0 0.0
        %3169 = vmatprep.subr.mxu0 0.0
        %3170 = vmatpush1.xpose.msra.mxu0 0.0
        %3171 = vmatprep.subr.mxu0 0.0
        %3172 = vmatpush1.xpose.msra.mxu0 0.0
        %3173 = vmatprep.subr.mxu0 0.0
        %3174 = vmatpush1.xpose.msra.mxu0 0.0
        %3175 = vmatprep.subr.mxu0 0.0
        %3176 = vmatpush1.xpose.msra.mxu0 0.0
        %3177 = vmatprep.subr.mxu0 0.0
        %3178 = vmatpush1.xpose.msra.mxu0 0.0
        %3179 = vmatprep.subr.mxu0 0.0
        %3180 = vmatpush1.xpose.msra.mxu0 0.0
        %3181 = vmatprep.subr.mxu0 0.0
        %3182 = vmatpush1.xpose.msra.mxu0 0.0
        %3183 = vmatprep.subr.mxu0 0.0
        %3184 = vmatpush1.xpose.msra.mxu0 0.0
        %3185 = vmatprep.subr.mxu0 0.0
        %3186 = vmatpush1.xpose.msra.mxu0 0.0
        %3187 = vmatprep.subr.mxu0 0.0
        %3188 = vmatpush1.xpose.msra.mxu0 0.0
        %3189 = vmatprep.subr.mxu0 0.0
        %3190 = vmatpush1.xpose.msra.mxu0 0.0
        %3191 = vmatprep.subr.mxu0 0.0
        %3192 = vmatpush1.xpose.msra.mxu0 0.0
        %3193 = vmatprep.subr.mxu0 0.0
        %3194 = vmatpush1.xpose.msra.mxu0 0.0
        %3195 = vmatprep.subr.mxu0 0.0
        %3196 = vmatpush1.xpose.msra.mxu0 0.0
        %3197 = vmatprep.subr.mxu0 0.0
        %3198 = vmatpush1.xpose.msra.mxu0 0.0
        %3199 = vmatprep.subr.mxu0 0.0
        %3200 = vmatpush1.xpose.msra.mxu0 0.0
        %3201 = vmatprep.subr.mxu0 0.0
        %3202 = vmatpush1.xpose.msra.mxu0 0.0
        %3203 = vmatprep.subr.mxu0 0.0
        %3204 = vmatpush1.xpose.msra.mxu0 0.0
        %3205 = vmatprep.subr.mxu0 0.0
        %3206 = vmatpush1.xpose.msra.mxu0 0.0
        %3207 = vmatprep.subr.mxu0 0.0
        %3208 = vmatpush1.xpose.msra.mxu0 0.0
        %3209 = vmatprep.subr.mxu0 0.0
        %3210 = vmatpush1.xpose.msra.mxu0 0.0
        %3211 = vmatprep.subr.mxu0 0.0
        %3212 = vmatpush1.xpose.msra.mxu0 0.0
        %3213 = vmatprep.subr.mxu0 0.0
        %3214 = vmatpush1.xpose.msra.mxu0 0.0
        %3215 = vmatprep.subr.mxu0 0.0
        %3216 = vmatpush1.xpose.msra.mxu0 0.0
        %3217 = vmatprep.subr.mxu0 0.0
        %3218 = vmatpush1.xpose.msra.mxu0 0.0
        %3219 = vmatprep.subr.mxu0 0.0
        %3220 = vmatpush1.xpose.msra.mxu0 0.0
        %3221 = vmatprep.subr.mxu0 0.0
        %3222 = vmatpush1.xpose.msra.mxu0 0.0
        %3223 = vmatprep.subr.mxu0 0.0
        %3224 = vmatpush1.xpose.msra.mxu0 0.0
        %3225 = vmatprep.mubr.f32.mxu0 0.0
        %3226 = vmatmul.mubr.f32.gmra.mrb[0].mxu0 %v3157
        %v3227 = vpop.f32.mrb[0].mxu0
        %v3228 = vadd.f32 0.0, %v3227
        %v3229 = vpop.f32.mrb[0].mxu0
        %3230 = vdwg.mxu0
        %3231 = vrot.lane.b32.xlu0 %v3151, 120
        %v3232 = vpop.permute.xlu0 %3231
        %3233 = vrot.lane.b32.xlu0 %v3151, 88
        %v3234 = vpop.permute.xlu0 %3233
        %v3235 = vsel %vm2047, %v3232, 0
        %v3237 = vsel %vm2047, %v3234, 0
        %3239 = vmatprep.subr.mxu0 0.0
        %3240 = vmatpush1.xpose.msra.mxu0 %v3237
        %3241 = vmatprep.subr.mxu0 0.0
        %3242 = vmatpush1.xpose.msra.mxu0 0.0
        %3243 = vmatprep.subr.mxu0 0.0
        %3244 = vmatpush1.xpose.msra.mxu0 0.0
        %3245 = vmatprep.subr.mxu0 0.0
        %3246 = vmatpush1.xpose.msra.mxu0 0.0
        %3247 = vmatprep.subr.mxu0 0.0
        %3248 = vmatpush1.xpose.msra.mxu0 0.0
        %3249 = vmatprep.subr.mxu0 0.0
        %3250 = vmatpush1.xpose.msra.mxu0 0.0
        %3251 = vmatprep.subr.mxu0 0.0
        %3252 = vmatpush1.xpose.msra.mxu0 0.0
        %3253 = vmatprep.subr.mxu0 0.0
        %3254 = vmatpush1.xpose.msra.mxu0 0.0
        %3255 = vmatprep.subr.mxu0 0.0
        %3256 = vmatpush1.xpose.msra.mxu0 0.0
        %3257 = vmatprep.subr.mxu0 0.0
        %3258 = vmatpush1.xpose.msra.mxu0 0.0
        %3259 = vmatprep.subr.mxu0 0.0
        %3260 = vmatpush1.xpose.msra.mxu0 0.0
        %3261 = vmatprep.subr.mxu0 0.0
        %3262 = vmatpush1.xpose.msra.mxu0 0.0
        %3263 = vmatprep.subr.mxu0 0.0
        %3264 = vmatpush1.xpose.msra.mxu0 0.0
        %3265 = vmatprep.subr.mxu0 0.0
        %3266 = vmatpush1.xpose.msra.mxu0 0.0
        %3267 = vmatprep.subr.mxu0 0.0
        %3268 = vmatpush1.xpose.msra.mxu0 0.0
        %3269 = vmatprep.subr.mxu0 0.0
        %3270 = vmatpush1.xpose.msra.mxu0 0.0
        %3271 = vmatprep.subr.mxu0 0.0
        %3272 = vmatpush1.xpose.msra.mxu0 0.0
        %3273 = vmatprep.subr.mxu0 0.0
        %3274 = vmatpush1.xpose.msra.mxu0 0.0
        %3275 = vmatprep.subr.mxu0 0.0
        %3276 = vmatpush1.xpose.msra.mxu0 0.0
        %3277 = vmatprep.subr.mxu0 0.0
        %3278 = vmatpush1.xpose.msra.mxu0 0.0
        %3279 = vmatprep.subr.mxu0 0.0
        %3280 = vmatpush1.xpose.msra.mxu0 0.0
        %3281 = vmatprep.subr.mxu0 0.0
        %3282 = vmatpush1.xpose.msra.mxu0 0.0
        %3283 = vmatprep.subr.mxu0 0.0
        %3284 = vmatpush1.xpose.msra.mxu0 0.0
        %3285 = vmatprep.subr.mxu0 0.0
        %3286 = vmatpush1.xpose.msra.mxu0 0.0
        %3287 = vmatprep.subr.mxu0 0.0
        %3288 = vmatpush1.xpose.msra.mxu0 0.0
        %3289 = vmatprep.subr.mxu0 0.0
        %3290 = vmatpush1.xpose.msra.mxu0 0.0
        %3291 = vmatprep.subr.mxu0 0.0
        %3292 = vmatpush1.xpose.msra.mxu0 0.0
        %3293 = vmatprep.subr.mxu0 0.0
        %3294 = vmatpush1.xpose.msra.mxu0 0.0
        %3295 = vmatprep.subr.mxu0 0.0
        %3296 = vmatpush1.xpose.msra.mxu0 0.0
        %3297 = vmatprep.subr.mxu0 0.0
        %3298 = vmatpush1.xpose.msra.mxu0 0.0
        %3299 = vmatprep.subr.mxu0 0.0
        %3300 = vmatpush1.xpose.msra.mxu0 0.0
        %3301 = vmatprep.subr.mxu0 0.0
        %3302 = vmatpush1.xpose.msra.mxu0 0.0
        %3303 = vmatprep.mubr.f32.mxu0 0.0
        %3304 = vmatmul.mubr.f32.gmra.mrb[0].mxu0 %v3235
        %v3305 = vpop.f32.mrb[0].mxu0
        %v3306 = vadd.f32 0.0, %v3305
        %v3307 = vpop.f32.mrb[0].mxu0
        %3308 = vdwg.mxu0
        %3309 = vrot.lane.b32.xlu0 %v3151, 112
        %v3310 = vpop.permute.xlu0 %3309
        %3311 = vrot.lane.b32.xlu0 %v3151, 80
        %v3312 = vpop.permute.xlu0 %3311
        %v3313 = vsel %vm2047, %v3310, 0
        %v3315 = vsel %vm2047, %v3312, 0
        %3317 = vmatprep.subr.mxu0 0.0
        %3318 = vmatpush1.xpose.msra.mxu0 %v3315
        %3319 = vmatprep.subr.mxu0 0.0
        %3320 = vmatpush1.xpose.msra.mxu0 0.0
        %3321 = vmatprep.subr.mxu0 0.0
        %3322 = vmatpush1.xpose.msra.mxu0 0.0
        %3323 = vmatprep.subr.mxu0 0.0
        %3324 = vmatpush1.xpose.msra.mxu0 0.0
        %3325 = vmatprep.subr.mxu0 0.0
        %3326 = vmatpush1.xpose.msra.mxu0 0.0
        %3327 = vmatprep.subr.mxu0 0.0
        %3328 = vmatpush1.xpose.msra.mxu0 0.0
        %3329 = vmatprep.subr.mxu0 0.0
        %3330 = vmatpush1.xpose.msra.mxu0 0.0
        %3331 = vmatprep.subr.mxu0 0.0
        %3332 = vmatpush1.xpose.msra.mxu0 0.0
        %3333 = vmatprep.subr.mxu0 0.0
        %3334 = vmatpush1.xpose.msra.mxu0 0.0
        %3335 = vmatprep.subr.mxu0 0.0
        %3336 = vmatpush1.xpose.msra.mxu0 0.0
        %3337 = vmatprep.subr.mxu0 0.0
        %3338 = vmatpush1.xpose.msra.mxu0 0.0
        %3339 = vmatprep.subr.mxu0 0.0
        %3340 = vmatpush1.xpose.msra.mxu0 0.0
        %3341 = vmatprep.subr.mxu0 0.0
        %3342 = vmatpush1.xpose.msra.mxu0 0.0
        %3343 = vmatprep.subr.mxu0 0.0
        %3344 = vmatpush1.xpose.msra.mxu0 0.0
        %3345 = vmatprep.subr.mxu0 0.0
        %3346 = vmatpush1.xpose.msra.mxu0 0.0
        %3347 = vmatprep.subr.mxu0 0.0
        %3348 = vmatpush1.xpose.msra.mxu0 0.0
        %3349 = vmatprep.subr.mxu0 0.0
        %3350 = vmatpush1.xpose.msra.mxu0 0.0
        %3351 = vmatprep.subr.mxu0 0.0
        %3352 = vmatpush1.xpose.msra.mxu0 0.0
        %3353 = vmatprep.subr.mxu0 0.0
        %3354 = vmatpush1.xpose.msra.mxu0 0.0
        %3355 = vmatprep.subr.mxu0 0.0
        %3356 = vmatpush1.xpose.msra.mxu0 0.0
        %3357 = vmatprep.subr.mxu0 0.0
        %3358 = vmatpush1.xpose.msra.mxu0 0.0
        %3359 = vmatprep.subr.mxu0 0.0
        %3360 = vmatpush1.xpose.msra.mxu0 0.0
        %3361 = vmatprep.subr.mxu0 0.0
        %3362 = vmatpush1.xpose.msra.mxu0 0.0
        %3363 = vmatprep.subr.mxu0 0.0
        %3364 = vmatpush1.xpose.msra.mxu0 0.0
        %3365 = vmatprep.subr.mxu0 0.0
        %3366 = vmatpush1.xpose.msra.mxu0 0.0
        %3367 = vmatprep.subr.mxu0 0.0
        %3368 = vmatpush1.xpose.msra.mxu0 0.0
        %3369 = vmatprep.subr.mxu0 0.0
        %3370 = vmatpush1.xpose.msra.mxu0 0.0
        %3371 = vmatprep.subr.mxu0 0.0
        %3372 = vmatpush1.xpose.msra.mxu0 0.0
        %3373 = vmatprep.subr.mxu0 0.0
        %3374 = vmatpush1.xpose.msra.mxu0 0.0
        %3375 = vmatprep.subr.mxu0 0.0
        %3376 = vmatpush1.xpose.msra.mxu0 0.0
        %3377 = vmatprep.subr.mxu0 0.0
        %3378 = vmatpush1.xpose.msra.mxu0 0.0
        %3379 = vmatprep.subr.mxu0 0.0
        %3380 = vmatpush1.xpose.msra.mxu0 0.0
        %3381 = vmatprep.mubr.f32.mxu0 0.0
        %3382 = vmatmul.mubr.f32.gmra.mrb[0].mxu0 %v3313
        %v3383 = vpop.f32.mrb[0].mxu0
        %v3384 = vadd.f32 0.0, %v3383
        %v3385 = vpop.f32.mrb[0].mxu0
        %3386 = vdwg.mxu0
        %3387 = vrot.lane.b32.xlu0 %v3151, 104
        %v3388 = vpop.permute.xlu0 %3387
        %3389 = vrot.lane.b32.xlu0 %v3151, 72
        %v3390 = vpop.permute.xlu0 %3389
        %v3391 = vsel %vm2047, %v3388, 0
        %v3393 = vsel %vm2047, %v3390, 0
        %3395 = vmatprep.subr.mxu0 0.0
        %3396 = vmatpush1.xpose.msra.mxu0 %v3393
        %3397 = vmatprep.subr.mxu0 0.0
        %3398 = vmatpush1.xpose.msra.mxu0 0.0
        %3399 = vmatprep.subr.mxu0 0.0
        %3400 = vmatpush1.xpose.msra.mxu0 0.0
        %3401 = vmatprep.subr.mxu0 0.0
        %3402 = vmatpush1.xpose.msra.mxu0 0.0
        %3403 = vmatprep.subr.mxu0 0.0
        %3404 = vmatpush1.xpose.msra.mxu0 0.0
        %3405 = vmatprep.subr.mxu0 0.0
        %3406 = vmatpush1.xpose.msra.mxu0 0.0
        %3407 = vmatprep.subr.mxu0 0.0
        %3408 = vmatpush1.xpose.msra.mxu0 0.0
        %3409 = vmatprep.subr.mxu0 0.0
        %3410 = vmatpush1.xpose.msra.mxu0 0.0
        %3411 = vmatprep.subr.mxu0 0.0
        %3412 = vmatpush1.xpose.msra.mxu0 0.0
        %3413 = vmatprep.subr.mxu0 0.0
        %3414 = vmatpush1.xpose.msra.mxu0 0.0
        %3415 = vmatprep.subr.mxu0 0.0
        %3416 = vmatpush1.xpose.msra.mxu0 0.0
        %3417 = vmatprep.subr.mxu0 0.0
        %3418 = vmatpush1.xpose.msra.mxu0 0.0
        %3419 = vmatprep.subr.mxu0 0.0
        %3420 = vmatpush1.xpose.msra.mxu0 0.0
        %3421 = vmatprep.subr.mxu0 0.0
        %3422 = vmatpush1.xpose.msra.mxu0 0.0
        %3423 = vmatprep.subr.mxu0 0.0
        %3424 = vmatpush1.xpose.msra.mxu0 0.0
        %3425 = vmatprep.subr.mxu0 0.0
        %3426 = vmatpush1.xpose.msra.mxu0 0.0
        %3427 = vmatprep.subr.mxu0 0.0
        %3428 = vmatpush1.xpose.msra.mxu0 0.0
        %3429 = vmatprep.subr.mxu0 0.0
        %3430 = vmatpush1.xpose.msra.mxu0 0.0
        %3431 = vmatprep.subr.mxu0 0.0
        %3432 = vmatpush1.xpose.msra.mxu0 0.0
        %3433 = vmatprep.subr.mxu0 0.0
        %3434 = vmatpush1.xpose.msra.mxu0 0.0
        %3435 = vmatprep.subr.mxu0 0.0
        %3436 = vmatpush1.xpose.msra.mxu0 0.0
        %3437 = vmatprep.subr.mxu0 0.0
        %3438 = vmatpush1.xpose.msra.mxu0 0.0
        %3439 = vmatprep.subr.mxu0 0.0
        %3440 = vmatpush1.xpose.msra.mxu0 0.0
        %3441 = vmatprep.subr.mxu0 0.0
        %3442 = vmatpush1.xpose.msra.mxu0 0.0
        %3443 = vmatprep.subr.mxu0 0.0
        %3444 = vmatpush1.xpose.msra.mxu0 0.0
        %3445 = vmatprep.subr.mxu0 0.0
        %3446 = vmatpush1.xpose.msra.mxu0 0.0
        %3447 = vmatprep.subr.mxu0 0.0
        %3448 = vmatpush1.xpose.msra.mxu0 0.0
        %3449 = vmatprep.subr.mxu0 0.0
        %3450 = vmatpush1.xpose.msra.mxu0 0.0
        %3451 = vmatprep.subr.mxu0 0.0
        %3452 = vmatpush1.xpose.msra.mxu0 0.0
        %3453 = vmatprep.subr.mxu0 0.0
        %3454 = vmatpush1.xpose.msra.mxu0 0.0
        %3455 = vmatprep.subr.mxu0 0.0
        %3456 = vmatpush1.xpose.msra.mxu0 0.0
        %3457 = vmatprep.subr.mxu0 0.0
        %3458 = vmatpush1.xpose.msra.mxu0 0.0
        %3459 = vmatprep.mubr.f32.mxu0 0.0
        %3460 = vmatmul.mubr.f32.gmra.mrb[0].mxu0 %v3391
        %v3461 = vpop.f32.mrb[0].mxu0
        %v3462 = vadd.f32 0.0, %v3461
        %v3463 = vpop.f32.mrb[0].mxu0
        %3464 = vdwg.mxu0
        %v3465 = vmul.f32 %v3228, 0.35355338
        %v3466 = vmul.f32 %v3306, 0.35355338
        %v3467 = vmul.f32 %v3384, 0.35355338
        %v3468 = vmul.f32 %v3462, 0.35355338
        %v3469 = vadd.f32 %v3465, %v2364
        %v3470 = vadd.f32 %v3466, %v2364
        %v3471 = vadd.f32 %v3467, %v2364
        %v3472 = vadd.f32 %v3468, %v2364
        %v3473 = vsel %vm2047, %v3469, -inf
        %3474 = vmax.xlane.f32.xlu0 %v3473
        %v3475 = vpop.xlane.xlu0 %3474
        %v3476 = vsel %vm2047, %v3470, -inf
        %3477 = vmax.xlane.f32.xlu0 %v3476
        %v3478 = vpop.xlane.xlu0 %3477
        %v3479 = vsel %vm2047, %v3471, -inf
        %3480 = vmax.xlane.f32.xlu0 %v3479
        %v3481 = vpop.xlane.xlu0 %3480
        %v3482 = vsel %vm2047, %v3472, -inf
        %3483 = vmax.xlane.f32.xlu0 %v3482
        %v3484 = vpop.xlane.xlu0 %3483
        %v3485 = vsub.f32 %v3469, %v3475
        %v3486 = vsub.f32 %v3470, %v3478
        %v3487 = vsub.f32 %v3471, %v3481
        %v3488 = vsub.f32 %v3472, %v3484
        %v3489 = vmul.f32 %v3485, 1.442695
        %v3490 = vpow.pop %v3489
        %v3491 = vmul.f32 %v3486, 1.442695
        %v3492 = vpow.pop %v3491
        %v3493 = vmul.f32 %v3487, 1.442695
        %v3494 = vpow.pop %v3493
        %v3495 = vmul.f32 %v3488, 1.442695
        %v3496 = vpow.pop %v3495
        %v3497 = vsel %vm2047, %v3490, 0.0
        %3498 = vadd.xlane.f32.xlu0 %v3497
        %v3499 = vpop.xlane.xlu0 %3498
        %v3500 = vsel %vm2047, %v3492, 0.0
        %3501 = vadd.xlane.f32.xlu0 %v3500
        %v3502 = vpop.xlane.xlu0 %3501
        %v3503 = vsel %vm2047, %v3494, 0.0
        %3504 = vadd.xlane.f32.xlu0 %v3503
        %v3505 = vpop.xlane.xlu0 %3504
        %v3506 = vsel %vm2047, %v3496, 0.0
        %3507 = vadd.xlane.f32.xlu0 %v3506
        %v3508 = vpop.xlane.xlu0 %3507
        %v3509 = vrcp.pop %v3499
        %v3510 = vrcp.pop %v3502
        %v3511 = vrcp.pop %v3505
        %v3512 = vrcp.pop %v3508
        %v3513 = vmul.f32 %v3490, %v3509
        %v3514 = vmul.f32 %v3492, %v3510
        %v3515 = vmul.f32 %v3494, %v3511
        %v3516 = vmul.f32 %v3496, %v3512
        %3517 = vrot.lane.b32.xlu0 %v3151, 64
        %v3518 = vpop.permute.xlu0 %3517
        %v3521 = vsel %vm2047, %v3513, 0
        %3523 = vmatprep.subr.mxu0 0.0
        %3524 = vmatpush1.msra.mxu0 %v3518
        %3525 = vmatprep.subr.mxu0 0.0
        %3526 = vmatpush1.msra.mxu0 0.0
        %3527 = vmatprep.subr.mxu0 0.0
        %3528 = vmatpush1.msra.mxu0 0.0
        %3529 = vmatprep.subr.mxu0 0.0
        %3530 = vmatpush1.msra.mxu0 0.0
        %3531 = vmatprep.subr.mxu0 0.0
        %3532 = vmatpush1.msra.mxu0 0.0
        %3533 = vmatprep.subr.mxu0 0.0
        %3534 = vmatpush1.msra.mxu0 0.0
        %3535 = vmatprep.subr.mxu0 0.0
        %3536 = vmatpush1.msra.mxu0 0.0
        %3537 = vmatprep.subr.mxu0 0.0
        %3538 = vmatpush1.msra.mxu0 0.0
        %3539 = vmatprep.subr.mxu0 0.0
        %3540 = vmatpush1.msra.mxu0 0.0
        %3541 = vmatprep.subr.mxu0 0.0
        %3542 = vmatpush1.msra.mxu0 0.0
        %3543 = vmatprep.subr.mxu0 0.0
        %3544 = vmatpush1.msra.mxu0 0.0
        %3545 = vmatprep.subr.mxu0 0.0
        %3546 = vmatpush1.msra.mxu0 0.0
        %3547 = vmatprep.subr.mxu0 0.0
        %3548 = vmatpush1.msra.mxu0 0.0
        %3549 = vmatprep.subr.mxu0 0.0
        %3550 = vmatpush1.msra.mxu0 0.0
        %3551 = vmatprep.subr.mxu0 0.0
        %3552 = vmatpush1.msra.mxu0 0.0
        %3553 = vmatprep.subr.mxu0 0.0
        %3554 = vmatpush1.msra.mxu0 0.0
        %3555 = vmatprep.subr.mxu0 0.0
        %3556 = vmatpush1.msra.mxu0 0.0
        %3557 = vmatprep.subr.mxu0 0.0
        %3558 = vmatpush1.msra.mxu0 0.0
        %3559 = vmatprep.subr.mxu0 0.0
        %3560 = vmatpush1.msra.mxu0 0.0
        %3561 = vmatprep.subr.mxu0 0.0
        %3562 = vmatpush1.msra.mxu0 0.0
        %3563 = vmatprep.subr.mxu0 0.0
        %3564 = vmatpush1.msra.mxu0 0.0
        %3565 = vmatprep.subr.mxu0 0.0
        %3566 = vmatpush1.msra.mxu0 0.0
        %3567 = vmatprep.subr.mxu0 0.0
        %3568 = vmatpush1.msra.mxu0 0.0
        %3569 = vmatprep.subr.mxu0 0.0
        %3570 = vmatpush1.msra.mxu0 0.0
        %3571 = vmatprep.subr.mxu0 0.0
        %3572 = vmatpush1.msra.mxu0 0.0
        %3573 = vmatprep.subr.mxu0 0.0
        %3574 = vmatpush1.msra.mxu0 0.0
        %3575 = vmatprep.subr.mxu0 0.0
        %3576 = vmatpush1.msra.mxu0 0.0
        %3577 = vmatprep.subr.mxu0 0.0
        %3578 = vmatpush1.msra.mxu0 0.0
        %3579 = vmatprep.subr.mxu0 0.0
        %3580 = vmatpush1.msra.mxu0 0.0
        %3581 = vmatprep.subr.mxu0 0.0
        %3582 = vmatpush1.msra.mxu0 0.0
        %3583 = vmatprep.subr.mxu0 0.0
        %3584 = vmatpush1.msra.mxu0 0.0
        %3585 = vmatprep.subr.mxu0 0.0
        %3586 = vmatpush1.msra.mxu0 0.0
        %3587 = vmatprep.mubr.f32.mxu0 0.0
        %3588 = vmatmul.mubr.f32.gmra.mrb[0].mxu0 %v3521
        %v3589 = vpop.f32.mrb[0].mxu0
        %v3590 = vadd.f32 0.0, %v3589
        %v3591 = vpop.f32.mrb[0].mxu0
        %3592 = vdwg.mxu0
        %3593 = vrot.lane.b32.xlu0 %v3151, 56
        %v3594 = vpop.permute.xlu0 %3593
        %v3597 = vsel %vm2047, %v3514, 0
        %3599 = vmatprep.subr.mxu0 0.0
        %3600 = vmatpush1.msra.mxu0 %v3594
        %3601 = vmatprep.subr.mxu0 0.0
        %3602 = vmatpush1.msra.mxu0 0.0
        %3603 = vmatprep.subr.mxu0 0.0
        %3604 = vmatpush1.msra.mxu0 0.0
        %3605 = vmatprep.subr.mxu0 0.0
        %3606 = vmatpush1.msra.mxu0 0.0
        %3607 = vmatprep.subr.mxu0 0.0
        %3608 = vmatpush1.msra.mxu0 0.0
        %3609 = vmatprep.subr.mxu0 0.0
        %3610 = vmatpush1.msra.mxu0 0.0
        %3611 = vmatprep.subr.mxu0 0.0
        %3612 = vmatpush1.msra.mxu0 0.0
        %3613 = vmatprep.subr.mxu0 0.0
        %3614 = vmatpush1.msra.mxu0 0.0
        %3615 = vmatprep.subr.mxu0 0.0
        %3616 = vmatpush1.msra.mxu0 0.0
        %3617 = vmatprep.subr.mxu0 0.0
        %3618 = vmatpush1.msra.mxu0 0.0
        %3619 = vmatprep.subr.mxu0 0.0
        %3620 = vmatpush1.msra.mxu0 0.0
        %3621 = vmatprep.subr.mxu0 0.0
        %3622 = vmatpush1.msra.mxu0 0.0
        %3623 = vmatprep.subr.mxu0 0.0
        %3624 = vmatpush1.msra.mxu0 0.0
        %3625 = vmatprep.subr.mxu0 0.0
        %3626 = vmatpush1.msra.mxu0 0.0
        %3627 = vmatprep.subr.mxu0 0.0
        %3628 = vmatpush1.msra.mxu0 0.0
        %3629 = vmatprep.subr.mxu0 0.0
        %3630 = vmatpush1.msra.mxu0 0.0
        %3631 = vmatprep.subr.mxu0 0.0
        %3632 = vmatpush1.msra.mxu0 0.0
        %3633 = vmatprep.subr.mxu0 0.0
        %3634 = vmatpush1.msra.mxu0 0.0
        %3635 = vmatprep.subr.mxu0 0.0
        %3636 = vmatpush1.msra.mxu0 0.0
        %3637 = vmatprep.subr.mxu0 0.0
        %3638 = vmatpush1.msra.mxu0 0.0
        %3639 = vmatprep.subr.mxu0 0.0
        %3640 = vmatpush1.msra.mxu0 0.0
        %3641 = vmatprep.subr.mxu0 0.0
        %3642 = vmatpush1.msra.mxu0 0.0
        %3643 = vmatprep.subr.mxu0 0.0
        %3644 = vmatpush1.msra.mxu0 0.0
        %3645 = vmatprep.subr.mxu0 0.0
        %3646 = vmatpush1.msra.mxu0 0.0
        %3647 = vmatprep.subr.mxu0 0.0
        %3648 = vmatpush1.msra.mxu0 0.0
        %3649 = vmatprep.subr.mxu0 0.0
        %3650 = vmatpush1.msra.mxu0 0.0
        %3651 = vmatprep.subr.mxu0 0.0
        %3652 = vmatpush1.msra.mxu0 0.0
        %3653 = vmatprep.subr.mxu0 0.0
        %3654 = vmatpush1.msra.mxu0 0.0
        %3655 = vmatprep.subr.mxu0 0.0
        %3656 = vmatpush1.msra.mxu0 0.0
        %3657 = vmatprep.subr.mxu0 0.0
        %3658 = vmatpush1.msra.mxu0 0.0
        %3659 = vmatprep.subr.mxu0 0.0
        %3660 = vmatpush1.msra.mxu0 0.0
        %3661 = vmatprep.subr.mxu0 0.0
        %3662 = vmatpush1.msra.mxu0 0.0
        %3663 = vmatprep.mubr.f32.mxu0 0.0
        %3664 = vmatmul.mubr.f32.gmra.mrb[0].mxu0 %v3597
        %v3665 = vpop.f32.mrb[0].mxu0
        %v3666 = vadd.f32 0.0, %v3665
        %v3667 = vpop.f32.mrb[0].mxu0
        %3668 = vdwg.mxu0
        %3669 = vrot.lane.b32.xlu0 %v3151, 48
        %v3670 = vpop.permute.xlu0 %3669
        %v3673 = vsel %vm2047, %v3515, 0
        %3675 = vmatprep.subr.mxu0 0.0
        %3676 = vmatpush1.msra.mxu0 %v3670
        %3677 = vmatprep.subr.mxu0 0.0
        %3678 = vmatpush1.msra.mxu0 0.0
        %3679 = vmatprep.subr.mxu0 0.0
        %3680 = vmatpush1.msra.mxu0 0.0
        %3681 = vmatprep.subr.mxu0 0.0
        %3682 = vmatpush1.msra.mxu0 0.0
        %3683 = vmatprep.subr.mxu0 0.0
        %3684 = vmatpush1.msra.mxu0 0.0
        %3685 = vmatprep.subr.mxu0 0.0
        %3686 = vmatpush1.msra.mxu0 0.0
        %3687 = vmatprep.subr.mxu0 0.0
        %3688 = vmatpush1.msra.mxu0 0.0
        %3689 = vmatprep.subr.mxu0 0.0
        %3690 = vmatpush1.msra.mxu0 0.0
        %3691 = vmatprep.subr.mxu0 0.0
        %3692 = vmatpush1.msra.mxu0 0.0
        %3693 = vmatprep.subr.mxu0 0.0
        %3694 = vmatpush1.msra.mxu0 0.0
        %3695 = vmatprep.subr.mxu0 0.0
        %3696 = vmatpush1.msra.mxu0 0.0
        %3697 = vmatprep.subr.mxu0 0.0
        %3698 = vmatpush1.msra.mxu0 0.0
        %3699 = vmatprep.subr.mxu0 0.0
        %3700 = vmatpush1.msra.mxu0 0.0
        %3701 = vmatprep.subr.mxu0 0.0
        %3702 = vmatpush1.msra.mxu0 0.0
        %3703 = vmatprep.subr.mxu0 0.0
        %3704 = vmatpush1.msra.mxu0 0.0
        %3705 = vmatprep.subr.mxu0 0.0
        %3706 = vmatpush1.msra.mxu0 0.0
        %3707 = vmatprep.subr.mxu0 0.0
        %3708 = vmatpush1.msra.mxu0 0.0
        %3709 = vmatprep.subr.mxu0 0.0
        %3710 = vmatpush1.msra.mxu0 0.0
        %3711 = vmatprep.subr.mxu0 0.0
        %3712 = vmatpush1.msra.mxu0 0.0
        %3713 = vmatprep.subr.mxu0 0.0
        %3714 = vmatpush1.msra.mxu0 0.0
        %3715 = vmatprep.subr.mxu0 0.0
        %3716 = vmatpush1.msra.mxu0 0.0
        %3717 = vmatprep.subr.mxu0 0.0
        %3718 = vmatpush1.msra.mxu0 0.0
        %3719 = vmatprep.subr.mxu0 0.0
        %3720 = vmatpush1.msra.mxu0 0.0
        %3721 = vmatprep.subr.mxu0 0.0
        %3722 = vmatpush1.msra.mxu0 0.0
        %3723 = vmatprep.subr.mxu0 0.0
        %3724 = vmatpush1.msra.mxu0 0.0
        %3725 = vmatprep.subr.mxu0 0.0
        %3726 = vmatpush1.msra.mxu0 0.0
        %3727 = vmatprep.subr.mxu0 0.0
        %3728 = vmatpush1.msra.mxu0 0.0
        %3729 = vmatprep.subr.mxu0 0.0
        %3730 = vmatpush1.msra.mxu0 0.0
        %3731 = vmatprep.subr.mxu0 0.0
        %3732 = vmatpush1.msra.mxu0 0.0
        %3733 = vmatprep.subr.mxu0 0.0
        %3734 = vmatpush1.msra.mxu0 0.0
        %3735 = vmatprep.subr.mxu0 0.0
        %3736 = vmatpush1.msra.mxu0 0.0
        %3737 = vmatprep.subr.mxu0 0.0
        %3738 = vmatpush1.msra.mxu0 0.0
        %3739 = vmatprep.mubr.f32.mxu0 0.0
        %3740 = vmatmul.mubr.f32.gmra.mrb[0].mxu0 %v3673
        %v3741 = vpop.f32.mrb[0].mxu0
        %v3742 = vadd.f32 0.0, %v3741
        %v3743 = vpop.f32.mrb[0].mxu0
        %3744 = vdwg.mxu0
        %3745 = vrot.lane.b32.xlu0 %v3151, 40
        %v3746 = vpop.permute.xlu0 %3745
        %v3749 = vsel %vm2047, %v3516, 0
        %3751 = vmatprep.subr.mxu0 0.0
        %3752 = vmatpush1.msra.mxu0 %v3746
        %3753 = vmatprep.subr.mxu0 0.0
        %3754 = vmatpush1.msra.mxu0 0.0
        %3755 = vmatprep.subr.mxu0 0.0
        %3756 = vmatpush1.msra.mxu0 0.0
        %3757 = vmatprep.subr.mxu0 0.0
        %3758 = vmatpush1.msra.mxu0 0.0
        %3759 = vmatprep.subr.mxu0 0.0
        %3760 = vmatpush1.msra.mxu0 0.0
        %3761 = vmatprep.subr.mxu0 0.0
        %3762 = vmatpush1.msra.mxu0 0.0
        %3763 = vmatprep.subr.mxu0 0.0
        %3764 = vmatpush1.msra.mxu0 0.0
        %3765 = vmatprep.subr.mxu0 0.0
        %3766 = vmatpush1.msra.mxu0 0.0
        %3767 = vmatprep.subr.mxu0 0.0
        %3768 = vmatpush1.msra.mxu0 0.0
        %3769 = vmatprep.subr.mxu0 0.0
        %3770 = vmatpush1.msra.mxu0 0.0
        %3771 = vmatprep.subr.mxu0 0.0
        %3772 = vmatpush1.msra.mxu0 0.0
        %3773 = vmatprep.subr.mxu0 0.0
        %3774 = vmatpush1.msra.mxu0 0.0
        %3775 = vmatprep.subr.mxu0 0.0
        %3776 = vmatpush1.msra.mxu0 0.0
        %3777 = vmatprep.subr.mxu0 0.0
        %3778 = vmatpush1.msra.mxu0 0.0
        %3779 = vmatprep.subr.mxu0 0.0
        %3780 = vmatpush1.msra.mxu0 0.0
        %3781 = vmatprep.subr.mxu0 0.0
        %3782 = vmatpush1.msra.mxu0 0.0
        %3783 = vmatprep.subr.mxu0 0.0
        %3784 = vmatpush1.msra.mxu0 0.0
        %3785 = vmatprep.subr.mxu0 0.0
        %3786 = vmatpush1.msra.mxu0 0.0
        %3787 = vmatprep.subr.mxu0 0.0
        %3788 = vmatpush1.msra.mxu0 0.0
        %3789 = vmatprep.subr.mxu0 0.0
        %3790 = vmatpush1.msra.mxu0 0.0
        %3791 = vmatprep.subr.mxu0 0.0
        %3792 = vmatpush1.msra.mxu0 0.0
        %3793 = vmatprep.subr.mxu0 0.0
        %3794 = vmatpush1.msra.mxu0 0.0
        %3795 = vmatprep.subr.mxu0 0.0
        %3796 = vmatpush1.msra.mxu0 0.0
        %3797 = vmatprep.subr.mxu0 0.0
        %3798 = vmatpush1.msra.mxu0 0.0
        %3799 = vmatprep.subr.mxu0 0.0
        %3800 = vmatpush1.msra.mxu0 0.0
        %3801 = vmatprep.subr.mxu0 0.0
        %3802 = vmatpush1.msra.mxu0 0.0
        %3803 = vmatprep.subr.mxu0 0.0
        %3804 = vmatpush1.msra.mxu0 0.0
        %3805 = vmatprep.subr.mxu0 0.0
        %3806 = vmatpush1.msra.mxu0 0.0
        %3807 = vmatprep.subr.mxu0 0.0
        %3808 = vmatpush1.msra.mxu0 0.0
        %3809 = vmatprep.subr.mxu0 0.0
        %3810 = vmatpush1.msra.mxu0 0.0
        %3811 = vmatprep.subr.mxu0 0.0
        %3812 = vmatpush1.msra.mxu0 0.0
        %3813 = vmatprep.subr.mxu0 0.0
        %3814 = vmatpush1.msra.mxu0 0.0
        %3815 = vmatprep.mubr.f32.mxu0 0.0
        %3816 = vmatmul.mubr.f32.gmra.mrb[0].mxu0 %v3749
        %v3817 = vpop.f32.mrb[0].mxu0
        %v3818 = vadd.f32 0.0, %v3817
        %v3819 = vpop.f32.mrb[0].mxu0
        %3820 = vdwg.mxu0
        %3822 = vrot.lane.b32.xlu0 %v3666, 8
        %v3823 = vpop.permute.xlu0 %3822
        %3826 = vrot.lane.b32.xlu0 %v3742, 16
        %v3827 = vpop.permute.xlu0 %3826
        %3830 = vrot.lane.b32.xlu0 %v3818, 24
        %v3831 = vpop.permute.xlu0 %3830
        %v3833 = vsel %vm2047, %v3590, %v3823
        %v3834 = vsel %vm2731, %v3833, %v3827
        %v3835 = vsel %vm2733, %v3834, %v3831
        %v3837 = vlaneseq
        %v3838 = vshrl.u32 %v3837, 7
        %v3839 = vsub.s32 0, %v3838
        %v3840 = vrot.slane %v3070, %v3839
        %v3843 = vsel %vm1970, %v3835, 0
        %3845 = vmatprep.subr.mxu0 0.0
        %3846 = vmatpush1.msra.mxu0 %v3065
        %3847 = vmatprep.subr.mxu0 0.0
        %3848 = vmatpush1.msra.mxu0 %v3066
        %3849 = vmatprep.subr.mxu0 0.0
        %3850 = vmatpush1.msra.mxu0 %v3067
        %3851 = vmatprep.subr.mxu0 0.0
        %3852 = vmatpush1.msra.mxu0 %v3068
        %3853 = vmatprep.subr.mxu0 0.0
        %3854 = vmatpush1.msra.mxu0 0.0
        %3855 = vmatprep.subr.mxu0 0.0
        %3856 = vmatpush1.msra.mxu0 0.0
        %3857 = vmatprep.subr.mxu0 0.0
        %3858 = vmatpush1.msra.mxu0 0.0
        %3859 = vmatprep.subr.mxu0 0.0
        %3860 = vmatpush1.msra.mxu0 0.0
        %3861 = vmatprep.subr.mxu0 0.0
        %3862 = vmatpush1.msra.mxu0 0.0
        %3863 = vmatprep.subr.mxu0 0.0
        %3864 = vmatpush1.msra.mxu0 0.0
        %3865 = vmatprep.subr.mxu0 0.0
        %3866 = vmatpush1.msra.mxu0 0.0
        %3867 = vmatprep.subr.mxu0 0.0
        %3868 = vmatpush1.msra.mxu0 0.0
        %3869 = vmatprep.subr.mxu0 0.0
        %3870 = vmatpush1.msra.mxu0 0.0
        %3871 = vmatprep.subr.mxu0 0.0
        %3872 = vmatpush1.msra.mxu0 0.0
        %3873 = vmatprep.subr.mxu0 0.0
        %3874 = vmatpush1.msra.mxu0 0.0
        %3875 = vmatprep.subr.mxu0 0.0
        %3876 = vmatpush1.msra.mxu0 0.0
        %3877 = vmatprep.subr.mxu0 0.0
        %3878 = vmatpush1.msra.mxu0 0.0
        %3879 = vmatprep.subr.mxu0 0.0
        %3880 = vmatpush1.msra.mxu0 0.0
        %3881 = vmatprep.subr.mxu0 0.0
        %3882 = vmatpush1.msra.mxu0 0.0
        %3883 = vmatprep.subr.mxu0 0.0
        %3884 = vmatpush1.msra.mxu0 0.0
        %3885 = vmatprep.subr.mxu0 0.0
        %3886 = vmatpush1.msra.mxu0 0.0
        %3887 = vmatprep.subr.mxu0 0.0
        %3888 = vmatpush1.msra.mxu0 0.0
        %3889 = vmatprep.subr.mxu0 0.0
        %3890 = vmatpush1.msra.mxu0 0.0
        %3891 = vmatprep.subr.mxu0 0.0
        %3892 = vmatpush1.msra.mxu0 0.0
        %3893 = vmatprep.subr.mxu0 0.0
        %3894 = vmatpush1.msra.mxu0 0.0
        %3895 = vmatprep.subr.mxu0 0.0
        %3896 = vmatpush1.msra.mxu0 0.0
        %3897 = vmatprep.subr.mxu0 0.0
        %3898 = vmatpush1.msra.mxu0 0.0
        %3899 = vmatprep.subr.mxu0 0.0
        %3900 = vmatpush1.msra.mxu0 0.0
        %3901 = vmatprep.subr.mxu0 0.0
        %3902 = vmatpush1.msra.mxu0 0.0
        %3903 = vmatprep.subr.mxu0 0.0
        %3904 = vmatpush1.msra.mxu0 0.0
        %3905 = vmatprep.subr.mxu0 0.0
        %3906 = vmatpush1.msra.mxu0 0.0
        %3907 = vmatprep.subr.mxu0 0.0
        %3908 = vmatpush1.msra.mxu0 0.0
        %3909 = vmatprep.mubr.f32.mxu0 0.0
        %3910 = vmatmul.mubr.f32.gmra.mrb[0].mxu0 %v3843
        %v3911 = vpop.f32.mrb[0].mxu0
        %v3912 = vadd.f32 %v3840, %v3911
        %v3913 = vpop.f32.mrb[0].mxu0
        %3914 = vdwg.mxu0
        %v3915 = vadd.f32 %v3912, %v3056
        %v3916 = vsel %vm1970, %v3915, 0.0
        %3917 = vadd.xlane.f32.xlu0 %v3916
        %v3918 = vpop.xlane.xlu0 %3917
        %v3919 = vmul.f32 %v3918, %v2818
        %v3920 = vmul.f32 %v3915, %v3915
        %v3921 = vsel %vm1970, %v3920, 0.0
        %3922 = vadd.xlane.f32.xlu0 %v3921
        %v3923 = vpop.xlane.xlu0 %3922
        %v3924 = vmul.f32 %v3923, %v2818
        %v3925 = vmul.f32 %v3919, %v3919
        %v3926 = vsub.f32 %v3924, %v3925
        %v3927 = vsub.f32 %v3915, %v3919
        %v3928 = vadd.f32 %v3926, 1e-05
        %v3929 = vrsqrt.pop %v3928
        %v3930 = vmul.f32 %v3927, %v3929
        %v3932 = vlaneseq
        %v3933 = vshrl.u32 %v3932, 7
        %v3934 = vsub.s32 0, %v3933
        %v3935 = vrot.slane %v3072, %v3934
        %v3937 = vmul.f32 %v3930, %v3935
        %v3939 = vlaneseq
        %v3940 = vshrl.u32 %v3939, 7
        %v3941 = vsub.s32 0, %v3940
        %v3942 = vrot.slane %v3074, %v3941
        %v3944 = vadd.f32 %v3937, %v3942
        %v3945 = vmul.f32 %v3944, %v2848
        %s3946 = scalar_lea.vmem %s31, 32
        %v3947 = vld [vmem:[%s3946] sm:$0xff]
        %v3948 = vld [vmem:[%s3946 + $0x8] sm:$0xff]
        %v3949 = vld [vmem:[%s3946 + $0x10] sm:$0xff]
        %v3950 = vld [vmem:[%s3946 + $0x18] sm:$0xff]
        %s3951 = scalar_lea.vmem [#allocation9], 1
        %v3952 = vld [vmem:[%s3951] sm:$0x1]
        %s3953 = scalar_lea.vmem %s35, 64
        %v3954 = vld [vmem:[%s3953] sm:$0xff]
        %v3955 = vld [vmem:[%s3953 + $0x8] sm:$0xff]
        %v3956 = vld [vmem:[%s3953 + $0x10] sm:$0xff]
        %v3957 = vld [vmem:[%s3953 + $0x18] sm:$0xff]
        %v3958 = vld [vmem:[%s3953 + $0x20] sm:$0xff]
        %v3959 = vld [vmem:[%s3953 + $0x28] sm:$0xff]
        %v3960 = vld [vmem:[%s3953 + $0x30] sm:$0xff]
        %v3961 = vld [vmem:[%s3953 + $0x38] sm:$0xff]
        %s3962 = scalar_lea.vmem [#allocation10], 1
        %v3963 = vld [vmem:[%s3962] sm:$0x1]
        %s3964 = scalar_lea.vmem [#allocation12], 1
        %v3965 = vld [vmem:[%s3964] sm:$0x1]
        %s3966 = scalar_lea.vmem [#allocation13], 1
        %v3967 = vld [vmem:[%s3966] sm:$0x1]
        %v3969 = vlaneseq
        %v3970 = vshrl.u32 %v3969, 7
        %v3971 = vsub.s32 0, %v3970
        %v3972 = vrot.slane %v3952, %v3971
        %v3975 = vsel %vm1970, %v3945, 0
        %3977 = vmatprep.subr.mxu0 0.0
        %3978 = vmatpush1.msra.mxu0 %v3947
        %3979 = vmatprep.subr.mxu0 0.0
        %3980 = vmatpush1.msra.mxu0 %v3948
        %3981 = vmatprep.subr.mxu0 0.0
        %3982 = vmatpush1.msra.mxu0 %v3949
        %3983 = vmatprep.subr.mxu0 0.0
        %3984 = vmatpush1.msra.mxu0 %v3950
        %3985 = vmatprep.subr.mxu0 0.0
        %3986 = vmatpush1.msra.mxu0 0.0
        %3987 = vmatprep.subr.mxu0 0.0
        %3988 = vmatpush1.msra.mxu0 0.0
        %3989 = vmatprep.subr.mxu0 0.0
        %3990 = vmatpush1.msra.mxu0 0.0
        %3991 = vmatprep.subr.mxu0 0.0
        %3992 = vmatpush1.msra.mxu0 0.0
        %3993 = vmatprep.subr.mxu0 0.0
        %3994 = vmatpush1.msra.mxu0 0.0
        %3995 = vmatprep.subr.mxu0 0.0
        %3996 = vmatpush1.msra.mxu0 0.0
        %3997 = vmatprep.subr.mxu0 0.0
        %3998 = vmatpush1.msra.mxu0 0.0
        %3999 = vmatprep.subr.mxu0 0.0
        %4000 = vmatpush1.msra.mxu0 0.0
        %4001 = vmatprep.subr.mxu0 0.0
        %4002 = vmatpush1.msra.mxu0 0.0
        %4003 = vmatprep.subr.mxu0 0.0
        %4004 = vmatpush1.msra.mxu0 0.0
        %4005 = vmatprep.subr.mxu0 0.0
        %4006 = vmatpush1.msra.mxu0 0.0
        %4007 = vmatprep.subr.mxu0 0.0
        %4008 = vmatpush1.msra.mxu0 0.0
        %4009 = vmatprep.subr.mxu0 0.0
        %4010 = vmatpush1.msra.mxu0 0.0
        %4011 = vmatprep.subr.mxu0 0.0
        %4012 = vmatpush1.msra.mxu0 0.0
        %4013 = vmatprep.subr.mxu0 0.0
        %4014 = vmatpush1.msra.mxu0 0.0
        %4015 = vmatprep.subr.mxu0 0.0
        %4016 = vmatpush1.msra.mxu0 0.0
        %4017 = vmatprep.subr.mxu0 0.0
        %4018 = vmatpush1.msra.mxu0 0.0
        %4019 = vmatprep.subr.mxu0 0.0
        %4020 = vmatpush1.msra.mxu0 0.0
        %4021 = vmatprep.subr.mxu0 0.0
        %4022 = vmatpush1.msra.mxu0 0.0
        %4023 = vmatprep.subr.mxu0 0.0
        %4024 = vmatpush1.msra.mxu0 0.0
        %4025 = vmatprep.subr.mxu0 0.0
        %4026 = vmatpush1.msra.mxu0 0.0
        %4027 = vmatprep.subr.mxu0 0.0
        %4028 = vmatpush1.msra.mxu0 0.0
        %4029 = vmatprep.subr.mxu0 0.0
        %4030 = vmatpush1.msra.mxu0 0.0
        %4031 = vmatprep.subr.mxu0 0.0
        %4032 = vmatpush1.msra.mxu0 0.0
        %4033 = vmatprep.subr.mxu0 0.0
        %4034 = vmatpush1.msra.mxu0 0.0
        %4035 = vmatprep.subr.mxu0 0.0
        %4036 = vmatpush1.msra.mxu0 0.0
        %4037 = vmatprep.subr.mxu0 0.0
        %4038 = vmatpush1.msra.mxu0 0.0
        %4039 = vmatprep.subr.mxu0 0.0
        %4040 = vmatpush1.msra.mxu0 0.0
        %4041 = vmatprep.mubr.f32.mxu0 0.0
        %4042 = vmatmul.mubr.f32.gmra.mrb[0].mxu0 %v3975
        %v4043 = vpop.f32.mrb[0].mxu0
        %v4044 = vadd.f32 %v3972, %v4043
        %v4045 = vpop.f32.mrb[0].mxu0
        %4046 = vdwg.mxu0
        %v4047 = vmax.f32 %v4044, 0.0
        %v4049 = vlaneseq
        %v4050 = vshrl.u32 %v4049, 7
        %v4051 = vsub.s32 0, %v4050
        %v4052 = vrot.slane %v3963, %v4051
        %v4055 = vsel %vm1619, %v4047, 0
        %4057 = vmatprep.subr.mxu0 0.0
        %4058 = vmatpush1.msra.mxu0 %v3954
        %4059 = vmatprep.subr.mxu0 0.0
        %4060 = vmatpush1.msra.mxu0 %v3955
        %4061 = vmatprep.subr.mxu0 0.0
        %4062 = vmatpush1.msra.mxu0 %v3956
        %4063 = vmatprep.subr.mxu0 0.0
        %4064 = vmatpush1.msra.mxu0 %v3957
        %4065 = vmatprep.subr.mxu0 0.0
        %4066 = vmatpush1.msra.mxu0 %v3958
        %4067 = vmatprep.subr.mxu0 0.0
        %4068 = vmatpush1.msra.mxu0 %v3959
        %4069 = vmatprep.subr.mxu0 0.0
        %4070 = vmatpush1.msra.mxu0 %v3960
        %4071 = vmatprep.subr.mxu0 0.0
        %4072 = vmatpush1.msra.mxu0 %v3961
        %4073 = vmatprep.subr.mxu0 0.0
        %4074 = vmatpush1.msra.mxu0 0.0
        %4075 = vmatprep.subr.mxu0 0.0
        %4076 = vmatpush1.msra.mxu0 0.0
        %4077 = vmatprep.subr.mxu0 0.0
        %4078 = vmatpush1.msra.mxu0 0.0
        %4079 = vmatprep.subr.mxu0 0.0
        %4080 = vmatpush1.msra.mxu0 0.0
        %4081 = vmatprep.subr.mxu0 0.0
        %4082 = vmatpush1.msra.mxu0 0.0
        %4083 = vmatprep.subr.mxu0 0.0
        %4084 = vmatpush1.msra.mxu0 0.0
        %4085 = vmatprep.subr.mxu0 0.0
        %4086 = vmatpush1.msra.mxu0 0.0
        %4087 = vmatprep.subr.mxu0 0.0
        %4088 = vmatpush1.msra.mxu0 0.0
        %4089 = vmatprep.subr.mxu0 0.0
        %4090 = vmatpush1.msra.mxu0 0.0
        %4091 = vmatprep.subr.mxu0 0.0
        %4092 = vmatpush1.msra.mxu0 0.0
        %4093 = vmatprep.subr.mxu0 0.0
        %4094 = vmatpush1.msra.mxu0 0.0
        %4095 = vmatprep.subr.mxu0 0.0
        %4096 = vmatpush1.msra.mxu0 0.0
        %4097 = vmatprep.subr.mxu0 0.0
        %4098 = vmatpush1.msra.mxu0 0.0
        %4099 = vmatprep.subr.mxu0 0.0
        %4100 = vmatpush1.msra.mxu0 0.0
        %4101 = vmatprep.subr.mxu0 0.0
        %4102 = vmatpush1.msra.mxu0 0.0
        %4103 = vmatprep.subr.mxu0 0.0
        %4104 = vmatpush1.msra.mxu0 0.0
        %4105 = vmatprep.subr.mxu0 0.0
        %4106 = vmatpush1.msra.mxu0 0.0
        %4107 = vmatprep.subr.mxu0 0.0
        %4108 = vmatpush1.msra.mxu0 0.0
        %4109 = vmatprep.subr.mxu0 0.0
        %4110 = vmatpush1.msra.mxu0 0.0
        %4111 = vmatprep.subr.mxu0 0.0
        %4112 = vmatpush1.msra.mxu0 0.0
        %4113 = vmatprep.subr.mxu0 0.0
        %4114 = vmatpush1.msra.mxu0 0.0
        %4115 = vmatprep.subr.mxu0 0.0
        %4116 = vmatpush1.msra.mxu0 0.0
        %4117 = vmatprep.subr.mxu0 0.0
        %4118 = vmatpush1.msra.mxu0 0.0
        %4119 = vmatprep.subr.mxu0 0.0
        %4120 = vmatpush1.msra.mxu0 0.0
        %4121 = vmatprep.mubr.f32.mxu0 0.0
        %4122 = vmatmul.mubr.f32.gmra.mrb[0].mxu0 %v4055
        %v4123 = vpop.f32.mrb[0].mxu0
        %v4124 = vadd.f32 %v4052, %v4123
        %v4125 = vpop.f32.mrb[0].mxu0
        %4126 = vdwg.mxu0
        %v4127 = vadd.f32 %v4124, %v3945
        %v4128 = vsel %vm1970, %v4127, 0.0
        %4129 = vadd.xlane.f32.xlu0 %v4128
        %v4130 = vpop.xlane.xlu0 %4129
        %v4131 = vmul.f32 %v4130, %v2818
        %v4132 = vmul.f32 %v4127, %v4127
        %v4133 = vsel %vm1970, %v4132, 0.0
        %4134 = vadd.xlane.f32.xlu0 %v4133
        %v4135 = vpop.xlane.xlu0 %4134
        %v4136 = vmul.f32 %v4135, %v2818
        %v4137 = vmul.f32 %v4131, %v4131
        %v4138 = vsub.f32 %v4136, %v4137
        %v4139 = vsub.f32 %v4127, %v4131
        %v4140 = vadd.f32 %v4138, 1e-05
        %v4141 = vrsqrt.pop %v4140
        %v4142 = vmul.f32 %v4139, %v4141
        %v4144 = vlaneseq
        %v4145 = vshrl.u32 %v4144, 7
        %v4146 = vsub.s32 0, %v4145
        %v4147 = vrot.slane %v3965, %v4146
        %v4149 = vmul.f32 %v4142, %v4147
        %v4151 = vlaneseq
        %v4152 = vshrl.u32 %v4151, 7
        %v4153 = vsub.s32 0, %v4152
        %v4154 = vrot.slane %v3967, %v4153
        %v4156 = vadd.f32 %v4149, %v4154
        %v4157 = vmul.f32 %v4156, %v2848
        %v4158 = vld [vmem:[%s43] sm:$0xff]
        %v4159 = vld [vmem:[%s43 + $0x8] sm:$0xff]
        %v4160 = vld [vmem:[%s43 + $0x10] sm:$0xff]
        %v4161 = vld [vmem:[%s43 + $0x18] sm:$0xff]
        %v4162 = vld [vmem:[%s45] sm:$0x1]
        %v4163 = vld [vmem:[%s47] sm:$0xff]
        %v4164 = vld [vmem:[%s47 + $0x8] sm:$0xff]
        %v4165 = vld [vmem:[%s47 + $0x10] sm:$0xff]
        %v4166 = vld [vmem:[%s47 + $0x18] sm:$0xff]
        %v4167 = vld [vmem:[%s49] sm:$0x1]
        %v4168 = vld [vmem:[%s51] sm:$0x1]
        %v4169 = vld [vmem:[%s53] sm:$0x1]
        %v4171 = vlaneseq
        %v4172 = vshrl.u32 %v4171, 7
        %v4173 = vsub.s32 0, %v4172
        %v4174 = vrot.slane %v4162, %v4173
        %v4177 = vsel %vm1970, %v1930, 0
        %4179 = vmatprep.subr.mxu0 0.0
        %4180 = vmatpush1.msra.mxu0 %v4158
        %4181 = vmatprep.subr.mxu0 0.0
        %4182 = vmatpush1.msra.mxu0 %v4159
        %4183 = vmatprep.subr.mxu0 0.0
        %4184 = vmatpush1.msra.mxu0 %v4160
        %4185 = vmatprep.subr.mxu0 0.0
        %4186 = vmatpush1.msra.mxu0 %v4161
        %4187 = vmatprep.subr.mxu0 0.0
        %4188 = vmatpush1.msra.mxu0 0.0
        %4189 = vmatprep.subr.mxu0 0.0
        %4190 = vmatpush1.msra.mxu0 0.0
        %4191 = vmatprep.subr.mxu0 0.0
        %4192 = vmatpush1.msra.mxu0 0.0
        %4193 = vmatprep.subr.mxu0 0.0
        %4194 = vmatpush1.msra.mxu0 0.0
        %4195 = vmatprep.subr.mxu0 0.0
        %4196 = vmatpush1.msra.mxu0 0.0
        %4197 = vmatprep.subr.mxu0 0.0
        %4198 = vmatpush1.msra.mxu0 0.0
        %4199 = vmatprep.subr.mxu0 0.0
        %4200 = vmatpush1.msra.mxu0 0.0
        %4201 = vmatprep.subr.mxu0 0.0
        %4202 = vmatpush1.msra.mxu0 0.0
        %4203 = vmatprep.subr.mxu0 0.0
        %4204 = vmatpush1.msra.mxu0 0.0
        %4205 = vmatprep.subr.mxu0 0.0
        %4206 = vmatpush1.msra.mxu0 0.0
        %4207 = vmatprep.subr.mxu0 0.0
        %4208 = vmatpush1.msra.mxu0 0.0
        %4209 = vmatprep.subr.mxu0 0.0
        %4210 = vmatpush1.msra.mxu0 0.0
        %4211 = vmatprep.subr.mxu0 0.0
        %4212 = vmatpush1.msra.mxu0 0.0
        %4213 = vmatprep.subr.mxu0 0.0
        %4214 = vmatpush1.msra.mxu0 0.0
        %4215 = vmatprep.subr.mxu0 0.0
        %4216 = vmatpush1.msra.mxu0 0.0
        %4217 = vmatprep.subr.mxu0 0.0
        %4218 = vmatpush1.msra.mxu0 0.0
        %4219 = vmatprep.subr.mxu0 0.0
        %4220 = vmatpush1.msra.mxu0 0.0
        %4221 = vmatprep.subr.mxu0 0.0
        %4222 = vmatpush1.msra.mxu0 0.0
        %4223 = vmatprep.subr.mxu0 0.0
        %4224 = vmatpush1.msra.mxu0 0.0
        %4225 = vmatprep.subr.mxu0 0.0
        %4226 = vmatpush1.msra.mxu0 0.0
        %4227 = vmatprep.subr.mxu0 0.0
        %4228 = vmatpush1.msra.mxu0 0.0
        %4229 = vmatprep.subr.mxu0 0.0
        %4230 = vmatpush1.msra.mxu0 0.0
        %4231 = vmatprep.subr.mxu0 0.0
        %4232 = vmatpush1.msra.mxu0 0.0
        %4233 = vmatprep.subr.mxu0 0.0
        %4234 = vmatpush1.msra.mxu0 0.0
        %4235 = vmatprep.subr.mxu0 0.0
        %4236 = vmatpush1.msra.mxu0 0.0
        %4237 = vmatprep.subr.mxu0 0.0
        %4238 = vmatpush1.msra.mxu0 0.0
        %4239 = vmatprep.subr.mxu0 0.0
        %4240 = vmatpush1.msra.mxu0 0.0
        %4241 = vmatprep.subr.mxu0 0.0
        %4242 = vmatpush1.msra.mxu0 0.0
        %4243 = vmatprep.mubr.f32.mxu0 0.0
        %4244 = vmatmul.mubr.f32.gmra.mrb[0].mxu0 %v4177
        %v4245 = vpop.f32.mrb[0].mxu0
        %v4246 = vadd.f32 %v4174, %v4245
        %v4247 = vpop.f32.mrb[0].mxu0
        %4248 = vdwg.mxu0
        %4250 = vrot.lane.b32.xlu0 %v4246, 96
        %v4251 = vpop.permute.xlu0 %4250
        %v4252 = vsel %vm2047, %v4246, 0
        %v4254 = vsel %vm2047, %v4251, 0
        %4256 = vmatprep.subr.mxu0 0.0
        %4257 = vmatpush1.xpose.msra.mxu0 %v4254
        %4258 = vmatprep.subr.mxu0 0.0
        %4259 = vmatpush1.xpose.msra.mxu0 0.0
        %4260 = vmatprep.subr.mxu0 0.0
        %4261 = vmatpush1.xpose.msra.mxu0 0.0
        %4262 = vmatprep.subr.mxu0 0.0
        %4263 = vmatpush1.xpose.msra.mxu0 0.0
        %4264 = vmatprep.subr.mxu0 0.0
        %4265 = vmatpush1.xpose.msra.mxu0 0.0
        %4266 = vmatprep.subr.mxu0 0.0
        %4267 = vmatpush1.xpose.msra.mxu0 0.0
        %4268 = vmatprep.subr.mxu0 0.0
        %4269 = vmatpush1.xpose.msra.mxu0 0.0
        %4270 = vmatprep.subr.mxu0 0.0
        %4271 = vmatpush1.xpose.msra.mxu0 0.0
        %4272 = vmatprep.subr.mxu0 0.0
        %4273 = vmatpush1.xpose.msra.mxu0 0.0
        %4274 = vmatprep.subr.mxu0 0.0
        %4275 = vmatpush1.xpose.msra.mxu0 0.0
        %4276 = vmatprep.subr.mxu0 0.0
        %4277 = vmatpush1.xpose.msra.mxu0 0.0
        %4278 = vmatprep.subr.mxu0 0.0
        %4279 = vmatpush1.xpose.msra.mxu0 0.0
        %4280 = vmatprep.subr.mxu0 0.0
        %4281 = vmatpush1.xpose.msra.mxu0 0.0
        %4282 = vmatprep.subr.mxu0 0.0
        %4283 = vmatpush1.xpose.msra.mxu0 0.0
        %4284 = vmatprep.subr.mxu0 0.0
        %4285 = vmatpush1.xpose.msra.mxu0 0.0
        %4286 = vmatprep.subr.mxu0 0.0
        %4287 = vmatpush1.xpose.msra.mxu0 0.0
        %4288 = vmatprep.subr.mxu0 0.0
        %4289 = vmatpush1.xpose.msra.mxu0 0.0
        %4290 = vmatprep.subr.mxu0 0.0
        %4291 = vmatpush1.xpose.msra.mxu0 0.0
        %4292 = vmatprep.subr.mxu0 0.0
        %4293 = vmatpush1.xpose.msra.mxu0 0.0
        %4294 = vmatprep.subr.mxu0 0.0
        %4295 = vmatpush1.xpose.msra.mxu0 0.0
        %4296 = vmatprep.subr.mxu0 0.0
        %4297 = vmatpush1.xpose.msra.mxu0 0.0
        %4298 = vmatprep.subr.mxu0 0.0
        %4299 = vmatpush1.xpose.msra.mxu0 0.0
        %4300 = vmatprep.subr.mxu0 0.0
        %4301 = vmatpush1.xpose.msra.mxu0 0.0
        %4302 = vmatprep.subr.mxu0 0.0
        %4303 = vmatpush1.xpose.msra.mxu0 0.0
        %4304 = vmatprep.subr.mxu0 0.0
        %4305 = vmatpush1.xpose.msra.mxu0 0.0
        %4306 = vmatprep.subr.mxu0 0.0
        %4307 = vmatpush1.xpose.msra.mxu0 0.0
        %4308 = vmatprep.subr.mxu0 0.0
        %4309 = vmatpush1.xpose.msra.mxu0 0.0
        %4310 = vmatprep.subr.mxu0 0.0
        %4311 = vmatpush1.xpose.msra.mxu0 0.0
        %4312 = vmatprep.subr.mxu0 0.0
        %4313 = vmatpush1.xpose.msra.mxu0 0.0
        %4314 = vmatprep.subr.mxu0 0.0
        %4315 = vmatpush1.xpose.msra.mxu0 0.0
        %4316 = vmatprep.subr.mxu0 0.0
        %4317 = vmatpush1.xpose.msra.mxu0 0.0
        %4318 = vmatprep.subr.mxu0 0.0
        %4319 = vmatpush1.xpose.msra.mxu0 0.0
        %4320 = vmatprep.mubr.f32.mxu0 0.0
        %4321 = vmatmul.mubr.f32.gmra.mrb[0].mxu0 %v4252
        %v4322 = vpop.f32.mrb[0].mxu0
        %v4323 = vadd.f32 0.0, %v4322
        %v4324 = vpop.f32.mrb[0].mxu0
        %4325 = vdwg.mxu0
        %4326 = vrot.lane.b32.xlu0 %v4246, 120
        %v4327 = vpop.permute.xlu0 %4326
        %4328 = vrot.lane.b32.xlu0 %v4246, 88
        %v4329 = vpop.permute.xlu0 %4328
        %v4330 = vsel %vm2047, %v4327, 0
        %v4332 = vsel %vm2047, %v4329, 0
        %4334 = vmatprep.subr.mxu0 0.0
        %4335 = vmatpush1.xpose.msra.mxu0 %v4332
        %4336 = vmatprep.subr.mxu0 0.0
        %4337 = vmatpush1.xpose.msra.mxu0 0.0
        %4338 = vmatprep.subr.mxu0 0.0
        %4339 = vmatpush1.xpose.msra.mxu0 0.0
        %4340 = vmatprep.subr.mxu0 0.0
        %4341 = vmatpush1.xpose.msra.mxu0 0.0
        %4342 = vmatprep.subr.mxu0 0.0
        %4343 = vmatpush1.xpose.msra.mxu0 0.0
        %4344 = vmatprep.subr.mxu0 0.0
        %4345 = vmatpush1.xpose.msra.mxu0 0.0
        %4346 = vmatprep.subr.mxu0 0.0
        %4347 = vmatpush1.xpose.msra.mxu0 0.0
        %4348 = vmatprep.subr.mxu0 0.0
        %4349 = vmatpush1.xpose.msra.mxu0 0.0
        %4350 = vmatprep.subr.mxu0 0.0
        %4351 = vmatpush1.xpose.msra.mxu0 0.0
        %4352 = vmatprep.subr.mxu0 0.0
        %4353 = vmatpush1.xpose.msra.mxu0 0.0
        %4354 = vmatprep.subr.mxu0 0.0
        %4355 = vmatpush1.xpose.msra.mxu0 0.0
        %4356 = vmatprep.subr.mxu0 0.0
        %4357 = vmatpush1.xpose.msra.mxu0 0.0
        %4358 = vmatprep.subr.mxu0 0.0
        %4359 = vmatpush1.xpose.msra.mxu0 0.0
        %4360 = vmatprep.subr.mxu0 0.0
        %4361 = vmatpush1.xpose.msra.mxu0 0.0
        %4362 = vmatprep.subr.mxu0 0.0
        %4363 = vmatpush1.xpose.msra.mxu0 0.0
        %4364 = vmatprep.subr.mxu0 0.0
        %4365 = vmatpush1.xpose.msra.mxu0 0.0
        %4366 = vmatprep.subr.mxu0 0.0
        %4367 = vmatpush1.xpose.msra.mxu0 0.0
        %4368 = vmatprep.subr.mxu0 0.0
        %4369 = vmatpush1.xpose.msra.mxu0 0.0
        %4370 = vmatprep.subr.mxu0 0.0
        %4371 = vmatpush1.xpose.msra.mxu0 0.0
        %4372 = vmatprep.subr.mxu0 0.0
        %4373 = vmatpush1.xpose.msra.mxu0 0.0
        %4374 = vmatprep.subr.mxu0 0.0
        %4375 = vmatpush1.xpose.msra.mxu0 0.0
        %4376 = vmatprep.subr.mxu0 0.0
        %4377 = vmatpush1.xpose.msra.mxu0 0.0
        %4378 = vmatprep.subr.mxu0 0.0
        %4379 = vmatpush1.xpose.msra.mxu0 0.0
        %4380 = vmatprep.subr.mxu0 0.0
        %4381 = vmatpush1.xpose.msra.mxu0 0.0
        %4382 = vmatprep.subr.mxu0 0.0
        %4383 = vmatpush1.xpose.msra.mxu0 0.0
        %4384 = vmatprep.subr.mxu0 0.0
        %4385 = vmatpush1.xpose.msra.mxu0 0.0
        %4386 = vmatprep.subr.mxu0 0.0
        %4387 = vmatpush1.xpose.msra.mxu0 0.0
        %4388 = vmatprep.subr.mxu0 0.0
        %4389 = vmatpush1.xpose.msra.mxu0 0.0
        %4390 = vmatprep.subr.mxu0 0.0
        %4391 = vmatpush1.xpose.msra.mxu0 0.0
        %4392 = vmatprep.subr.mxu0 0.0
        %4393 = vmatpush1.xpose.msra.mxu0 0.0
        %4394 = vmatprep.subr.mxu0 0.0
        %4395 = vmatpush1.xpose.msra.mxu0 0.0
        %4396 = vmatprep.subr.mxu0 0.0
        %4397 = vmatpush1.xpose.msra.mxu0 0.0
        %4398 = vmatprep.mubr.f32.mxu0 0.0
        %4399 = vmatmul.mubr.f32.gmra.mrb[0].mxu0 %v4330
        %v4400 = vpop.f32.mrb[0].mxu0
        %v4401 = vadd.f32 0.0, %v4400
        %v4402 = vpop.f32.mrb[0].mxu0
        %4403 = vdwg.mxu0
        %4404 = vrot.lane.b32.xlu0 %v4246, 112
        %v4405 = vpop.permute.xlu0 %4404
        %4406 = vrot.lane.b32.xlu0 %v4246, 80
        %v4407 = vpop.permute.xlu0 %4406
        %v4408 = vsel %vm2047, %v4405, 0
        %v4410 = vsel %vm2047, %v4407, 0
        %4412 = vmatprep.subr.mxu0 0.0
        %4413 = vmatpush1.xpose.msra.mxu0 %v4410
        %4414 = vmatprep.subr.mxu0 0.0
        %4415 = vmatpush1.xpose.msra.mxu0 0.0
        %4416 = vmatprep.subr.mxu0 0.0
        %4417 = vmatpush1.xpose.msra.mxu0 0.0
        %4418 = vmatprep.subr.mxu0 0.0
        %4419 = vmatpush1.xpose.msra.mxu0 0.0
        %4420 = vmatprep.subr.mxu0 0.0
        %4421 = vmatpush1.xpose.msra.mxu0 0.0
        %4422 = vmatprep.subr.mxu0 0.0
        %4423 = vmatpush1.xpose.msra.mxu0 0.0
        %4424 = vmatprep.subr.mxu0 0.0
        %4425 = vmatpush1.xpose.msra.mxu0 0.0
        %4426 = vmatprep.subr.mxu0 0.0
        %4427 = vmatpush1.xpose.msra.mxu0 0.0
        %4428 = vmatprep.subr.mxu0 0.0
        %4429 = vmatpush1.xpose.msra.mxu0 0.0
        %4430 = vmatprep.subr.mxu0 0.0
        %4431 = vmatpush1.xpose.msra.mxu0 0.0
        %4432 = vmatprep.subr.mxu0 0.0
        %4433 = vmatpush1.xpose.msra.mxu0 0.0
        %4434 = vmatprep.subr.mxu0 0.0
        %4435 = vmatpush1.xpose.msra.mxu0 0.0
        %4436 = vmatprep.subr.mxu0 0.0
        %4437 = vmatpush1.xpose.msra.mxu0 0.0
        %4438 = vmatprep.subr.mxu0 0.0
        %4439 = vmatpush1.xpose.msra.mxu0 0.0
        %4440 = vmatprep.subr.mxu0 0.0
        %4441 = vmatpush1.xpose.msra.mxu0 0.0
        %4442 = vmatprep.subr.mxu0 0.0
        %4443 = vmatpush1.xpose.msra.mxu0 0.0
        %4444 = vmatprep.subr.mxu0 0.0
        %4445 = vmatpush1.xpose.msra.mxu0 0.0
        %4446 = vmatprep.subr.mxu0 0.0
        %4447 = vmatpush1.xpose.msra.mxu0 0.0
        %4448 = vmatprep.subr.mxu0 0.0
        %4449 = vmatpush1.xpose.msra.mxu0 0.0
        %4450 = vmatprep.subr.mxu0 0.0
        %4451 = vmatpush1.xpose.msra.mxu0 0.0
        %4452 = vmatprep.subr.mxu0 0.0
        %4453 = vmatpush1.xpose.msra.mxu0 0.0
        %4454 = vmatprep.subr.mxu0 0.0
        %4455 = vmatpush1.xpose.msra.mxu0 0.0
        %4456 = vmatprep.subr.mxu0 0.0
        %4457 = vmatpush1.xpose.msra.mxu0 0.0
        %4458 = vmatprep.subr.mxu0 0.0
        %4459 = vmatpush1.xpose.msra.mxu0 0.0
        %4460 = vmatprep.subr.mxu0 0.0
        %4461 = vmatpush1.xpose.msra.mxu0 0.0
        %4462 = vmatprep.subr.mxu0 0.0
        %4463 = vmatpush1.xpose.msra.mxu0 0.0
        %4464 = vmatprep.subr.mxu0 0.0
        %4465 = vmatpush1.xpose.msra.mxu0 0.0
        %4466 = vmatprep.subr.mxu0 0.0
        %4467 = vmatpush1.xpose.msra.mxu0 0.0
        %4468 = vmatprep.subr.mxu0 0.0
        %4469 = vmatpush1.xpose.msra.mxu0 0.0
        %4470 = vmatprep.subr.mxu0 0.0
        %4471 = vmatpush1.xpose.msra.mxu0 0.0
        %4472 = vmatprep.subr.mxu0 0.0
        %4473 = vmatpush1.xpose.msra.mxu0 0.0
        %4474 = vmatprep.subr.mxu0 0.0
        %4475 = vmatpush1.xpose.msra.mxu0 0.0
        %4476 = vmatprep.mubr.f32.mxu0 0.0
        %4477 = vmatmul.mubr.f32.gmra.mrb[0].mxu0 %v4408
        %v4478 = vpop.f32.mrb[0].mxu0
        %v4479 = vadd.f32 0.0, %v4478
        %v4480 = vpop.f32.mrb[0].mxu0
        %4481 = vdwg.mxu0
        %4482 = vrot.lane.b32.xlu0 %v4246, 104
        %v4483 = vpop.permute.xlu0 %4482
        %4484 = vrot.lane.b32.xlu0 %v4246, 72
        %v4485 = vpop.permute.xlu0 %4484
        %v4486 = vsel %vm2047, %v4483, 0
        %v4488 = vsel %vm2047, %v4485, 0
        %4490 = vmatprep.subr.mxu0 0.0
        %4491 = vmatpush1.xpose.msra.mxu0 %v4488
        %4492 = vmatprep.subr.mxu0 0.0
        %4493 = vmatpush1.xpose.msra.mxu0 0.0
        %4494 = vmatprep.subr.mxu0 0.0
        %4495 = vmatpush1.xpose.msra.mxu0 0.0
        %4496 = vmatprep.subr.mxu0 0.0
        %4497 = vmatpush1.xpose.msra.mxu0 0.0
        %4498 = vmatprep.subr.mxu0 0.0
        %4499 = vmatpush1.xpose.msra.mxu0 0.0
        %4500 = vmatprep.subr.mxu0 0.0
        %4501 = vmatpush1.xpose.msra.mxu0 0.0
        %4502 = vmatprep.subr.mxu0 0.0
        %4503 = vmatpush1.xpose.msra.mxu0 0.0
        %4504 = vmatprep.subr.mxu0 0.0
        %4505 = vmatpush1.xpose.msra.mxu0 0.0
        %4506 = vmatprep.subr.mxu0 0.0
        %4507 = vmatpush1.xpose.msra.mxu0 0.0
        %4508 = vmatprep.subr.mxu0 0.0
        %4509 = vmatpush1.xpose.msra.mxu0 0.0
        %4510 = vmatprep.subr.mxu0 0.0
        %4511 = vmatpush1.xpose.msra.mxu0 0.0
        %4512 = vmatprep.subr.mxu0 0.0
        %4513 = vmatpush1.xpose.msra.mxu0 0.0
        %4514 = vmatprep.subr.mxu0 0.0
        %4515 = vmatpush1.xpose.msra.mxu0 0.0
        %4516 = vmatprep.subr.mxu0 0.0
        %4517 = vmatpush1.xpose.msra.mxu0 0.0
        %4518 = vmatprep.subr.mxu0 0.0
        %4519 = vmatpush1.xpose.msra.mxu0 0.0
        %4520 = vmatprep.subr.mxu0 0.0
        %4521 = vmatpush1.xpose.msra.mxu0 0.0
        %4522 = vmatprep.subr.mxu0 0.0
        %4523 = vmatpush1.xpose.msra.mxu0 0.0
        %4524 = vmatprep.subr.mxu0 0.0
        %4525 = vmatpush1.xpose.msra.mxu0 0.0
        %4526 = vmatprep.subr.mxu0 0.0
        %4527 = vmatpush1.xpose.msra.mxu0 0.0
        %4528 = vmatprep.subr.mxu0 0.0
        %4529 = vmatpush1.xpose.msra.mxu0 0.0
        %4530 = vmatprep.subr.mxu0 0.0
        %4531 = vmatpush1.xpose.msra.mxu0 0.0
        %4532 = vmatprep.subr.mxu0 0.0
        %4533 = vmatpush1.xpose.msra.mxu0 0.0
        %4534 = vmatprep.subr.mxu0 0.0
        %4535 = vmatpush1.xpose.msra.mxu0 0.0
        %4536 = vmatprep.subr.mxu0 0.0
        %4537 = vmatpush1.xpose.msra.mxu0 0.0
        %4538 = vmatprep.subr.mxu0 0.0
        %4539 = vmatpush1.xpose.msra.mxu0 0.0
        %4540 = vmatprep.subr.mxu0 0.0
        %4541 = vmatpush1.xpose.msra.mxu0 0.0
        %4542 = vmatprep.subr.mxu0 0.0
        %4543 = vmatpush1.xpose.msra.mxu0 0.0
        %4544 = vmatprep.subr.mxu0 0.0
        %4545 = vmatpush1.xpose.msra.mxu0 0.0
        %4546 = vmatprep.subr.mxu0 0.0
        %4547 = vmatpush1.xpose.msra.mxu0 0.0
        %4548 = vmatprep.subr.mxu0 0.0
        %4549 = vmatpush1.xpose.msra.mxu0 0.0
        %4550 = vmatprep.subr.mxu0 0.0
        %4551 = vmatpush1.xpose.msra.mxu0 0.0
        %4552 = vmatprep.subr.mxu0 0.0
        %4553 = vmatpush1.xpose.msra.mxu0 0.0
        %4554 = vmatprep.mubr.f32.mxu0 0.0
        %4555 = vmatmul.mubr.f32.gmra.mrb[0].mxu0 %v4486
        %v4556 = vpop.f32.mrb[0].mxu0
        %v4557 = vadd.f32 0.0, %v4556
        %v4558 = vpop.f32.mrb[0].mxu0
        %4559 = vdwg.mxu0
        %v4560 = vmul.f32 %v4323, 0.35355338
        %v4561 = vmul.f32 %v4401, 0.35355338
        %v4562 = vmul.f32 %v4479, 0.35355338
        %v4563 = vmul.f32 %v4557, 0.35355338
        %v4564 = vadd.f32 %v4560, %v1951
        %v4565 = vadd.f32 %v4561, %v1951
        %v4566 = vadd.f32 %v4562, %v1951
        %v4567 = vadd.f32 %v4563, %v1951
        %v4568 = vsel %vm2047, %v4564, -inf
        %4569 = vmax.xlane.f32.xlu0 %v4568
        %v4570 = vpop.xlane.xlu0 %4569
        %v4571 = vsel %vm2047, %v4565, -inf
        %4572 = vmax.xlane.f32.xlu0 %v4571
        %v4573 = vpop.xlane.xlu0 %4572
        %v4574 = vsel %vm2047, %v4566, -inf
        %4575 = vmax.xlane.f32.xlu0 %v4574
        %v4576 = vpop.xlane.xlu0 %4575
        %v4577 = vsel %vm2047, %v4567, -inf
        %4578 = vmax.xlane.f32.xlu0 %v4577
        %v4579 = vpop.xlane.xlu0 %4578
        %v4580 = vsub.f32 %v4564, %v4570
        %v4581 = vsub.f32 %v4565, %v4573
        %v4582 = vsub.f32 %v4566, %v4576
        %v4583 = vsub.f32 %v4567, %v4579
        %v4584 = vmul.f32 %v4580, 1.442695
        %v4585 = vpow.pop %v4584
        %v4586 = vmul.f32 %v4581, 1.442695
        %v4587 = vpow.pop %v4586
        %v4588 = vmul.f32 %v4582, 1.442695
        %v4589 = vpow.pop %v4588
        %v4590 = vmul.f32 %v4583, 1.442695
        %v4591 = vpow.pop %v4590
        %v4592 = vsel %vm2047, %v4585, 0.0
        %4593 = vadd.xlane.f32.xlu0 %v4592
        %v4594 = vpop.xlane.xlu0 %4593
        %v4595 = vsel %vm2047, %v4587, 0.0
        %4596 = vadd.xlane.f32.xlu0 %v4595
        %v4597 = vpop.xlane.xlu0 %4596
        %v4598 = vsel %vm2047, %v4589, 0.0
        %4599 = vadd.xlane.f32.xlu0 %v4598
        %v4600 = vpop.xlane.xlu0 %4599
        %v4601 = vsel %vm2047, %v4591, 0.0
        %4602 = vadd.xlane.f32.xlu0 %v4601
        %v4603 = vpop.xlane.xlu0 %4602
        %v4604 = vrcp.pop %v4594
        %v4605 = vrcp.pop %v4597
        %v4606 = vrcp.pop %v4600
        %v4607 = vrcp.pop %v4603
        %v4608 = vmul.f32 %v4585, %v4604
        %v4609 = vmul.f32 %v4587, %v4605
        %v4610 = vmul.f32 %v4589, %v4606
        %v4611 = vmul.f32 %v4591, %v4607
        %4612 = vrot.lane.b32.xlu0 %v4246, 64
        %v4613 = vpop.permute.xlu0 %4612
        %v4616 = vsel %vm2047, %v4608, 0
        %4618 = vmatprep.subr.mxu0 0.0
        %4619 = vmatpush1.msra.mxu0 %v4613
        %4620 = vmatprep.subr.mxu0 0.0
        %4621 = vmatpush1.msra.mxu0 0.0
        %4622 = vmatprep.subr.mxu0 0.0
        %4623 = vmatpush1.msra.mxu0 0.0
        %4624 = vmatprep.subr.mxu0 0.0
        %4625 = vmatpush1.msra.mxu0 0.0
        %4626 = vmatprep.subr.mxu0 0.0
        %4627 = vmatpush1.msra.mxu0 0.0
        %4628 = vmatprep.subr.mxu0 0.0
        %4629 = vmatpush1.msra.mxu0 0.0
        %4630 = vmatprep.subr.mxu0 0.0
        %4631 = vmatpush1.msra.mxu0 0.0
        %4632 = vmatprep.subr.mxu0 0.0
        %4633 = vmatpush1.msra.mxu0 0.0
        %4634 = vmatprep.subr.mxu0 0.0
        %4635 = vmatpush1.msra.mxu0 0.0
        %4636 = vmatprep.subr.mxu0 0.0
        %4637 = vmatpush1.msra.mxu0 0.0
        %4638 = vmatprep.subr.mxu0 0.0
        %4639 = vmatpush1.msra.mxu0 0.0
        %4640 = vmatprep.subr.mxu0 0.0
        %4641 = vmatpush1.msra.mxu0 0.0
        %4642 = vmatprep.subr.mxu0 0.0
        %4643 = vmatpush1.msra.mxu0 0.0
        %4644 = vmatprep.subr.mxu0 0.0
        %4645 = vmatpush1.msra.mxu0 0.0
        %4646 = vmatprep.subr.mxu0 0.0
        %4647 = vmatpush1.msra.mxu0 0.0
        %4648 = vmatprep.subr.mxu0 0.0
        %4649 = vmatpush1.msra.mxu0 0.0
        %4650 = vmatprep.subr.mxu0 0.0
        %4651 = vmatpush1.msra.mxu0 0.0
        %4652 = vmatprep.subr.mxu0 0.0
        %4653 = vmatpush1.msra.mxu0 0.0
        %4654 = vmatprep.subr.mxu0 0.0
        %4655 = vmatpush1.msra.mxu0 0.0
        %4656 = vmatprep.subr.mxu0 0.0
        %4657 = vmatpush1.msra.mxu0 0.0
        %4658 = vmatprep.subr.mxu0 0.0
        %4659 = vmatpush1.msra.mxu0 0.0
        %4660 = vmatprep.subr.mxu0 0.0
        %4661 = vmatpush1.msra.mxu0 0.0
        %4662 = vmatprep.subr.mxu0 0.0
        %4663 = vmatpush1.msra.mxu0 0.0
        %4664 = vmatprep.subr.mxu0 0.0
        %4665 = vmatpush1.msra.mxu0 0.0
        %4666 = vmatprep.subr.mxu0 0.0
        %4667 = vmatpush1.msra.mxu0 0.0
        %4668 = vmatprep.subr.mxu0 0.0
        %4669 = vmatpush1.msra.mxu0 0.0
        %4670 = vmatprep.subr.mxu0 0.0
        %4671 = vmatpush1.msra.mxu0 0.0
        %4672 = vmatprep.subr.mxu0 0.0
        %4673 = vmatpush1.msra.mxu0 0.0
        %4674 = vmatprep.subr.mxu0 0.0
        %4675 = vmatpush1.msra.mxu0 0.0
        %4676 = vmatprep.subr.mxu0 0.0
        %4677 = vmatpush1.msra.mxu0 0.0
        %4678 = vmatprep.subr.mxu0 0.0
        %4679 = vmatpush1.msra.mxu0 0.0
        %4680 = vmatprep.subr.mxu0 0.0
        %4681 = vmatpush1.msra.mxu0 0.0
        %4682 = vmatprep.mubr.f32.mxu0 0.0
        %4683 = vmatmul.mubr.f32.gmra.mrb[0].mxu0 %v4616
        %v4684 = vpop.f32.mrb[0].mxu0
        %v4685 = vadd.f32 0.0, %v4684
        %v4686 = vpop.f32.mrb[0].mxu0
        %4687 = vdwg.mxu0
        %4688 = vrot.lane.b32.xlu0 %v4246, 56
        %v4689 = vpop.permute.xlu0 %4688
        %v4692 = vsel %vm2047, %v4609, 0
        %4694 = vmatprep.subr.mxu0 0.0
        %4695 = vmatpush1.msra.mxu0 %v4689
        %4696 = vmatprep.subr.mxu0 0.0
        %4697 = vmatpush1.msra.mxu0 0.0
        %4698 = vmatprep.subr.mxu0 0.0
        %4699 = vmatpush1.msra.mxu0 0.0
        %4700 = vmatprep.subr.mxu0 0.0
        %4701 = vmatpush1.msra.mxu0 0.0
        %4702 = vmatprep.subr.mxu0 0.0
        %4703 = vmatpush1.msra.mxu0 0.0
        %4704 = vmatprep.subr.mxu0 0.0
        %4705 = vmatpush1.msra.mxu0 0.0
        %4706 = vmatprep.subr.mxu0 0.0
        %4707 = vmatpush1.msra.mxu0 0.0
        %4708 = vmatprep.subr.mxu0 0.0
        %4709 = vmatpush1.msra.mxu0 0.0
        %4710 = vmatprep.subr.mxu0 0.0
        %4711 = vmatpush1.msra.mxu0 0.0
        %4712 = vmatprep.subr.mxu0 0.0
        %4713 = vmatpush1.msra.mxu0 0.0
        %4714 = vmatprep.subr.mxu0 0.0
        %4715 = vmatpush1.msra.mxu0 0.0
        %4716 = vmatprep.subr.mxu0 0.0
        %4717 = vmatpush1.msra.mxu0 0.0
        %4718 = vmatprep.subr.mxu0 0.0
        %4719 = vmatpush1.msra.mxu0 0.0
        %4720 = vmatprep.subr.mxu0 0.0
        %4721 = vmatpush1.msra.mxu0 0.0
        %4722 = vmatprep.subr.mxu0 0.0
        %4723 = vmatpush1.msra.mxu0 0.0
        %4724 = vmatprep.subr.mxu0 0.0
        %4725 = vmatpush1.msra.mxu0 0.0
        %4726 = vmatprep.subr.mxu0 0.0
        %4727 = vmatpush1.msra.mxu0 0.0
        %4728 = vmatprep.subr.mxu0 0.0
        %4729 = vmatpush1.msra.mxu0 0.0
        %4730 = vmatprep.subr.mxu0 0.0
        %4731 = vmatpush1.msra.mxu0 0.0
        %4732 = vmatprep.subr.mxu0 0.0
        %4733 = vmatpush1.msra.mxu0 0.0
        %4734 = vmatprep.subr.mxu0 0.0
        %4735 = vmatpush1.msra.mxu0 0.0
        %4736 = vmatprep.subr.mxu0 0.0
        %4737 = vmatpush1.msra.mxu0 0.0
        %4738 = vmatprep.subr.mxu0 0.0
        %4739 = vmatpush1.msra.mxu0 0.0
        %4740 = vmatprep.subr.mxu0 0.0
        %4741 = vmatpush1.msra.mxu0 0.0
        %4742 = vmatprep.subr.mxu0 0.0
        %4743 = vmatpush1.msra.mxu0 0.0
        %4744 = vmatprep.subr.mxu0 0.0
        %4745 = vmatpush1.msra.mxu0 0.0
        %4746 = vmatprep.subr.mxu0 0.0
        %4747 = vmatpush1.msra.mxu0 0.0
        %4748 = vmatprep.subr.mxu0 0.0
        %4749 = vmatpush1.msra.mxu0 0.0
        %4750 = vmatprep.subr.mxu0 0.0
        %4751 = vmatpush1.msra.mxu0 0.0
        %4752 = vmatprep.subr.mxu0 0.0
        %4753 = vmatpush1.msra.mxu0 0.0
        %4754 = vmatprep.subr.mxu0 0.0
        %4755 = vmatpush1.msra.mxu0 0.0
        %4756 = vmatprep.subr.mxu0 0.0
        %4757 = vmatpush1.msra.mxu0 0.0
        %4758 = vmatprep.mubr.f32.mxu0 0.0
        %4759 = vmatmul.mubr.f32.gmra.mrb[0].mxu0 %v4692
        %v4760 = vpop.f32.mrb[0].mxu0
        %v4761 = vadd.f32 0.0, %v4760
        %v4762 = vpop.f32.mrb[0].mxu0
        %4763 = vdwg.mxu0
        %4764 = vrot.lane.b32.xlu0 %v4246, 48
        %v4765 = vpop.permute.xlu0 %4764
        %v4768 = vsel %vm2047, %v4610, 0
        %4770 = vmatprep.subr.mxu0 0.0
        %4771 = vmatpush1.msra.mxu0 %v4765
        %4772 = vmatprep.subr.mxu0 0.0
        %4773 = vmatpush1.msra.mxu0 0.0
        %4774 = vmatprep.subr.mxu0 0.0
        %4775 = vmatpush1.msra.mxu0 0.0
        %4776 = vmatprep.subr.mxu0 0.0
        %4777 = vmatpush1.msra.mxu0 0.0
        %4778 = vmatprep.subr.mxu0 0.0
        %4779 = vmatpush1.msra.mxu0 0.0
        %4780 = vmatprep.subr.mxu0 0.0
        %4781 = vmatpush1.msra.mxu0 0.0
        %4782 = vmatprep.subr.mxu0 0.0
        %4783 = vmatpush1.msra.mxu0 0.0
        %4784 = vmatprep.subr.mxu0 0.0
        %4785 = vmatpush1.msra.mxu0 0.0
        %4786 = vmatprep.subr.mxu0 0.0
        %4787 = vmatpush1.msra.mxu0 0.0
        %4788 = vmatprep.subr.mxu0 0.0
        %4789 = vmatpush1.msra.mxu0 0.0
        %4790 = vmatprep.subr.mxu0 0.0
        %4791 = vmatpush1.msra.mxu0 0.0
        %4792 = vmatprep.subr.mxu0 0.0
        %4793 = vmatpush1.msra.mxu0 0.0
        %4794 = vmatprep.subr.mxu0 0.0
        %4795 = vmatpush1.msra.mxu0 0.0
        %4796 = vmatprep.subr.mxu0 0.0
        %4797 = vmatpush1.msra.mxu0 0.0
        %4798 = vmatprep.subr.mxu0 0.0
        %4799 = vmatpush1.msra.mxu0 0.0
        %4800 = vmatprep.subr.mxu0 0.0
        %4801 = vmatpush1.msra.mxu0 0.0
        %4802 = vmatprep.subr.mxu0 0.0
        %4803 = vmatpush1.msra.mxu0 0.0
        %4804 = vmatprep.subr.mxu0 0.0
        %4805 = vmatpush1.msra.mxu0 0.0
        %4806 = vmatprep.subr.mxu0 0.0
        %4807 = vmatpush1.msra.mxu0 0.0
        %4808 = vmatprep.subr.mxu0 0.0
        %4809 = vmatpush1.msra.mxu0 0.0
        %4810 = vmatprep.subr.mxu0 0.0
        %4811 = vmatpush1.msra.mxu0 0.0
        %4812 = vmatprep.subr.mxu0 0.0
        %4813 = vmatpush1.msra.mxu0 0.0
        %4814 = vmatprep.subr.mxu0 0.0
        %4815 = vmatpush1.msra.mxu0 0.0
        %4816 = vmatprep.subr.mxu0 0.0
        %4817 = vmatpush1.msra.mxu0 0.0
        %4818 = vmatprep.subr.mxu0 0.0
        %4819 = vmatpush1.msra.mxu0 0.0
        %4820 = vmatprep.subr.mxu0 0.0
        %4821 = vmatpush1.msra.mxu0 0.0
        %4822 = vmatprep.subr.mxu0 0.0
        %4823 = vmatpush1.msra.mxu0 0.0
        %4824 = vmatprep.subr.mxu0 0.0
        %4825 = vmatpush1.msra.mxu0 0.0
        %4826 = vmatprep.subr.mxu0 0.0
        %4827 = vmatpush1.msra.mxu0 0.0
        %4828 = vmatprep.subr.mxu0 0.0
        %4829 = vmatpush1.msra.mxu0 0.0
        %4830 = vmatprep.subr.mxu0 0.0
        %4831 = vmatpush1.msra.mxu0 0.0
        %4832 = vmatprep.subr.mxu0 0.0
        %4833 = vmatpush1.msra.mxu0 0.0
        %4834 = vmatprep.mubr.f32.mxu0 0.0
        %4835 = vmatmul.mubr.f32.gmra.mrb[0].mxu0 %v4768
        %v4836 = vpop.f32.mrb[0].mxu0
        %v4837 = vadd.f32 0.0, %v4836
        %v4838 = vpop.f32.mrb[0].mxu0
        %4839 = vdwg.mxu0
        %4840 = vrot.lane.b32.xlu0 %v4246, 40
        %v4841 = vpop.permute.xlu0 %4840
        %v4844 = vsel %vm2047, %v4611, 0
        %4846 = vmatprep.subr.mxu0 0.0
        %4847 = vmatpush1.msra.mxu0 %v4841
        %4848 = vmatprep.subr.mxu0 0.0
        %4849 = vmatpush1.msra.mxu0 0.0
        %4850 = vmatprep.subr.mxu0 0.0
        %4851 = vmatpush1.msra.mxu0 0.0
        %4852 = vmatprep.subr.mxu0 0.0
        %4853 = vmatpush1.msra.mxu0 0.0
        %4854 = vmatprep.subr.mxu0 0.0
        %4855 = vmatpush1.msra.mxu0 0.0
        %4856 = vmatprep.subr.mxu0 0.0
        %4857 = vmatpush1.msra.mxu0 0.0
        %4858 = vmatprep.subr.mxu0 0.0
        %4859 = vmatpush1.msra.mxu0 0.0
        %4860 = vmatprep.subr.mxu0 0.0
        %4861 = vmatpush1.msra.mxu0 0.0
        %4862 = vmatprep.subr.mxu0 0.0
        %4863 = vmatpush1.msra.mxu0 0.0
        %4864 = vmatprep.subr.mxu0 0.0
        %4865 = vmatpush1.msra.mxu0 0.0
        %4866 = vmatprep.subr.mxu0 0.0
        %4867 = vmatpush1.msra.mxu0 0.0
        %4868 = vmatprep.subr.mxu0 0.0
        %4869 = vmatpush1.msra.mxu0 0.0
        %4870 = vmatprep.subr.mxu0 0.0
        %4871 = vmatpush1.msra.mxu0 0.0
        %4872 = vmatprep.subr.mxu0 0.0
        %4873 = vmatpush1.msra.mxu0 0.0
        %4874 = vmatprep.subr.mxu0 0.0
        %4875 = vmatpush1.msra.mxu0 0.0
        %4876 = vmatprep.subr.mxu0 0.0
        %4877 = vmatpush1.msra.mxu0 0.0
        %4878 = vmatprep.subr.mxu0 0.0
        %4879 = vmatpush1.msra.mxu0 0.0
        %4880 = vmatprep.subr.mxu0 0.0
        %4881 = vmatpush1.msra.mxu0 0.0
        %4882 = vmatprep.subr.mxu0 0.0
        %4883 = vmatpush1.msra.mxu0 0.0
        %4884 = vmatprep.subr.mxu0 0.0
        %4885 = vmatpush1.msra.mxu0 0.0
        %4886 = vmatprep.subr.mxu0 0.0
        %4887 = vmatpush1.msra.mxu0 0.0
        %4888 = vmatprep.subr.mxu0 0.0
        %4889 = vmatpush1.msra.mxu0 0.0
        %4890 = vmatprep.subr.mxu0 0.0
        %4891 = vmatpush1.msra.mxu0 0.0
        %4892 = vmatprep.subr.mxu0 0.0
        %4893 = vmatpush1.msra.mxu0 0.0
        %4894 = vmatprep.subr.mxu0 0.0
        %4895 = vmatpush1.msra.mxu0 0.0
        %4896 = vmatprep.subr.mxu0 0.0
        %4897 = vmatpush1.msra.mxu0 0.0
        %4898 = vmatprep.subr.mxu0 0.0
        %4899 = vmatpush1.msra.mxu0 0.0
        %4900 = vmatprep.subr.mxu0 0.0
        %4901 = vmatpush1.msra.mxu0 0.0
        %4902 = vmatprep.subr.mxu0 0.0
        %4903 = vmatpush1.msra.mxu0 0.0
        %4904 = vmatprep.subr.mxu0 0.0
        %4905 = vmatpush1.msra.mxu0 0.0
        %4906 = vmatprep.subr.mxu0 0.0
        %4907 = vmatpush1.msra.mxu0 0.0
        %4908 = vmatprep.subr.mxu0 0.0
        %4909 = vmatpush1.msra.mxu0 0.0
        %4910 = vmatprep.mubr.f32.mxu0 0.0
        %4911 = vmatmul.mubr.f32.gmra.mrb[0].mxu0 %v4844
        %v4912 = vpop.f32.mrb[0].mxu0
        %v4913 = vadd.f32 0.0, %v4912
        %v4914 = vpop.f32.mrb[0].mxu0
        %4915 = vdwg.mxu0
        %4917 = vrot.lane.b32.xlu0 %v4761, 8
        %v4918 = vpop.permute.xlu0 %4917
        %4921 = vrot.lane.b32.xlu0 %v4837, 16
        %v4922 = vpop.permute.xlu0 %4921
        %4925 = vrot.lane.b32.xlu0 %v4913, 24
        %v4926 = vpop.permute.xlu0 %4925
        %v4928 = vsel %vm2047, %v4685, %v4918
        %v4929 = vsel %vm2731, %v4928, %v4922
        %v4930 = vsel %vm2733, %v4929, %v4926
        %v4932 = vlaneseq
        %v4933 = vshrl.u32 %v4932, 7
        %v4934 = vsub.s32 0, %v4933
        %v4935 = vrot.slane %v4167, %v4934
        %v4938 = vsel %vm1970, %v4930, 0
        %4940 = vmatprep.subr.mxu0 0.0
        %4941 = vmatpush1.msra.mxu0 %v4163
        %4942 = vmatprep.subr.mxu0 0.0
        %4943 = vmatpush1.msra.mxu0 %v4164
        %4944 = vmatprep.subr.mxu0 0.0
        %4945 = vmatpush1.msra.mxu0 %v4165
        %4946 = vmatprep.subr.mxu0 0.0
        %4947 = vmatpush1.msra.mxu0 %v4166
        %4948 = vmatprep.subr.mxu0 0.0
        %4949 = vmatpush1.msra.mxu0 0.0
        %4950 = vmatprep.subr.mxu0 0.0
        %4951 = vmatpush1.msra.mxu0 0.0
        %4952 = vmatprep.subr.mxu0 0.0
        %4953 = vmatpush1.msra.mxu0 0.0
        %4954 = vmatprep.subr.mxu0 0.0
        %4955 = vmatpush1.msra.mxu0 0.0
        %4956 = vmatprep.subr.mxu0 0.0
        %4957 = vmatpush1.msra.mxu0 0.0
        %4958 = vmatprep.subr.mxu0 0.0
        %4959 = vmatpush1.msra.mxu0 0.0
        %4960 = vmatprep.subr.mxu0 0.0
        %4961 = vmatpush1.msra.mxu0 0.0
        %4962 = vmatprep.subr.mxu0 0.0
        %4963 = vmatpush1.msra.mxu0 0.0
        %4964 = vmatprep.subr.mxu0 0.0
        %4965 = vmatpush1.msra.mxu0 0.0
        %4966 = vmatprep.subr.mxu0 0.0
        %4967 = vmatpush1.msra.mxu0 0.0
        %4968 = vmatprep.subr.mxu0 0.0
        %4969 = vmatpush1.msra.mxu0 0.0
        %4970 = vmatprep.subr.mxu0 0.0
        %4971 = vmatpush1.msra.mxu0 0.0
        %4972 = vmatprep.subr.mxu0 0.0
        %4973 = vmatpush1.msra.mxu0 0.0
        %4974 = vmatprep.subr.mxu0 0.0
        %4975 = vmatpush1.msra.mxu0 0.0
        %4976 = vmatprep.subr.mxu0 0.0
        %4977 = vmatpush1.msra.mxu0 0.0
        %4978 = vmatprep.subr.mxu0 0.0
        %4979 = vmatpush1.msra.mxu0 0.0
        %4980 = vmatprep.subr.mxu0 0.0
        %4981 = vmatpush1.msra.mxu0 0.0
        %4982 = vmatprep.subr.mxu0 0.0
        %4983 = vmatpush1.msra.mxu0 0.0
        %4984 = vmatprep.subr.mxu0 0.0
        %4985 = vmatpush1.msra.mxu0 0.0
        %4986 = vmatprep.subr.mxu0 0.0
        %4987 = vmatpush1.msra.mxu0 0.0
        %4988 = vmatprep.subr.mxu0 0.0
        %4989 = vmatpush1.msra.mxu0 0.0
        %4990 = vmatprep.subr.mxu0 0.0
        %4991 = vmatpush1.msra.mxu0 0.0
        %4992 = vmatprep.subr.mxu0 0.0
        %4993 = vmatpush1.msra.mxu0 0.0
        %4994 = vmatprep.subr.mxu0 0.0
        %4995 = vmatpush1.msra.mxu0 0.0
        %4996 = vmatprep.subr.mxu0 0.0
        %4997 = vmatpush1.msra.mxu0 0.0
        %4998 = vmatprep.subr.mxu0 0.0
        %4999 = vmatpush1.msra.mxu0 0.0
        %5000 = vmatprep.subr.mxu0 0.0
        %5001 = vmatpush1.msra.mxu0 0.0
        %5002 = vmatprep.subr.mxu0 0.0
        %5003 = vmatpush1.msra.mxu0 0.0
        %5004 = vmatprep.mubr.f32.mxu0 0.0
        %5005 = vmatmul.mubr.f32.gmra.mrb[0].mxu0 %v4938
        %v5006 = vpop.f32.mrb[0].mxu0
        %v5007 = vadd.f32 %v4935, %v5006
        %v5008 = vpop.f32.mrb[0].mxu0
        %5009 = vdwg.mxu0
        %v5010 = vadd.f32 %v5007, %v1930
        %v5011 = vsel %vm1970, %v5010, 0.0
        %5012 = vadd.xlane.f32.xlu0 %v5011
        %v5013 = vpop.xlane.xlu0 %5012
        %v5014 = vmul.f32 %v5013, %v2818
        %v5015 = vmul.f32 %v5010, %v5010
        %v5016 = vsel %vm1970, %v5015, 0.0
        %5017 = vadd.xlane.f32.xlu0 %v5016
        %v5018 = vpop.xlane.xlu0 %5017
        %v5019 = vmul.f32 %v5018, %v2818
        %v5020 = vmul.f32 %v5014, %v5014
        %v5021 = vsub.f32 %v5019, %v5020
        %v5022 = vsub.f32 %v5010, %v5014
        %v5023 = vadd.f32 %v5021, 1e-05
        %v5024 = vrsqrt.pop %v5023
        %v5025 = vmul.f32 %v5022, %v5024
        %v5027 = vlaneseq
        %v5028 = vshrl.u32 %v5027, 7
        %v5029 = vsub.s32 0, %v5028
        %v5030 = vrot.slane %v4168, %v5029
        %v5032 = vmul.f32 %v5025, %v5030
        %v5034 = vlaneseq
        %v5035 = vshrl.u32 %v5034, 7
        %v5036 = vsub.s32 0, %v5035
        %v5037 = vrot.slane %v4169, %v5036
        %v5039 = vadd.f32 %v5032, %v5037
        %5041 = vset.pattern.permute.xlu0 0
        %5042 = vperm.xlu0 %5041, %v1938
        %v5043 = vpop.permute.xlu0 %5042
        %v5045 = vmul.f32 %v5039, %v5043
        %v5046 = vld [vmem:[%s55] sm:$0xff]
        %v5047 = vld [vmem:[%s55 + $0x8] sm:$0xff]
        %v5048 = vld [vmem:[%s55 + $0x10] sm:$0xff]
        %v5049 = vld [vmem:[%s55 + $0x18] sm:$0xff]
        %v5050 = vld [vmem:[#allocation15] sm:$0x1]
        %v5051 = vld [vmem:[%s59] sm:$0xff]
        %v5052 = vld [vmem:[%s59 + $0x8] sm:$0xff]
        %v5053 = vld [vmem:[%s59 + $0x10] sm:$0xff]
        %v5054 = vld [vmem:[%s59 + $0x18] sm:$0xff]
        %v5055 = vld [vmem:[#allocation16] sm:$0x1]
        %v5056 = vld [vmem:[%s63] sm:$0xff]
        %v5057 = vld [vmem:[%s63 + $0x8] sm:$0xff]
        %v5058 = vld [vmem:[%s63 + $0x10] sm:$0xff]
        %v5059 = vld [vmem:[%s63 + $0x18] sm:$0xff]
        %v5060 = vld [vmem:[#allocation18] sm:$0x1]
        %v5061 = vld [vmem:[#allocation19] sm:$0x1]
        %v5062 = vld [vmem:[#allocation21] sm:$0x1]
        %v5064 = vlaneseq
        %v5065 = vshrl.u32 %v5064, 7
        %v5066 = vsub.s32 0, %v5065
        %v5067 = vrot.slane %v5050, %v5066
        %v5070 = vsel %vm1970, %v5045, 0
        %5072 = vmatprep.subr.mxu0 0.0
        %5073 = vmatpush1.msra.mxu0 %v5046
        %5074 = vmatprep.subr.mxu0 0.0
        %5075 = vmatpush1.msra.mxu0 %v5047
        %5076 = vmatprep.subr.mxu0 0.0
        %5077 = vmatpush1.msra.mxu0 %v5048
        %5078 = vmatprep.subr.mxu0 0.0
        %5079 = vmatpush1.msra.mxu0 %v5049
        %5080 = vmatprep.subr.mxu0 0.0
        %5081 = vmatpush1.msra.mxu0 0.0
        %5082 = vmatprep.subr.mxu0 0.0
        %5083 = vmatpush1.msra.mxu0 0.0
        %5084 = vmatprep.subr.mxu0 0.0
        %5085 = vmatpush1.msra.mxu0 0.0
        %5086 = vmatprep.subr.mxu0 0.0
        %5087 = vmatpush1.msra.mxu0 0.0
        %5088 = vmatprep.subr.mxu0 0.0
        %5089 = vmatpush1.msra.mxu0 0.0
        %5090 = vmatprep.subr.mxu0 0.0
        %5091 = vmatpush1.msra.mxu0 0.0
        %5092 = vmatprep.subr.mxu0 0.0
        %5093 = vmatpush1.msra.mxu0 0.0
        %5094 = vmatprep.subr.mxu0 0.0
        %5095 = vmatpush1.msra.mxu0 0.0
        %5096 = vmatprep.subr.mxu0 0.0
        %5097 = vmatpush1.msra.mxu0 0.0
        %5098 = vmatprep.subr.mxu0 0.0
        %5099 = vmatpush1.msra.mxu0 0.0
        %5100 = vmatprep.subr.mxu0 0.0
        %5101 = vmatpush1.msra.mxu0 0.0
        %5102 = vmatprep.subr.mxu0 0.0
        %5103 = vmatpush1.msra.mxu0 0.0
        %5104 = vmatprep.subr.mxu0 0.0
        %5105 = vmatpush1.msra.mxu0 0.0
        %5106 = vmatprep.subr.mxu0 0.0
        %5107 = vmatpush1.msra.mxu0 0.0
        %5108 = vmatprep.subr.mxu0 0.0
        %5109 = vmatpush1.msra.mxu0 0.0
        %5110 = vmatprep.subr.mxu0 0.0
        %5111 = vmatpush1.msra.mxu0 0.0
        %5112 = vmatprep.subr.mxu0 0.0
        %5113 = vmatpush1.msra.mxu0 0.0
        %5114 = vmatprep.subr.mxu0 0.0
        %5115 = vmatpush1.msra.mxu0 0.0
        %5116 = vmatprep.subr.mxu0 0.0
        %5117 = vmatpush1.msra.mxu0 0.0
        %5118 = vmatprep.subr.mxu0 0.0
        %5119 = vmatpush1.msra.mxu0 0.0
        %5120 = vmatprep.subr.mxu0 0.0
        %5121 = vmatpush1.msra.mxu0 0.0
        %5122 = vmatprep.subr.mxu0 0.0
        %5123 = vmatpush1.msra.mxu0 0.0
        %5124 = vmatprep.subr.mxu0 0.0
        %5125 = vmatpush1.msra.mxu0 0.0
        %5126 = vmatprep.subr.mxu0 0.0
        %5127 = vmatpush1.msra.mxu0 0.0
        %5128 = vmatprep.subr.mxu0 0.0
        %5129 = vmatpush1.msra.mxu0 0.0
        %5130 = vmatprep.subr.mxu0 0.0
        %5131 = vmatpush1.msra.mxu0 0.0
        %5132 = vmatprep.subr.mxu0 0.0
        %5133 = vmatpush1.msra.mxu0 0.0
        %5134 = vmatprep.subr.mxu0 0.0
        %5135 = vmatpush1.msra.mxu0 0.0
        %5136 = vmatprep.mubr.f32.mxu0 0.0
        %5137 = vmatmul.mubr.f32.gmra.mrb[0].mxu0 %v5070
        %v5138 = vpop.f32.mrb[0].mxu0
        %v5139 = vadd.f32 %v5067, %v5138
        %v5140 = vpop.f32.mrb[0].mxu0
        %5141 = vdwg.mxu0
        %v5143 = vlaneseq
        %v5144 = vshrl.u32 %v5143, 7
        %v5145 = vsub.s32 0, %v5144
        %v5146 = vrot.slane %v5055, %v5145
        %v5149 = vsel %vm1970, %v4157, 0
        %5151 = vmatprep.subr.mxu0 0.0
        %5152 = vmatpush1.msra.mxu0 %v5051
        %5153 = vmatprep.subr.mxu0 0.0
        %5154 = vmatpush1.msra.mxu0 %v5052
        %5155 = vmatprep.subr.mxu0 0.0
        %5156 = vmatpush1.msra.mxu0 %v5053
        %5157 = vmatprep.subr.mxu0 0.0
        %5158 = vmatpush1.msra.mxu0 %v5054
        %5159 = vmatprep.subr.mxu0 0.0
        %5160 = vmatpush1.msra.mxu0 0.0
        %5161 = vmatprep.subr.mxu0 0.0
        %5162 = vmatpush1.msra.mxu0 0.0
        %5163 = vmatprep.subr.mxu0 0.0
        %5164 = vmatpush1.msra.mxu0 0.0
        %5165 = vmatprep.subr.mxu0 0.0
        %5166 = vmatpush1.msra.mxu0 0.0
        %5167 = vmatprep.subr.mxu0 0.0
        %5168 = vmatpush1.msra.mxu0 0.0
        %5169 = vmatprep.subr.mxu0 0.0
        %5170 = vmatpush1.msra.mxu0 0.0
        %5171 = vmatprep.subr.mxu0 0.0
        %5172 = vmatpush1.msra.mxu0 0.0
        %5173 = vmatprep.subr.mxu0 0.0
        %5174 = vmatpush1.msra.mxu0 0.0
        %5175 = vmatprep.subr.mxu0 0.0
        %5176 = vmatpush1.msra.mxu0 0.0
        %5177 = vmatprep.subr.mxu0 0.0
        %5178 = vmatpush1.msra.mxu0 0.0
        %5179 = vmatprep.subr.mxu0 0.0
        %5180 = vmatpush1.msra.mxu0 0.0
        %5181 = vmatprep.subr.mxu0 0.0
        %5182 = vmatpush1.msra.mxu0 0.0
        %5183 = vmatprep.subr.mxu0 0.0
        %5184 = vmatpush1.msra.mxu0 0.0
        %5185 = vmatprep.subr.mxu0 0.0
        %5186 = vmatpush1.msra.mxu0 0.0
        %5187 = vmatprep.subr.mxu0 0.0
        %5188 = vmatpush1.msra.mxu0 0.0
        %5189 = vmatprep.subr.mxu0 0.0
        %5190 = vmatpush1.msra.mxu0 0.0
        %5191 = vmatprep.subr.mxu0 0.0
        %5192 = vmatpush1.msra.mxu0 0.0
        %5193 = vmatprep.subr.mxu0 0.0
        %5194 = vmatpush1.msra.mxu0 0.0
        %5195 = vmatprep.subr.mxu0 0.0
        %5196 = vmatpush1.msra.mxu0 0.0
        %5197 = vmatprep.subr.mxu0 0.0
        %5198 = vmatpush1.msra.mxu0 0.0
        %5199 = vmatprep.subr.mxu0 0.0
        %5200 = vmatpush1.msra.mxu0 0.0
        %5201 = vmatprep.subr.mxu0 0.0
        %5202 = vmatpush1.msra.mxu0 0.0
        %5203 = vmatprep.subr.mxu0 0.0
        %5204 = vmatpush1.msra.mxu0 0.0
        %5205 = vmatprep.subr.mxu0 0.0
        %5206 = vmatpush1.msra.mxu0 0.0
        %5207 = vmatprep.subr.mxu0 0.0
        %5208 = vmatpush1.msra.mxu0 0.0
        %5209 = vmatprep.subr.mxu0 0.0
        %5210 = vmatpush1.msra.mxu0 0.0
        %5211 = vmatprep.subr.mxu0 0.0
        %5212 = vmatpush1.msra.mxu0 0.0
        %5213 = vmatprep.subr.mxu0 0.0
        %5214 = vmatpush1.msra.mxu0 0.0
        %5215 = vmatprep.mubr.f32.mxu0 0.0
        %5216 = vmatmul.mubr.f32.gmra.mrb[0].mxu0 %v5149
        %v5217 = vpop.f32.mrb[0].mxu0
        %v5218 = vadd.f32 %v5146, %v5217
        %v5219 = vpop.f32.mrb[0].mxu0
        %5220 = vdwg.mxu0
        %v5222 = vsel %vm2047, %v5139, 0
        %v5225 = vsel %vm2047, %v5218, 0
        %5227 = vmatprep.subr.mxu0 0.0
        %5228 = vmatpush1.xpose.msra.mxu0 %v5225
        %5229 = vmatprep.subr.mxu0 0.0
        %5230 = vmatpush1.xpose.msra.mxu0 0.0
        %5231 = vmatprep.subr.mxu0 0.0
        %5232 = vmatpush1.xpose.msra.mxu0 0.0
        %5233 = vmatprep.subr.mxu0 0.0
        %5234 = vmatpush1.xpose.msra.mxu0 0.0
        %5235 = vmatprep.subr.mxu0 0.0
        %5236 = vmatpush1.xpose.msra.mxu0 0.0
        %5237 = vmatprep.subr.mxu0 0.0
        %5238 = vmatpush1.xpose.msra.mxu0 0.0
        %5239 = vmatprep.subr.mxu0 0.0
        %5240 = vmatpush1.xpose.msra.mxu0 0.0
        %5241 = vmatprep.subr.mxu0 0.0
        %5242 = vmatpush1.xpose.msra.mxu0 0.0
        %5243 = vmatprep.subr.mxu0 0.0
        %5244 = vmatpush1.xpose.msra.mxu0 0.0
        %5245 = vmatprep.subr.mxu0 0.0
        %5246 = vmatpush1.xpose.msra.mxu0 0.0
        %5247 = vmatprep.subr.mxu0 0.0
        %5248 = vmatpush1.xpose.msra.mxu0 0.0
        %5249 = vmatprep.subr.mxu0 0.0
        %5250 = vmatpush1.xpose.msra.mxu0 0.0
        %5251 = vmatprep.subr.mxu0 0.0
        %5252 = vmatpush1.xpose.msra.mxu0 0.0
        %5253 = vmatprep.subr.mxu0 0.0
        %5254 = vmatpush1.xpose.msra.mxu0 0.0
        %5255 = vmatprep.subr.mxu0 0.0
        %5256 = vmatpush1.xpose.msra.mxu0 0.0
        %5257 = vmatprep.subr.mxu0 0.0
        %5258 = vmatpush1.xpose.msra.mxu0 0.0
        %5259 = vmatprep.subr.mxu0 0.0
        %5260 = vmatpush1.xpose.msra.mxu0 0.0
        %5261 = vmatprep.subr.mxu0 0.0
        %5262 = vmatpush1.xpose.msra.mxu0 0.0
        %5263 = vmatprep.subr.mxu0 0.0
        %5264 = vmatpush1.xpose.msra.mxu0 0.0
        %5265 = vmatprep.subr.mxu0 0.0
        %5266 = vmatpush1.xpose.msra.mxu0 0.0
        %5267 = vmatprep.subr.mxu0 0.0
        %5268 = vmatpush1.xpose.msra.mxu0 0.0
        %5269 = vmatprep.subr.mxu0 0.0
        %5270 = vmatpush1.xpose.msra.mxu0 0.0
        %5271 = vmatprep.subr.mxu0 0.0
        %5272 = vmatpush1.xpose.msra.mxu0 0.0
        %5273 = vmatprep.subr.mxu0 0.0
        %5274 = vmatpush1.xpose.msra.mxu0 0.0
        %5275 = vmatprep.subr.mxu0 0.0
        %5276 = vmatpush1.xpose.msra.mxu0 0.0
        %5277 = vmatprep.subr.mxu0 0.0
        %5278 = vmatpush1.xpose.msra.mxu0 0.0
        %5279 = vmatprep.subr.mxu0 0.0
        %5280 = vmatpush1.xpose.msra.mxu0 0.0
        %5281 = vmatprep.subr.mxu0 0.0
        %5282 = vmatpush1.xpose.msra.mxu0 0.0
        %5283 = vmatprep.subr.mxu0 0.0
        %5284 = vmatpush1.xpose.msra.mxu0 0.0
        %5285 = vmatprep.subr.mxu0 0.0
        %5286 = vmatpush1.xpose.msra.mxu0 0.0
        %5287 = vmatprep.subr.mxu0 0.0
        %5288 = vmatpush1.xpose.msra.mxu0 0.0
        %5289 = vmatprep.subr.mxu0 0.0
        %5290 = vmatpush1.xpose.msra.mxu0 0.0
        %5291 = vmatprep.mubr.f32.mxu0 0.0
        %5292 = vmatmul.mubr.f32.gmra.mrb[0].mxu0 %v5222
        %v5293 = vpop.f32.mrb[0].mxu0
        %v5294 = vadd.f32 0.0, %v5293
        %v5295 = vpop.f32.mrb[0].mxu0
        %5296 = vdwg.mxu0
        %5297 = vrot.lane.b32.xlu0 %v5139, 120
        %v5298 = vpop.permute.xlu0 %5297
        %5299 = vrot.lane.b32.xlu0 %v5218, 120
        %v5300 = vpop.permute.xlu0 %5299
        %v5301 = vsel %vm2047, %v5298, 0
        %v5303 = vsel %vm2047, %v5300, 0
        %5305 = vmatprep.subr.mxu0 0.0
        %5306 = vmatpush1.xpose.msra.mxu0 %v5303
        %5307 = vmatprep.subr.mxu0 0.0
        %5308 = vmatpush1.xpose.msra.mxu0 0.0
        %5309 = vmatprep.subr.mxu0 0.0
        %5310 = vmatpush1.xpose.msra.mxu0 0.0
        %5311 = vmatprep.subr.mxu0 0.0
        %5312 = vmatpush1.xpose.msra.mxu0 0.0
        %5313 = vmatprep.subr.mxu0 0.0
        %5314 = vmatpush1.xpose.msra.mxu0 0.0
        %5315 = vmatprep.subr.mxu0 0.0
        %5316 = vmatpush1.xpose.msra.mxu0 0.0
        %5317 = vmatprep.subr.mxu0 0.0
        %5318 = vmatpush1.xpose.msra.mxu0 0.0
        %5319 = vmatprep.subr.mxu0 0.0
        %5320 = vmatpush1.xpose.msra.mxu0 0.0
        %5321 = vmatprep.subr.mxu0 0.0
        %5322 = vmatpush1.xpose.msra.mxu0 0.0
        %5323 = vmatprep.subr.mxu0 0.0
        %5324 = vmatpush1.xpose.msra.mxu0 0.0
        %5325 = vmatprep.subr.mxu0 0.0
        %5326 = vmatpush1.xpose.msra.mxu0 0.0
        %5327 = vmatprep.subr.mxu0 0.0
        %5328 = vmatpush1.xpose.msra.mxu0 0.0
        %5329 = vmatprep.subr.mxu0 0.0
        %5330 = vmatpush1.xpose.msra.mxu0 0.0
        %5331 = vmatprep.subr.mxu0 0.0
        %5332 = vmatpush1.xpose.msra.mxu0 0.0
        %5333 = vmatprep.subr.mxu0 0.0
        %5334 = vmatpush1.xpose.msra.mxu0 0.0
        %5335 = vmatprep.subr.mxu0 0.0
        %5336 = vmatpush1.xpose.msra.mxu0 0.0
        %5337 = vmatprep.subr.mxu0 0.0
        %5338 = vmatpush1.xpose.msra.mxu0 0.0
        %5339 = vmatprep.subr.mxu0 0.0
        %5340 = vmatpush1.xpose.msra.mxu0 0.0
        %5341 = vmatprep.subr.mxu0 0.0
        %5342 = vmatpush1.xpose.msra.mxu0 0.0
        %5343 = vmatprep.subr.mxu0 0.0
        %5344 = vmatpush1.xpose.msra.mxu0 0.0
        %5345 = vmatprep.subr.mxu0 0.0
        %5346 = vmatpush1.xpose.msra.mxu0 0.0
        %5347 = vmatprep.subr.mxu0 0.0
        %5348 = vmatpush1.xpose.msra.mxu0 0.0
        %5349 = vmatprep.subr.mxu0 0.0
        %5350 = vmatpush1.xpose.msra.mxu0 0.0
        %5351 = vmatprep.subr.mxu0 0.0
        %5352 = vmatpush1.xpose.msra.mxu0 0.0
        %5353 = vmatprep.subr.mxu0 0.0
        %5354 = vmatpush1.xpose.msra.mxu0 0.0
        %5355 = vmatprep.subr.mxu0 0.0
        %5356 = vmatpush1.xpose.msra.mxu0 0.0
        %5357 = vmatprep.subr.mxu0 0.0
        %5358 = vmatpush1.xpose.msra.mxu0 0.0
        %5359 = vmatprep.subr.mxu0 0.0
        %5360 = vmatpush1.xpose.msra.mxu0 0.0
        %5361 = vmatprep.subr.mxu0 0.0
        %5362 = vmatpush1.xpose.msra.mxu0 0.0
        %5363 = vmatprep.subr.mxu0 0.0
        %5364 = vmatpush1.xpose.msra.mxu0 0.0
        %5365 = vmatprep.subr.mxu0 0.0
        %5366 = vmatpush1.xpose.msra.mxu0 0.0
        %5367 = vmatprep.subr.mxu0 0.0
        %5368 = vmatpush1.xpose.msra.mxu0 0.0
        %5369 = vmatprep.mubr.f32.mxu0 0.0
        %5370 = vmatmul.mubr.f32.gmra.mrb[0].mxu0 %v5301
        %v5371 = vpop.f32.mrb[0].mxu0
        %v5372 = vadd.f32 0.0, %v5371
        %v5373 = vpop.f32.mrb[0].mxu0
        %5374 = vdwg.mxu0
        %5375 = vrot.lane.b32.xlu0 %v5139, 112
        %v5376 = vpop.permute.xlu0 %5375
        %5377 = vrot.lane.b32.xlu0 %v5218, 112
        %v5378 = vpop.permute.xlu0 %5377
        %v5379 = vsel %vm2047, %v5376, 0
        %v5381 = vsel %vm2047, %v5378, 0
        %5383 = vmatprep.subr.mxu0 0.0
        %5384 = vmatpush1.xpose.msra.mxu0 %v5381
        %5385 = vmatprep.subr.mxu0 0.0
        %5386 = vmatpush1.xpose.msra.mxu0 0.0
        %5387 = vmatprep.subr.mxu0 0.0
        %5388 = vmatpush1.xpose.msra.mxu0 0.0
        %5389 = vmatprep.subr.mxu0 0.0
        %5390 = vmatpush1.xpose.msra.mxu0 0.0
        %5391 = vmatprep.subr.mxu0 0.0
        %5392 = vmatpush1.xpose.msra.mxu0 0.0
        %5393 = vmatprep.subr.mxu0 0.0
        %5394 = vmatpush1.xpose.msra.mxu0 0.0
        %5395 = vmatprep.subr.mxu0 0.0
        %5396 = vmatpush1.xpose.msra.mxu0 0.0
        %5397 = vmatprep.subr.mxu0 0.0
        %5398 = vmatpush1.xpose.msra.mxu0 0.0
        %5399 = vmatprep.subr.mxu0 0.0
        %5400 = vmatpush1.xpose.msra.mxu0 0.0
        %5401 = vmatprep.subr.mxu0 0.0
        %5402 = vmatpush1.xpose.msra.mxu0 0.0
        %5403 = vmatprep.subr.mxu0 0.0
        %5404 = vmatpush1.xpose.msra.mxu0 0.0
        %5405 = vmatprep.subr.mxu0 0.0
        %5406 = vmatpush1.xpose.msra.mxu0 0.0
        %5407 = vmatprep.subr.mxu0 0.0
        %5408 = vmatpush1.xpose.msra.mxu0 0.0
        %5409 = vmatprep.subr.mxu0 0.0
        %5410 = vmatpush1.xpose.msra.mxu0 0.0
        %5411 = vmatprep.subr.mxu0 0.0
        %5412 = vmatpush1.xpose.msra.mxu0 0.0
        %5413 = vmatprep.subr.mxu0 0.0
        %5414 = vmatpush1.xpose.msra.mxu0 0.0
        %5415 = vmatprep.subr.mxu0 0.0
        %5416 = vmatpush1.xpose.msra.mxu0 0.0
        %5417 = vmatprep.subr.mxu0 0.0
        %5418 = vmatpush1.xpose.msra.mxu0 0.0
        %5419 = vmatprep.subr.mxu0 0.0
        %5420 = vmatpush1.xpose.msra.mxu0 0.0
        %5421 = vmatprep.subr.mxu0 0.0
        %5422 = vmatpush1.xpose.msra.mxu0 0.0
        %5423 = vmatprep.subr.mxu0 0.0
        %5424 = vmatpush1.xpose.msra.mxu0 0.0
        %5425 = vmatprep.subr.mxu0 0.0
        %5426 = vmatpush1.xpose.msra.mxu0 0.0
        %5427 = vmatprep.subr.mxu0 0.0
        %5428 = vmatpush1.xpose.msra.mxu0 0.0
        %5429 = vmatprep.subr.mxu0 0.0
        %5430 = vmatpush1.xpose.msra.mxu0 0.0
        %5431 = vmatprep.subr.mxu0 0.0
        %5432 = vmatpush1.xpose.msra.mxu0 0.0
        %5433 = vmatprep.subr.mxu0 0.0
        %5434 = vmatpush1.xpose.msra.mxu0 0.0
        %5435 = vmatprep.subr.mxu0 0.0
        %5436 = vmatpush1.xpose.msra.mxu0 0.0
        %5437 = vmatprep.subr.mxu0 0.0
        %5438 = vmatpush1.xpose.msra.mxu0 0.0
        %5439 = vmatprep.subr.mxu0 0.0
        %5440 = vmatpush1.xpose.msra.mxu0 0.0
        %5441 = vmatprep.subr.mxu0 0.0
        %5442 = vmatpush1.xpose.msra.mxu0 0.0
        %5443 = vmatprep.subr.mxu0 0.0
        %5444 = vmatpush1.xpose.msra.mxu0 0.0
        %5445 = vmatprep.subr.mxu0 0.0
        %5446 = vmatpush1.xpose.msra.mxu0 0.0
        %5447 = vmatprep.mubr.f32.mxu0 0.0
        %5448 = vmatmul.mubr.f32.gmra.mrb[0].mxu0 %v5379
        %v5449 = vpop.f32.mrb[0].mxu0
        %v5450 = vadd.f32 0.0, %v5449
        %v5451 = vpop.f32.mrb[0].mxu0
        %5452 = vdwg.mxu0
        %5453 = vrot.lane.b32.xlu0 %v5139, 104
        %v5454 = vpop.permute.xlu0 %5453
        %5455 = vrot.lane.b32.xlu0 %v5218, 104
        %v5456 = vpop.permute.xlu0 %5455
        %v5457 = vsel %vm2047, %v5454, 0
        %v5459 = vsel %vm2047, %v5456, 0
        %5461 = vmatprep.subr.mxu0 0.0
        %5462 = vmatpush1.xpose.msra.mxu0 %v5459
        %5463 = vmatprep.subr.mxu0 0.0
        %5464 = vmatpush1.xpose.msra.mxu0 0.0
        %5465 = vmatprep.subr.mxu0 0.0
        %5466 = vmatpush1.xpose.msra.mxu0 0.0
        %5467 = vmatprep.subr.mxu0 0.0
        %5468 = vmatpush1.xpose.msra.mxu0 0.0
        %5469 = vmatprep.subr.mxu0 0.0
        %5470 = vmatpush1.xpose.msra.mxu0 0.0
        %5471 = vmatprep.subr.mxu0 0.0
        %5472 = vmatpush1.xpose.msra.mxu0 0.0
        %5473 = vmatprep.subr.mxu0 0.0
        %5474 = vmatpush1.xpose.msra.mxu0 0.0
        %5475 = vmatprep.subr.mxu0 0.0
        %5476 = vmatpush1.xpose.msra.mxu0 0.0
        %5477 = vmatprep.subr.mxu0 0.0
        %5478 = vmatpush1.xpose.msra.mxu0 0.0
        %5479 = vmatprep.subr.mxu0 0.0
        %5480 = vmatpush1.xpose.msra.mxu0 0.0
        %5481 = vmatprep.subr.mxu0 0.0
        %5482 = vmatpush1.xpose.msra.mxu0 0.0
        %5483 = vmatprep.subr.mxu0 0.0
        %5484 = vmatpush1.xpose.msra.mxu0 0.0
        %5485 = vmatprep.subr.mxu0 0.0
        %5486 = vmatpush1.xpose.msra.mxu0 0.0
        %5487 = vmatprep.subr.mxu0 0.0
        %5488 = vmatpush1.xpose.msra.mxu0 0.0
        %5489 = vmatprep.subr.mxu0 0.0
        %5490 = vmatpush1.xpose.msra.mxu0 0.0
        %5491 = vmatprep.subr.mxu0 0.0
        %5492 = vmatpush1.xpose.msra.mxu0 0.0
        %5493 = vmatprep.subr.mxu0 0.0
        %5494 = vmatpush1.xpose.msra.mxu0 0.0
        %5495 = vmatprep.subr.mxu0 0.0
        %5496 = vmatpush1.xpose.msra.mxu0 0.0
        %5497 = vmatprep.subr.mxu0 0.0
        %5498 = vmatpush1.xpose.msra.mxu0 0.0
        %5499 = vmatprep.subr.mxu0 0.0
        %5500 = vmatpush1.xpose.msra.mxu0 0.0
        %5501 = vmatprep.subr.mxu0 0.0
        %5502 = vmatpush1.xpose.msra.mxu0 0.0
        %5503 = vmatprep.subr.mxu0 0.0
        %5504 = vmatpush1.xpose.msra.mxu0 0.0
        %5505 = vmatprep.subr.mxu0 0.0
        %5506 = vmatpush1.xpose.msra.mxu0 0.0
        %5507 = vmatprep.subr.mxu0 0.0
        %5508 = vmatpush1.xpose.msra.mxu0 0.0
        %5509 = vmatprep.subr.mxu0 0.0
        %5510 = vmatpush1.xpose.msra.mxu0 0.0
        %5511 = vmatprep.subr.mxu0 0.0
        %5512 = vmatpush1.xpose.msra.mxu0 0.0
        %5513 = vmatprep.subr.mxu0 0.0
        %5514 = vmatpush1.xpose.msra.mxu0 0.0
        %5515 = vmatprep.subr.mxu0 0.0
        %5516 = vmatpush1.xpose.msra.mxu0 0.0
        %5517 = vmatprep.subr.mxu0 0.0
        %5518 = vmatpush1.xpose.msra.mxu0 0.0
        %5519 = vmatprep.subr.mxu0 0.0
        %5520 = vmatpush1.xpose.msra.mxu0 0.0
        %5521 = vmatprep.subr.mxu0 0.0
        %5522 = vmatpush1.xpose.msra.mxu0 0.0
        %5523 = vmatprep.subr.mxu0 0.0
        %5524 = vmatpush1.xpose.msra.mxu0 0.0
        %5525 = vmatprep.mubr.f32.mxu0 0.0
        %5526 = vmatmul.mubr.f32.gmra.mrb[0].mxu0 %v5457
        %v5527 = vpop.f32.mrb[0].mxu0
        %v5528 = vadd.f32 0.0, %v5527
        %v5529 = vpop.f32.mrb[0].mxu0
        %5530 = vdwg.mxu0
        %v5531 = vmul.f32 %v5294, 0.35355338
        %v5532 = vmul.f32 %v5372, 0.35355338
        %v5533 = vmul.f32 %v5450, 0.35355338
        %v5534 = vmul.f32 %v5528, 0.35355338
        %v5535 = vadd.f32 %v5531, %v2364
        %v5536 = vadd.f32 %v5532, %v2364
        %v5537 = vadd.f32 %v5533, %v2364
        %v5538 = vadd.f32 %v5534, %v2364
        %v5539 = vsel %vm2047, %v5535, -inf
        %5540 = vmax.xlane.f32.xlu0 %v5539
        %v5541 = vpop.xlane.xlu0 %5540
        %v5542 = vsel %vm2047, %v5536, -inf
        %5543 = vmax.xlane.f32.xlu0 %v5542
        %v5544 = vpop.xlane.xlu0 %5543
        %v5545 = vsel %vm2047, %v5537, -inf
        %5546 = vmax.xlane.f32.xlu0 %v5545
        %v5547 = vpop.xlane.xlu0 %5546
        %v5548 = vsel %vm2047, %v5538, -inf
        %5549 = vmax.xlane.f32.xlu0 %v5548
        %v5550 = vpop.xlane.xlu0 %5549
        %v5551 = vsub.f32 %v5535, %v5541
        %v5552 = vsub.f32 %v5536, %v5544
        %v5553 = vsub.f32 %v5537, %v5547
        %v5554 = vsub.f32 %v5538, %v5550
        %v5555 = vmul.f32 %v5551, 1.442695
        %v5556 = vpow.pop %v5555
        %v5557 = vmul.f32 %v5552, 1.442695
        %v5558 = vpow.pop %v5557
        %v5559 = vmul.f32 %v5553, 1.442695
        %v5560 = vpow.pop %v5559
        %v5561 = vmul.f32 %v5554, 1.442695
        %v5562 = vpow.pop %v5561
        %v5563 = vsel %vm2047, %v5556, 0.0
        %5564 = vadd.xlane.f32.xlu0 %v5563
        %v5565 = vpop.xlane.xlu0 %5564
        %v5566 = vsel %vm2047, %v5558, 0.0
        %5567 = vadd.xlane.f32.xlu0 %v5566
        %v5568 = vpop.xlane.xlu0 %5567
        %v5569 = vsel %vm2047, %v5560, 0.0
        %5570 = vadd.xlane.f32.xlu0 %v5569
        %v5571 = vpop.xlane.xlu0 %5570
        %v5572 = vsel %vm2047, %v5562, 0.0
        %5573 = vadd.xlane.f32.xlu0 %v5572
        %v5574 = vpop.xlane.xlu0 %5573
        %v5575 = vrcp.pop %v5565
        %v5576 = vrcp.pop %v5568
        %v5577 = vrcp.pop %v5571
        %v5578 = vrcp.pop %v5574
        %v5579 = vmul.f32 %v5556, %v5575
        %v5580 = vmul.f32 %v5558, %v5576
        %v5581 = vmul.f32 %v5560, %v5577
        %v5582 = vmul.f32 %v5562, %v5578
        %5583 = vrot.lane.b32.xlu0 %v5218, 96
        %v5584 = vpop.permute.xlu0 %5583
        %v5587 = vsel %vm2047, %v5579, 0
        %5589 = vmatprep.subr.mxu0 0.0
        %5590 = vmatpush1.msra.mxu0 %v5584
        %5591 = vmatprep.subr.mxu0 0.0
        %5592 = vmatpush1.msra.mxu0 0.0
        %5593 = vmatprep.subr.mxu0 0.0
        %5594 = vmatpush1.msra.mxu0 0.0
        %5595 = vmatprep.subr.mxu0 0.0
        %5596 = vmatpush1.msra.mxu0 0.0
        %5597 = vmatprep.subr.mxu0 0.0
        %5598 = vmatpush1.msra.mxu0 0.0
        %5599 = vmatprep.subr.mxu0 0.0
        %5600 = vmatpush1.msra.mxu0 0.0
        %5601 = vmatprep.subr.mxu0 0.0
        %5602 = vmatpush1.msra.mxu0 0.0
        %5603 = vmatprep.subr.mxu0 0.0
        %5604 = vmatpush1.msra.mxu0 0.0
        %5605 = vmatprep.subr.mxu0 0.0
        %5606 = vmatpush1.msra.mxu0 0.0
        %5607 = vmatprep.subr.mxu0 0.0
        %5608 = vmatpush1.msra.mxu0 0.0
        %5609 = vmatprep.subr.mxu0 0.0
        %5610 = vmatpush1.msra.mxu0 0.0
        %5611 = vmatprep.subr.mxu0 0.0
        %5612 = vmatpush1.msra.mxu0 0.0
        %5613 = vmatprep.subr.mxu0 0.0
        %5614 = vmatpush1.msra.mxu0 0.0
        %5615 = vmatprep.subr.mxu0 0.0
        %5616 = vmatpush1.msra.mxu0 0.0
        %5617 = vmatprep.subr.mxu0 0.0
        %5618 = vmatpush1.msra.mxu0 0.0
        %5619 = vmatprep.subr.mxu0 0.0
        %5620 = vmatpush1.msra.mxu0 0.0
        %5621 = vmatprep.subr.mxu0 0.0
        %5622 = vmatpush1.msra.mxu0 0.0
        %5623 = vmatprep.subr.mxu0 0.0
        %5624 = vmatpush1.msra.mxu0 0.0
        %5625 = vmatprep.subr.mxu0 0.0
        %5626 = vmatpush1.msra.mxu0 0.0
        %5627 = vmatprep.subr.mxu0 0.0
        %5628 = vmatpush1.msra.mxu0 0.0
        %5629 = vmatprep.subr.mxu0 0.0
        %5630 = vmatpush1.msra.mxu0 0.0
        %5631 = vmatprep.subr.mxu0 0.0
        %5632 = vmatpush1.msra.mxu0 0.0
        %5633 = vmatprep.subr.mxu0 0.0
        %5634 = vmatpush1.msra.mxu0 0.0
        %5635 = vmatprep.subr.mxu0 0.0
        %5636 = vmatpush1.msra.mxu0 0.0
        %5637 = vmatprep.subr.mxu0 0.0
        %5638 = vmatpush1.msra.mxu0 0.0
        %5639 = vmatprep.subr.mxu0 0.0
        %5640 = vmatpush1.msra.mxu0 0.0
        %5641 = vmatprep.subr.mxu0 0.0
        %5642 = vmatpush1.msra.mxu0 0.0
        %5643 = vmatprep.subr.mxu0 0.0
        %5644 = vmatpush1.msra.mxu0 0.0
        %5645 = vmatprep.subr.mxu0 0.0
        %5646 = vmatpush1.msra.mxu0 0.0
        %5647 = vmatprep.subr.mxu0 0.0
        %5648 = vmatpush1.msra.mxu0 0.0
        %5649 = vmatprep.subr.mxu0 0.0
        %5650 = vmatpush1.msra.mxu0 0.0
        %5651 = vmatprep.subr.mxu0 0.0
        %5652 = vmatpush1.msra.mxu0 0.0
        %5653 = vmatprep.mubr.f32.mxu0 0.0
        %5654 = vmatmul.mubr.f32.gmra.mrb[0].mxu0 %v5587
        %v5655 = vpop.f32.mrb[0].mxu0
        %v5656 = vadd.f32 0.0, %v5655
        %v5657 = vpop.f32.mrb[0].mxu0
        %5658 = vdwg.mxu0
        %5659 = vrot.lane.b32.xlu0 %v5218, 88
        %v5660 = vpop.permute.xlu0 %5659
        %v5663 = vsel %vm2047, %v5580, 0
        %5665 = vmatprep.subr.mxu0 0.0
        %5666 = vmatpush1.msra.mxu0 %v5660
        %5667 = vmatprep.subr.mxu0 0.0
        %5668 = vmatpush1.msra.mxu0 0.0
        %5669 = vmatprep.subr.mxu0 0.0
        %5670 = vmatpush1.msra.mxu0 0.0
        %5671 = vmatprep.subr.mxu0 0.0
        %5672 = vmatpush1.msra.mxu0 0.0
        %5673 = vmatprep.subr.mxu0 0.0
        %5674 = vmatpush1.msra.mxu0 0.0
        %5675 = vmatprep.subr.mxu0 0.0
        %5676 = vmatpush1.msra.mxu0 0.0
        %5677 = vmatprep.subr.mxu0 0.0
        %5678 = vmatpush1.msra.mxu0 0.0
        %5679 = vmatprep.subr.mxu0 0.0
        %5680 = vmatpush1.msra.mxu0 0.0
        %5681 = vmatprep.subr.mxu0 0.0
        %5682 = vmatpush1.msra.mxu0 0.0
        %5683 = vmatprep.subr.mxu0 0.0
        %5684 = vmatpush1.msra.mxu0 0.0
        %5685 = vmatprep.subr.mxu0 0.0
        %5686 = vmatpush1.msra.mxu0 0.0
        %5687 = vmatprep.subr.mxu0 0.0
        %5688 = vmatpush1.msra.mxu0 0.0
        %5689 = vmatprep.subr.mxu0 0.0
        %5690 = vmatpush1.msra.mxu0 0.0
        %5691 = vmatprep.subr.mxu0 0.0
        %5692 = vmatpush1.msra.mxu0 0.0
        %5693 = vmatprep.subr.mxu0 0.0
        %5694 = vmatpush1.msra.mxu0 0.0
        %5695 = vmatprep.subr.mxu0 0.0
        %5696 = vmatpush1.msra.mxu0 0.0
        %5697 = vmatprep.subr.mxu0 0.0
        %5698 = vmatpush1.msra.mxu0 0.0
        %5699 = vmatprep.subr.mxu0 0.0
        %5700 = vmatpush1.msra.mxu0 0.0
        %5701 = vmatprep.subr.mxu0 0.0
        %5702 = vmatpush1.msra.mxu0 0.0
        %5703 = vmatprep.subr.mxu0 0.0
        %5704 = vmatpush1.msra.mxu0 0.0
        %5705 = vmatprep.subr.mxu0 0.0
        %5706 = vmatpush1.msra.mxu0 0.0
        %5707 = vmatprep.subr.mxu0 0.0
        %5708 = vmatpush1.msra.mxu0 0.0
        %5709 = vmatprep.subr.mxu0 0.0
        %5710 = vmatpush1.msra.mxu0 0.0
        %5711 = vmatprep.subr.mxu0 0.0
        %5712 = vmatpush1.msra.mxu0 0.0
        %5713 = vmatprep.subr.mxu0 0.0
        %5714 = vmatpush1.msra.mxu0 0.0
        %5715 = vmatprep.subr.mxu0 0.0
        %5716 = vmatpush1.msra.mxu0 0.0
        %5717 = vmatprep.subr.mxu0 0.0
        %5718 = vmatpush1.msra.mxu0 0.0
        %5719 = vmatprep.subr.mxu0 0.0
        %5720 = vmatpush1.msra.mxu0 0.0
        %5721 = vmatprep.subr.mxu0 0.0
        %5722 = vmatpush1.msra.mxu0 0.0
        %5723 = vmatprep.subr.mxu0 0.0
        %5724 = vmatpush1.msra.mxu0 0.0
        %5725 = vmatprep.subr.mxu0 0.0
        %5726 = vmatpush1.msra.mxu0 0.0
        %5727 = vmatprep.subr.mxu0 0.0
        %5728 = vmatpush1.msra.mxu0 0.0
        %5729 = vmatprep.mubr.f32.mxu0 0.0
        %5730 = vmatmul.mubr.f32.gmra.mrb[0].mxu0 %v5663
        %v5731 = vpop.f32.mrb[0].mxu0
        %v5732 = vadd.f32 0.0, %v5731
        %v5733 = vpop.f32.mrb[0].mxu0
        %5734 = vdwg.mxu0
        %5735 = vrot.lane.b32.xlu0 %v5218, 80
        %v5736 = vpop.permute.xlu0 %5735
        %v5739 = vsel %vm2047, %v5581, 0
        %5741 = vmatprep.subr.mxu0 0.0
        %5742 = vmatpush1.msra.mxu0 %v5736
        %5743 = vmatprep.subr.mxu0 0.0
        %5744 = vmatpush1.msra.mxu0 0.0
        %5745 = vmatprep.subr.mxu0 0.0
        %5746 = vmatpush1.msra.mxu0 0.0
        %5747 = vmatprep.subr.mxu0 0.0
        %5748 = vmatpush1.msra.mxu0 0.0
        %5749 = vmatprep.subr.mxu0 0.0
        %5750 = vmatpush1.msra.mxu0 0.0
        %5751 = vmatprep.subr.mxu0 0.0
        %5752 = vmatpush1.msra.mxu0 0.0
        %5753 = vmatprep.subr.mxu0 0.0
        %5754 = vmatpush1.msra.mxu0 0.0
        %5755 = vmatprep.subr.mxu0 0.0
        %5756 = vmatpush1.msra.mxu0 0.0
        %5757 = vmatprep.subr.mxu0 0.0
        %5758 = vmatpush1.msra.mxu0 0.0
        %5759 = vmatprep.subr.mxu0 0.0
        %5760 = vmatpush1.msra.mxu0 0.0
        %5761 = vmatprep.subr.mxu0 0.0
        %5762 = vmatpush1.msra.mxu0 0.0
        %5763 = vmatprep.subr.mxu0 0.0
        %5764 = vmatpush1.msra.mxu0 0.0
        %5765 = vmatprep.subr.mxu0 0.0
        %5766 = vmatpush1.msra.mxu0 0.0
        %5767 = vmatprep.subr.mxu0 0.0
        %5768 = vmatpush1.msra.mxu0 0.0
        %5769 = vmatprep.subr.mxu0 0.0
        %5770 = vmatpush1.msra.mxu0 0.0
        %5771 = vmatprep.subr.mxu0 0.0
        %5772 = vmatpush1.msra.mxu0 0.0
        %5773 = vmatprep.subr.mxu0 0.0
        %5774 = vmatpush1.msra.mxu0 0.0
        %5775 = vmatprep.subr.mxu0 0.0
        %5776 = vmatpush1.msra.mxu0 0.0
        %5777 = vmatprep.subr.mxu0 0.0
        %5778 = vmatpush1.msra.mxu0 0.0
        %5779 = vmatprep.subr.mxu0 0.0
        %5780 = vmatpush1.msra.mxu0 0.0
        %5781 = vmatprep.subr.mxu0 0.0
        %5782 = vmatpush1.msra.mxu0 0.0
        %5783 = vmatprep.subr.mxu0 0.0
        %5784 = vmatpush1.msra.mxu0 0.0
        %5785 = vmatprep.subr.mxu0 0.0
        %5786 = vmatpush1.msra.mxu0 0.0
        %5787 = vmatprep.subr.mxu0 0.0
        %5788 = vmatpush1.msra.mxu0 0.0
        %5789 = vmatprep.subr.mxu0 0.0
        %5790 = vmatpush1.msra.mxu0 0.0
        %5791 = vmatprep.subr.mxu0 0.0
        %5792 = vmatpush1.msra.mxu0 0.0
        %5793 = vmatprep.subr.mxu0 0.0
        %5794 = vmatpush1.msra.mxu0 0.0
        %5795 = vmatprep.subr.mxu0 0.0
        %5796 = vmatpush1.msra.mxu0 0.0
        %5797 = vmatprep.subr.mxu0 0.0
        %5798 = vmatpush1.msra.mxu0 0.0
        %5799 = vmatprep.subr.mxu0 0.0
        %5800 = vmatpush1.msra.mxu0 0.0
        %5801 = vmatprep.subr.mxu0 0.0
        %5802 = vmatpush1.msra.mxu0 0.0
        %5803 = vmatprep.subr.mxu0 0.0
        %5804 = vmatpush1.msra.mxu0 0.0
        %5805 = vmatprep.mubr.f32.mxu0 0.0
        %5806 = vmatmul.mubr.f32.gmra.mrb[0].mxu0 %v5739
        %v5807 = vpop.f32.mrb[0].mxu0
        %v5808 = vadd.f32 0.0, %v5807
        %v5809 = vpop.f32.mrb[0].mxu0
        %5810 = vdwg.mxu0
        %5811 = vrot.lane.b32.xlu0 %v5218, 72
        %v5812 = vpop.permute.xlu0 %5811
        %v5815 = vsel %vm2047, %v5582, 0
        %5817 = vmatprep.subr.mxu0 0.0
        %5818 = vmatpush1.msra.mxu0 %v5812
        %5819 = vmatprep.subr.mxu0 0.0
        %5820 = vmatpush1.msra.mxu0 0.0
        %5821 = vmatprep.subr.mxu0 0.0
        %5822 = vmatpush1.msra.mxu0 0.0
        %5823 = vmatprep.subr.mxu0 0.0
        %5824 = vmatpush1.msra.mxu0 0.0
        %5825 = vmatprep.subr.mxu0 0.0
        %5826 = vmatpush1.msra.mxu0 0.0
        %5827 = vmatprep.subr.mxu0 0.0
        %5828 = vmatpush1.msra.mxu0 0.0
        %5829 = vmatprep.subr.mxu0 0.0
        %5830 = vmatpush1.msra.mxu0 0.0
        %5831 = vmatprep.subr.mxu0 0.0
        %5832 = vmatpush1.msra.mxu0 0.0
        %5833 = vmatprep.subr.mxu0 0.0
        %5834 = vmatpush1.msra.mxu0 0.0
        %5835 = vmatprep.subr.mxu0 0.0
        %5836 = vmatpush1.msra.mxu0 0.0
        %5837 = vmatprep.subr.mxu0 0.0
        %5838 = vmatpush1.msra.mxu0 0.0
        %5839 = vmatprep.subr.mxu0 0.0
        %5840 = vmatpush1.msra.mxu0 0.0
        %5841 = vmatprep.subr.mxu0 0.0
        %5842 = vmatpush1.msra.mxu0 0.0
        %5843 = vmatprep.subr.mxu0 0.0
        %5844 = vmatpush1.msra.mxu0 0.0
        %5845 = vmatprep.subr.mxu0 0.0
        %5846 = vmatpush1.msra.mxu0 0.0
        %5847 = vmatprep.subr.mxu0 0.0
        %5848 = vmatpush1.msra.mxu0 0.0
        %5849 = vmatprep.subr.mxu0 0.0
        %5850 = vmatpush1.msra.mxu0 0.0
        %5851 = vmatprep.subr.mxu0 0.0
        %5852 = vmatpush1.msra.mxu0 0.0
        %5853 = vmatprep.subr.mxu0 0.0
        %5854 = vmatpush1.msra.mxu0 0.0
        %5855 = vmatprep.subr.mxu0 0.0
        %5856 = vmatpush1.msra.mxu0 0.0
        %5857 = vmatprep.subr.mxu0 0.0
        %5858 = vmatpush1.msra.mxu0 0.0
        %5859 = vmatprep.subr.mxu0 0.0
        %5860 = vmatpush1.msra.mxu0 0.0
        %5861 = vmatprep.subr.mxu0 0.0
        %5862 = vmatpush1.msra.mxu0 0.0
        %5863 = vmatprep.subr.mxu0 0.0
        %5864 = vmatpush1.msra.mxu0 0.0
        %5865 = vmatprep.subr.mxu0 0.0
        %5866 = vmatpush1.msra.mxu0 0.0
        %5867 = vmatprep.subr.mxu0 0.0
        %5868 = vmatpush1.msra.mxu0 0.0
        %5869 = vmatprep.subr.mxu0 0.0
        %5870 = vmatpush1.msra.mxu0 0.0
        %5871 = vmatprep.subr.mxu0 0.0
        %5872 = vmatpush1.msra.mxu0 0.0
        %5873 = vmatprep.subr.mxu0 0.0
        %5874 = vmatpush1.msra.mxu0 0.0
        %5875 = vmatprep.subr.mxu0 0.0
        %5876 = vmatpush1.msra.mxu0 0.0
        %5877 = vmatprep.subr.mxu0 0.0
        %5878 = vmatpush1.msra.mxu0 0.0
        %5879 = vmatprep.subr.mxu0 0.0
        %5880 = vmatpush1.msra.mxu0 0.0
        %5881 = vmatprep.mubr.f32.mxu0 0.0
        %5882 = vmatmul.mubr.f32.gmra.mrb[0].mxu0 %v5815
        %v5883 = vpop.f32.mrb[0].mxu0
        %v5884 = vadd.f32 0.0, %v5883
        %v5885 = vpop.f32.mrb[0].mxu0
        %5886 = vdwg.mxu0
        %5888 = vrot.lane.b32.xlu0 %v5732, 8
        %v5889 = vpop.permute.xlu0 %5888
        %5892 = vrot.lane.b32.xlu0 %v5808, 16
        %v5893 = vpop.permute.xlu0 %5892
        %5896 = vrot.lane.b32.xlu0 %v5884, 24
        %v5897 = vpop.permute.xlu0 %5896
        %v5899 = vsel %vm2047, %v5656, %v5889
        %v5900 = vsel %vm2731, %v5899, %v5893
        %v5901 = vsel %vm2733, %v5900, %v5897
        %v5903 = vlaneseq
        %v5904 = vshrl.u32 %v5903, 7
        %v5905 = vsub.s32 0, %v5904
        %v5906 = vrot.slane %v5060, %v5905
        %v5909 = vsel %vm1970, %v5901, 0
        %5911 = vmatprep.subr.mxu0 0.0
        %5912 = vmatpush1.msra.mxu0 %v5056
        %5913 = vmatprep.subr.mxu0 0.0
        %5914 = vmatpush1.msra.mxu0 %v5057
        %5915 = vmatprep.subr.mxu0 0.0
        %5916 = vmatpush1.msra.mxu0 %v5058
        %5917 = vmatprep.subr.mxu0 0.0
        %5918 = vmatpush1.msra.mxu0 %v5059
        %5919 = vmatprep.subr.mxu0 0.0
        %5920 = vmatpush1.msra.mxu0 0.0
        %5921 = vmatprep.subr.mxu0 0.0
        %5922 = vmatpush1.msra.mxu0 0.0
        %5923 = vmatprep.subr.mxu0 0.0
        %5924 = vmatpush1.msra.mxu0 0.0
        %5925 = vmatprep.subr.mxu0 0.0
        %5926 = vmatpush1.msra.mxu0 0.0
        %5927 = vmatprep.subr.mxu0 0.0
        %5928 = vmatpush1.msra.mxu0 0.0
        %5929 = vmatprep.subr.mxu0 0.0
        %5930 = vmatpush1.msra.mxu0 0.0
        %5931 = vmatprep.subr.mxu0 0.0
        %5932 = vmatpush1.msra.mxu0 0.0
        %5933 = vmatprep.subr.mxu0 0.0
        %5934 = vmatpush1.msra.mxu0 0.0
        %5935 = vmatprep.subr.mxu0 0.0
        %5936 = vmatpush1.msra.mxu0 0.0
        %5937 = vmatprep.subr.mxu0 0.0
        %5938 = vmatpush1.msra.mxu0 0.0
        %5939 = vmatprep.subr.mxu0 0.0
        %5940 = vmatpush1.msra.mxu0 0.0
        %5941 = vmatprep.subr.mxu0 0.0
        %5942 = vmatpush1.msra.mxu0 0.0
        %5943 = vmatprep.subr.mxu0 0.0
        %5944 = vmatpush1.msra.mxu0 0.0
        %5945 = vmatprep.subr.mxu0 0.0
        %5946 = vmatpush1.msra.mxu0 0.0
        %5947 = vmatprep.subr.mxu0 0.0
        %5948 = vmatpush1.msra.mxu0 0.0
        %5949 = vmatprep.subr.mxu0 0.0
        %5950 = vmatpush1.msra.mxu0 0.0
        %5951 = vmatprep.subr.mxu0 0.0
        %5952 = vmatpush1.msra.mxu0 0.0
        %5953 = vmatprep.subr.mxu0 0.0
        %5954 = vmatpush1.msra.mxu0 0.0
        %5955 = vmatprep.subr.mxu0 0.0
        %5956 = vmatpush1.msra.mxu0 0.0
        %5957 = vmatprep.subr.mxu0 0.0
        %5958 = vmatpush1.msra.mxu0 0.0
        %5959 = vmatprep.subr.mxu0 0.0
        %5960 = vmatpush1.msra.mxu0 0.0
        %5961 = vmatprep.subr.mxu0 0.0
        %5962 = vmatpush1.msra.mxu0 0.0
        %5963 = vmatprep.subr.mxu0 0.0
        %5964 = vmatpush1.msra.mxu0 0.0
        %5965 = vmatprep.subr.mxu0 0.0
        %5966 = vmatpush1.msra.mxu0 0.0
        %5967 = vmatprep.subr.mxu0 0.0
        %5968 = vmatpush1.msra.mxu0 0.0
        %5969 = vmatprep.subr.mxu0 0.0
        %5970 = vmatpush1.msra.mxu0 0.0
        %5971 = vmatprep.subr.mxu0 0.0
        %5972 = vmatpush1.msra.mxu0 0.0
        %5973 = vmatprep.subr.mxu0 0.0
        %5974 = vmatpush1.msra.mxu0 0.0
        %5975 = vmatprep.mubr.f32.mxu0 0.0
        %5976 = vmatmul.mubr.f32.gmra.mrb[0].mxu0 %v5909
        %v5977 = vpop.f32.mrb[0].mxu0
        %v5978 = vadd.f32 %v5906, %v5977
        %v5979 = vpop.f32.mrb[0].mxu0
        %5980 = vdwg.mxu0
        %v5981 = vadd.f32 %v5978, %v5045
        %v5982 = vsel %vm1970, %v5981, 0.0
        %5983 = vadd.xlane.f32.xlu0 %v5982
        %v5984 = vpop.xlane.xlu0 %5983
        %v5985 = vmul.f32 %v5984, %v2818
        %v5986 = vmul.f32 %v5981, %v5981
        %v5987 = vsel %vm1970, %v5986, 0.0
        %5988 = vadd.xlane.f32.xlu0 %v5987
        %v5989 = vpop.xlane.xlu0 %5988
        %v5990 = vmul.f32 %v5989, %v2818
        %v5991 = vmul.f32 %v5985, %v5985
        %v5992 = vsub.f32 %v5990, %v5991
        %v5993 = vsub.f32 %v5981, %v5985
        %v5994 = vadd.f32 %v5992, 1e-05
        %v5995 = vrsqrt.pop %v5994
        %v5996 = vmul.f32 %v5993, %v5995
        %v5998 = vlaneseq
        %v5999 = vshrl.u32 %v5998, 7
        %v6000 = vsub.s32 0, %v5999
        %v6001 = vrot.slane %v5061, %v6000
        %v6003 = vmul.f32 %v5996, %v6001
        %v6005 = vlaneseq
        %v6006 = vshrl.u32 %v6005, 7
        %v6007 = vsub.s32 0, %v6006
        %v6008 = vrot.slane %v5062, %v6007
        %v6010 = vadd.f32 %v6003, %v6008
        %v6011 = vmul.f32 %v6010, %v5043
        %v6012 = vld [vmem:[%s71] sm:$0xff]
        %v6013 = vld [vmem:[%s71 + $0x8] sm:$0xff]
        %v6014 = vld [vmem:[%s71 + $0x10] sm:$0xff]
        %v6015 = vld [vmem:[%s71 + $0x18] sm:$0xff]
        %v6016 = vld [vmem:[%s73] sm:$0x1]
        %v6017 = vld [vmem:[%s75] sm:$0xff]
        %v6018 = vld [vmem:[%s75 + $0x8] sm:$0xff]
        %v6019 = vld [vmem:[%s75 + $0x10] sm:$0xff]
        %v6020 = vld [vmem:[%s75 + $0x18] sm:$0xff]
        %v6021 = vld [vmem:[%s75 + $0x20] sm:$0xff]
        %v6022 = vld [vmem:[%s75 + $0x28] sm:$0xff]
        %v6023 = vld [vmem:[%s75 + $0x30] sm:$0xff]
        %v6024 = vld [vmem:[%s75 + $0x38] sm:$0xff]
        %v6025 = vld [vmem:[#allocation22] sm:$0x1]
        %v6026 = vld [vmem:[%s79] sm:$0x1]
        %v6027 = vld [vmem:[#allocation24] sm:$0x1]
        %v6029 = vlaneseq
        %v6030 = vshrl.u32 %v6029, 7
        %v6031 = vsub.s32 0, %v6030
        %v6032 = vrot.slane %v6016, %v6031
        %v6035 = vsel %vm1970, %v6011, 0
        %6037 = vmatprep.subr.mxu0 0.0
        %6038 = vmatpush1.msra.mxu0 %v6012
        %6039 = vmatprep.subr.mxu0 0.0
        %6040 = vmatpush1.msra.mxu0 %v6013
        %6041 = vmatprep.subr.mxu0 0.0
        %6042 = vmatpush1.msra.mxu0 %v6014
        %6043 = vmatprep.subr.mxu0 0.0
        %6044 = vmatpush1.msra.mxu0 %v6015
        %6045 = vmatprep.subr.mxu0 0.0
        %6046 = vmatpush1.msra.mxu0 0.0
        %6047 = vmatprep.subr.mxu0 0.0
        %6048 = vmatpush1.msra.mxu0 0.0
        %6049 = vmatprep.subr.mxu0 0.0
        %6050 = vmatpush1.msra.mxu0 0.0
        %6051 = vmatprep.subr.mxu0 0.0
        %6052 = vmatpush1.msra.mxu0 0.0
        %6053 = vmatprep.subr.mxu0 0.0
        %6054 = vmatpush1.msra.mxu0 0.0
        %6055 = vmatprep.subr.mxu0 0.0
        %6056 = vmatpush1.msra.mxu0 0.0
        %6057 = vmatprep.subr.mxu0 0.0
        %6058 = vmatpush1.msra.mxu0 0.0
        %6059 = vmatprep.subr.mxu0 0.0
        %6060 = vmatpush1.msra.mxu0 0.0
        %6061 = vmatprep.subr.mxu0 0.0
        %6062 = vmatpush1.msra.mxu0 0.0
        %6063 = vmatprep.subr.mxu0 0.0
        %6064 = vmatpush1.msra.mxu0 0.0
        %6065 = vmatprep.subr.mxu0 0.0
        %6066 = vmatpush1.msra.mxu0 0.0
        %6067 = vmatprep.subr.mxu0 0.0
        %6068 = vmatpush1.msra.mxu0 0.0
        %6069 = vmatprep.subr.mxu0 0.0
        %6070 = vmatpush1.msra.mxu0 0.0
        %6071 = vmatprep.subr.mxu0 0.0
        %6072 = vmatpush1.msra.mxu0 0.0
        %6073 = vmatprep.subr.mxu0 0.0
        %6074 = vmatpush1.msra.mxu0 0.0
        %6075 = vmatprep.subr.mxu0 0.0
        %6076 = vmatpush1.msra.mxu0 0.0
        %6077 = vmatprep.subr.mxu0 0.0
        %6078 = vmatpush1.msra.mxu0 0.0
        %6079 = vmatprep.subr.mxu0 0.0
        %6080 = vmatpush1.msra.mxu0 0.0
        %6081 = vmatprep.subr.mxu0 0.0
        %6082 = vmatpush1.msra.mxu0 0.0
        %6083 = vmatprep.subr.mxu0 0.0
        %6084 = vmatpush1.msra.mxu0 0.0
        %6085 = vmatprep.subr.mxu0 0.0
        %6086 = vmatpush1.msra.mxu0 0.0
        %6087 = vmatprep.subr.mxu0 0.0
        %6088 = vmatpush1.msra.mxu0 0.0
        %6089 = vmatprep.subr.mxu0 0.0
        %6090 = vmatpush1.msra.mxu0 0.0
        %6091 = vmatprep.subr.mxu0 0.0
        %6092 = vmatpush1.msra.mxu0 0.0
        %6093 = vmatprep.subr.mxu0 0.0
        %6094 = vmatpush1.msra.mxu0 0.0
        %6095 = vmatprep.subr.mxu0 0.0
        %6096 = vmatpush1.msra.mxu0 0.0
        %6097 = vmatprep.subr.mxu0 0.0
        %6098 = vmatpush1.msra.mxu0 0.0
        %6099 = vmatprep.subr.mxu0 0.0
        %6100 = vmatpush1.msra.mxu0 0.0
        %6101 = vmatprep.mubr.f32.mxu0 0.0
        %6102 = vmatmul.mubr.f32.gmra.mrb[0].mxu0 %v6035
        %v6103 = vpop.f32.mrb[0].mxu0
        %v6104 = vadd.f32 %v6032, %v6103
        %v6105 = vpop.f32.mrb[0].mxu0
        %6106 = vdwg.mxu0
        %v6107 = vmax.f32 %v6104, 0.0
        %v6109 = vlaneseq
        %v6110 = vshrl.u32 %v6109, 7
        %v6111 = vsub.s32 0, %v6110
        %v6112 = vrot.slane %v6025, %v6111
        %v6115 = vsel %vm1619, %v6107, 0
        %6117 = vmatprep.subr.mxu0 0.0
        %6118 = vmatpush1.msra.mxu0 %v6017
        %6119 = vmatprep.subr.mxu0 0.0
        %6120 = vmatpush1.msra.mxu0 %v6018
        %6121 = vmatprep.subr.mxu0 0.0
        %6122 = vmatpush1.msra.mxu0 %v6019
        %6123 = vmatprep.subr.mxu0 0.0
        %6124 = vmatpush1.msra.mxu0 %v6020
        %6125 = vmatprep.subr.mxu0 0.0
        %6126 = vmatpush1.msra.mxu0 %v6021
        %6127 = vmatprep.subr.mxu0 0.0
        %6128 = vmatpush1.msra.mxu0 %v6022
        %6129 = vmatprep.subr.mxu0 0.0
        %6130 = vmatpush1.msra.mxu0 %v6023
        %6131 = vmatprep.subr.mxu0 0.0
        %6132 = vmatpush1.msra.mxu0 %v6024
        %6133 = vmatprep.subr.mxu0 0.0
        %6134 = vmatpush1.msra.mxu0 0.0
        %6135 = vmatprep.subr.mxu0 0.0
        %6136 = vmatpush1.msra.mxu0 0.0
        %6137 = vmatprep.subr.mxu0 0.0
        %6138 = vmatpush1.msra.mxu0 0.0
        %6139 = vmatprep.subr.mxu0 0.0
        %6140 = vmatpush1.msra.mxu0 0.0
        %6141 = vmatprep.subr.mxu0 0.0
        %6142 = vmatpush1.msra.mxu0 0.0
        %6143 = vmatprep.subr.mxu0 0.0
        %6144 = vmatpush1.msra.mxu0 0.0
        %6145 = vmatprep.subr.mxu0 0.0
        %6146 = vmatpush1.msra.mxu0 0.0
        %6147 = vmatprep.subr.mxu0 0.0
        %6148 = vmatpush1.msra.mxu0 0.0
        %6149 = vmatprep.subr.mxu0 0.0
        %6150 = vmatpush1.msra.mxu0 0.0
        %6151 = vmatprep.subr.mxu0 0.0
        %6152 = vmatpush1.msra.mxu0 0.0
        %6153 = vmatprep.subr.mxu0 0.0
        %6154 = vmatpush1.msra.mxu0 0.0
        %6155 = vmatprep.subr.mxu0 0.0
        %6156 = vmatpush1.msra.mxu0 0.0
        %6157 = vmatprep.subr.mxu0 0.0
        %6158 = vmatpush1.msra.mxu0 0.0
        %6159 = vmatprep.subr.mxu0 0.0
        %6160 = vmatpush1.msra.mxu0 0.0
        %6161 = vmatprep.subr.mxu0 0.0
        %6162 = vmatpush1.msra.mxu0 0.0
        %6163 = vmatprep.subr.mxu0 0.0
        %6164 = vmatpush1.msra.mxu0 0.0
        %6165 = vmatprep.subr.mxu0 0.0
        %6166 = vmatpush1.msra.mxu0 0.0
        %6167 = vmatprep.subr.mxu0 0.0
        %6168 = vmatpush1.msra.mxu0 0.0
        %6169 = vmatprep.subr.mxu0 0.0
        %6170 = vmatpush1.msra.mxu0 0.0
        %6171 = vmatprep.subr.mxu0 0.0
        %6172 = vmatpush1.msra.mxu0 0.0
        %6173 = vmatprep.subr.mxu0 0.0
        %6174 = vmatpush1.msra.mxu0 0.0
        %6175 = vmatprep.subr.mxu0 0.0
        %6176 = vmatpush1.msra.mxu0 0.0
        %6177 = vmatprep.subr.mxu0 0.0
        %6178 = vmatpush1.msra.mxu0 0.0
        %6179 = vmatprep.subr.mxu0 0.0
        %6180 = vmatpush1.msra.mxu0 0.0
        %6181 = vmatprep.mubr.f32.mxu0 0.0
        %6182 = vmatmul.mubr.f32.gmra.mrb[0].mxu0 %v6115
        %v6183 = vpop.f32.mrb[0].mxu0
        %v6184 = vadd.f32 %v6112, %v6183
        %v6185 = vpop.f32.mrb[0].mxu0
        %6186 = vdwg.mxu0
        %v6187 = vadd.f32 %v6184, %v6011
        %v6188 = vsel %vm1970, %v6187, 0.0
        %6189 = vadd.xlane.f32.xlu0 %v6188
        %v6190 = vpop.xlane.xlu0 %6189
        %v6191 = vmul.f32 %v6190, %v2818
        %v6192 = vmul.f32 %v6187, %v6187
        %v6193 = vsel %vm1970, %v6192, 0.0
        %6194 = vadd.xlane.f32.xlu0 %v6193
        %v6195 = vpop.xlane.xlu0 %6194
        %v6196 = vmul.f32 %v6195, %v2818
        %v6197 = vmul.f32 %v6191, %v6191
        %v6198 = vsub.f32 %v6196, %v6197
        %v6199 = vsub.f32 %v6187, %v6191
        %v6200 = vadd.f32 %v6198, 1e-05
        %v6201 = vrsqrt.pop %v6200
        %v6202 = vmul.f32 %v6199, %v6201
        %v6204 = vlaneseq
        %v6205 = vshrl.u32 %v6204, 7
        %v6206 = vsub.s32 0, %v6205
        %v6207 = vrot.slane %v6026, %v6206
        %v6209 = vmul.f32 %v6202, %v6207
        %v6211 = vlaneseq
        %v6212 = vshrl.u32 %v6211, 7
        %v6213 = vsub.s32 0, %v6212
        %v6214 = vrot.slane %v6027, %v6213
        %v6216 = vadd.f32 %v6209, %v6214
        %v6217 = vmul.f32 %v6216, %v5043
        %s6218 = scalar_lea.vmem %s43, 32
        %v6219 = vld [vmem:[%s6218] sm:$0xff]
        %v6220 = vld [vmem:[%s6218 + $0x8] sm:$0xff]
        %v6221 = vld [vmem:[%s6218 + $0x10] sm:$0xff]
        %v6222 = vld [vmem:[%s6218 + $0x18] sm:$0xff]
        %s6223 = scalar_lea.vmem %s45, 1
        %v6224 = vld [vmem:[%s6223] sm:$0x1]
        %s6225 = scalar_lea.vmem %s47, 32
        %v6226 = vld [vmem:[%s6225] sm:$0xff]
        %v6227 = vld [vmem:[%s6225 + $0x8] sm:$0xff]
        %v6228 = vld [vmem:[%s6225 + $0x10] sm:$0xff]
        %v6229 = vld [vmem:[%s6225 + $0x18] sm:$0xff]
        %s6230 = scalar_lea.vmem %s49, 1
        %v6231 = vld [vmem:[%s6230] sm:$0x1]
        %s6232 = scalar_lea.vmem %s51, 1
        %v6233 = vld [vmem:[%s6232] sm:$0x1]
        %s6234 = scalar_lea.vmem %s53, 1
        %v6235 = vld [vmem:[%s6234] sm:$0x1]
        %v6237 = vlaneseq
        %v6238 = vshrl.u32 %v6237, 7
        %v6239 = vsub.s32 0, %v6238
        %v6240 = vrot.slane %v6224, %v6239
        %v6243 = vsel %vm1970, %v6217, 0
        %6245 = vmatprep.subr.mxu0 0.0
        %6246 = vmatpush1.msra.mxu0 %v6219
        %6247 = vmatprep.subr.mxu0 0.0
        %6248 = vmatpush1.msra.mxu0 %v6220
        %6249 = vmatprep.subr.mxu0 0.0
        %6250 = vmatpush1.msra.mxu0 %v6221
        %6251 = vmatprep.subr.mxu0 0.0
        %6252 = vmatpush1.msra.mxu0 %v6222
        %6253 = vmatprep.subr.mxu0 0.0
        %6254 = vmatpush1.msra.mxu0 0.0
        %6255 = vmatprep.subr.mxu0 0.0
        %6256 = vmatpush1.msra.mxu0 0.0
        %6257 = vmatprep.subr.mxu0 0.0
        %6258 = vmatpush1.msra.mxu0 0.0
        %6259 = vmatprep.subr.mxu0 0.0
        %6260 = vmatpush1.msra.mxu0 0.0
        %6261 = vmatprep.subr.mxu0 0.0
        %6262 = vmatpush1.msra.mxu0 0.0
        %6263 = vmatprep.subr.mxu0 0.0
        %6264 = vmatpush1.msra.mxu0 0.0
        %6265 = vmatprep.subr.mxu0 0.0
        %6266 = vmatpush1.msra.mxu0 0.0
        %6267 = vmatprep.subr.mxu0 0.0
        %6268 = vmatpush1.msra.mxu0 0.0
        %6269 = vmatprep.subr.mxu0 0.0
        %6270 = vmatpush1.msra.mxu0 0.0
        %6271 = vmatprep.subr.mxu0 0.0
        %6272 = vmatpush1.msra.mxu0 0.0
        %6273 = vmatprep.subr.mxu0 0.0
        %6274 = vmatpush1.msra.mxu0 0.0
        %6275 = vmatprep.subr.mxu0 0.0
        %6276 = vmatpush1.msra.mxu0 0.0
        %6277 = vmatprep.subr.mxu0 0.0
        %6278 = vmatpush1.msra.mxu0 0.0
        %6279 = vmatprep.subr.mxu0 0.0
        %6280 = vmatpush1.msra.mxu0 0.0
        %6281 = vmatprep.subr.mxu0 0.0
        %6282 = vmatpush1.msra.mxu0 0.0
        %6283 = vmatprep.subr.mxu0 0.0
        %6284 = vmatpush1.msra.mxu0 0.0
        %6285 = vmatprep.subr.mxu0 0.0
        %6286 = vmatpush1.msra.mxu0 0.0
        %6287 = vmatprep.subr.mxu0 0.0
        %6288 = vmatpush1.msra.mxu0 0.0
        %6289 = vmatprep.subr.mxu0 0.0
        %6290 = vmatpush1.msra.mxu0 0.0
        %6291 = vmatprep.subr.mxu0 0.0
        %6292 = vmatpush1.msra.mxu0 0.0
        %6293 = vmatprep.subr.mxu0 0.0
        %6294 = vmatpush1.msra.mxu0 0.0
        %6295 = vmatprep.subr.mxu0 0.0
        %6296 = vmatpush1.msra.mxu0 0.0
        %6297 = vmatprep.subr.mxu0 0.0
        %6298 = vmatpush1.msra.mxu0 0.0
        %6299 = vmatprep.subr.mxu0 0.0
        %6300 = vmatpush1.msra.mxu0 0.0
        %6301 = vmatprep.subr.mxu0 0.0
        %6302 = vmatpush1.msra.mxu0 0.0
        %6303 = vmatprep.subr.mxu0 0.0
        %6304 = vmatpush1.msra.mxu0 0.0
        %6305 = vmatprep.subr.mxu0 0.0
        %6306 = vmatpush1.msra.mxu0 0.0
        %6307 = vmatprep.subr.mxu0 0.0
        %6308 = vmatpush1.msra.mxu0 0.0
        %6309 = vmatprep.mubr.f32.mxu0 0.0
        %6310 = vmatmul.mubr.f32.gmra.mrb[0].mxu0 %v6243
        %v6311 = vpop.f32.mrb[0].mxu0
        %v6312 = vadd.f32 %v6240, %v6311
        %v6313 = vpop.f32.mrb[0].mxu0
        %6314 = vdwg.mxu0
        %6316 = vrot.lane.b32.xlu0 %v6312, 96
        %v6317 = vpop.permute.xlu0 %6316
        %v6318 = vsel %vm2047, %v6312, 0
        %v6320 = vsel %vm2047, %v6317, 0
        %6322 = vmatprep.subr.mxu0 0.0
        %6323 = vmatpush1.xpose.msra.mxu0 %v6320
        %6324 = vmatprep.subr.mxu0 0.0
        %6325 = vmatpush1.xpose.msra.mxu0 0.0
        %6326 = vmatprep.subr.mxu0 0.0
        %6327 = vmatpush1.xpose.msra.mxu0 0.0
        %6328 = vmatprep.subr.mxu0 0.0
        %6329 = vmatpush1.xpose.msra.mxu0 0.0
        %6330 = vmatprep.subr.mxu0 0.0
        %6331 = vmatpush1.xpose.msra.mxu0 0.0
        %6332 = vmatprep.subr.mxu0 0.0
        %6333 = vmatpush1.xpose.msra.mxu0 0.0
        %6334 = vmatprep.subr.mxu0 0.0
        %6335 = vmatpush1.xpose.msra.mxu0 0.0
        %6336 = vmatprep.subr.mxu0 0.0
        %6337 = vmatpush1.xpose.msra.mxu0 0.0
        %6338 = vmatprep.subr.mxu0 0.0
        %6339 = vmatpush1.xpose.msra.mxu0 0.0
        %6340 = vmatprep.subr.mxu0 0.0
        %6341 = vmatpush1.xpose.msra.mxu0 0.0
        %6342 = vmatprep.subr.mxu0 0.0
        %6343 = vmatpush1.xpose.msra.mxu0 0.0
        %6344 = vmatprep.subr.mxu0 0.0
        %6345 = vmatpush1.xpose.msra.mxu0 0.0
        %6346 = vmatprep.subr.mxu0 0.0
        %6347 = vmatpush1.xpose.msra.mxu0 0.0
        %6348 = vmatprep.subr.mxu0 0.0
        %6349 = vmatpush1.xpose.msra.mxu0 0.0
        %6350 = vmatprep.subr.mxu0 0.0
        %6351 = vmatpush1.xpose.msra.mxu0 0.0
        %6352 = vmatprep.subr.mxu0 0.0
        %6353 = vmatpush1.xpose.msra.mxu0 0.0
        %6354 = vmatprep.subr.mxu0 0.0
        %6355 = vmatpush1.xpose.msra.mxu0 0.0
        %6356 = vmatprep.subr.mxu0 0.0
        %6357 = vmatpush1.xpose.msra.mxu0 0.0
        %6358 = vmatprep.subr.mxu0 0.0
        %6359 = vmatpush1.xpose.msra.mxu0 0.0
        %6360 = vmatprep.subr.mxu0 0.0
        %6361 = vmatpush1.xpose.msra.mxu0 0.0
        %6362 = vmatprep.subr.mxu0 0.0
        %6363 = vmatpush1.xpose.msra.mxu0 0.0
        %6364 = vmatprep.subr.mxu0 0.0
        %6365 = vmatpush1.xpose.msra.mxu0 0.0
        %6366 = vmatprep.subr.mxu0 0.0
        %6367 = vmatpush1.xpose.msra.mxu0 0.0
        %6368 = vmatprep.subr.mxu0 0.0
        %6369 = vmatpush1.xpose.msra.mxu0 0.0
        %6370 = vmatprep.subr.mxu0 0.0
        %6371 = vmatpush1.xpose.msra.mxu0 0.0
        %6372 = vmatprep.subr.mxu0 0.0
        %6373 = vmatpush1.xpose.msra.mxu0 0.0
        %6374 = vmatprep.subr.mxu0 0.0
        %6375 = vmatpush1.xpose.msra.mxu0 0.0
        %6376 = vmatprep.subr.mxu0 0.0
        %6377 = vmatpush1.xpose.msra.mxu0 0.0
        %6378 = vmatprep.subr.mxu0 0.0
        %6379 = vmatpush1.xpose.msra.mxu0 0.0
        %6380 = vmatprep.subr.mxu0 0.0
        %6381 = vmatpush1.xpose.msra.mxu0 0.0
        %6382 = vmatprep.subr.mxu0 0.0
        %6383 = vmatpush1.xpose.msra.mxu0 0.0
        %6384 = vmatprep.subr.mxu0 0.0
        %6385 = vmatpush1.xpose.msra.mxu0 0.0
        %6386 = vmatprep.mubr.f32.mxu0 0.0
        %6387 = vmatmul.mubr.f32.gmra.mrb[0].mxu0 %v6318
        %v6388 = vpop.f32.mrb[0].mxu0
        %v6389 = vadd.f32 0.0, %v6388
        %v6390 = vpop.f32.mrb[0].mxu0
        %6391 = vdwg.mxu0
        %6392 = vrot.lane.b32.xlu0 %v6312, 120
        %v6393 = vpop.permute.xlu0 %6392
        %6394 = vrot.lane.b32.xlu0 %v6312, 88
        %v6395 = vpop.permute.xlu0 %6394
        %v6396 = vsel %vm2047, %v6393, 0
        %v6398 = vsel %vm2047, %v6395, 0
        %6400 = vmatprep.subr.mxu0 0.0
        %6401 = vmatpush1.xpose.msra.mxu0 %v6398
        %6402 = vmatprep.subr.mxu0 0.0
        %6403 = vmatpush1.xpose.msra.mxu0 0.0
        %6404 = vmatprep.subr.mxu0 0.0
        %6405 = vmatpush1.xpose.msra.mxu0 0.0
        %6406 = vmatprep.subr.mxu0 0.0
        %6407 = vmatpush1.xpose.msra.mxu0 0.0
        %6408 = vmatprep.subr.mxu0 0.0
        %6409 = vmatpush1.xpose.msra.mxu0 0.0
        %6410 = vmatprep.subr.mxu0 0.0
        %6411 = vmatpush1.xpose.msra.mxu0 0.0
        %6412 = vmatprep.subr.mxu0 0.0
        %6413 = vmatpush1.xpose.msra.mxu0 0.0
        %6414 = vmatprep.subr.mxu0 0.0
        %6415 = vmatpush1.xpose.msra.mxu0 0.0
        %6416 = vmatprep.subr.mxu0 0.0
        %6417 = vmatpush1.xpose.msra.mxu0 0.0
        %6418 = vmatprep.subr.mxu0 0.0
        %6419 = vmatpush1.xpose.msra.mxu0 0.0
        %6420 = vmatprep.subr.mxu0 0.0
        %6421 = vmatpush1.xpose.msra.mxu0 0.0
        %6422 = vmatprep.subr.mxu0 0.0
        %6423 = vmatpush1.xpose.msra.mxu0 0.0
        %6424 = vmatprep.subr.mxu0 0.0
        %6425 = vmatpush1.xpose.msra.mxu0 0.0
        %6426 = vmatprep.subr.mxu0 0.0
        %6427 = vmatpush1.xpose.msra.mxu0 0.0
        %6428 = vmatprep.subr.mxu0 0.0
        %6429 = vmatpush1.xpose.msra.mxu0 0.0
        %6430 = vmatprep.subr.mxu0 0.0
        %6431 = vmatpush1.xpose.msra.mxu0 0.0
        %6432 = vmatprep.subr.mxu0 0.0
        %6433 = vmatpush1.xpose.msra.mxu0 0.0
        %6434 = vmatprep.subr.mxu0 0.0
        %6435 = vmatpush1.xpose.msra.mxu0 0.0
        %6436 = vmatprep.subr.mxu0 0.0
        %6437 = vmatpush1.xpose.msra.mxu0 0.0
        %6438 = vmatprep.subr.mxu0 0.0
        %6439 = vmatpush1.xpose.msra.mxu0 0.0
        %6440 = vmatprep.subr.mxu0 0.0
        %6441 = vmatpush1.xpose.msra.mxu0 0.0
        %6442 = vmatprep.subr.mxu0 0.0
        %6443 = vmatpush1.xpose.msra.mxu0 0.0
        %6444 = vmatprep.subr.mxu0 0.0
        %6445 = vmatpush1.xpose.msra.mxu0 0.0
        %6446 = vmatprep.subr.mxu0 0.0
        %6447 = vmatpush1.xpose.msra.mxu0 0.0
        %6448 = vmatprep.subr.mxu0 0.0
        %6449 = vmatpush1.xpose.msra.mxu0 0.0
        %6450 = vmatprep.subr.mxu0 0.0
        %6451 = vmatpush1.xpose.msra.mxu0 0.0
        %6452 = vmatprep.subr.mxu0 0.0
        %6453 = vmatpush1.xpose.msra.mxu0 0.0
        %6454 = vmatprep.subr.mxu0 0.0
        %6455 = vmatpush1.xpose.msra.mxu0 0.0
        %6456 = vmatprep.subr.mxu0 0.0
        %6457 = vmatpush1.xpose.msra.mxu0 0.0
        %6458 = vmatprep.subr.mxu0 0.0
        %6459 = vmatpush1.xpose.msra.mxu0 0.0
        %6460 = vmatprep.subr.mxu0 0.0
        %6461 = vmatpush1.xpose.msra.mxu0 0.0
        %6462 = vmatprep.subr.mxu0 0.0
        %6463 = vmatpush1.xpose.msra.mxu0 0.0
        %6464 = vmatprep.mubr.f32.mxu0 0.0
        %6465 = vmatmul.mubr.f32.gmra.mrb[0].mxu0 %v6396
        %v6466 = vpop.f32.mrb[0].mxu0
        %v6467 = vadd.f32 0.0, %v6466
        %v6468 = vpop.f32.mrb[0].mxu0
        %6469 = vdwg.mxu0
        %6470 = vrot.lane.b32.xlu0 %v6312, 112
        %v6471 = vpop.permute.xlu0 %6470
        %6472 = vrot.lane.b32.xlu0 %v6312, 80
        %v6473 = vpop.permute.xlu0 %6472
        %v6474 = vsel %vm2047, %v6471, 0
        %v6476 = vsel %vm2047, %v6473, 0
        %6478 = vmatprep.subr.mxu0 0.0
        %6479 = vmatpush1.xpose.msra.mxu0 %v6476
        %6480 = vmatprep.subr.mxu0 0.0
        %6481 = vmatpush1.xpose.msra.mxu0 0.0
        %6482 = vmatprep.subr.mxu0 0.0
        %6483 = vmatpush1.xpose.msra.mxu0 0.0
        %6484 = vmatprep.subr.mxu0 0.0
        %6485 = vmatpush1.xpose.msra.mxu0 0.0
        %6486 = vmatprep.subr.mxu0 0.0
        %6487 = vmatpush1.xpose.msra.mxu0 0.0
        %6488 = vmatprep.subr.mxu0 0.0
        %6489 = vmatpush1.xpose.msra.mxu0 0.0
        %6490 = vmatprep.subr.mxu0 0.0
        %6491 = vmatpush1.xpose.msra.mxu0 0.0
        %6492 = vmatprep.subr.mxu0 0.0
        %6493 = vmatpush1.xpose.msra.mxu0 0.0
        %6494 = vmatprep.subr.mxu0 0.0
        %6495 = vmatpush1.xpose.msra.mxu0 0.0
        %6496 = vmatprep.subr.mxu0 0.0
        %6497 = vmatpush1.xpose.msra.mxu0 0.0
        %6498 = vmatprep.subr.mxu0 0.0
        %6499 = vmatpush1.xpose.msra.mxu0 0.0
        %6500 = vmatprep.subr.mxu0 0.0
        %6501 = vmatpush1.xpose.msra.mxu0 0.0
        %6502 = vmatprep.subr.mxu0 0.0
        %6503 = vmatpush1.xpose.msra.mxu0 0.0
        %6504 = vmatprep.subr.mxu0 0.0
        %6505 = vmatpush1.xpose.msra.mxu0 0.0
        %6506 = vmatprep.subr.mxu0 0.0
        %6507 = vmatpush1.xpose.msra.mxu0 0.0
        %6508 = vmatprep.subr.mxu0 0.0
        %6509 = vmatpush1.xpose.msra.mxu0 0.0
        %6510 = vmatprep.subr.mxu0 0.0
        %6511 = vmatpush1.xpose.msra.mxu0 0.0
        %6512 = vmatprep.subr.mxu0 0.0
        %6513 = vmatpush1.xpose.msra.mxu0 0.0
        %6514 = vmatprep.subr.mxu0 0.0
        %6515 = vmatpush1.xpose.msra.mxu0 0.0
        %6516 = vmatprep.subr.mxu0 0.0
        %6517 = vmatpush1.xpose.msra.mxu0 0.0
        %6518 = vmatprep.subr.mxu0 0.0
        %6519 = vmatpush1.xpose.msra.mxu0 0.0
        %6520 = vmatprep.subr.mxu0 0.0
        %6521 = vmatpush1.xpose.msra.mxu0 0.0
        %6522 = vmatprep.subr.mxu0 0.0
        %6523 = vmatpush1.xpose.msra.mxu0 0.0
        %6524 = vmatprep.subr.mxu0 0.0
        %6525 = vmatpush1.xpose.msra.mxu0 0.0
        %6526 = vmatprep.subr.mxu0 0.0
        %6527 = vmatpush1.xpose.msra.mxu0 0.0
        %6528 = vmatprep.subr.mxu0 0.0
        %6529 = vmatpush1.xpose.msra.mxu0 0.0
        %6530 = vmatprep.subr.mxu0 0.0
        %6531 = vmatpush1.xpose.msra.mxu0 0.0
        %6532 = vmatprep.subr.mxu0 0.0
        %6533 = vmatpush1.xpose.msra.mxu0 0.0
        %6534 = vmatprep.subr.mxu0 0.0
        %6535 = vmatpush1.xpose.msra.mxu0 0.0
        %6536 = vmatprep.subr.mxu0 0.0
        %6537 = vmatpush1.xpose.msra.mxu0 0.0
        %6538 = vmatprep.subr.mxu0 0.0
        %6539 = vmatpush1.xpose.msra.mxu0 0.0
        %6540 = vmatprep.subr.mxu0 0.0
        %6541 = vmatpush1.xpose.msra.mxu0 0.0
        %6542 = vmatprep.mubr.f32.mxu0 0.0
        %6543 = vmatmul.mubr.f32.gmra.mrb[0].mxu0 %v6474
        %v6544 = vpop.f32.mrb[0].mxu0
        %v6545 = vadd.f32 0.0, %v6544
        %v6546 = vpop.f32.mrb[0].mxu0
        %6547 = vdwg.mxu0
        %6548 = vrot.lane.b32.xlu0 %v6312, 104
        %v6549 = vpop.permute.xlu0 %6548
        %6550 = vrot.lane.b32.xlu0 %v6312, 72
        %v6551 = vpop.permute.xlu0 %6550
        %v6552 = vsel %vm2047, %v6549, 0
        %v6554 = vsel %vm2047, %v6551, 0
        %6556 = vmatprep.subr.mxu0 0.0
        %6557 = vmatpush1.xpose.msra.mxu0 %v6554
        %6558 = vmatprep.subr.mxu0 0.0
        %6559 = vmatpush1.xpose.msra.mxu0 0.0
        %6560 = vmatprep.subr.mxu0 0.0
        %6561 = vmatpush1.xpose.msra.mxu0 0.0
        %6562 = vmatprep.subr.mxu0 0.0
        %6563 = vmatpush1.xpose.msra.mxu0 0.0
        %6564 = vmatprep.subr.mxu0 0.0
        %6565 = vmatpush1.xpose.msra.mxu0 0.0
        %6566 = vmatprep.subr.mxu0 0.0
        %6567 = vmatpush1.xpose.msra.mxu0 0.0
        %6568 = vmatprep.subr.mxu0 0.0
        %6569 = vmatpush1.xpose.msra.mxu0 0.0
        %6570 = vmatprep.subr.mxu0 0.0
        %6571 = vmatpush1.xpose.msra.mxu0 0.0
        %6572 = vmatprep.subr.mxu0 0.0
        %6573 = vmatpush1.xpose.msra.mxu0 0.0
        %6574 = vmatprep.subr.mxu0 0.0
        %6575 = vmatpush1.xpose.msra.mxu0 0.0
        %6576 = vmatprep.subr.mxu0 0.0
        %6577 = vmatpush1.xpose.msra.mxu0 0.0
        %6578 = vmatprep.subr.mxu0 0.0
        %6579 = vmatpush1.xpose.msra.mxu0 0.0
        %6580 = vmatprep.subr.mxu0 0.0
        %6581 = vmatpush1.xpose.msra.mxu0 0.0
        %6582 = vmatprep.subr.mxu0 0.0
        %6583 = vmatpush1.xpose.msra.mxu0 0.0
        %6584 = vmatprep.subr.mxu0 0.0
        %6585 = vmatpush1.xpose.msra.mxu0 0.0
        %6586 = vmatprep.subr.mxu0 0.0
        %6587 = vmatpush1.xpose.msra.mxu0 0.0
        %6588 = vmatprep.subr.mxu0 0.0
        %6589 = vmatpush1.xpose.msra.mxu0 0.0
        %6590 = vmatprep.subr.mxu0 0.0
        %6591 = vmatpush1.xpose.msra.mxu0 0.0
        %6592 = vmatprep.subr.mxu0 0.0
        %6593 = vmatpush1.xpose.msra.mxu0 0.0
        %6594 = vmatprep.subr.mxu0 0.0
        %6595 = vmatpush1.xpose.msra.mxu0 0.0
        %6596 = vmatprep.subr.mxu0 0.0
        %6597 = vmatpush1.xpose.msra.mxu0 0.0
        %6598 = vmatprep.subr.mxu0 0.0
        %6599 = vmatpush1.xpose.msra.mxu0 0.0
        %6600 = vmatprep.subr.mxu0 0.0
        %6601 = vmatpush1.xpose.msra.mxu0 0.0
        %6602 = vmatprep.subr.mxu0 0.0
        %6603 = vmatpush1.xpose.msra.mxu0 0.0
        %6604 = vmatprep.subr.mxu0 0.0
        %6605 = vmatpush1.xpose.msra.mxu0 0.0
        %6606 = vmatprep.subr.mxu0 0.0
        %6607 = vmatpush1.xpose.msra.mxu0 0.0
        %6608 = vmatprep.subr.mxu0 0.0
        %6609 = vmatpush1.xpose.msra.mxu0 0.0
        %6610 = vmatprep.subr.mxu0 0.0
        %6611 = vmatpush1.xpose.msra.mxu0 0.0
        %6612 = vmatprep.subr.mxu0 0.0
        %6613 = vmatpush1.xpose.msra.mxu0 0.0
        %6614 = vmatprep.subr.mxu0 0.0
        %6615 = vmatpush1.xpose.msra.mxu0 0.0
        %6616 = vmatprep.subr.mxu0 0.0
        %6617 = vmatpush1.xpose.msra.mxu0 0.0
        %6618 = vmatprep.subr.mxu0 0.0
        %6619 = vmatpush1.xpose.msra.mxu0 0.0
        %6620 = vmatprep.mubr.f32.mxu0 0.0
        %6621 = vmatmul.mubr.f32.gmra.mrb[0].mxu0 %v6552
        %v6622 = vpop.f32.mrb[0].mxu0
        %v6623 = vadd.f32 0.0, %v6622
        %v6624 = vpop.f32.mrb[0].mxu0
        %6625 = vdwg.mxu0
        %v6626 = vmul.f32 %v6389, 0.35355338
        %v6627 = vmul.f32 %v6467, 0.35355338
        %v6628 = vmul.f32 %v6545, 0.35355338
        %v6629 = vmul.f32 %v6623, 0.35355338
        %v6630 = vadd.f32 %v6626, %v1951
        %v6631 = vadd.f32 %v6627, %v1951
        %v6632 = vadd.f32 %v6628, %v1951
        %v6633 = vadd.f32 %v6629, %v1951
        %v6634 = vsel %vm2047, %v6630, -inf
        %6635 = vmax.xlane.f32.xlu0 %v6634
        %v6636 = vpop.xlane.xlu0 %6635
        %v6637 = vsel %vm2047, %v6631, -inf
        %6638 = vmax.xlane.f32.xlu0 %v6637
        %v6639 = vpop.xlane.xlu0 %6638
        %v6640 = vsel %vm2047, %v6632, -inf
        %6641 = vmax.xlane.f32.xlu0 %v6640
        %v6642 = vpop.xlane.xlu0 %6641
        %v6643 = vsel %vm2047, %v6633, -inf
        %6644 = vmax.xlane.f32.xlu0 %v6643
        %v6645 = vpop.xlane.xlu0 %6644
        %v6646 = vsub.f32 %v6630, %v6636
        %v6647 = vsub.f32 %v6631, %v6639
        %v6648 = vsub.f32 %v6632, %v6642
        %v6649 = vsub.f32 %v6633, %v6645
        %v6650 = vmul.f32 %v6646, 1.442695
        %v6651 = vpow.pop %v6650
        %v6652 = vmul.f32 %v6647, 1.442695
        %v6653 = vpow.pop %v6652
        %v6654 = vmul.f32 %v6648, 1.442695
        %v6655 = vpow.pop %v6654
        %v6656 = vmul.f32 %v6649, 1.442695
        %v6657 = vpow.pop %v6656
        %v6658 = vsel %vm2047, %v6651, 0.0
        %6659 = vadd.xlane.f32.xlu0 %v6658
        %v6660 = vpop.xlane.xlu0 %6659
        %v6661 = vsel %vm2047, %v6653, 0.0
        %6662 = vadd.xlane.f32.xlu0 %v6661
        %v6663 = vpop.xlane.xlu0 %6662
        %v6664 = vsel %vm2047, %v6655, 0.0
        %6665 = vadd.xlane.f32.xlu0 %v6664
        %v6666 = vpop.xlane.xlu0 %6665
        %v6667 = vsel %vm2047, %v6657, 0.0
        %6668 = vadd.xlane.f32.xlu0 %v6667
        %v6669 = vpop.xlane.xlu0 %6668
        %v6670 = vrcp.pop %v6660
        %v6671 = vrcp.pop %v6663
        %v6672 = vrcp.pop %v6666
        %v6673 = vrcp.pop %v6669
        %v6674 = vmul.f32 %v6651, %v6670
        %v6675 = vmul.f32 %v6653, %v6671
        %v6676 = vmul.f32 %v6655, %v6672
        %v6677 = vmul.f32 %v6657, %v6673
        %6678 = vrot.lane.b32.xlu0 %v6312, 64
        %v6679 = vpop.permute.xlu0 %6678
        %v6682 = vsel %vm2047, %v6674, 0
        %6684 = vmatprep.subr.mxu0 0.0
        %6685 = vmatpush1.msra.mxu0 %v6679
        %6686 = vmatprep.subr.mxu0 0.0
        %6687 = vmatpush1.msra.mxu0 0.0
        %6688 = vmatprep.subr.mxu0 0.0
        %6689 = vmatpush1.msra.mxu0 0.0
        %6690 = vmatprep.subr.mxu0 0.0
        %6691 = vmatpush1.msra.mxu0 0.0
        %6692 = vmatprep.subr.mxu0 0.0
        %6693 = vmatpush1.msra.mxu0 0.0
        %6694 = vmatprep.subr.mxu0 0.0
        %6695 = vmatpush1.msra.mxu0 0.0
        %6696 = vmatprep.subr.mxu0 0.0
        %6697 = vmatpush1.msra.mxu0 0.0
        %6698 = vmatprep.subr.mxu0 0.0
        %6699 = vmatpush1.msra.mxu0 0.0
        %6700 = vmatprep.subr.mxu0 0.0
        %6701 = vmatpush1.msra.mxu0 0.0
        %6702 = vmatprep.subr.mxu0 0.0
        %6703 = vmatpush1.msra.mxu0 0.0
        %6704 = vmatprep.subr.mxu0 0.0
        %6705 = vmatpush1.msra.mxu0 0.0
        %6706 = vmatprep.subr.mxu0 0.0
        %6707 = vmatpush1.msra.mxu0 0.0
        %6708 = vmatprep.subr.mxu0 0.0
        %6709 = vmatpush1.msra.mxu0 0.0
        %6710 = vmatprep.subr.mxu0 0.0
        %6711 = vmatpush1.msra.mxu0 0.0
        %6712 = vmatprep.subr.mxu0 0.0
        %6713 = vmatpush1.msra.mxu0 0.0
        %6714 = vmatprep.subr.mxu0 0.0
        %6715 = vmatpush1.msra.mxu0 0.0
        %6716 = vmatprep.subr.mxu0 0.0
        %6717 = vmatpush1.msra.mxu0 0.0
        %6718 = vmatprep.subr.mxu0 0.0
        %6719 = vmatpush1.msra.mxu0 0.0
        %6720 = vmatprep.subr.mxu0 0.0
        %6721 = vmatpush1.msra.mxu0 0.0
        %6722 = vmatprep.subr.mxu0 0.0
        %6723 = vmatpush1.msra.mxu0 0.0
        %6724 = vmatprep.subr.mxu0 0.0
        %6725 = vmatpush1.msra.mxu0 0.0
        %6726 = vmatprep.subr.mxu0 0.0
        %6727 = vmatpush1.msra.mxu0 0.0
        %6728 = vmatprep.subr.mxu0 0.0
        %6729 = vmatpush1.msra.mxu0 0.0
        %6730 = vmatprep.subr.mxu0 0.0
        %6731 = vmatpush1.msra.mxu0 0.0
        %6732 = vmatprep.subr.mxu0 0.0
        %6733 = vmatpush1.msra.mxu0 0.0
        %6734 = vmatprep.subr.mxu0 0.0
        %6735 = vmatpush1.msra.mxu0 0.0
        %6736 = vmatprep.subr.mxu0 0.0
        %6737 = vmatpush1.msra.mxu0 0.0
        %6738 = vmatprep.subr.mxu0 0.0
        %6739 = vmatpush1.msra.mxu0 0.0
        %6740 = vmatprep.subr.mxu0 0.0
        %6741 = vmatpush1.msra.mxu0 0.0
        %6742 = vmatprep.subr.mxu0 0.0
        %6743 = vmatpush1.msra.mxu0 0.0
        %6744 = vmatprep.subr.mxu0 0.0
        %6745 = vmatpush1.msra.mxu0 0.0
        %6746 = vmatprep.subr.mxu0 0.0
        %6747 = vmatpush1.msra.mxu0 0.0
        %6748 = vmatprep.mubr.f32.mxu0 0.0
        %6749 = vmatmul.mubr.f32.gmra.mrb[0].mxu0 %v6682
        %v6750 = vpop.f32.mrb[0].mxu0
        %v6751 = vadd.f32 0.0, %v6750
        %v6752 = vpop.f32.mrb[0].mxu0
        %6753 = vdwg.mxu0
        %6754 = vrot.lane.b32.xlu0 %v6312, 56
        %v6755 = vpop.permute.xlu0 %6754
        %v6758 = vsel %vm2047, %v6675, 0
        %6760 = vmatprep.subr.mxu0 0.0
        %6761 = vmatpush1.msra.mxu0 %v6755
        %6762 = vmatprep.subr.mxu0 0.0
        %6763 = vmatpush1.msra.mxu0 0.0
        %6764 = vmatprep.subr.mxu0 0.0
        %6765 = vmatpush1.msra.mxu0 0.0
        %6766 = vmatprep.subr.mxu0 0.0
        %6767 = vmatpush1.msra.mxu0 0.0
        %6768 = vmatprep.subr.mxu0 0.0
        %6769 = vmatpush1.msra.mxu0 0.0
        %6770 = vmatprep.subr.mxu0 0.0
        %6771 = vmatpush1.msra.mxu0 0.0
        %6772 = vmatprep.subr.mxu0 0.0
        %6773 = vmatpush1.msra.mxu0 0.0
        %6774 = vmatprep.subr.mxu0 0.0
        %6775 = vmatpush1.msra.mxu0 0.0
        %6776 = vmatprep.subr.mxu0 0.0
        %6777 = vmatpush1.msra.mxu0 0.0
        %6778 = vmatprep.subr.mxu0 0.0
        %6779 = vmatpush1.msra.mxu0 0.0
        %6780 = vmatprep.subr.mxu0 0.0
        %6781 = vmatpush1.msra.mxu0 0.0
        %6782 = vmatprep.subr.mxu0 0.0
        %6783 = vmatpush1.msra.mxu0 0.0
        %6784 = vmatprep.subr.mxu0 0.0
        %6785 = vmatpush1.msra.mxu0 0.0
        %6786 = vmatprep.subr.mxu0 0.0
        %6787 = vmatpush1.msra.mxu0 0.0
        %6788 = vmatprep.subr.mxu0 0.0
        %6789 = vmatpush1.msra.mxu0 0.0
        %6790 = vmatprep.subr.mxu0 0.0
        %6791 = vmatpush1.msra.mxu0 0.0
        %6792 = vmatprep.subr.mxu0 0.0
        %6793 = vmatpush1.msra.mxu0 0.0
        %6794 = vmatprep.subr.mxu0 0.0
        %6795 = vmatpush1.msra.mxu0 0.0
        %6796 = vmatprep.subr.mxu0 0.0
        %6797 = vmatpush1.msra.mxu0 0.0
        %6798 = vmatprep.subr.mxu0 0.0
        %6799 = vmatpush1.msra.mxu0 0.0
        %6800 = vmatprep.subr.mxu0 0.0
        %6801 = vmatpush1.msra.mxu0 0.0
        %6802 = vmatprep.subr.mxu0 0.0
        %6803 = vmatpush1.msra.mxu0 0.0
        %6804 = vmatprep.subr.mxu0 0.0
        %6805 = vmatpush1.msra.mxu0 0.0
        %6806 = vmatprep.subr.mxu0 0.0
        %6807 = vmatpush1.msra.mxu0 0.0
        %6808 = vmatprep.subr.mxu0 0.0
        %6809 = vmatpush1.msra.mxu0 0.0
        %6810 = vmatprep.subr.mxu0 0.0
        %6811 = vmatpush1.msra.mxu0 0.0
        %6812 = vmatprep.subr.mxu0 0.0
        %6813 = vmatpush1.msra.mxu0 0.0
        %6814 = vmatprep.subr.mxu0 0.0
        %6815 = vmatpush1.msra.mxu0 0.0
        %6816 = vmatprep.subr.mxu0 0.0
        %6817 = vmatpush1.msra.mxu0 0.0
        %6818 = vmatprep.subr.mxu0 0.0
        %6819 = vmatpush1.msra.mxu0 0.0
        %6820 = vmatprep.subr.mxu0 0.0
        %6821 = vmatpush1.msra.mxu0 0.0
        %6822 = vmatprep.subr.mxu0 0.0
        %6823 = vmatpush1.msra.mxu0 0.0
        %6824 = vmatprep.mubr.f32.mxu0 0.0
        %6825 = vmatmul.mubr.f32.gmra.mrb[0].mxu0 %v6758
        %v6826 = vpop.f32.mrb[0].mxu0
        %v6827 = vadd.f32 0.0, %v6826
        %v6828 = vpop.f32.mrb[0].mxu0
        %6829 = vdwg.mxu0
        %6830 = vrot.lane.b32.xlu0 %v6312, 48
        %v6831 = vpop.permute.xlu0 %6830
        %v6834 = vsel %vm2047, %v6676, 0
        %6836 = vmatprep.subr.mxu0 0.0
        %6837 = vmatpush1.msra.mxu0 %v6831
        %6838 = vmatprep.subr.mxu0 0.0
        %6839 = vmatpush1.msra.mxu0 0.0
        %6840 = vmatprep.subr.mxu0 0.0
        %6841 = vmatpush1.msra.mxu0 0.0
        %6842 = vmatprep.subr.mxu0 0.0
        %6843 = vmatpush1.msra.mxu0 0.0
        %6844 = vmatprep.subr.mxu0 0.0
        %6845 = vmatpush1.msra.mxu0 0.0
        %6846 = vmatprep.subr.mxu0 0.0
        %6847 = vmatpush1.msra.mxu0 0.0
        %6848 = vmatprep.subr.mxu0 0.0
        %6849 = vmatpush1.msra.mxu0 0.0
        %6850 = vmatprep.subr.mxu0 0.0
        %6851 = vmatpush1.msra.mxu0 0.0
        %6852 = vmatprep.subr.mxu0 0.0
        %6853 = vmatpush1.msra.mxu0 0.0
        %6854 = vmatprep.subr.mxu0 0.0
        %6855 = vmatpush1.msra.mxu0 0.0
        %6856 = vmatprep.subr.mxu0 0.0
        %6857 = vmatpush1.msra.mxu0 0.0
        %6858 = vmatprep.subr.mxu0 0.0
        %6859 = vmatpush1.msra.mxu0 0.0
        %6860 = vmatprep.subr.mxu0 0.0
        %6861 = vmatpush1.msra.mxu0 0.0
        %6862 = vmatprep.subr.mxu0 0.0
        %6863 = vmatpush1.msra.mxu0 0.0
        %6864 = vmatprep.subr.mxu0 0.0
        %6865 = vmatpush1.msra.mxu0 0.0
        %6866 = vmatprep.subr.mxu0 0.0
        %6867 = vmatpush1.msra.mxu0 0.0
        %6868 = vmatprep.subr.mxu0 0.0
        %6869 = vmatpush1.msra.mxu0 0.0
        %6870 = vmatprep.subr.mxu0 0.0
        %6871 = vmatpush1.msra.mxu0 0.0
        %6872 = vmatprep.subr.mxu0 0.0
        %6873 = vmatpush1.msra.mxu0 0.0
        %6874 = vmatprep.subr.mxu0 0.0
        %6875 = vmatpush1.msra.mxu0 0.0
        %6876 = vmatprep.subr.mxu0 0.0
        %6877 = vmatpush1.msra.mxu0 0.0
        %6878 = vmatprep.subr.mxu0 0.0
        %6879 = vmatpush1.msra.mxu0 0.0
        %6880 = vmatprep.subr.mxu0 0.0
        %6881 = vmatpush1.msra.mxu0 0.0
        %6882 = vmatprep.subr.mxu0 0.0
        %6883 = vmatpush1.msra.mxu0 0.0
        %6884 = vmatprep.subr.mxu0 0.0
        %6885 = vmatpush1.msra.mxu0 0.0
        %6886 = vmatprep.subr.mxu0 0.0
        %6887 = vmatpush1.msra.mxu0 0.0
        %6888 = vmatprep.subr.mxu0 0.0
        %6889 = vmatpush1.msra.mxu0 0.0
        %6890 = vmatprep.subr.mxu0 0.0
        %6891 = vmatpush1.msra.mxu0 0.0
        %6892 = vmatprep.subr.mxu0 0.0
        %6893 = vmatpush1.msra.mxu0 0.0
        %6894 = vmatprep.subr.mxu0 0.0
        %6895 = vmatpush1.msra.mxu0 0.0
        %6896 = vmatprep.subr.mxu0 0.0
        %6897 = vmatpush1.msra.mxu0 0.0
        %6898 = vmatprep.subr.mxu0 0.0
        %6899 = vmatpush1.msra.mxu0 0.0
        %6900 = vmatprep.mubr.f32.mxu0 0.0
        %6901 = vmatmul.mubr.f32.gmra.mrb[0].mxu0 %v6834
        %v6902 = vpop.f32.mrb[0].mxu0
        %v6903 = vadd.f32 0.0, %v6902
        %v6904 = vpop.f32.mrb[0].mxu0
        %6905 = vdwg.mxu0
        %6906 = vrot.lane.b32.xlu0 %v6312, 40
        %v6907 = vpop.permute.xlu0 %6906
        %v6910 = vsel %vm2047, %v6677, 0
        %6912 = vmatprep.subr.mxu0 0.0
        %6913 = vmatpush1.msra.mxu0 %v6907
        %6914 = vmatprep.subr.mxu0 0.0
        %6915 = vmatpush1.msra.mxu0 0.0
        %6916 = vmatprep.subr.mxu0 0.0
        %6917 = vmatpush1.msra.mxu0 0.0
        %6918 = vmatprep.subr.mxu0 0.0
        %6919 = vmatpush1.msra.mxu0 0.0
        %6920 = vmatprep.subr.mxu0 0.0
        %6921 = vmatpush1.msra.mxu0 0.0
        %6922 = vmatprep.subr.mxu0 0.0
        %6923 = vmatpush1.msra.mxu0 0.0
        %6924 = vmatprep.subr.mxu0 0.0
        %6925 = vmatpush1.msra.mxu0 0.0
        %6926 = vmatprep.subr.mxu0 0.0
        %6927 = vmatpush1.msra.mxu0 0.0
        %6928 = vmatprep.subr.mxu0 0.0
        %6929 = vmatpush1.msra.mxu0 0.0
        %6930 = vmatprep.subr.mxu0 0.0
        %6931 = vmatpush1.msra.mxu0 0.0
        %6932 = vmatprep.subr.mxu0 0.0
        %6933 = vmatpush1.msra.mxu0 0.0
        %6934 = vmatprep.subr.mxu0 0.0
        %6935 = vmatpush1.msra.mxu0 0.0
        %6936 = vmatprep.subr.mxu0 0.0
        %6937 = vmatpush1.msra.mxu0 0.0
        %6938 = vmatprep.subr.mxu0 0.0
        %6939 = vmatpush1.msra.mxu0 0.0
        %6940 = vmatprep.subr.mxu0 0.0
        %6941 = vmatpush1.msra.mxu0 0.0
        %6942 = vmatprep.subr.mxu0 0.0
        %6943 = vmatpush1.msra.mxu0 0.0
        %6944 = vmatprep.subr.mxu0 0.0
        %6945 = vmatpush1.msra.mxu0 0.0
        %6946 = vmatprep.subr.mxu0 0.0
        %6947 = vmatpush1.msra.mxu0 0.0
        %6948 = vmatprep.subr.mxu0 0.0
        %6949 = vmatpush1.msra.mxu0 0.0
        %6950 = vmatprep.subr.mxu0 0.0
        %6951 = vmatpush1.msra.mxu0 0.0
        %6952 = vmatprep.subr.mxu0 0.0
        %6953 = vmatpush1.msra.mxu0 0.0
        %6954 = vmatprep.subr.mxu0 0.0
        %6955 = vmatpush1.msra.mxu0 0.0
        %6956 = vmatprep.subr.mxu0 0.0
        %6957 = vmatpush1.msra.mxu0 0.0
        %6958 = vmatprep.subr.mxu0 0.0
        %6959 = vmatpush1.msra.mxu0 0.0
        %6960 = vmatprep.subr.mxu0 0.0
        %6961 = vmatpush1.msra.mxu0 0.0
        %6962 = vmatprep.subr.mxu0 0.0
        %6963 = vmatpush1.msra.mxu0 0.0
        %6964 = vmatprep.subr.mxu0 0.0
        %6965 = vmatpush1.msra.mxu0 0.0
        %6966 = vmatprep.subr.mxu0 0.0
        %6967 = vmatpush1.msra.mxu0 0.0
        %6968 = vmatprep.subr.mxu0 0.0
        %6969 = vmatpush1.msra.mxu0 0.0
        %6970 = vmatprep.subr.mxu0 0.0
        %6971 = vmatpush1.msra.mxu0 0.0
        %6972 = vmatprep.subr.mxu0 0.0
        %6973 = vmatpush1.msra.mxu0 0.0
        %6974 = vmatprep.subr.mxu0 0.0
        %6975 = vmatpush1.msra.mxu0 0.0
        %6976 = vmatprep.mubr.f32.mxu0 0.0
        %6977 = vmatmul.mubr.f32.gmra.mrb[0].mxu0 %v6910
        %v6978 = vpop.f32.mrb[0].mxu0
        %v6979 = vadd.f32 0.0, %v6978
        %v6980 = vpop.f32.mrb[0].mxu0
        %6981 = vdwg.mxu0
        %6983 = vrot.lane.b32.xlu0 %v6827, 8
        %v6984 = vpop.permute.xlu0 %6983
        %6987 = vrot.lane.b32.xlu0 %v6903, 16
        %v6988 = vpop.permute.xlu0 %6987
        %6991 = vrot.lane.b32.xlu0 %v6979, 24
        %v6992 = vpop.permute.xlu0 %6991
        %v6994 = vsel %vm2047, %v6751, %v6984
        %v6995 = vsel %vm2731, %v6994, %v6988
        %v6996 = vsel %vm2733, %v6995, %v6992
        %v6998 = vlaneseq
        %v6999 = vshrl.u32 %v6998, 7
        %v7000 = vsub.s32 0, %v6999
        %v7001 = vrot.slane %v6231, %v7000
        %v7004 = vsel %vm1970, %v6996, 0
        %7006 = vmatprep.subr.mxu0 0.0
        %7007 = vmatpush1.msra.mxu0 %v6226
        %7008 = vmatprep.subr.mxu0 0.0
        %7009 = vmatpush1.msra.mxu0 %v6227
        %7010 = vmatprep.subr.mxu0 0.0
        %7011 = vmatpush1.msra.mxu0 %v6228
        %7012 = vmatprep.subr.mxu0 0.0
        %7013 = vmatpush1.msra.mxu0 %v6229
        %7014 = vmatprep.subr.mxu0 0.0
        %7015 = vmatpush1.msra.mxu0 0.0
        %7016 = vmatprep.subr.mxu0 0.0
        %7017 = vmatpush1.msra.mxu0 0.0
        %7018 = vmatprep.subr.mxu0 0.0
        %7019 = vmatpush1.msra.mxu0 0.0
        %7020 = vmatprep.subr.mxu0 0.0
        %7021 = vmatpush1.msra.mxu0 0.0
        %7022 = vmatprep.subr.mxu0 0.0
        %7023 = vmatpush1.msra.mxu0 0.0
        %7024 = vmatprep.subr.mxu0 0.0
        %7025 = vmatpush1.msra.mxu0 0.0
        %7026 = vmatprep.subr.mxu0 0.0
        %7027 = vmatpush1.msra.mxu0 0.0
        %7028 = vmatprep.subr.mxu0 0.0
        %7029 = vmatpush1.msra.mxu0 0.0
        %7030 = vmatprep.subr.mxu0 0.0
        %7031 = vmatpush1.msra.mxu0 0.0
        %7032 = vmatprep.subr.mxu0 0.0
        %7033 = vmatpush1.msra.mxu0 0.0
        %7034 = vmatprep.subr.mxu0 0.0
        %7035 = vmatpush1.msra.mxu0 0.0
        %7036 = vmatprep.subr.mxu0 0.0
        %7037 = vmatpush1.msra.mxu0 0.0
        %7038 = vmatprep.subr.mxu0 0.0
        %7039 = vmatpush1.msra.mxu0 0.0
        %7040 = vmatprep.subr.mxu0 0.0
        %7041 = vmatpush1.msra.mxu0 0.0
        %7042 = vmatprep.subr.mxu0 0.0
        %7043 = vmatpush1.msra.mxu0 0.0
        %7044 = vmatprep.subr.mxu0 0.0
        %7045 = vmatpush1.msra.mxu0 0.0
        %7046 = vmatprep.subr.mxu0 0.0
        %7047 = vmatpush1.msra.mxu0 0.0
        %7048 = vmatprep.subr.mxu0 0.0
        %7049 = vmatpush1.msra.mxu0 0.0
        %7050 = vmatprep.subr.mxu0 0.0
        %7051 = vmatpush1.msra.mxu0 0.0
        %7052 = vmatprep.subr.mxu0 0.0
        %7053 = vmatpush1.msra.mxu0 0.0
        %7054 = vmatprep.subr.mxu0 0.0
        %7055 = vmatpush1.msra.mxu0 0.0
        %7056 = vmatprep.subr.mxu0 0.0
        %7057 = vmatpush1.msra.mxu0 0.0
        %7058 = vmatprep.subr.mxu0 0.0
        %7059 = vmatpush1.msra.mxu0 0.0
        %7060 = vmatprep.subr.mxu0 0.0
        %7061 = vmatpush1.msra.mxu0 0.0
        %7062 = vmatprep.subr.mxu0 0.0
        %7063 = vmatpush1.msra.mxu0 0.0
        %7064 = vmatprep.subr.mxu0 0.0
        %7065 = vmatpush1.msra.mxu0 0.0
        %7066 = vmatprep.subr.mxu0 0.0
        %7067 = vmatpush1.msra.mxu0 0.0
        %7068 = vmatprep.subr.mxu0 0.0
        %7069 = vmatpush1.msra.mxu0 0.0
        %7070 = vmatprep.mubr.f32.mxu0 0.0
        %7071 = vmatmul.mubr.f32.gmra.mrb[0].mxu0 %v7004
        %v7072 = vpop.f32.mrb[0].mxu0
        %v7073 = vadd.f32 %v7001, %v7072
        %v7074 = vpop.f32.mrb[0].mxu0
        %7075 = vdwg.mxu0
        %v7076 = vadd.f32 %v7073, %v6217
        %v7077 = vsel %vm1970, %v7076, 0.0
        %7078 = vadd.xlane.f32.xlu0 %v7077
        %v7079 = vpop.xlane.xlu0 %7078
        %v7080 = vmul.f32 %v7079, %v2818
        %v7081 = vmul.f32 %v7076, %v7076
        %v7082 = vsel %vm1970, %v7081, 0.0
        %7083 = vadd.xlane.f32.xlu0 %v7082
        %v7084 = vpop.xlane.xlu0 %7083
        %v7085 = vmul.f32 %v7084, %v2818
        %v7086 = vmul.f32 %v7080, %v7080
        %v7087 = vsub.f32 %v7085, %v7086
        %v7088 = vsub.f32 %v7076, %v7080
        %v7089 = vadd.f32 %v7087, 1e-05
        %v7090 = vrsqrt.pop %v7089
        %v7091 = vmul.f32 %v7088, %v7090
        %v7093 = vlaneseq
        %v7094 = vshrl.u32 %v7093, 7
        %v7095 = vsub.s32 0, %v7094
        %v7096 = vrot.slane %v6233, %v7095
        %v7098 = vmul.f32 %v7091, %v7096
        %v7100 = vlaneseq
        %v7101 = vshrl.u32 %v7100, 7
        %v7102 = vsub.s32 0, %v7101
        %v7103 = vrot.slane %v6235, %v7102
        %v7105 = vadd.f32 %v7098, %v7103
        %v7106 = vmul.f32 %v7105, %v5043
        %s7107 = scalar_lea.vmem %s55, 32
        %v7108 = vld [vmem:[%s7107] sm:$0xff]
        %v7109 = vld [vmem:[%s7107 + $0x8] sm:$0xff]
        %v7110 = vld [vmem:[%s7107 + $0x10] sm:$0xff]
        %v7111 = vld [vmem:[%s7107 + $0x18] sm:$0xff]
        %s7112 = scalar_lea.vmem [#allocation15], 1
        %v7113 = vld [vmem:[%s7112] sm:$0x1]
        %s7114 = scalar_lea.vmem %s59, 32
        %v7115 = vld [vmem:[%s7114] sm:$0xff]
        %v7116 = vld [vmem:[%s7114 + $0x8] sm:$0xff]
        %v7117 = vld [vmem:[%s7114 + $0x10] sm:$0xff]
        %v7118 = vld [vmem:[%s7114 + $0x18] sm:$0xff]
        %s7119 = scalar_lea.vmem [#allocation16], 1
        %v7120 = vld [vmem:[%s7119] sm:$0x1]
        %s7121 = scalar_lea.vmem %s63, 32
        %v7122 = vld [vmem:[%s7121] sm:$0xff]
        %v7123 = vld [vmem:[%s7121 + $0x8] sm:$0xff]
        %v7124 = vld [vmem:[%s7121 + $0x10] sm:$0xff]
        %v7125 = vld [vmem:[%s7121 + $0x18] sm:$0xff]
        %s7126 = scalar_lea.vmem [#allocation18], 1
        %v7127 = vld [vmem:[%s7126] sm:$0x1]
        %s7128 = scalar_lea.vmem [#allocation19], 1
        %v7129 = vld [vmem:[%s7128] sm:$0x1]
        %s7130 = scalar_lea.vmem [#allocation21], 1
        %v7131 = vld [vmem:[%s7130] sm:$0x1]
        %v7133 = vlaneseq
        %v7134 = vshrl.u32 %v7133, 7
        %v7135 = vsub.s32 0, %v7134
        %v7136 = vrot.slane %v7113, %v7135
        %v7139 = vsel %vm1970, %v7106, 0
        %7141 = vmatprep.subr.mxu0 0.0
        %7142 = vmatpush1.msra.mxu0 %v7108
        %7143 = vmatprep.subr.mxu0 0.0
        %7144 = vmatpush1.msra.mxu0 %v7109
        %7145 = vmatprep.subr.mxu0 0.0
        %7146 = vmatpush1.msra.mxu0 %v7110
        %7147 = vmatprep.subr.mxu0 0.0
        %7148 = vmatpush1.msra.mxu0 %v7111
        %7149 = vmatprep.subr.mxu0 0.0
        %7150 = vmatpush1.msra.mxu0 0.0
        %7151 = vmatprep.subr.mxu0 0.0
        %7152 = vmatpush1.msra.mxu0 0.0
        %7153 = vmatprep.subr.mxu0 0.0
        %7154 = vmatpush1.msra.mxu0 0.0
        %7155 = vmatprep.subr.mxu0 0.0
        %7156 = vmatpush1.msra.mxu0 0.0
        %7157 = vmatprep.subr.mxu0 0.0
        %7158 = vmatpush1.msra.mxu0 0.0
        %7159 = vmatprep.subr.mxu0 0.0
        %7160 = vmatpush1.msra.mxu0 0.0
        %7161 = vmatprep.subr.mxu0 0.0
        %7162 = vmatpush1.msra.mxu0 0.0
        %7163 = vmatprep.subr.mxu0 0.0
        %7164 = vmatpush1.msra.mxu0 0.0
        %7165 = vmatprep.subr.mxu0 0.0
        %7166 = vmatpush1.msra.mxu0 0.0
        %7167 = vmatprep.subr.mxu0 0.0
        %7168 = vmatpush1.msra.mxu0 0.0
        %7169 = vmatprep.subr.mxu0 0.0
        %7170 = vmatpush1.msra.mxu0 0.0
        %7171 = vmatprep.subr.mxu0 0.0
        %7172 = vmatpush1.msra.mxu0 0.0
        %7173 = vmatprep.subr.mxu0 0.0
        %7174 = vmatpush1.msra.mxu0 0.0
        %7175 = vmatprep.subr.mxu0 0.0
        %7176 = vmatpush1.msra.mxu0 0.0
        %7177 = vmatprep.subr.mxu0 0.0
        %7178 = vmatpush1.msra.mxu0 0.0
        %7179 = vmatprep.subr.mxu0 0.0
        %7180 = vmatpush1.msra.mxu0 0.0
        %7181 = vmatprep.subr.mxu0 0.0
        %7182 = vmatpush1.msra.mxu0 0.0
        %7183 = vmatprep.subr.mxu0 0.0
        %7184 = vmatpush1.msra.mxu0 0.0
        %7185 = vmatprep.subr.mxu0 0.0
        %7186 = vmatpush1.msra.mxu0 0.0
        %7187 = vmatprep.subr.mxu0 0.0
        %7188 = vmatpush1.msra.mxu0 0.0
        %7189 = vmatprep.subr.mxu0 0.0
        %7190 = vmatpush1.msra.mxu0 0.0
        %7191 = vmatprep.subr.mxu0 0.0
        %7192 = vmatpush1.msra.mxu0 0.0
        %7193 = vmatprep.subr.mxu0 0.0
        %7194 = vmatpush1.msra.mxu0 0.0
        %7195 = vmatprep.subr.mxu0 0.0
        %7196 = vmatpush1.msra.mxu0 0.0
        %7197 = vmatprep.subr.mxu0 0.0
        %7198 = vmatpush1.msra.mxu0 0.0
        %7199 = vmatprep.subr.mxu0 0.0
        %7200 = vmatpush1.msra.mxu0 0.0
        %7201 = vmatprep.subr.mxu0 0.0
        %7202 = vmatpush1.msra.mxu0 0.0
        %7203 = vmatprep.subr.mxu0 0.0
        %7204 = vmatpush1.msra.mxu0 0.0
        %7205 = vmatprep.mubr.f32.mxu0 0.0
        %7206 = vmatmul.mubr.f32.gmra.mrb[0].mxu0 %v7139
        %v7207 = vpop.f32.mrb[0].mxu0
        %v7208 = vadd.f32 %v7136, %v7207
        %v7209 = vpop.f32.mrb[0].mxu0
        %7210 = vdwg.mxu0
        %v7212 = vlaneseq
        %v7213 = vshrl.u32 %v7212, 7
        %v7214 = vsub.s32 0, %v7213
        %v7215 = vrot.slane %v7120, %v7214
        %7217 = vmatprep.subr.mxu0 0.0
        %7218 = vmatpush1.msra.mxu0 %v7115
        %7219 = vmatprep.subr.mxu0 0.0
        %7220 = vmatpush1.msra.mxu0 %v7116
        %7221 = vmatprep.subr.mxu0 0.0
        %7222 = vmatpush1.msra.mxu0 %v7117
        %7223 = vmatprep.subr.mxu0 0.0
        %7224 = vmatpush1.msra.mxu0 %v7118
        %7225 = vmatprep.subr.mxu0 0.0
        %7226 = vmatpush1.msra.mxu0 0.0
        %7227 = vmatprep.subr.mxu0 0.0
        %7228 = vmatpush1.msra.mxu0 0.0
        %7229 = vmatprep.subr.mxu0 0.0
        %7230 = vmatpush1.msra.mxu0 0.0
        %7231 = vmatprep.subr.mxu0 0.0
        %7232 = vmatpush1.msra.mxu0 0.0
        %7233 = vmatprep.subr.mxu0 0.0
        %7234 = vmatpush1.msra.mxu0 0.0
        %7235 = vmatprep.subr.mxu0 0.0
        %7236 = vmatpush1.msra.mxu0 0.0
        %7237 = vmatprep.subr.mxu0 0.0
        %7238 = vmatpush1.msra.mxu0 0.0
        %7239 = vmatprep.subr.mxu0 0.0
        %7240 = vmatpush1.msra.mxu0 0.0
        %7241 = vmatprep.subr.mxu0 0.0
        %7242 = vmatpush1.msra.mxu0 0.0
        %7243 = vmatprep.subr.mxu0 0.0
        %7244 = vmatpush1.msra.mxu0 0.0
        %7245 = vmatprep.subr.mxu0 0.0
        %7246 = vmatpush1.msra.mxu0 0.0
        %7247 = vmatprep.subr.mxu0 0.0
        %7248 = vmatpush1.msra.mxu0 0.0
        %7249 = vmatprep.subr.mxu0 0.0
        %7250 = vmatpush1.msra.mxu0 0.0
        %7251 = vmatprep.subr.mxu0 0.0
        %7252 = vmatpush1.msra.mxu0 0.0
        %7253 = vmatprep.subr.mxu0 0.0
        %7254 = vmatpush1.msra.mxu0 0.0
        %7255 = vmatprep.subr.mxu0 0.0
        %7256 = vmatpush1.msra.mxu0 0.0
        %7257 = vmatprep.subr.mxu0 0.0
        %7258 = vmatpush1.msra.mxu0 0.0
        %7259 = vmatprep.subr.mxu0 0.0
        %7260 = vmatpush1.msra.mxu0 0.0
        %7261 = vmatprep.subr.mxu0 0.0
        %7262 = vmatpush1.msra.mxu0 0.0
        %7263 = vmatprep.subr.mxu0 0.0
        %7264 = vmatpush1.msra.mxu0 0.0
        %7265 = vmatprep.subr.mxu0 0.0
        %7266 = vmatpush1.msra.mxu0 0.0
        %7267 = vmatprep.subr.mxu0 0.0
        %7268 = vmatpush1.msra.mxu0 0.0
        %7269 = vmatprep.subr.mxu0 0.0
        %7270 = vmatpush1.msra.mxu0 0.0
        %7271 = vmatprep.subr.mxu0 0.0
        %7272 = vmatpush1.msra.mxu0 0.0
        %7273 = vmatprep.subr.mxu0 0.0
        %7274 = vmatpush1.msra.mxu0 0.0
        %7275 = vmatprep.subr.mxu0 0.0
        %7276 = vmatpush1.msra.mxu0 0.0
        %7277 = vmatprep.subr.mxu0 0.0
        %7278 = vmatpush1.msra.mxu0 0.0
        %7279 = vmatprep.subr.mxu0 0.0
        %7280 = vmatpush1.msra.mxu0 0.0
        %7281 = vmatprep.mubr.f32.mxu0 0.0
        %7282 = vmatmul.mubr.f32.gmra.mrb[0].mxu0 %v5149
        %v7283 = vpop.f32.mrb[0].mxu0
        %v7284 = vadd.f32 %v7215, %v7283
        %v7285 = vpop.f32.mrb[0].mxu0
        %7286 = vdwg.mxu0
        %v7288 = vsel %vm2047, %v7208, 0
        %v7291 = vsel %vm2047, %v7284, 0
        %7293 = vmatprep.subr.mxu0 0.0
        %7294 = vmatpush1.xpose.msra.mxu0 %v7291
        %7295 = vmatprep.subr.mxu0 0.0
        %7296 = vmatpush1.xpose.msra.mxu0 0.0
        %7297 = vmatprep.subr.mxu0 0.0
        %7298 = vmatpush1.xpose.msra.mxu0 0.0
        %7299 = vmatprep.subr.mxu0 0.0
        %7300 = vmatpush1.xpose.msra.mxu0 0.0
        %7301 = vmatprep.subr.mxu0 0.0
        %7302 = vmatpush1.xpose.msra.mxu0 0.0
        %7303 = vmatprep.subr.mxu0 0.0
        %7304 = vmatpush1.xpose.msra.mxu0 0.0
        %7305 = vmatprep.subr.mxu0 0.0
        %7306 = vmatpush1.xpose.msra.mxu0 0.0
        %7307 = vmatprep.subr.mxu0 0.0
        %7308 = vmatpush1.xpose.msra.mxu0 0.0
        %7309 = vmatprep.subr.mxu0 0.0
        %7310 = vmatpush1.xpose.msra.mxu0 0.0
        %7311 = vmatprep.subr.mxu0 0.0
        %7312 = vmatpush1.xpose.msra.mxu0 0.0
        %7313 = vmatprep.subr.mxu0 0.0
        %7314 = vmatpush1.xpose.msra.mxu0 0.0
        %7315 = vmatprep.subr.mxu0 0.0
        %7316 = vmatpush1.xpose.msra.mxu0 0.0
        %7317 = vmatprep.subr.mxu0 0.0
        %7318 = vmatpush1.xpose.msra.mxu0 0.0
        %7319 = vmatprep.subr.mxu0 0.0
        %7320 = vmatpush1.xpose.msra.mxu0 0.0
        %7321 = vmatprep.subr.mxu0 0.0
        %7322 = vmatpush1.xpose.msra.mxu0 0.0
        %7323 = vmatprep.subr.mxu0 0.0
        %7324 = vmatpush1.xpose.msra.mxu0 0.0
        %7325 = vmatprep.subr.mxu0 0.0
        %7326 = vmatpush1.xpose.msra.mxu0 0.0
        %7327 = vmatprep.subr.mxu0 0.0
        %7328 = vmatpush1.xpose.msra.mxu0 0.0
        %7329 = vmatprep.subr.mxu0 0.0
        %7330 = vmatpush1.xpose.msra.mxu0 0.0
        %7331 = vmatprep.subr.mxu0 0.0
        %7332 = vmatpush1.xpose.msra.mxu0 0.0
        %7333 = vmatprep.subr.mxu0 0.0
        %7334 = vmatpush1.xpose.msra.mxu0 0.0
        %7335 = vmatprep.subr.mxu0 0.0
        %7336 = vmatpush1.xpose.msra.mxu0 0.0
        %7337 = vmatprep.subr.mxu0 0.0
        %7338 = vmatpush1.xpose.msra.mxu0 0.0
        %7339 = vmatprep.subr.mxu0 0.0
        %7340 = vmatpush1.xpose.msra.mxu0 0.0
        %7341 = vmatprep.subr.mxu0 0.0
        %7342 = vmatpush1.xpose.msra.mxu0 0.0
        %7343 = vmatprep.subr.mxu0 0.0
        %7344 = vmatpush1.xpose.msra.mxu0 0.0
        %7345 = vmatprep.subr.mxu0 0.0
        %7346 = vmatpush1.xpose.msra.mxu0 0.0
        %7347 = vmatprep.subr.mxu0 0.0
        %7348 = vmatpush1.xpose.msra.mxu0 0.0
        %7349 = vmatprep.subr.mxu0 0.0
        %7350 = vmatpush1.xpose.msra.mxu0 0.0
        %7351 = vmatprep.subr.mxu0 0.0
        %7352 = vmatpush1.xpose.msra.mxu0 0.0
        %7353 = vmatprep.subr.mxu0 0.0
        %7354 = vmatpush1.xpose.msra.mxu0 0.0
        %7355 = vmatprep.subr.mxu0 0.0
        %7356 = vmatpush1.xpose.msra.mxu0 0.0
        %7357 = vmatprep.mubr.f32.mxu0 0.0
        %7358 = vmatmul.mubr.f32.gmra.mrb[0].mxu0 %v7288
        %v7359 = vpop.f32.mrb[0].mxu0
        %v7360 = vadd.f32 0.0, %v7359
        %v7361 = vpop.f32.mrb[0].mxu0
        %7362 = vdwg.mxu0
        %7363 = vrot.lane.b32.xlu0 %v7208, 120
        %v7364 = vpop.permute.xlu0 %7363
        %7365 = vrot.lane.b32.xlu0 %v7284, 120
        %v7366 = vpop.permute.xlu0 %7365
        %v7367 = vsel %vm2047, %v7364, 0
        %v7369 = vsel %vm2047, %v7366, 0
        %7371 = vmatprep.subr.mxu0 0.0
        %7372 = vmatpush1.xpose.msra.mxu0 %v7369
        %7373 = vmatprep.subr.mxu0 0.0
        %7374 = vmatpush1.xpose.msra.mxu0 0.0
        %7375 = vmatprep.subr.mxu0 0.0
        %7376 = vmatpush1.xpose.msra.mxu0 0.0
        %7377 = vmatprep.subr.mxu0 0.0
        %7378 = vmatpush1.xpose.msra.mxu0 0.0
        %7379 = vmatprep.subr.mxu0 0.0
        %7380 = vmatpush1.xpose.msra.mxu0 0.0
        %7381 = vmatprep.subr.mxu0 0.0
        %7382 = vmatpush1.xpose.msra.mxu0 0.0
        %7383 = vmatprep.subr.mxu0 0.0
        %7384 = vmatpush1.xpose.msra.mxu0 0.0
        %7385 = vmatprep.subr.mxu0 0.0
        %7386 = vmatpush1.xpose.msra.mxu0 0.0
        %7387 = vmatprep.subr.mxu0 0.0
        %7388 = vmatpush1.xpose.msra.mxu0 0.0
        %7389 = vmatprep.subr.mxu0 0.0
        %7390 = vmatpush1.xpose.msra.mxu0 0.0
        %7391 = vmatprep.subr.mxu0 0.0
        %7392 = vmatpush1.xpose.msra.mxu0 0.0
        %7393 = vmatprep.subr.mxu0 0.0
        %7394 = vmatpush1.xpose.msra.mxu0 0.0
        %7395 = vmatprep.subr.mxu0 0.0
        %7396 = vmatpush1.xpose.msra.mxu0 0.0
        %7397 = vmatprep.subr.mxu0 0.0
        %7398 = vmatpush1.xpose.msra.mxu0 0.0
        %7399 = vmatprep.subr.mxu0 0.0
        %7400 = vmatpush1.xpose.msra.mxu0 0.0
        %7401 = vmatprep.subr.mxu0 0.0
        %7402 = vmatpush1.xpose.msra.mxu0 0.0
        %7403 = vmatprep.subr.mxu0 0.0
        %7404 = vmatpush1.xpose.msra.mxu0 0.0
        %7405 = vmatprep.subr.mxu0 0.0
        %7406 = vmatpush1.xpose.msra.mxu0 0.0
        %7407 = vmatprep.subr.mxu0 0.0
        %7408 = vmatpush1.xpose.msra.mxu0 0.0
        %7409 = vmatprep.subr.mxu0 0.0
        %7410 = vmatpush1.xpose.msra.mxu0 0.0
        %7411 = vmatprep.subr.mxu0 0.0
        %7412 = vmatpush1.xpose.msra.mxu0 0.0
        %7413 = vmatprep.subr.mxu0 0.0
        %7414 = vmatpush1.xpose.msra.mxu0 0.0
        %7415 = vmatprep.subr.mxu0 0.0
        %7416 = vmatpush1.xpose.msra.mxu0 0.0
        %7417 = vmatprep.subr.mxu0 0.0
        %7418 = vmatpush1.xpose.msra.mxu0 0.0
        %7419 = vmatprep.subr.mxu0 0.0
        %7420 = vmatpush1.xpose.msra.mxu0 0.0
        %7421 = vmatprep.subr.mxu0 0.0
        %7422 = vmatpush1.xpose.msra.mxu0 0.0
        %7423 = vmatprep.subr.mxu0 0.0
        %7424 = vmatpush1.xpose.msra.mxu0 0.0
        %7425 = vmatprep.subr.mxu0 0.0
        %7426 = vmatpush1.xpose.msra.mxu0 0.0
        %7427 = vmatprep.subr.mxu0 0.0
        %7428 = vmatpush1.xpose.msra.mxu0 0.0
        %7429 = vmatprep.subr.mxu0 0.0
        %7430 = vmatpush1.xpose.msra.mxu0 0.0
        %7431 = vmatprep.subr.mxu0 0.0
        %7432 = vmatpush1.xpose.msra.mxu0 0.0
        %7433 = vmatprep.subr.mxu0 0.0
        %7434 = vmatpush1.xpose.msra.mxu0 0.0
        %7435 = vmatprep.mubr.f32.mxu0 0.0
        %7436 = vmatmul.mubr.f32.gmra.mrb[0].mxu0 %v7367
        %v7437 = vpop.f32.mrb[0].mxu0
        %v7438 = vadd.f32 0.0, %v7437
        %v7439 = vpop.f32.mrb[0].mxu0
        %7440 = vdwg.mxu0
        %7441 = vrot.lane.b32.xlu0 %v7208, 112
        %v7442 = vpop.permute.xlu0 %7441
        %7443 = vrot.lane.b32.xlu0 %v7284, 112
        %v7444 = vpop.permute.xlu0 %7443
        %v7445 = vsel %vm2047, %v7442, 0
        %v7447 = vsel %vm2047, %v7444, 0
        %7449 = vmatprep.subr.mxu0 0.0
        %7450 = vmatpush1.xpose.msra.mxu0 %v7447
        %7451 = vmatprep.subr.mxu0 0.0
        %7452 = vmatpush1.xpose.msra.mxu0 0.0
        %7453 = vmatprep.subr.mxu0 0.0
        %7454 = vmatpush1.xpose.msra.mxu0 0.0
        %7455 = vmatprep.subr.mxu0 0.0
        %7456 = vmatpush1.xpose.msra.mxu0 0.0
        %7457 = vmatprep.subr.mxu0 0.0
        %7458 = vmatpush1.xpose.msra.mxu0 0.0
        %7459 = vmatprep.subr.mxu0 0.0
        %7460 = vmatpush1.xpose.msra.mxu0 0.0
        %7461 = vmatprep.subr.mxu0 0.0
        %7462 = vmatpush1.xpose.msra.mxu0 0.0
        %7463 = vmatprep.subr.mxu0 0.0
        %7464 = vmatpush1.xpose.msra.mxu0 0.0
        %7465 = vmatprep.subr.mxu0 0.0
        %7466 = vmatpush1.xpose.msra.mxu0 0.0
        %7467 = vmatprep.subr.mxu0 0.0
        %7468 = vmatpush1.xpose.msra.mxu0 0.0
        %7469 = vmatprep.subr.mxu0 0.0
        %7470 = vmatpush1.xpose.msra.mxu0 0.0
        %7471 = vmatprep.subr.mxu0 0.0
        %7472 = vmatpush1.xpose.msra.mxu0 0.0
        %7473 = vmatprep.subr.mxu0 0.0
        %7474 = vmatpush1.xpose.msra.mxu0 0.0
        %7475 = vmatprep.subr.mxu0 0.0
        %7476 = vmatpush1.xpose.msra.mxu0 0.0
        %7477 = vmatprep.subr.mxu0 0.0
        %7478 = vmatpush1.xpose.msra.mxu0 0.0
        %7479 = vmatprep.subr.mxu0 0.0
        %7480 = vmatpush1.xpose.msra.mxu0 0.0
        %7481 = vmatprep.subr.mxu0 0.0
        %7482 = vmatpush1.xpose.msra.mxu0 0.0
        %7483 = vmatprep.subr.mxu0 0.0
        %7484 = vmatpush1.xpose.msra.mxu0 0.0
        %7485 = vmatprep.subr.mxu0 0.0
        %7486 = vmatpush1.xpose.msra.mxu0 0.0
        %7487 = vmatprep.subr.mxu0 0.0
        %7488 = vmatpush1.xpose.msra.mxu0 0.0
        %7489 = vmatprep.subr.mxu0 0.0
        %7490 = vmatpush1.xpose.msra.mxu0 0.0
        %7491 = vmatprep.subr.mxu0 0.0
        %7492 = vmatpush1.xpose.msra.mxu0 0.0
        %7493 = vmatprep.subr.mxu0 0.0
        %7494 = vmatpush1.xpose.msra.mxu0 0.0
        %7495 = vmatprep.subr.mxu0 0.0
        %7496 = vmatpush1.xpose.msra.mxu0 0.0
        %7497 = vmatprep.subr.mxu0 0.0
        %7498 = vmatpush1.xpose.msra.mxu0 0.0
        %7499 = vmatprep.subr.mxu0 0.0
        %7500 = vmatpush1.xpose.msra.mxu0 0.0
        %7501 = vmatprep.subr.mxu0 0.0
        %7502 = vmatpush1.xpose.msra.mxu0 0.0
        %7503 = vmatprep.subr.mxu0 0.0
        %7504 = vmatpush1.xpose.msra.mxu0 0.0
        %7505 = vmatprep.subr.mxu0 0.0
        %7506 = vmatpush1.xpose.msra.mxu0 0.0
        %7507 = vmatprep.subr.mxu0 0.0
        %7508 = vmatpush1.xpose.msra.mxu0 0.0
        %7509 = vmatprep.subr.mxu0 0.0
        %7510 = vmatpush1.xpose.msra.mxu0 0.0
        %7511 = vmatprep.subr.mxu0 0.0
        %7512 = vmatpush1.xpose.msra.mxu0 0.0
        %7513 = vmatprep.mubr.f32.mxu0 0.0
        %7514 = vmatmul.mubr.f32.gmra.mrb[0].mxu0 %v7445
        %v7515 = vpop.f32.mrb[0].mxu0
        %v7516 = vadd.f32 0.0, %v7515
        %v7517 = vpop.f32.mrb[0].mxu0
        %7518 = vdwg.mxu0
        %7519 = vrot.lane.b32.xlu0 %v7208, 104
        %v7520 = vpop.permute.xlu0 %7519
        %7521 = vrot.lane.b32.xlu0 %v7284, 104
        %v7522 = vpop.permute.xlu0 %7521
        %v7523 = vsel %vm2047, %v7520, 0
        %v7525 = vsel %vm2047, %v7522, 0
        %7527 = vmatprep.subr.mxu0 0.0
        %7528 = vmatpush1.xpose.msra.mxu0 %v7525
        %7529 = vmatprep.subr.mxu0 0.0
        %7530 = vmatpush1.xpose.msra.mxu0 0.0
        %7531 = vmatprep.subr.mxu0 0.0
        %7532 = vmatpush1.xpose.msra.mxu0 0.0
        %7533 = vmatprep.subr.mxu0 0.0
        %7534 = vmatpush1.xpose.msra.mxu0 0.0
        %7535 = vmatprep.subr.mxu0 0.0
        %7536 = vmatpush1.xpose.msra.mxu0 0.0
        %7537 = vmatprep.subr.mxu0 0.0
        %7538 = vmatpush1.xpose.msra.mxu0 0.0
        %7539 = vmatprep.subr.mxu0 0.0
        %7540 = vmatpush1.xpose.msra.mxu0 0.0
        %7541 = vmatprep.subr.mxu0 0.0
        %7542 = vmatpush1.xpose.msra.mxu0 0.0
        %7543 = vmatprep.subr.mxu0 0.0
        %7544 = vmatpush1.xpose.msra.mxu0 0.0
        %7545 = vmatprep.subr.mxu0 0.0
        %7546 = vmatpush1.xpose.msra.mxu0 0.0
        %7547 = vmatprep.subr.mxu0 0.0
        %7548 = vmatpush1.xpose.msra.mxu0 0.0
        %7549 = vmatprep.subr.mxu0 0.0
        %7550 = vmatpush1.xpose.msra.mxu0 0.0
        %7551 = vmatprep.subr.mxu0 0.0
        %7552 = vmatpush1.xpose.msra.mxu0 0.0
        %7553 = vmatprep.subr.mxu0 0.0
        %7554 = vmatpush1.xpose.msra.mxu0 0.0
        %7555 = vmatprep.subr.mxu0 0.0
        %7556 = vmatpush1.xpose.msra.mxu0 0.0
        %7557 = vmatprep.subr.mxu0 0.0
        %7558 = vmatpush1.xpose.msra.mxu0 0.0
        %7559 = vmatprep.subr.mxu0 0.0
        %7560 = vmatpush1.xpose.msra.mxu0 0.0
        %7561 = vmatprep.subr.mxu0 0.0
        %7562 = vmatpush1.xpose.msra.mxu0 0.0
        %7563 = vmatprep.subr.mxu0 0.0
        %7564 = vmatpush1.xpose.msra.mxu0 0.0
        %7565 = vmatprep.subr.mxu0 0.0
        %7566 = vmatpush1.xpose.msra.mxu0 0.0
        %7567 = vmatprep.subr.mxu0 0.0
        %7568 = vmatpush1.xpose.msra.mxu0 0.0
        %7569 = vmatprep.subr.mxu0 0.0
        %7570 = vmatpush1.xpose.msra.mxu0 0.0
        %7571 = vmatprep.subr.mxu0 0.0
        %7572 = vmatpush1.xpose.msra.mxu0 0.0
        %7573 = vmatprep.subr.mxu0 0.0
        %7574 = vmatpush1.xpose.msra.mxu0 0.0
        %7575 = vmatprep.subr.mxu0 0.0
        %7576 = vmatpush1.xpose.msra.mxu0 0.0
        %7577 = vmatprep.subr.mxu0 0.0
        %7578 = vmatpush1.xpose.msra.mxu0 0.0
        %7579 = vmatprep.subr.mxu0 0.0
        %7580 = vmatpush1.xpose.msra.mxu0 0.0
        %7581 = vmatprep.subr.mxu0 0.0
        %7582 = vmatpush1.xpose.msra.mxu0 0.0
        %7583 = vmatprep.subr.mxu0 0.0
        %7584 = vmatpush1.xpose.msra.mxu0 0.0
        %7585 = vmatprep.subr.mxu0 0.0
        %7586 = vmatpush1.xpose.msra.mxu0 0.0
        %7587 = vmatprep.subr.mxu0 0.0
        %7588 = vmatpush1.xpose.msra.mxu0 0.0
        %7589 = vmatprep.subr.mxu0 0.0
        %7590 = vmatpush1.xpose.msra.mxu0 0.0
        %7591 = vmatprep.mubr.f32.mxu0 0.0
        %7592 = vmatmul.mubr.f32.gmra.mrb[0].mxu0 %v7523
        %v7593 = vpop.f32.mrb[0].mxu0
        %v7594 = vadd.f32 0.0, %v7593
        %v7595 = vpop.f32.mrb[0].mxu0
        %7596 = vdwg.mxu0
        %v7597 = vmul.f32 %v7360, 0.35355338
        %v7598 = vmul.f32 %v7438, 0.35355338
        %v7599 = vmul.f32 %v7516, 0.35355338
        %v7600 = vmul.f32 %v7594, 0.35355338
        %v7601 = vadd.f32 %v7597, %v2364
        %v7602 = vadd.f32 %v7598, %v2364
        %v7603 = vadd.f32 %v7599, %v2364
        %v7604 = vadd.f32 %v7600, %v2364
        %v7605 = vsel %vm2047, %v7601, -inf
        %7606 = vmax.xlane.f32.xlu0 %v7605
        %v7607 = vpop.xlane.xlu0 %7606
        %v7608 = vsel %vm2047, %v7602, -inf
        %7609 = vmax.xlane.f32.xlu0 %v7608
        %v7610 = vpop.xlane.xlu0 %7609
        %v7611 = vsel %vm2047, %v7603, -inf
        %7612 = vmax.xlane.f32.xlu0 %v7611
        %v7613 = vpop.xlane.xlu0 %7612
        %v7614 = vsel %vm2047, %v7604, -inf
        %7615 = vmax.xlane.f32.xlu0 %v7614
        %v7616 = vpop.xlane.xlu0 %7615
        %v7617 = vsub.f32 %v7601, %v7607
        %v7618 = vsub.f32 %v7602, %v7610
        %v7619 = vsub.f32 %v7603, %v7613
        %v7620 = vsub.f32 %v7604, %v7616
        %v7621 = vmul.f32 %v7617, 1.442695
        %v7622 = vpow.pop %v7621
        %v7623 = vmul.f32 %v7618, 1.442695
        %v7624 = vpow.pop %v7623
        %v7625 = vmul.f32 %v7619, 1.442695
        %v7626 = vpow.pop %v7625
        %v7627 = vmul.f32 %v7620, 1.442695
        %v7628 = vpow.pop %v7627
        %v7629 = vsel %vm2047, %v7622, 0.0
        %7630 = vadd.xlane.f32.xlu0 %v7629
        %v7631 = vpop.xlane.xlu0 %7630
        %v7632 = vsel %vm2047, %v7624, 0.0
        %7633 = vadd.xlane.f32.xlu0 %v7632
        %v7634 = vpop.xlane.xlu0 %7633
        %v7635 = vsel %vm2047, %v7626, 0.0
        %7636 = vadd.xlane.f32.xlu0 %v7635
        %v7637 = vpop.xlane.xlu0 %7636
        %v7638 = vsel %vm2047, %v7628, 0.0
        %7639 = vadd.xlane.f32.xlu0 %v7638
        %v7640 = vpop.xlane.xlu0 %7639
        %v7641 = vrcp.pop %v7631
        %v7642 = vrcp.pop %v7634
        %v7643 = vrcp.pop %v7637
        %v7644 = vrcp.pop %v7640
        %v7645 = vmul.f32 %v7622, %v7641
        %v7646 = vmul.f32 %v7624, %v7642
        %v7647 = vmul.f32 %v7626, %v7643
        %v7648 = vmul.f32 %v7628, %v7644
        %7649 = vrot.lane.b32.xlu0 %v7284, 96
        %v7650 = vpop.permute.xlu0 %7649
        %v7653 = vsel %vm2047, %v7645, 0
        %7655 = vmatprep.subr.mxu0 0.0
        %7656 = vmatpush1.msra.mxu0 %v7650
        %7657 = vmatprep.subr.mxu0 0.0
        %7658 = vmatpush1.msra.mxu0 0.0
        %7659 = vmatprep.subr.mxu0 0.0
        %7660 = vmatpush1.msra.mxu0 0.0
        %7661 = vmatprep.subr.mxu0 0.0
        %7662 = vmatpush1.msra.mxu0 0.0
        %7663 = vmatprep.subr.mxu0 0.0
        %7664 = vmatpush1.msra.mxu0 0.0
        %7665 = vmatprep.subr.mxu0 0.0
        %7666 = vmatpush1.msra.mxu0 0.0
        %7667 = vmatprep.subr.mxu0 0.0
        %7668 = vmatpush1.msra.mxu0 0.0
        %7669 = vmatprep.subr.mxu0 0.0
        %7670 = vmatpush1.msra.mxu0 0.0
        %7671 = vmatprep.subr.mxu0 0.0
        %7672 = vmatpush1.msra.mxu0 0.0
        %7673 = vmatprep.subr.mxu0 0.0
        %7674 = vmatpush1.msra.mxu0 0.0
        %7675 = vmatprep.subr.mxu0 0.0
        %7676 = vmatpush1.msra.mxu0 0.0
        %7677 = vmatprep.subr.mxu0 0.0
        %7678 = vmatpush1.msra.mxu0 0.0
        %7679 = vmatprep.subr.mxu0 0.0
        %7680 = vmatpush1.msra.mxu0 0.0
        %7681 = vmatprep.subr.mxu0 0.0
        %7682 = vmatpush1.msra.mxu0 0.0
        %7683 = vmatprep.subr.mxu0 0.0
        %7684 = vmatpush1.msra.mxu0 0.0
        %7685 = vmatprep.subr.mxu0 0.0
        %7686 = vmatpush1.msra.mxu0 0.0
        %7687 = vmatprep.subr.mxu0 0.0
        %7688 = vmatpush1.msra.mxu0 0.0
        %7689 = vmatprep.subr.mxu0 0.0
        %7690 = vmatpush1.msra.mxu0 0.0
        %7691 = vmatprep.subr.mxu0 0.0
        %7692 = vmatpush1.msra.mxu0 0.0
        %7693 = vmatprep.subr.mxu0 0.0
        %7694 = vmatpush1.msra.mxu0 0.0
        %7695 = vmatprep.subr.mxu0 0.0
        %7696 = vmatpush1.msra.mxu0 0.0
        %7697 = vmatprep.subr.mxu0 0.0
        %7698 = vmatpush1.msra.mxu0 0.0
        %7699 = vmatprep.subr.mxu0 0.0
        %7700 = vmatpush1.msra.mxu0 0.0
        %7701 = vmatprep.subr.mxu0 0.0
        %7702 = vmatpush1.msra.mxu0 0.0
        %7703 = vmatprep.subr.mxu0 0.0
        %7704 = vmatpush1.msra.mxu0 0.0
        %7705 = vmatprep.subr.mxu0 0.0
        %7706 = vmatpush1.msra.mxu0 0.0
        %7707 = vmatprep.subr.mxu0 0.0
        %7708 = vmatpush1.msra.mxu0 0.0
        %7709 = vmatprep.subr.mxu0 0.0
        %7710 = vmatpush1.msra.mxu0 0.0
        %7711 = vmatprep.subr.mxu0 0.0
        %7712 = vmatpush1.msra.mxu0 0.0
        %7713 = vmatprep.subr.mxu0 0.0
        %7714 = vmatpush1.msra.mxu0 0.0
        %7715 = vmatprep.subr.mxu0 0.0
        %7716 = vmatpush1.msra.mxu0 0.0
        %7717 = vmatprep.subr.mxu0 0.0
        %7718 = vmatpush1.msra.mxu0 0.0
        %7719 = vmatprep.mubr.f32.mxu0 0.0
        %7720 = vmatmul.mubr.f32.gmra.mrb[0].mxu0 %v7653
        %v7721 = vpop.f32.mrb[0].mxu0
        %v7722 = vadd.f32 0.0, %v7721
        %v7723 = vpop.f32.mrb[0].mxu0
        %7724 = vdwg.mxu0
        %7725 = vrot.lane.b32.xlu0 %v7284, 88
        %v7726 = vpop.permute.xlu0 %7725
        %v7729 = vsel %vm2047, %v7646, 0
        %7731 = vmatprep.subr.mxu0 0.0
        %7732 = vmatpush1.msra.mxu0 %v7726
        %7733 = vmatprep.subr.mxu0 0.0
        %7734 = vmatpush1.msra.mxu0 0.0
        %7735 = vmatprep.subr.mxu0 0.0
        %7736 = vmatpush1.msra.mxu0 0.0
        %7737 = vmatprep.subr.mxu0 0.0
        %7738 = vmatpush1.msra.mxu0 0.0
        %7739 = vmatprep.subr.mxu0 0.0
        %7740 = vmatpush1.msra.mxu0 0.0
        %7741 = vmatprep.subr.mxu0 0.0
        %7742 = vmatpush1.msra.mxu0 0.0
        %7743 = vmatprep.subr.mxu0 0.0
        %7744 = vmatpush1.msra.mxu0 0.0
        %7745 = vmatprep.subr.mxu0 0.0
        %7746 = vmatpush1.msra.mxu0 0.0
        %7747 = vmatprep.subr.mxu0 0.0
        %7748 = vmatpush1.msra.mxu0 0.0
        %7749 = vmatprep.subr.mxu0 0.0
        %7750 = vmatpush1.msra.mxu0 0.0
        %7751 = vmatprep.subr.mxu0 0.0
        %7752 = vmatpush1.msra.mxu0 0.0
        %7753 = vmatprep.subr.mxu0 0.0
        %7754 = vmatpush1.msra.mxu0 0.0
        %7755 = vmatprep.subr.mxu0 0.0
        %7756 = vmatpush1.msra.mxu0 0.0
        %7757 = vmatprep.subr.mxu0 0.0
        %7758 = vmatpush1.msra.mxu0 0.0
        %7759 = vmatprep.subr.mxu0 0.0
        %7760 = vmatpush1.msra.mxu0 0.0
        %7761 = vmatprep.subr.mxu0 0.0
        %7762 = vmatpush1.msra.mxu0 0.0
        %7763 = vmatprep.subr.mxu0 0.0
        %7764 = vmatpush1.msra.mxu0 0.0
        %7765 = vmatprep.subr.mxu0 0.0
        %7766 = vmatpush1.msra.mxu0 0.0
        %7767 = vmatprep.subr.mxu0 0.0
        %7768 = vmatpush1.msra.mxu0 0.0
        %7769 = vmatprep.subr.mxu0 0.0
        %7770 = vmatpush1.msra.mxu0 0.0
        %7771 = vmatprep.subr.mxu0 0.0
        %7772 = vmatpush1.msra.mxu0 0.0
        %7773 = vmatprep.subr.mxu0 0.0
        %7774 = vmatpush1.msra.mxu0 0.0
        %7775 = vmatprep.subr.mxu0 0.0
        %7776 = vmatpush1.msra.mxu0 0.0
        %7777 = vmatprep.subr.mxu0 0.0
        %7778 = vmatpush1.msra.mxu0 0.0
        %7779 = vmatprep.subr.mxu0 0.0
        %7780 = vmatpush1.msra.mxu0 0.0
        %7781 = vmatprep.subr.mxu0 0.0
        %7782 = vmatpush1.msra.mxu0 0.0
        %7783 = vmatprep.subr.mxu0 0.0
        %7784 = vmatpush1.msra.mxu0 0.0
        %7785 = vmatprep.subr.mxu0 0.0
        %7786 = vmatpush1.msra.mxu0 0.0
        %7787 = vmatprep.subr.mxu0 0.0
        %7788 = vmatpush1.msra.mxu0 0.0
        %7789 = vmatprep.subr.mxu0 0.0
        %7790 = vmatpush1.msra.mxu0 0.0
        %7791 = vmatprep.subr.mxu0 0.0
        %7792 = vmatpush1.msra.mxu0 0.0
        %7793 = vmatprep.subr.mxu0 0.0
        %7794 = vmatpush1.msra.mxu0 0.0
        %7795 = vmatprep.mubr.f32.mxu0 0.0
        %7796 = vmatmul.mubr.f32.gmra.mrb[0].mxu0 %v7729
        %v7797 = vpop.f32.mrb[0].mxu0
        %v7798 = vadd.f32 0.0, %v7797
        %v7799 = vpop.f32.mrb[0].mxu0
        %7800 = vdwg.mxu0
        %7801 = vrot.lane.b32.xlu0 %v7284, 80
        %v7802 = vpop.permute.xlu0 %7801
        %v7805 = vsel %vm2047, %v7647, 0
        %7807 = vmatprep.subr.mxu0 0.0
        %7808 = vmatpush1.msra.mxu0 %v7802
        %7809 = vmatprep.subr.mxu0 0.0
        %7810 = vmatpush1.msra.mxu0 0.0
        %7811 = vmatprep.subr.mxu0 0.0
        %7812 = vmatpush1.msra.mxu0 0.0
        %7813 = vmatprep.subr.mxu0 0.0
        %7814 = vmatpush1.msra.mxu0 0.0
        %7815 = vmatprep.subr.mxu0 0.0
        %7816 = vmatpush1.msra.mxu0 0.0
        %7817 = vmatprep.subr.mxu0 0.0
        %7818 = vmatpush1.msra.mxu0 0.0
        %7819 = vmatprep.subr.mxu0 0.0
        %7820 = vmatpush1.msra.mxu0 0.0
        %7821 = vmatprep.subr.mxu0 0.0
        %7822 = vmatpush1.msra.mxu0 0.0
        %7823 = vmatprep.subr.mxu0 0.0
        %7824 = vmatpush1.msra.mxu0 0.0
        %7825 = vmatprep.subr.mxu0 0.0
        %7826 = vmatpush1.msra.mxu0 0.0
        %7827 = vmatprep.subr.mxu0 0.0
        %7828 = vmatpush1.msra.mxu0 0.0
        %7829 = vmatprep.subr.mxu0 0.0
        %7830 = vmatpush1.msra.mxu0 0.0
        %7831 = vmatprep.subr.mxu0 0.0
        %7832 = vmatpush1.msra.mxu0 0.0
        %7833 = vmatprep.subr.mxu0 0.0
        %7834 = vmatpush1.msra.mxu0 0.0
        %7835 = vmatprep.subr.mxu0 0.0
        %7836 = vmatpush1.msra.mxu0 0.0
        %7837 = vmatprep.subr.mxu0 0.0
        %7838 = vmatpush1.msra.mxu0 0.0
        %7839 = vmatprep.subr.mxu0 0.0
        %7840 = vmatpush1.msra.mxu0 0.0
        %7841 = vmatprep.subr.mxu0 0.0
        %7842 = vmatpush1.msra.mxu0 0.0
        %7843 = vmatprep.subr.mxu0 0.0
        %7844 = vmatpush1.msra.mxu0 0.0
        %7845 = vmatprep.subr.mxu0 0.0
        %7846 = vmatpush1.msra.mxu0 0.0
        %7847 = vmatprep.subr.mxu0 0.0
        %7848 = vmatpush1.msra.mxu0 0.0
        %7849 = vmatprep.subr.mxu0 0.0
        %7850 = vmatpush1.msra.mxu0 0.0
        %7851 = vmatprep.subr.mxu0 0.0
        %7852 = vmatpush1.msra.mxu0 0.0
        %7853 = vmatprep.subr.mxu0 0.0
        %7854 = vmatpush1.msra.mxu0 0.0
        %7855 = vmatprep.subr.mxu0 0.0
        %7856 = vmatpush1.msra.mxu0 0.0
        %7857 = vmatprep.subr.mxu0 0.0
        %7858 = vmatpush1.msra.mxu0 0.0
        %7859 = vmatprep.subr.mxu0 0.0
        %7860 = vmatpush1.msra.mxu0 0.0
        %7861 = vmatprep.subr.mxu0 0.0
        %7862 = vmatpush1.msra.mxu0 0.0
        %7863 = vmatprep.subr.mxu0 0.0
        %7864 = vmatpush1.msra.mxu0 0.0
        %7865 = vmatprep.subr.mxu0 0.0
        %7866 = vmatpush1.msra.mxu0 0.0
        %7867 = vmatprep.subr.mxu0 0.0
        %7868 = vmatpush1.msra.mxu0 0.0
        %7869 = vmatprep.subr.mxu0 0.0
        %7870 = vmatpush1.msra.mxu0 0.0
        %7871 = vmatprep.mubr.f32.mxu0 0.0
        %7872 = vmatmul.mubr.f32.gmra.mrb[0].mxu0 %v7805
        %v7873 = vpop.f32.mrb[0].mxu0
        %v7874 = vadd.f32 0.0, %v7873
        %v7875 = vpop.f32.mrb[0].mxu0
        %7876 = vdwg.mxu0
        %7877 = vrot.lane.b32.xlu0 %v7284, 72
        %v7878 = vpop.permute.xlu0 %7877
        %v7881 = vsel %vm2047, %v7648, 0
        %7883 = vmatprep.subr.mxu0 0.0
        %7884 = vmatpush1.msra.mxu0 %v7878
        %7885 = vmatprep.subr.mxu0 0.0
        %7886 = vmatpush1.msra.mxu0 0.0
        %7887 = vmatprep.subr.mxu0 0.0
        %7888 = vmatpush1.msra.mxu0 0.0
        %7889 = vmatprep.subr.mxu0 0.0
        %7890 = vmatpush1.msra.mxu0 0.0
        %7891 = vmatprep.subr.mxu0 0.0
        %7892 = vmatpush1.msra.mxu0 0.0
        %7893 = vmatprep.subr.mxu0 0.0
        %7894 = vmatpush1.msra.mxu0 0.0
        %7895 = vmatprep.subr.mxu0 0.0
        %7896 = vmatpush1.msra.mxu0 0.0
        %7897 = vmatprep.subr.mxu0 0.0
        %7898 = vmatpush1.msra.mxu0 0.0
        %7899 = vmatprep.subr.mxu0 0.0
        %7900 = vmatpush1.msra.mxu0 0.0
        %7901 = vmatprep.subr.mxu0 0.0
        %7902 = vmatpush1.msra.mxu0 0.0
        %7903 = vmatprep.subr.mxu0 0.0
        %7904 = vmatpush1.msra.mxu0 0.0
        %7905 = vmatprep.subr.mxu0 0.0
        %7906 = vmatpush1.msra.mxu0 0.0
        %7907 = vmatprep.subr.mxu0 0.0
        %7908 = vmatpush1.msra.mxu0 0.0
        %7909 = vmatprep.subr.mxu0 0.0
        %7910 = vmatpush1.msra.mxu0 0.0
        %7911 = vmatprep.subr.mxu0 0.0
        %7912 = vmatpush1.msra.mxu0 0.0
        %7913 = vmatprep.subr.mxu0 0.0
        %7914 = vmatpush1.msra.mxu0 0.0
        %7915 = vmatprep.subr.mxu0 0.0
        %7916 = vmatpush1.msra.mxu0 0.0
        %7917 = vmatprep.subr.mxu0 0.0
        %7918 = vmatpush1.msra.mxu0 0.0
        %7919 = vmatprep.subr.mxu0 0.0
        %7920 = vmatpush1.msra.mxu0 0.0
        %7921 = vmatprep.subr.mxu0 0.0
        %7922 = vmatpush1.msra.mxu0 0.0
        %7923 = vmatprep.subr.mxu0 0.0
        %7924 = vmatpush1.msra.mxu0 0.0
        %7925 = vmatprep.subr.mxu0 0.0
        %7926 = vmatpush1.msra.mxu0 0.0
        %7927 = vmatprep.subr.mxu0 0.0
        %7928 = vmatpush1.msra.mxu0 0.0
        %7929 = vmatprep.subr.mxu0 0.0
        %7930 = vmatpush1.msra.mxu0 0.0
        %7931 = vmatprep.subr.mxu0 0.0
        %7932 = vmatpush1.msra.mxu0 0.0
        %7933 = vmatprep.subr.mxu0 0.0
        %7934 = vmatpush1.msra.mxu0 0.0
        %7935 = vmatprep.subr.mxu0 0.0
        %7936 = vmatpush1.msra.mxu0 0.0
        %7937 = vmatprep.subr.mxu0 0.0
        %7938 = vmatpush1.msra.mxu0 0.0
        %7939 = vmatprep.subr.mxu0 0.0
        %7940 = vmatpush1.msra.mxu0 0.0
        %7941 = vmatprep.subr.mxu0 0.0
        %7942 = vmatpush1.msra.mxu0 0.0
        %7943 = vmatprep.subr.mxu0 0.0
        %7944 = vmatpush1.msra.mxu0 0.0
        %7945 = vmatprep.subr.mxu0 0.0
        %7946 = vmatpush1.msra.mxu0 0.0
        %7947 = vmatprep.mubr.f32.mxu0 0.0
        %7948 = vmatmul.mubr.f32.gmra.mrb[0].mxu0 %v7881
        %v7949 = vpop.f32.mrb[0].mxu0
        %v7950 = vadd.f32 0.0, %v7949
        %v7951 = vpop.f32.mrb[0].mxu0
        %7952 = vdwg.mxu0
        %7954 = vrot.lane.b32.xlu0 %v7798, 8
        %v7955 = vpop.permute.xlu0 %7954
        %7958 = vrot.lane.b32.xlu0 %v7874, 16
        %v7959 = vpop.permute.xlu0 %7958
        %7962 = vrot.lane.b32.xlu0 %v7950, 24
        %v7963 = vpop.permute.xlu0 %7962
        %v7965 = vsel %vm2047, %v7722, %v7955
        %v7966 = vsel %vm2731, %v7965, %v7959
        %v7967 = vsel %vm2733, %v7966, %v7963
        %v7969 = vlaneseq
        %v7970 = vshrl.u32 %v7969, 7
        %v7971 = vsub.s32 0, %v7970
        %v7972 = vrot.slane %v7127, %v7971
        %v7975 = vsel %vm1970, %v7967, 0
        %7977 = vmatprep.subr.mxu0 0.0
        %7978 = vmatpush1.msra.mxu0 %v7122
        %7979 = vmatprep.subr.mxu0 0.0
        %7980 = vmatpush1.msra.mxu0 %v7123
        %7981 = vmatprep.subr.mxu0 0.0
        %7982 = vmatpush1.msra.mxu0 %v7124
        %7983 = vmatprep.subr.mxu0 0.0
        %7984 = vmatpush1.msra.mxu0 %v7125
        %7985 = vmatprep.subr.mxu0 0.0
        %7986 = vmatpush1.msra.mxu0 0.0
        %7987 = vmatprep.subr.mxu0 0.0
        %7988 = vmatpush1.msra.mxu0 0.0
        %7989 = vmatprep.subr.mxu0 0.0
        %7990 = vmatpush1.msra.mxu0 0.0
        %7991 = vmatprep.subr.mxu0 0.0
        %7992 = vmatpush1.msra.mxu0 0.0
        %7993 = vmatprep.subr.mxu0 0.0
        %7994 = vmatpush1.msra.mxu0 0.0
        %7995 = vmatprep.subr.mxu0 0.0
        %7996 = vmatpush1.msra.mxu0 0.0
        %7997 = vmatprep.subr.mxu0 0.0
        %7998 = vmatpush1.msra.mxu0 0.0
        %7999 = vmatprep.subr.mxu0 0.0
        %8000 = vmatpush1.msra.mxu0 0.0
        %8001 = vmatprep.subr.mxu0 0.0
        %8002 = vmatpush1.msra.mxu0 0.0
        %8003 = vmatprep.subr.mxu0 0.0
        %8004 = vmatpush1.msra.mxu0 0.0
        %8005 = vmatprep.subr.mxu0 0.0
        %8006 = vmatpush1.msra.mxu0 0.0
        %8007 = vmatprep.subr.mxu0 0.0
        %8008 = vmatpush1.msra.mxu0 0.0
        %8009 = vmatprep.subr.mxu0 0.0
        %8010 = vmatpush1.msra.mxu0 0.0
        %8011 = vmatprep.subr.mxu0 0.0
        %8012 = vmatpush1.msra.mxu0 0.0
        %8013 = vmatprep.subr.mxu0 0.0
        %8014 = vmatpush1.msra.mxu0 0.0
        %8015 = vmatprep.subr.mxu0 0.0
        %8016 = vmatpush1.msra.mxu0 0.0
        %8017 = vmatprep.subr.mxu0 0.0
        %8018 = vmatpush1.msra.mxu0 0.0
        %8019 = vmatprep.subr.mxu0 0.0
        %8020 = vmatpush1.msra.mxu0 0.0
        %8021 = vmatprep.subr.mxu0 0.0
        %8022 = vmatpush1.msra.mxu0 0.0
        %8023 = vmatprep.subr.mxu0 0.0
        %8024 = vmatpush1.msra.mxu0 0.0
        %8025 = vmatprep.subr.mxu0 0.0
        %8026 = vmatpush1.msra.mxu0 0.0
        %8027 = vmatprep.subr.mxu0 0.0
        %8028 = vmatpush1.msra.mxu0 0.0
        %8029 = vmatprep.subr.mxu0 0.0
        %8030 = vmatpush1.msra.mxu0 0.0
        %8031 = vmatprep.subr.mxu0 0.0
        %8032 = vmatpush1.msra.mxu0 0.0
        %8033 = vmatprep.subr.mxu0 0.0
        %8034 = vmatpush1.msra.mxu0 0.0
        %8035 = vmatprep.subr.mxu0 0.0
        %8036 = vmatpush1.msra.mxu0 0.0
        %8037 = vmatprep.subr.mxu0 0.0
        %8038 = vmatpush1.msra.mxu0 0.0
        %8039 = vmatprep.subr.mxu0 0.0
        %8040 = vmatpush1.msra.mxu0 0.0
        %8041 = vmatprep.mubr.f32.mxu0 0.0
        %8042 = vmatmul.mubr.f32.gmra.mrb[0].mxu0 %v7975
        %v8043 = vpop.f32.mrb[0].mxu0
        %v8044 = vadd.f32 %v7972, %v8043
        %v8045 = vpop.f32.mrb[0].mxu0
        %8046 = vdwg.mxu0
        %v8047 = vadd.f32 %v8044, %v7106
        %v8048 = vsel %vm1970, %v8047, 0.0
        %8049 = vadd.xlane.f32.xlu0 %v8048
        %v8050 = vpop.xlane.xlu0 %8049
        %v8051 = vmul.f32 %v8050, %v2818
        %v8052 = vmul.f32 %v8047, %v8047
        %v8053 = vsel %vm1970, %v8052, 0.0
        %8054 = vadd.xlane.f32.xlu0 %v8053
        %v8055 = vpop.xlane.xlu0 %8054
        %v8056 = vmul.f32 %v8055, %v2818
        %v8057 = vmul.f32 %v8051, %v8051
        %v8058 = vsub.f32 %v8056, %v8057
        %v8059 = vsub.f32 %v8047, %v8051
        %v8060 = vadd.f32 %v8058, 1e-05
        %v8061 = vrsqrt.pop %v8060
        %v8062 = vmul.f32 %v8059, %v8061
        %v8064 = vlaneseq
        %v8065 = vshrl.u32 %v8064, 7
        %v8066 = vsub.s32 0, %v8065
        %v8067 = vrot.slane %v7129, %v8066
        %v8069 = vmul.f32 %v8062, %v8067
        %v8071 = vlaneseq
        %v8072 = vshrl.u32 %v8071, 7
        %v8073 = vsub.s32 0, %v8072
        %v8074 = vrot.slane %v7131, %v8073
        %v8076 = vadd.f32 %v8069, %v8074
        %v8077 = vmul.f32 %v8076, %v5043
        %s8078 = scalar_lea.vmem %s71, 32
        %v8079 = vld [vmem:[%s8078] sm:$0xff]
        %v8080 = vld [vmem:[%s8078 + $0x8] sm:$0xff]
        %v8081 = vld [vmem:[%s8078 + $0x10] sm:$0xff]
        %v8082 = vld [vmem:[%s8078 + $0x18] sm:$0xff]
        %s8083 = scalar_lea.vmem %s73, 1
        %v8084 = vld [vmem:[%s8083] sm:$0x1]
        %s8085 = scalar_lea.vmem %s75, 64
        %v8086 = vld [vmem:[%s8085] sm:$0xff]
        %v8087 = vld [vmem:[%s8085 + $0x8] sm:$0xff]
        %v8088 = vld [vmem:[%s8085 + $0x10] sm:$0xff]
        %v8089 = vld [vmem:[%s8085 + $0x18] sm:$0xff]
        %v8090 = vld [vmem:[%s8085 + $0x20] sm:$0xff]
        %v8091 = vld [vmem:[%s8085 + $0x28] sm:$0xff]
        %v8092 = vld [vmem:[%s8085 + $0x30] sm:$0xff]
        %v8093 = vld [vmem:[%s8085 + $0x38] sm:$0xff]
        %s8094 = scalar_lea.vmem [#allocation22], 1
        %v8095 = vld [vmem:[%s8094] sm:$0x1]
        %s8096 = scalar_lea.vmem %s79, 1
        %v8097 = vld [vmem:[%s8096] sm:$0x1]
        %s8098 = scalar_lea.vmem [#allocation24], 1
        %v8099 = vld [vmem:[%s8098] sm:$0x1]
        %v8101 = vlaneseq
        %v8102 = vshrl.u32 %v8101, 7
        %v8103 = vsub.s32 0, %v8102
        %v8104 = vrot.slane %v8084, %v8103
        %v8107 = vsel %vm1970, %v8077, 0
        %8109 = vmatprep.subr.mxu0 0.0
        %8110 = vmatpush1.msra.mxu0 %v8079
        %8111 = vmatprep.subr.mxu0 0.0
        %8112 = vmatpush1.msra.mxu0 %v8080
        %8113 = vmatprep.subr.mxu0 0.0
        %8114 = vmatpush1.msra.mxu0 %v8081
        %8115 = vmatprep.subr.mxu0 0.0
        %8116 = vmatpush1.msra.mxu0 %v8082
        %8117 = vmatprep.subr.mxu0 0.0
        %8118 = vmatpush1.msra.mxu0 0.0
        %8119 = vmatprep.subr.mxu0 0.0
        %8120 = vmatpush1.msra.mxu0 0.0
        %8121 = vmatprep.subr.mxu0 0.0
        %8122 = vmatpush1.msra.mxu0 0.0
        %8123 = vmatprep.subr.mxu0 0.0
        %8124 = vmatpush1.msra.mxu0 0.0
        %8125 = vmatprep.subr.mxu0 0.0
        %8126 = vmatpush1.msra.mxu0 0.0
        %8127 = vmatprep.subr.mxu0 0.0
        %8128 = vmatpush1.msra.mxu0 0.0
        %8129 = vmatprep.subr.mxu0 0.0
        %8130 = vmatpush1.msra.mxu0 0.0
        %8131 = vmatprep.subr.mxu0 0.0
        %8132 = vmatpush1.msra.mxu0 0.0
        %8133 = vmatprep.subr.mxu0 0.0
        %8134 = vmatpush1.msra.mxu0 0.0
        %8135 = vmatprep.subr.mxu0 0.0
        %8136 = vmatpush1.msra.mxu0 0.0
        %8137 = vmatprep.subr.mxu0 0.0
        %8138 = vmatpush1.msra.mxu0 0.0
        %8139 = vmatprep.subr.mxu0 0.0
        %8140 = vmatpush1.msra.mxu0 0.0
        %8141 = vmatprep.subr.mxu0 0.0
        %8142 = vmatpush1.msra.mxu0 0.0
        %8143 = vmatprep.subr.mxu0 0.0
        %8144 = vmatpush1.msra.mxu0 0.0
        %8145 = vmatprep.subr.mxu0 0.0
        %8146 = vmatpush1.msra.mxu0 0.0
        %8147 = vmatprep.subr.mxu0 0.0
        %8148 = vmatpush1.msra.mxu0 0.0
        %8149 = vmatprep.subr.mxu0 0.0
        %8150 = vmatpush1.msra.mxu0 0.0
        %8151 = vmatprep.subr.mxu0 0.0
        %8152 = vmatpush1.msra.mxu0 0.0
        %8153 = vmatprep.subr.mxu0 0.0
        %8154 = vmatpush1.msra.mxu0 0.0
        %8155 = vmatprep.subr.mxu0 0.0
        %8156 = vmatpush1.msra.mxu0 0.0
        %8157 = vmatprep.subr.mxu0 0.0
        %8158 = vmatpush1.msra.mxu0 0.0
        %8159 = vmatprep.subr.mxu0 0.0
        %8160 = vmatpush1.msra.mxu0 0.0
        %8161 = vmatprep.subr.mxu0 0.0
        %8162 = vmatpush1.msra.mxu0 0.0
        %8163 = vmatprep.subr.mxu0 0.0
        %8164 = vmatpush1.msra.mxu0 0.0
        %8165 = vmatprep.subr.mxu0 0.0
        %8166 = vmatpush1.msra.mxu0 0.0
        %8167 = vmatprep.subr.mxu0 0.0
        %8168 = vmatpush1.msra.mxu0 0.0
        %8169 = vmatprep.subr.mxu0 0.0
        %8170 = vmatpush1.msra.mxu0 0.0
        %8171 = vmatprep.subr.mxu0 0.0
        %8172 = vmatpush1.msra.mxu0 0.0
        %8173 = vmatprep.mubr.f32.mxu0 0.0
        %8174 = vmatmul.mubr.f32.gmra.mrb[0].mxu0 %v8107
        %v8175 = vpop.f32.mrb[0].mxu0
        %v8176 = vadd.f32 %v8104, %v8175
        %v8177 = vpop.f32.mrb[0].mxu0
        %8178 = vdwg.mxu0
        %v8179 = vmax.f32 %v8176, 0.0
        %v8181 = vlaneseq
        %v8182 = vshrl.u32 %v8181, 7
        %v8183 = vsub.s32 0, %v8182
        %v8184 = vrot.slane %v8095, %v8183
        %v8187 = vsel %vm1619, %v8179, 0
        %8189 = vmatprep.subr.mxu0 0.0
        %8190 = vmatpush1.msra.mxu0 %v8086
        %8191 = vmatprep.subr.mxu0 0.0
        %8192 = vmatpush1.msra.mxu0 %v8087
        %8193 = vmatprep.subr.mxu0 0.0
        %8194 = vmatpush1.msra.mxu0 %v8088
        %8195 = vmatprep.subr.mxu0 0.0
        %8196 = vmatpush1.msra.mxu0 %v8089
        %8197 = vmatprep.subr.mxu0 0.0
        %8198 = vmatpush1.msra.mxu0 %v8090
        %8199 = vmatprep.subr.mxu0 0.0
        %8200 = vmatpush1.msra.mxu0 %v8091
        %8201 = vmatprep.subr.mxu0 0.0
        %8202 = vmatpush1.msra.mxu0 %v8092
        %8203 = vmatprep.subr.mxu0 0.0
        %8204 = vmatpush1.msra.mxu0 %v8093
        %8205 = vmatprep.subr.mxu0 0.0
        %8206 = vmatpush1.msra.mxu0 0.0
        %8207 = vmatprep.subr.mxu0 0.0
        %8208 = vmatpush1.msra.mxu0 0.0
        %8209 = vmatprep.subr.mxu0 0.0
        %8210 = vmatpush1.msra.mxu0 0.0
        %8211 = vmatprep.subr.mxu0 0.0
        %8212 = vmatpush1.msra.mxu0 0.0
        %8213 = vmatprep.subr.mxu0 0.0
        %8214 = vmatpush1.msra.mxu0 0.0
        %8215 = vmatprep.subr.mxu0 0.0
        %8216 = vmatpush1.msra.mxu0 0.0
        %8217 = vmatprep.subr.mxu0 0.0
        %8218 = vmatpush1.msra.mxu0 0.0
        %8219 = vmatprep.subr.mxu0 0.0
        %8220 = vmatpush1.msra.mxu0 0.0
        %8221 = vmatprep.subr.mxu0 0.0
        %8222 = vmatpush1.msra.mxu0 0.0
        %8223 = vmatprep.subr.mxu0 0.0
        %8224 = vmatpush1.msra.mxu0 0.0
        %8225 = vmatprep.subr.mxu0 0.0
        %8226 = vmatpush1.msra.mxu0 0.0
        %8227 = vmatprep.subr.mxu0 0.0
        %8228 = vmatpush1.msra.mxu0 0.0
        %8229 = vmatprep.subr.mxu0 0.0
        %8230 = vmatpush1.msra.mxu0 0.0
        %8231 = vmatprep.subr.mxu0 0.0
        %8232 = vmatpush1.msra.mxu0 0.0
        %8233 = vmatprep.subr.mxu0 0.0
        %8234 = vmatpush1.msra.mxu0 0.0
        %8235 = vmatprep.subr.mxu0 0.0
        %8236 = vmatpush1.msra.mxu0 0.0
        %8237 = vmatprep.subr.mxu0 0.0
        %8238 = vmatpush1.msra.mxu0 0.0
        %8239 = vmatprep.subr.mxu0 0.0
        %8240 = vmatpush1.msra.mxu0 0.0
        %8241 = vmatprep.subr.mxu0 0.0
        %8242 = vmatpush1.msra.mxu0 0.0
        %8243 = vmatprep.subr.mxu0 0.0
        %8244 = vmatpush1.msra.mxu0 0.0
        %8245 = vmatprep.subr.mxu0 0.0
        %8246 = vmatpush1.msra.mxu0 0.0
        %8247 = vmatprep.subr.mxu0 0.0
        %8248 = vmatpush1.msra.mxu0 0.0
        %8249 = vmatprep.subr.mxu0 0.0
        %8250 = vmatpush1.msra.mxu0 0.0
        %8251 = vmatprep.subr.mxu0 0.0
        %8252 = vmatpush1.msra.mxu0 0.0
        %8253 = vmatprep.mubr.f32.mxu0 0.0
        %8254 = vmatmul.mubr.f32.gmra.mrb[0].mxu0 %v8187
        %v8255 = vpop.f32.mrb[0].mxu0
        %v8256 = vadd.f32 %v8184, %v8255
        %v8257 = vpop.f32.mrb[0].mxu0
        %8258 = vdwg.mxu0
        %v8259 = vadd.f32 %v8256, %v8077
        %v8260 = vsel %vm1970, %v8259, 0.0
        %8261 = vadd.xlane.f32.xlu0 %v8260
        %v8262 = vpop.xlane.xlu0 %8261
        %v8263 = vmul.f32 %v8262, %v2818
        %v8264 = vmul.f32 %v8259, %v8259
        %v8265 = vsel %vm1970, %v8264, 0.0
        %8266 = vadd.xlane.f32.xlu0 %v8265
        %v8267 = vpop.xlane.xlu0 %8266
        %v8268 = vmul.f32 %v8267, %v2818
        %v8269 = vmul.f32 %v8263, %v8263
        %v8270 = vsub.f32 %v8268, %v8269
        %v8271 = vsub.f32 %v8259, %v8263
        %v8272 = vadd.f32 %v8270, 1e-05
        %v8273 = vrsqrt.pop %v8272
        %v8274 = vmul.f32 %v8271, %v8273
        %v8276 = vlaneseq
        %v8277 = vshrl.u32 %v8276, 7
        %v8278 = vsub.s32 0, %v8277
        %v8279 = vrot.slane %v8097, %v8278
        %v8281 = vmul.f32 %v8274, %v8279
        %v8283 = vlaneseq
        %v8284 = vshrl.u32 %v8283, 7
        %v8285 = vsub.s32 0, %v8284
        %v8286 = vrot.slane %v8099, %v8285
        %v8288 = vadd.f32 %v8281, %v8286
        %v8289 = vmul.f32 %v8288, %v5043
        %v8290 = vld [vmem:[%s83] sm:$0xff]
        %v8291 = vld [vmem:[%s83 + $0x8] sm:$0xff]
        %v8292 = vld [vmem:[%s83 + $0x10] sm:$0xff]
        %v8293 = vld [vmem:[%s83 + $0x18] sm:$0xff]
        %v8294 = vld [vmem:[%s85] sm:$0x1]
        %v8296 = vlaneseq
        %v8297 = vshrl.u32 %v8296, 7
        %v8298 = vsub.s32 0, %v8297
        %v8299 = vrot.slane %v8294, %v8298
        %v8302 = vsel %vm1970, %v8289, 0
        %8304 = vmatprep.subr.mxu0 0.0
        %8305 = vmatpush1.msra.mxu0 %v8290
        %8306 = vmatprep.subr.mxu0 0.0
        %8307 = vmatpush1.msra.mxu0 %v8291
        %8308 = vmatprep.subr.mxu0 0.0
        %8309 = vmatpush1.msra.mxu0 %v8292
        %8310 = vmatprep.subr.mxu0 0.0
        %8311 = vmatpush1.msra.mxu0 %v8293
        %8312 = vmatprep.subr.mxu0 0.0
        %8313 = vmatpush1.msra.mxu0 0.0
        %8314 = vmatprep.subr.mxu0 0.0
        %8315 = vmatpush1.msra.mxu0 0.0
        %8316 = vmatprep.subr.mxu0 0.0
        %8317 = vmatpush1.msra.mxu0 0.0
        %8318 = vmatprep.subr.mxu0 0.0
        %8319 = vmatpush1.msra.mxu0 0.0
        %8320 = vmatprep.subr.mxu0 0.0
        %8321 = vmatpush1.msra.mxu0 0.0
        %8322 = vmatprep.subr.mxu0 0.0
        %8323 = vmatpush1.msra.mxu0 0.0
        %8324 = vmatprep.subr.mxu0 0.0
        %8325 = vmatpush1.msra.mxu0 0.0
        %8326 = vmatprep.subr.mxu0 0.0
        %8327 = vmatpush1.msra.mxu0 0.0
        %8328 = vmatprep.subr.mxu0 0.0
        %8329 = vmatpush1.msra.mxu0 0.0
        %8330 = vmatprep.subr.mxu0 0.0
        %8331 = vmatpush1.msra.mxu0 0.0
        %8332 = vmatprep.subr.mxu0 0.0
        %8333 = vmatpush1.msra.mxu0 0.0
        %8334 = vmatprep.subr.mxu0 0.0
        %8335 = vmatpush1.msra.mxu0 0.0
        %8336 = vmatprep.subr.mxu0 0.0
        %8337 = vmatpush1.msra.mxu0 0.0
        %8338 = vmatprep.subr.mxu0 0.0
        %8339 = vmatpush1.msra.mxu0 0.0
        %8340 = vmatprep.subr.mxu0 0.0
        %8341 = vmatpush1.msra.mxu0 0.0
        %8342 = vmatprep.subr.mxu0 0.0
        %8343 = vmatpush1.msra.mxu0 0.0
        %8344 = vmatprep.subr.mxu0 0.0
        %8345 = vmatpush1.msra.mxu0 0.0
        %8346 = vmatprep.subr.mxu0 0.0
        %8347 = vmatpush1.msra.mxu0 0.0
        %8348 = vmatprep.subr.mxu0 0.0
        %8349 = vmatpush1.msra.mxu0 0.0
        %8350 = vmatprep.subr.mxu0 0.0
        %8351 = vmatpush1.msra.mxu0 0.0
        %8352 = vmatprep.subr.mxu0 0.0
        %8353 = vmatpush1.msra.mxu0 0.0
        %8354 = vmatprep.subr.mxu0 0.0
        %8355 = vmatpush1.msra.mxu0 0.0
        %8356 = vmatprep.subr.mxu0 0.0
        %8357 = vmatpush1.msra.mxu0 0.0
        %8358 = vmatprep.subr.mxu0 0.0
        %8359 = vmatpush1.msra.mxu0 0.0
        %8360 = vmatprep.subr.mxu0 0.0
        %8361 = vmatpush1.msra.mxu0 0.0
        %8362 = vmatprep.subr.mxu0 0.0
        %8363 = vmatpush1.msra.mxu0 0.0
        %8364 = vmatprep.subr.mxu0 0.0
        %8365 = vmatpush1.msra.mxu0 0.0
        %8366 = vmatprep.subr.mxu0 0.0
        %8367 = vmatpush1.msra.mxu0 0.0
        %8368 = vmatprep.mubr.f32.mxu0 0.0
        %8369 = vmatmul.mubr.f32.gmra.mrb[0].mxu0 %v8302
        %v8370 = vpop.f32.mrb[0].mxu0
        %v8371 = vadd.f32 %v8299, %v8370
        %v8372 = vpop.f32.mrb[0].mxu0
        %8373 = vdwg.mxu0
        %8374 = vst [vmem:[%s1586] sm:$0xff] %v8371
        %p8375 = scmp.lt.s32.totalorder %s106, 1
        %s8376 = scalar_select %p8375, %s106, 1
        %s8377 = smul.addr %s8376, 8
        %s8378 = scalar_lea.vmem %s87, %s8377
        // Predicated region
        $region253: #{transformer_forward.1} parent=191 // pred_check
          %p8379 = pneg %p1057
        $region254: #{transformer_forward.1} parent=191 // pred_check_branch
          %8381 = sbr.rel (%p8379) target = $region256
        $region255: #{transformer_forward.1} parent=191 // pred_region
          _
        $region256: #{transformer_forward.1} parent=191 // pred_fallthru
          _
      $region192: #{transformer_forward.1} parent=5 // pred_fallthru
        _
      %p8382 = scmp.le.s32.totalorder 2, %s101
      // Predicated region
      $region257: #{transformer_forward.1} parent=5 // pred_check
        %p8383 = pneg %p8382
      $region258: #{transformer_forward.1} parent=5 // pred_check_branch
        %8385 = sbr.rel (%p8383) target = $region260
      $region259: #{transformer_forward.1} parent=5 // pred_region
        %s8386 = ssub.s32 %s101, 2
        // Predicated region
        $region261: #{transformer_forward.1} parent=259 // pred_check
          %p8387 = pneg %p1063
        $region262: #{transformer_forward.1} parent=259 // pred_check_branch
          %8389 = sbr.rel (%p8387) target = $region264
        $region263: #{transformer_forward.1} parent=259 // pred_region
          %p8390 = scmp.lt.s32.totalorder %s107, 1
          %s8391 = scalar_select %p8390, %s107, 1
          %s8392 = smul.addr %s8391, 8
          %s8393 = scalar_lea.vmem %s87, %s8392
        $region264: #{transformer_forward.1} parent=259 // pred_fallthru
          _
      $region260: #{transformer_forward.1} parent=5 // pred_fallthru
        _
    $region6: #{transformer_forward.1} parent=1 // loop_footer
      %s105 = sadd.s32 1, %s101
    $region7: #{transformer_forward.1} parent=1 // loop_footer_branch
      %100 = sbr.rel target = $region3
    $region8: #{transformer_forward.1} parent=1 // loop_exit
      _
    %8394 = vsyncpa [#allocation3], 1
    %s8395 = scalar_lea.sflag [#allocation3], 1
    %8396 = vsyncpa %s8395, 1
    %8397 = vsyncpa [#allocation5], 1
    %8398 = vsyncpa [#allocation8], 1
    %8399 = vsyncpa [#allocation11], 1
    %8400 = vsyncpa [#allocation14], 1
    %8401 = vsyncpa [#allocation17], 1
    %8402 = vsyncpa [#allocation20], 1
    %8403 = vsyncpa [#allocation23], 1

</llo_original>
